<compile_context>
chip_gen: v5e
topology: v5e:2x2
jax: 0.10.0
libtpu: 0.0.40
codegen_flags: <defaults>
</compile_context>

<pallas_src>
import math
import numpy as np
import jax
import jax.numpy as jnp
from jax.experimental import pallas as pl
from jax.experimental.pallas import tpu as pltpu


# ---------------------------------------------------------------------------
# Host-side parameter packing: two lane-dense slabs + static-offset metadata
# ---------------------------------------------------------------------------

class _Packer:
    """Packs 2-D parameter blocks row-wise into one (rows, 128) slab."""

    def __init__(self, lanes=128):
        self.lanes = lanes
        self.row = 0
        self.blocks = []

    def add(self, arr, align=1):
        arr = np.asarray(arr, np.float32)
        if arr.ndim == 1:
            arr = arr.reshape(1, -1)
        r, c = arr.shape
        assert c <= self.lanes, (r, c)
        r0 = -(-self.row // align) * align
        self.blocks.append((r0, arr))
        self.row = r0 + r
        return (r0, r, c)

    def finalize(self):
        total = max(8, -(-self.row // 8) * 8)
        slab = np.zeros((total, self.lanes), np.float32)
        for r0, a in self.blocks:
            slab[r0:r0 + a.shape[0], :a.shape[1]] = a
        return slab


def prepare_weights(params, cfg):
    """One-time prep: transpose to (in, out), fuse [q|k], pack into 2 slabs."""
    d = cfg['d_model']
    wpk = _Packer()   # bf16 matmul-weight slab
    ppk = _Packer()   # f32 bias / norm / embedding slab
    meta = {}

    def add_w(mat):                       # (in, out) matrix -> bf16 slab
        return ('w',) + wpk.add(mat, align=16)

    def add_p(vec, align=1):              # vector / small f32 block -> f32 slab
        return ('p',) + ppk.add(vec, align=align)

    def mlp_meta(layers):
        out, n = [], len(layers)
        for i, p in enumerate(layers):
            wT = np.asarray(p['w'], np.float32).T
            b = np.asarray(p['b'], np.float32)
            if i < n - 1:                 # eval-mode BatchNorm -> scale/shift rows
                s = (np.asarray(p['bn_gamma'], np.float32)
                     / np.sqrt(np.asarray(p['bn_var'], np.float32) + 1e-5))
                t = (b * s + np.asarray(p['bn_beta'], np.float32)
                     - np.asarray(p['bn_mean'], np.float32) * s)
                out.append({'w': add_w(wT), 's': add_p(s), 't': add_p(t)})
            else:
                out.append({'w': add_w(wT), 'b': add_p(b)})
        return out

    def split_in_proj(p):
        w = np.asarray(p['in_w'], np.float32)
        b = np.asarray(p['in_b'], np.float32)
        return w[:d], w[d:2 * d], w[2 * d:], b[:d], b[d:2 * d], b[2 * d:]

    def self_attn_meta(p):                # fused [q | k] projection
        wq, wk, wv, bq, bk, bv = split_in_proj(p)
        return {'qk_w': add_w(np.concatenate([wq.T, wk.T], axis=1)),
                'qk_b': add_p(np.concatenate([bq, bk])),
                'v_w': add_w(wv.T), 'v_b': add_p(bv),
                'o_w': add_w(np.asarray(p['out_w'], np.float32).T),
                'o_b': add_p(p['out_b'])}

    def cross_attn_meta(p):
        wq, wk, wv, bq, bk, bv = split_in_proj(p)
        return {'q_w': add_w(wq.T), 'q_b': add_p(bq),
                'k_w': add_w(wk.T), 'k_b': add_p(bk),
                'v_w': add_w(wv.T), 'v_b': add_p(bv),
                'o_w': add_w(np.asarray(p['out_w'], np.float32).T),
                'o_b': add_p(p['out_b'])}

    meta['fe'] = mlp_meta(params['feature_encoder'])
    if cfg['use_position_encoder']:
        meta['pe'] = mlp_meta(params['pos_encoder'])

    if cfg['use_transformer_encoder']:
        meta['enc'] = []
        for lp in params['encoder_layers']:
            meta['enc'].append({
                'sa': self_attn_meta(lp['self_attn']),
                'n1g': add_p(lp['norm1_g']), 'n1b': add_p(lp['norm1_b']),
                'l1w': add_w(np.asarray(lp['lin1_w'], np.float32).T),
                'l1b': add_p(lp['lin1_b']),
                'l2w': add_w(np.asarray(lp['lin2_w'], np.float32).T),
                'l2b': add_p(lp['lin2_b']),
                'n2g': add_p(lp['norm2_g']), 'n2b': add_p(lp['norm2_b']),
            })

    if cfg['use_transformer_decoder']:
        meta['query'] = add_p(np.asarray(params['query_embed'], np.float32), align=8)
        meta['dec'] = []
        for lp in params['decoder_layers']:
            meta['dec'].append({
                'sa': self_attn_meta(lp['self_attn']),
                'n1g': add_p(lp['norm1_g']), 'n1b': add_p(lp['norm1_b']),
                'ca': cross_attn_meta(lp['cross_attn']),
                'n2g': add_p(lp['norm2_g']), 'n2b': add_p(lp['norm2_b']),
                'l1w': add_w(np.asarray(lp['lin1_w'], np.float32).T),
                'l1b': add_p(lp['lin1_b']),
                'l2w': add_w(np.asarray(lp['lin2_w'], np.float32).T),
                'l2b': add_p(lp['lin2_b']),
                'n3g': add_p(lp['norm3_g']), 'n3b': add_p(lp['norm3_b']),
            })

    # Output projection, padded to 128 lanes for a lane-dense final store.
    projw = np.zeros((d, 128), np.float32)
    projw[:, :2] = np.asarray(params['proj_w'], np.float32).T
    projb = np.zeros((128,), np.float32)
    projb[:2] = np.asarray(params['proj_b'], np.float32)
    meta['proj_w'] = add_w(projw)
    meta['proj_b'] = add_p(projb)

    wslab = jnp.asarray(wpk.finalize()).astype(jnp.bfloat16)
    pslab = jnp.asarray(ppk.finalize(), dtype=jnp.float32)
    return wslab, pslab, meta


# ---------------------------------------------------------------------------
# Fused forward kernel (one pallas_call for the whole model)
# ---------------------------------------------------------------------------

def _build_kernel(cfg, B, N, meta):
    d = cfg['d_model']
    nhead = cfg['nhead']
    Dh = d // nhead
    T = cfg['num_points_per_trajectory']
    use_pos = cfg['use_position_encoder']
    use_enc = cfg['use_transformer_encoder']
    use_dec = cfg['use_transformer_decoder']
    scale_q = 1.0 / math.sqrt(Dh)

    def kernel(*args):
        if use_pos:
            x_ref, pos_ref, w_ref, p_ref, out_ref = args
        else:
            x_ref, w_ref, p_ref, out_ref = args
            pos_ref = None

        # ---- static-offset reads from the packed slabs ----
        def rdw(m):                                   # bf16 (in, out) weight block
            _, r0, r, c = m
            return w_ref[r0:r0 + r, 0:c]

        def rdp(m):                                   # f32 vector / small block
            _, r0, r, c = m
            return p_ref[r0:r0 + r, 0:c]

        def mm(x, w_bf16):                            # bf16 MXU pass, f32 accumulate
            return jnp.dot(x.astype(jnp.bfloat16), w_bf16,
                           preferred_element_type=jnp.float32)

        def layer_norm(x, g, b):
            mu = jnp.mean(x, axis=-1, keepdims=True)
            var = jnp.mean(jnp.square(x - mu), axis=-1, keepdims=True)
            return (x - mu) * jax.lax.rsqrt(var + 1e-5) * g + b

        def mlp(x, layers_meta):
            n = len(layers_meta)
            for i, lm in enumerate(layers_meta):
                y = mm(x, rdw(lm['w']))
                if i < n - 1:                         # folded eval-mode BatchNorm + ReLU
                    x = jnp.maximum(y * rdp(lm['s']) + rdp(lm['t']), 0.0)
                else:
                    x = y + rdp(lm['b'])
            return x

        # ---- batched multi-head attention over value-resident activations ----
        def attention(q, k, v, Lq, Lk):
            q3 = q.reshape(B, Lq, d).astype(jnp.bfloat16)
            k3 = k.reshape(B, Lk, d).astype(jnp.bfloat16)
            v3 = v.reshape(B, Lk, d).astype(jnp.bfloat16)
            outs = []
            for h in range(nhead):
                c0 = h * Dh
                qh = q3[:, :, c0:c0 + Dh]
                kh = k3[:, :, c0:c0 + Dh]
                vh = v3[:, :, c0:c0 + Dh]
                # scores: 'bqd,bkd->bqk'
                s = jax.lax.dot_general(qh, kh, (((2,), (2,)), ((0,), (0,))),
                                        preferred_element_type=jnp.float32)
                s = s - jnp.max(s, axis=-1, keepdims=True)
                p = jnp.exp(s)
                p = p / jnp.sum(p, axis=-1, keepdims=True)     # exact divide
                # 'bqk,bkd->bqd'
                outs.append(jax.lax.dot_general(
                    p.astype(jnp.bfloat16), vh, (((2,), (1,)), ((0,), (0,))),
                    preferred_element_type=jnp.float32))
            return jnp.concatenate(outs, axis=-1).reshape(B * Lq, d)

        def self_attn_block(am, x_qk, x_v, L):
            qk = mm(x_qk, rdw(am['qk_w'])) + rdp(am['qk_b'])    # fused [q | k]
            q = qk[:, :d] * scale_q
            k = qk[:, d:2 * d]
            v = mm(x_v, rdw(am['v_w'])) + rdp(am['v_b'])
            o = attention(q, k, v, L, L)
            return mm(o, rdw(am['o_w'])) + rdp(am['o_b'])

        def cross_attn_block(am, x_q, x_k, x_v, Lq, Lk):
            q = (mm(x_q, rdw(am['q_w'])) + rdp(am['q_b'])) * scale_q
            k = mm(x_k, rdw(am['k_w'])) + rdp(am['k_b'])
            v = mm(x_v, rdw(am['v_w'])) + rdp(am['v_b'])
            o = attention(q, k, v, Lq, Lk)
            return mm(o, rdw(am['o_w'])) + rdp(am['o_b'])

        # ---------------- feature / position encoders ----------------
        src = mlp(x_ref[...], meta['fe'])                       # (B*N, d)
        pos = mlp(pos_ref[...], meta['pe']) if use_pos else None

        # ---------------- transformer encoder ----------------
        if use_enc:
            for lm in meta['enc']:
                x_qk = src if pos is None else src + pos
                a = self_attn_block(lm['sa'], x_qk, src, N)
                src = layer_norm(src + a, rdp(lm['n1g']), rdp(lm['n1b']))
                h = jnp.maximum(mm(src, rdw(lm['l1w'])) + rdp(lm['l1b']), 0.0)
                h = mm(h, rdw(lm['l2w'])) + rdp(lm['l2b'])
                src = layer_norm(src + h, rdp(lm['n2g']), rdp(lm['n2b']))

        # ---------------- transformer decoder ----------------
        if use_dec:
            qe = rdp(meta['query'])                             # (T, d)
            qpos = jnp.concatenate([qe] * B, axis=0)            # (B*T, d)
            tgt = jnp.zeros((B * T, d), jnp.float32)
            mem_k = src if pos is None else src + pos
            for lm in meta['dec']:
                a = self_attn_block(lm['sa'], tgt + qpos, tgt, T)
                tgt = layer_norm(tgt + a, rdp(lm['n1g']), rdp(lm['n1b']))
                a = cross_attn_block(lm['ca'], tgt + qpos, mem_k, src, T, N)
                tgt = layer_norm(tgt + a, rdp(lm['n2g']), rdp(lm['n2b']))
                h = jnp.maximum(mm(tgt, rdw(lm['l1w'])) + rdp(lm['l1b']), 0.0)
                h = mm(h, rdw(lm['l2w'])) + rdp(lm['l2b'])
                tgt = layer_norm(tgt + h, rdp(lm['n3g']), rdp(lm['n3b']))
            hs = tgt
        else:
            hs = src

        # ---------------- output projection (128-lane padded store) ----------------
        out_ref[...] = mm(hs, rdw(meta['proj_w'])) + rdp(meta['proj_b'])

    return kernel


def _full_spec(a):
    nd = a.ndim
    return pl.BlockSpec(a.shape, lambda i, _nd=nd: (0,) * _nd)


def transformer_forward(packed, cfg, waypoints_feature, pos_feature=None):
    wslab, pslab, meta = packed
    B, N, C_in = waypoints_feature.shape
    T = cfg['num_points_per_trajectory']
    L_out = T if cfg['use_transformer_decoder'] else N

    inputs = [waypoints_feature.reshape(B * N, C_in).astype(jnp.float32)]
    if cfg['use_position_encoder']:
        inputs.append(pos_feature.reshape(B * N, C_in).astype(jnp.float32))
    inputs += [wslab, pslab]

    kernel = _build_kernel(cfg, B, N, meta)
    out = pl.pallas_call(
        kernel,
        out_shape=jax.ShapeDtypeStruct((B * L_out, 128), jnp.float32),
        grid=(1,),
        in_specs=[_full_spec(a) for a in inputs],
        out_specs=pl.BlockSpec((B * L_out, 128), lambda i: (0, 0)),
        compiler_params=pltpu.CompilerParams(dimension_semantics=("arbitrary",)),
    )(*inputs)
    return out[:, :2].reshape(B, L_out, 2)


# ---------------------------------------------------------------------------
# Pure-JAX reference (mirrors the PyTorch eval-mode math, bf16 matmul operands
# / f32 accumulation like the kernel) for a sanity check
# ---------------------------------------------------------------------------

def _mm(a, b):
    return jnp.dot(a.astype(jnp.bfloat16), b.astype(jnp.bfloat16),
                   preferred_element_type=jnp.float32)


def _ref_mlp(x, layers):
    n = len(layers)
    for i, p in enumerate(layers):
        y = _mm(x, p['w'].T) + p['b']
        if i < n - 1:
            s = p['bn_gamma'] / jnp.sqrt(p['bn_var'] + 1e-5)
            y = jnp.maximum(y * s + (p['bn_beta'] - p['bn_mean'] * s), 0.0)
        x = y
    return x


def _ref_ln(x, g, b):
    m = x.mean(-1, keepdims=True)
    v = ((x - m) ** 2).mean(-1, keepdims=True)
    return (x - m) / jnp.sqrt(v + 1e-5) * g + b


def _ref_mha(q_in, k_in, v_in, p, nhead):
    B, Lq, E = q_in.shape
    Lk = k_in.shape[1]
    Dh = E // nhead
    wq, wk, wv = p['in_w'][:E], p['in_w'][E:2 * E], p['in_w'][2 * E:]
    bq, bk, bv = p['in_b'][:E], p['in_b'][E:2 * E], p['in_b'][2 * E:]
    q = (_mm(q_in, wq.T) + bq) * (1.0 / math.sqrt(Dh))
    k = _mm(k_in, wk.T) + bk
    v = _mm(v_in, wv.T) + bv
    q = q.reshape(B, Lq, nhead, Dh).transpose(0, 2, 1, 3)
    k = k.reshape(B, Lk, nhead, Dh).transpose(0, 2, 1, 3)
    v = v.reshape(B, Lk, nhead, Dh).transpose(0, 2, 1, 3)
    s = jnp.einsum('bhqd,bhkd->bhqk', q.astype(jnp.bfloat16), k.astype(jnp.bfloat16),
                   preferred_element_type=jnp.float32)
    a = jax.nn.softmax(s, axis=-1)
    o = jnp.einsum('bhqk,bhkd->bhqd', a.astype(jnp.bfloat16), v.astype(jnp.bfloat16),
                   preferred_element_type=jnp.float32)
    o = o.transpose(0, 2, 1, 3).reshape(B, Lq, E)
    return _mm(o, p['out_w'].T) + p['out_b']


def reference_forward(params, cfg, wp, pos_feat):
    B, N, C = wp.shape
    d, nh = cfg['d_model'], cfg['nhead']
    src = _ref_mlp(wp.reshape(B * N, C), params['feature_encoder']).reshape(B, N, d)
    pos = None
    if cfg['use_position_encoder']:
        pos = _ref_mlp(pos_feat.reshape(B * N, C), params['pos_encoder']).reshape(B, N, d)
    if cfg['use_transformer_encoder']:
        for p in params['encoder_layers']:
            qk = src if pos is None else src + pos
            a = _ref_mha(qk, qk, src, p['self_attn'], nh)
            src = _ref_ln(src + a, p['norm1_g'], p['norm1_b'])
            h = jnp.maximum(_mm(src, p['lin1_w'].T) + p['lin1_b'], 0.0)
            h = _mm(h, p['lin2_w'].T) + p['lin2_b']
            src = _ref_ln(src + h, p['norm2_g'], p['norm2_b'])
    if cfg['use_transformer_decoder']:
        T = cfg['num_points_per_trajectory']
        qpos = jnp.broadcast_to(params['query_embed'][None], (B, T, d))
        tgt = jnp.zeros((B, T, d), jnp.float32)
        for p in params['decoder_layers']:
            qk = tgt + qpos
            a = _ref_mha(qk, qk, tgt, p['self_attn'], nh)
            tgt = _ref_ln(tgt + a, p['norm1_g'], p['norm1_b'])
            kc = src if pos is None else src + pos
            a = _ref_mha(tgt + qpos, kc, src, p['cross_attn'], nh)
            tgt = _ref_ln(tgt + a, p['norm2_g'], p['norm2_b'])
            h = jnp.maximum(_mm(tgt, p['lin1_w'].T) + p['lin1_b'], 0.0)
            h = _mm(h, p['lin2_w'].T) + p['lin2_b']
            tgt = _ref_ln(tgt + h, p['norm3_g'], p['norm3_b'])
        hs = tgt
    else:
        hs = src
    return _mm(hs, params['proj_w'].T) + params['proj_b']       # (B, L_out, 2)


# ---------------------------------------------------------------------------
# Deterministic parameter init (torch-style layouts)
# ---------------------------------------------------------------------------

def make_params(cfg, key):
    keys = iter(jax.random.split(key, 512))

    def glorot(shape):
        fan_out, fan_in = shape
        lim = math.sqrt(6.0 / (fan_in + fan_out))
        return jax.random.uniform(next(keys), shape, jnp.float32, -lim, lim)

    def small(shape):
        return jax.random.normal(next(keys), shape, jnp.float32) * 0.02

    def mlp_params(channels):
        layers = []
        n = len(channels)
        for i in range(1, n):
            p = {'w': glorot((channels[i], channels[i - 1])), 'b': small((channels[i],))}
            if i < n - 1:
                p['bn_gamma'] = jnp.ones((channels[i],), jnp.float32)
                p['bn_beta'] = jnp.zeros((channels[i],), jnp.float32)
                p['bn_mean'] = jnp.zeros((channels[i],), jnp.float32)
                p['bn_var'] = jnp.ones((channels[i],), jnp.float32)
            layers.append(p)
        layers[-1]['b'] = jnp.zeros_like(layers[-1]['b'])  # nn.init.constant_(encoder[-1].bias, 0)
        return layers

    def mha_params(d):
        return {'in_w': glorot((3 * d, d)),
                'in_b': jnp.zeros((3 * d,), jnp.float32),
                'out_w': glorot((d, d)),
                'out_b': jnp.zeros((d,), jnp.float32)}

    def enc_layer_params(d, ff):
        return {'self_attn': mha_params(d),
                'lin1_w': glorot((ff, d)), 'lin1_b': small((ff,)),
                'lin2_w': glorot((d, ff)), 'lin2_b': small((d,)),
                'norm1_g': jnp.ones((d,), jnp.float32), 'norm1_b': jnp.zeros((d,), jnp.float32),
                'norm2_g': jnp.ones((d,), jnp.float32), 'norm2_b': jnp.zeros((d,), jnp.float32)}

    def dec_layer_params(d, ff):
        p = enc_layer_params(d, ff)
        p['cross_attn'] = mha_params(d)
        p['norm3_g'] = jnp.ones((d,), jnp.float32)
        p['norm3_b'] = jnp.zeros((d,), jnp.float32)
        return p

    d, ff = cfg['d_model'], cfg['dim_feedforward']
    params = {
        'feature_encoder': mlp_params([cfg['input_dim']] + cfg['feature_encoder_layers'] + [d]),
        'proj_w': glorot((2, d)),
        'proj_b': small((2,)),
    }
    if cfg['use_position_encoder']:
        params['pos_encoder'] = mlp_params([cfg['input_dim']] + cfg['position_encoder_layers'] + [d])
    if cfg['use_transformer_encoder']:
        params['encoder_layers'] = [enc_layer_params(d, ff) for _ in range(cfg['num_layers'])]
    if cfg['use_transformer_decoder']:
        params['query_embed'] = jax.random.normal(next(keys),
                                                  (cfg['num_points_per_trajectory'], d),
                                                  jnp.float32)
        params['decoder_layers'] = [dec_layer_params(d, ff) for _ in range(cfg['num_layers'])]
    return params


# ---------------------------------------------------------------------------
# Main
# ---------------------------------------------------------------------------

if __name__ == "__main__":
    cfg = {
        'input_dim': 4,
        'd_model': 32,
        'nhead': 4,
        'dim_feedforward': 64,
        'num_layers': 2,
        'dropout': 0.1,                    # identity in eval mode
        'activation': 'relu',
        'use_position_encoder': True,
        'use_transformer_encoder': True,
        'use_transformer_decoder': True,
        'feature_encoder_layers': [64, 32],
        'position_encoder_layers': [64, 32],
        'num_points_per_trajectory': 8,
        'normalize_before': False,
    }
    # TODO(synk): training-time loss (MSE / SmoothL1) is not implemented; inference only.

    key = jax.random.PRNGKey(0)
    k_param, k_wp, k_pos = jax.random.split(key, 3)

    B, N = 2, 8
    waypoints_feature = jax.random.normal(k_wp, (B, N, cfg['input_dim']), jnp.float32)
    pos_feature = jax.random.normal(k_pos, (B, N, cfg['input_dim']), jnp.float32)

    params = make_params(cfg, k_param)
    packed = prepare_weights(params, cfg)   # one-time fold / transpose / pack into 2 slabs

    waypoints_pred = transformer_forward(packed, cfg, waypoints_feature, pos_feature)
    waypoints_pred = jax.block_until_ready(waypoints_pred)
    ref = reference_forward(params, cfg, waypoints_feature, pos_feature)

    expected_shape = (B, cfg['num_points_per_trajectory'], 2)
    assert waypoints_pred.shape == expected_shape, waypoints_pred.shape
    assert bool(jnp.all(jnp.isfinite(waypoints_pred)))
    max_err = float(jnp.max(jnp.abs(waypoints_pred - ref)))
    assert bool(jnp.allclose(waypoints_pred, ref, atol=2e-2, rtol=2e-2)), max_err
    print("KERNEL_OK")
</pallas_src>

<mosaic_0001>
module attributes {stable_mosaic.version = 11 : i64} {
  func.func @kernel(%arg0: i32, %arg1: memref<16x4xf32, #tpu.memory_space<vmem>>, %arg2: memref<16x4xf32, #tpu.memory_space<vmem>>, %arg3: memref<1280x128xbf16, #tpu.memory_space<vmem>>, %arg4: memref<72x128xf32, #tpu.memory_space<vmem>>, %arg5: memref<16x128xf32, #tpu.memory_space<vmem>>) attributes {dimension_semantics = [#tpu.dimension_semantics<arbitrary>], iteration_bounds = array<i64: 1>, scalar_prefetch = 0 : i64, scratch_operands = 0 : i64, tpu.core_type = #tpu.core_type<tc>, window_params = [{pipeline_mode = #tpu.pipeline_mode<synchronous>, transform_indices = @transform_0, window_bounds = array<i64: 16, 4>}, {pipeline_mode = #tpu.pipeline_mode<synchronous>, transform_indices = @transform_1, window_bounds = array<i64: 16, 4>}, {pipeline_mode = #tpu.pipeline_mode<synchronous>, transform_indices = @transform_2, window_bounds = array<i64: 1280, 128>}, {pipeline_mode = #tpu.pipeline_mode<synchronous>, transform_indices = @transform_3, window_bounds = array<i64: 72, 128>}, {pipeline_mode = #tpu.pipeline_mode<synchronous>, transform_indices = @transform_4, window_bounds = array<i64: 16, 128>}]} {
    %c0 = arith.constant 0 : index
    %c0_0 = arith.constant 0 : index
    %0 = vector.load %arg1[%c0, %c0_0] : memref<16x4xf32, #tpu.memory_space<vmem>>, vector<16x4xf32>
    %c0_1 = arith.constant 0 : index
    %c0_2 = arith.constant 0 : index
    %1 = vector.load %arg3[%c0_1, %c0_2] : memref<1280x128xbf16, #tpu.memory_space<vmem>>, vector<4x64xbf16>
    %2 = arith.truncf %0 : vector<16x4xf32> to vector<16x4xbf16>
    %cst = arith.constant dense<0.000000e+00> : vector<16x64xf32>
    %3 = tpu.matmul %2, %1, %cst {dimension_numbers = #tpu.dot_dimension_numbers<[1], [0], [0], [1], [0, 0, 1, 1], [], []>} : vector<16x4xbf16>, vector<4x64xbf16>, vector<16x64xf32> -> vector<16x64xf32>
    %c0_3 = arith.constant 0 : index
    %c0_4 = arith.constant 0 : index
    %4 = vector.load %arg4[%c0_3, %c0_4] : memref<72x128xf32, #tpu.memory_space<vmem>>, vector<1x64xf32>
    %5 = vector.broadcast %4 : vector<1x64xf32> to vector<16x64xf32>
    %6 = arith.mulf %3, %5 : vector<16x64xf32>
    %c1 = arith.constant 1 : index
    %c0_5 = arith.constant 0 : index
    %7 = vector.load %arg4[%c1, %c0_5] : memref<72x128xf32, #tpu.memory_space<vmem>>, vector<1x64xf32>
    %8 = vector.broadcast %7 : vector<1x64xf32> to vector<16x64xf32>
    %9 = arith.addf %6, %8 : vector<16x64xf32>
    %cst_6 = arith.constant 0.000000e+00 : f32
    %10 = vector.broadcast %cst_6 : f32 to vector<16x64xf32>
    %11 = arith.maximumf %9, %10 : vector<16x64xf32>
    %c16 = arith.constant 16 : index
    %c0_7 = arith.constant 0 : index
    %12 = vector.load %arg3[%c16, %c0_7] : memref<1280x128xbf16, #tpu.memory_space<vmem>>, vector<64x32xbf16>
    %13 = arith.truncf %11 : vector<16x64xf32> to vector<16x64xbf16>
    %cst_8 = arith.constant dense<0.000000e+00> : vector<16x32xf32>
    %14 = tpu.matmul %13, %12, %cst_8 {dimension_numbers = #tpu.dot_dimension_numbers<[1], [0], [0], [1], [0, 0, 1, 1], [], []>} : vector<16x64xbf16>, vector<64x32xbf16>, vector<16x32xf32> -> vector<16x32xf32>
    %c2 = arith.constant 2 : index
    %c0_9 = arith.constant 0 : index
    %15 = vector.load %arg4[%c2, %c0_9] : memref<72x128xf32, #tpu.memory_space<vmem>>, vector<1x32xf32>
    %16 = vector.broadcast %15 : vector<1x32xf32> to vector<16x32xf32>
    %17 = arith.mulf %14, %16 : vector<16x32xf32>
    %c3 = arith.constant 3 : index
    %c0_10 = arith.constant 0 : index
    %18 = vector.load %arg4[%c3, %c0_10] : memref<72x128xf32, #tpu.memory_space<vmem>>, vector<1x32xf32>
    %19 = vector.broadcast %18 : vector<1x32xf32> to vector<16x32xf32>
    %20 = arith.addf %17, %19 : vector<16x32xf32>
    %cst_11 = arith.constant 0.000000e+00 : f32
    %21 = vector.broadcast %cst_11 : f32 to vector<16x32xf32>
    %22 = arith.maximumf %20, %21 : vector<16x32xf32>
    %c80 = arith.constant 80 : index
    %c0_12 = arith.constant 0 : index
    %23 = vector.load %arg3[%c80, %c0_12] : memref<1280x128xbf16, #tpu.memory_space<vmem>>, vector<32x32xbf16>
    %24 = arith.truncf %22 : vector<16x32xf32> to vector<16x32xbf16>
    %cst_13 = arith.constant dense<0.000000e+00> : vector<16x32xf32>
    %25 = tpu.matmul %24, %23, %cst_13 {dimension_numbers = #tpu.dot_dimension_numbers<[1], [0], [0], [1], [0, 0, 1, 1], [], []>} : vector<16x32xbf16>, vector<32x32xbf16>, vector<16x32xf32> -> vector<16x32xf32>
    %c4 = arith.constant 4 : index
    %c0_14 = arith.constant 0 : index
    %26 = vector.load %arg4[%c4, %c0_14] : memref<72x128xf32, #tpu.memory_space<vmem>>, vector<1x32xf32>
    %27 = vector.broadcast %26 : vector<1x32xf32> to vector<16x32xf32>
    %28 = arith.addf %25, %27 : vector<16x32xf32>
    %c0_15 = arith.constant 0 : index
    %c0_16 = arith.constant 0 : index
    %29 = vector.load %arg2[%c0_15, %c0_16] : memref<16x4xf32, #tpu.memory_space<vmem>>, vector<16x4xf32>
    %c112 = arith.constant 112 : index
    %c0_17 = arith.constant 0 : index
    %30 = vector.load %arg3[%c112, %c0_17] : memref<1280x128xbf16, #tpu.memory_space<vmem>>, vector<4x64xbf16>
    %31 = arith.truncf %29 : vector<16x4xf32> to vector<16x4xbf16>
    %cst_18 = arith.constant dense<0.000000e+00> : vector<16x64xf32>
    %32 = tpu.matmul %31, %30, %cst_18 {dimension_numbers = #tpu.dot_dimension_numbers<[1], [0], [0], [1], [0, 0, 1, 1], [], []>} : vector<16x4xbf16>, vector<4x64xbf16>, vector<16x64xf32> -> vector<16x64xf32>
    %c5 = arith.constant 5 : index
    %c0_19 = arith.constant 0 : index
    %33 = vector.load %arg4[%c5, %c0_19] : memref<72x128xf32, #tpu.memory_space<vmem>>, vector<1x64xf32>
    %34 = vector.broadcast %33 : vector<1x64xf32> to vector<16x64xf32>
    %35 = arith.mulf %32, %34 : vector<16x64xf32>
    %c6 = arith.constant 6 : index
    %c0_20 = arith.constant 0 : index
    %36 = vector.load %arg4[%c6, %c0_20] : memref<72x128xf32, #tpu.memory_space<vmem>>, vector<1x64xf32>
    %37 = vector.broadcast %36 : vector<1x64xf32> to vector<16x64xf32>
    %38 = arith.addf %35, %37 : vector<16x64xf32>
    %cst_21 = arith.constant 0.000000e+00 : f32
    %39 = vector.broadcast %cst_21 : f32 to vector<16x64xf32>
    %40 = arith.maximumf %38, %39 : vector<16x64xf32>
    %c128 = arith.constant 128 : index
    %c0_22 = arith.constant 0 : index
    %41 = vector.load %arg3[%c128, %c0_22] : memref<1280x128xbf16, #tpu.memory_space<vmem>>, vector<64x32xbf16>
    %42 = arith.truncf %40 : vector<16x64xf32> to vector<16x64xbf16>
    %cst_23 = arith.constant dense<0.000000e+00> : vector<16x32xf32>
    %43 = tpu.matmul %42, %41, %cst_23 {dimension_numbers = #tpu.dot_dimension_numbers<[1], [0], [0], [1], [0, 0, 1, 1], [], []>} : vector<16x64xbf16>, vector<64x32xbf16>, vector<16x32xf32> -> vector<16x32xf32>
    %c7 = arith.constant 7 : index
    %c0_24 = arith.constant 0 : index
    %44 = vector.load %arg4[%c7, %c0_24] : memref<72x128xf32, #tpu.memory_space<vmem>>, vector<1x32xf32>
    %45 = vector.broadcast %44 : vector<1x32xf32> to vector<16x32xf32>
    %46 = arith.mulf %43, %45 : vector<16x32xf32>
    %c8 = arith.constant 8 : index
    %c0_25 = arith.constant 0 : index
    %47 = vector.load %arg4[%c8, %c0_25] : memref<72x128xf32, #tpu.memory_space<vmem>>, vector<1x32xf32>
    %48 = vector.broadcast %47 : vector<1x32xf32> to vector<16x32xf32>
    %49 = arith.addf %46, %48 : vector<16x32xf32>
    %cst_26 = arith.constant 0.000000e+00 : f32
    %50 = vector.broadcast %cst_26 : f32 to vector<16x32xf32>
    %51 = arith.maximumf %49, %50 : vector<16x32xf32>
    %c192 = arith.constant 192 : index
    %c0_27 = arith.constant 0 : index
    %52 = vector.load %arg3[%c192, %c0_27] : memref<1280x128xbf16, #tpu.memory_space<vmem>>, vector<32x32xbf16>
    %53 = arith.truncf %51 : vector<16x32xf32> to vector<16x32xbf16>
    %cst_28 = arith.constant dense<0.000000e+00> : vector<16x32xf32>
    %54 = tpu.matmul %53, %52, %cst_28 {dimension_numbers = #tpu.dot_dimension_numbers<[1], [0], [0], [1], [0, 0, 1, 1], [], []>} : vector<16x32xbf16>, vector<32x32xbf16>, vector<16x32xf32> -> vector<16x32xf32>
    %c9 = arith.constant 9 : index
    %c0_29 = arith.constant 0 : index
    %55 = vector.load %arg4[%c9, %c0_29] : memref<72x128xf32, #tpu.memory_space<vmem>>, vector<1x32xf32>
    %56 = vector.broadcast %55 : vector<1x32xf32> to vector<16x32xf32>
    %57 = arith.addf %54, %56 : vector<16x32xf32>
    %58 = arith.addf %28, %57 : vector<16x32xf32>
    %c224 = arith.constant 224 : index
    %c0_30 = arith.constant 0 : index
    %59 = vector.load %arg3[%c224, %c0_30] : memref<1280x128xbf16, #tpu.memory_space<vmem>>, vector<32x64xbf16>
    %60 = arith.truncf %58 : vector<16x32xf32> to vector<16x32xbf16>
    %cst_31 = arith.constant dense<0.000000e+00> : vector<16x64xf32>
    %61 = tpu.matmul %60, %59, %cst_31 {dimension_numbers = #tpu.dot_dimension_numbers<[1], [0], [0], [1], [0, 0, 1, 1], [], []>} : vector<16x32xbf16>, vector<32x64xbf16>, vector<16x64xf32> -> vector<16x64xf32>
    %c10 = arith.constant 10 : index
    %c0_32 = arith.constant 0 : index
    %62 = vector.load %arg4[%c10, %c0_32] : memref<72x128xf32, #tpu.memory_space<vmem>>, vector<1x64xf32>
    %63 = vector.broadcast %62 : vector<1x64xf32> to vector<16x64xf32>
    %64 = arith.addf %61, %63 : vector<16x64xf32>
    %65 = vector.extract_strided_slice %64 {offsets = [0, 0], sizes = [16, 32], strides = [1, 1]} : vector<16x64xf32> to vector<16x32xf32>
    %cst_33 = arith.constant 0.353553385 : f32
    %66 = vector.broadcast %cst_33 : f32 to vector<16x32xf32>
    %67 = arith.mulf %65, %66 : vector<16x32xf32>
    %68 = vector.extract_strided_slice %64 {offsets = [0, 32], sizes = [16, 32], strides = [1, 1]} : vector<16x64xf32> to vector<16x32xf32>
    %c256 = arith.constant 256 : index
    %c0_34 = arith.constant 0 : index
    %69 = vector.load %arg3[%c256, %c0_34] : memref<1280x128xbf16, #tpu.memory_space<vmem>>, vector<32x32xbf16>
    %70 = arith.truncf %28 : vector<16x32xf32> to vector<16x32xbf16>
    %cst_35 = arith.constant dense<0.000000e+00> : vector<16x32xf32>
    %71 = tpu.matmul %70, %69, %cst_35 {dimension_numbers = #tpu.dot_dimension_numbers<[1], [0], [0], [1], [0, 0, 1, 1], [], []>} : vector<16x32xbf16>, vector<32x32xbf16>, vector<16x32xf32> -> vector<16x32xf32>
    %c11 = arith.constant 11 : index
    %c0_36 = arith.constant 0 : index
    %72 = vector.load %arg4[%c11, %c0_36] : memref<72x128xf32, #tpu.memory_space<vmem>>, vector<1x32xf32>
    %73 = vector.broadcast %72 : vector<1x32xf32> to vector<16x32xf32>
    %74 = arith.addf %71, %73 : vector<16x32xf32>
    %75 = vector.shape_cast %67 : vector<16x32xf32> to vector<2x8x32xf32>
    %76 = arith.truncf %75 : vector<2x8x32xf32> to vector<2x8x32xbf16>
    %77 = vector.shape_cast %68 : vector<16x32xf32> to vector<2x8x32xf32>
    %78 = arith.truncf %77 : vector<2x8x32xf32> to vector<2x8x32xbf16>
    %79 = vector.shape_cast %74 : vector<16x32xf32> to vector<2x8x32xf32>
    %80 = arith.truncf %79 : vector<2x8x32xf32> to vector<2x8x32xbf16>
    %81 = vector.extract_strided_slice %76 {offsets = [0, 0, 0], sizes = [2, 8, 8], strides = [1, 1, 1]} : vector<2x8x32xbf16> to vector<2x8x8xbf16>
    %82 = vector.extract_strided_slice %78 {offsets = [0, 0, 0], sizes = [2, 8, 8], strides = [1, 1, 1]} : vector<2x8x32xbf16> to vector<2x8x8xbf16>
    %83 = vector.extract_strided_slice %80 {offsets = [0, 0, 0], sizes = [2, 8, 8], strides = [1, 1, 1]} : vector<2x8x32xbf16> to vector<2x8x8xbf16>
    %cst_37 = arith.constant dense<0.000000e+00> : vector<2x8x8xf32>
    %84 = tpu.matmul %81, %82, %cst_37 {dimension_numbers = #tpu.dot_dimension_numbers<[2], [2], [1], [1], [0, 0, 0, 1, 1, 1], [0], [0]>} : vector<2x8x8xbf16>, vector<2x8x8xbf16>, vector<2x8x8xf32> -> vector<2x8x8xf32>
    %cst_38 = arith.constant dense<0xFF800000> : vector<2x8xf32>
    %85 = vector.multi_reduction <maximumf>, %84, %cst_38 [2] : vector<2x8x8xf32> to vector<2x8xf32>
    %86 = vector.shape_cast %85 : vector<2x8xf32> to vector<2x8x1xf32>
    %87 = vector.broadcast %86 : vector<2x8x1xf32> to vector<2x8x8xf32>
    %88 = arith.subf %84, %87 : vector<2x8x8xf32>
    %89 = math.exp %88 : vector<2x8x8xf32>
    %cst_39 = arith.constant dense<0.000000e+00> : vector<2x8xf32>
    %90 = vector.multi_reduction <add>, %89, %cst_39 [2] : vector<2x8x8xf32> to vector<2x8xf32>
    %91 = vector.shape_cast %90 : vector<2x8xf32> to vector<2x8x1xf32>
    %92 = vector.broadcast %91 : vector<2x8x1xf32> to vector<2x8x8xf32>
    %93 = arith.divf %89, %92 : vector<2x8x8xf32>
    %94 = arith.truncf %93 : vector<2x8x8xf32> to vector<2x8x8xbf16>
    %cst_40 = arith.constant dense<0.000000e+00> : vector<2x8x8xf32>
    %95 = tpu.matmul %94, %83, %cst_40 {dimension_numbers = #tpu.dot_dimension_numbers<[2], [1], [1], [2], [0, 0, 0, 1, 1, 2], [0], [0]>} : vector<2x8x8xbf16>, vector<2x8x8xbf16>, vector<2x8x8xf32> -> vector<2x8x8xf32>
    %96 = vector.extract_strided_slice %76 {offsets = [0, 0, 8], sizes = [2, 8, 8], strides = [1, 1, 1]} : vector<2x8x32xbf16> to vector<2x8x8xbf16>
    %97 = vector.extract_strided_slice %78 {offsets = [0, 0, 8], sizes = [2, 8, 8], strides = [1, 1, 1]} : vector<2x8x32xbf16> to vector<2x8x8xbf16>
    %98 = vector.extract_strided_slice %80 {offsets = [0, 0, 8], sizes = [2, 8, 8], strides = [1, 1, 1]} : vector<2x8x32xbf16> to vector<2x8x8xbf16>
    %cst_41 = arith.constant dense<0.000000e+00> : vector<2x8x8xf32>
    %99 = tpu.matmul %96, %97, %cst_41 {dimension_numbers = #tpu.dot_dimension_numbers<[2], [2], [1], [1], [0, 0, 0, 1, 1, 1], [0], [0]>} : vector<2x8x8xbf16>, vector<2x8x8xbf16>, vector<2x8x8xf32> -> vector<2x8x8xf32>
    %cst_42 = arith.constant dense<0xFF800000> : vector<2x8xf32>
    %100 = vector.multi_reduction <maximumf>, %99, %cst_42 [2] : vector<2x8x8xf32> to vector<2x8xf32>
    %101 = vector.shape_cast %100 : vector<2x8xf32> to vector<2x8x1xf32>
    %102 = vector.broadcast %101 : vector<2x8x1xf32> to vector<2x8x8xf32>
    %103 = arith.subf %99, %102 : vector<2x8x8xf32>
    %104 = math.exp %103 : vector<2x8x8xf32>
    %cst_43 = arith.constant dense<0.000000e+00> : vector<2x8xf32>
    %105 = vector.multi_reduction <add>, %104, %cst_43 [2] : vector<2x8x8xf32> to vector<2x8xf32>
    %106 = vector.shape_cast %105 : vector<2x8xf32> to vector<2x8x1xf32>
    %107 = vector.broadcast %106 : vector<2x8x1xf32> to vector<2x8x8xf32>
    %108 = arith.divf %104, %107 : vector<2x8x8xf32>
    %109 = arith.truncf %108 : vector<2x8x8xf32> to vector<2x8x8xbf16>
    %cst_44 = arith.constant dense<0.000000e+00> : vector<2x8x8xf32>
    %110 = tpu.matmul %109, %98, %cst_44 {dimension_numbers = #tpu.dot_dimension_numbers<[2], [1], [1], [2], [0, 0, 0, 1, 1, 2], [0], [0]>} : vector<2x8x8xbf16>, vector<2x8x8xbf16>, vector<2x8x8xf32> -> vector<2x8x8xf32>
    %111 = vector.extract_strided_slice %76 {offsets = [0, 0, 16], sizes = [2, 8, 8], strides = [1, 1, 1]} : vector<2x8x32xbf16> to vector<2x8x8xbf16>
    %112 = vector.extract_strided_slice %78 {offsets = [0, 0, 16], sizes = [2, 8, 8], strides = [1, 1, 1]} : vector<2x8x32xbf16> to vector<2x8x8xbf16>
    %113 = vector.extract_strided_slice %80 {offsets = [0, 0, 16], sizes = [2, 8, 8], strides = [1, 1, 1]} : vector<2x8x32xbf16> to vector<2x8x8xbf16>
    %cst_45 = arith.constant dense<0.000000e+00> : vector<2x8x8xf32>
    %114 = tpu.matmul %111, %112, %cst_45 {dimension_numbers = #tpu.dot_dimension_numbers<[2], [2], [1], [1], [0, 0, 0, 1, 1, 1], [0], [0]>} : vector<2x8x8xbf16>, vector<2x8x8xbf16>, vector<2x8x8xf32> -> vector<2x8x8xf32>
    %cst_46 = arith.constant dense<0xFF800000> : vector<2x8xf32>
    %115 = vector.multi_reduction <maximumf>, %114, %cst_46 [2] : vector<2x8x8xf32> to vector<2x8xf32>
    %116 = vector.shape_cast %115 : vector<2x8xf32> to vector<2x8x1xf32>
    %117 = vector.broadcast %116 : vector<2x8x1xf32> to vector<2x8x8xf32>
    %118 = arith.subf %114, %117 : vector<2x8x8xf32>
    %119 = math.exp %118 : vector<2x8x8xf32>
    %cst_47 = arith.constant dense<0.000000e+00> : vector<2x8xf32>
    %120 = vector.multi_reduction <add>, %119, %cst_47 [2] : vector<2x8x8xf32> to vector<2x8xf32>
    %121 = vector.shape_cast %120 : vector<2x8xf32> to vector<2x8x1xf32>
    %122 = vector.broadcast %121 : vector<2x8x1xf32> to vector<2x8x8xf32>
    %123 = arith.divf %119, %122 : vector<2x8x8xf32>
    %124 = arith.truncf %123 : vector<2x8x8xf32> to vector<2x8x8xbf16>
    %cst_48 = arith.constant dense<0.000000e+00> : vector<2x8x8xf32>
    %125 = tpu.matmul %124, %113, %cst_48 {dimension_numbers = #tpu.dot_dimension_numbers<[2], [1], [1], [2], [0, 0, 0, 1, 1, 2], [0], [0]>} : vector<2x8x8xbf16>, vector<2x8x8xbf16>, vector<2x8x8xf32> -> vector<2x8x8xf32>
    %126 = vector.extract_strided_slice %76 {offsets = [0, 0, 24], sizes = [2, 8, 8], strides = [1, 1, 1]} : vector<2x8x32xbf16> to vector<2x8x8xbf16>
    %127 = vector.extract_strided_slice %78 {offsets = [0, 0, 24], sizes = [2, 8, 8], strides = [1, 1, 1]} : vector<2x8x32xbf16> to vector<2x8x8xbf16>
    %128 = vector.extract_strided_slice %80 {offsets = [0, 0, 24], sizes = [2, 8, 8], strides = [1, 1, 1]} : vector<2x8x32xbf16> to vector<2x8x8xbf16>
    %cst_49 = arith.constant dense<0.000000e+00> : vector<2x8x8xf32>
    %129 = tpu.matmul %126, %127, %cst_49 {dimension_numbers = #tpu.dot_dimension_numbers<[2], [2], [1], [1], [0, 0, 0, 1, 1, 1], [0], [0]>} : vector<2x8x8xbf16>, vector<2x8x8xbf16>, vector<2x8x8xf32> -> vector<2x8x8xf32>
    %cst_50 = arith.constant dense<0xFF800000> : vector<2x8xf32>
    %130 = vector.multi_reduction <maximumf>, %129, %cst_50 [2] : vector<2x8x8xf32> to vector<2x8xf32>
    %131 = vector.shape_cast %130 : vector<2x8xf32> to vector<2x8x1xf32>
    %132 = vector.broadcast %131 : vector<2x8x1xf32> to vector<2x8x8xf32>
    %133 = arith.subf %129, %132 : vector<2x8x8xf32>
    %134 = math.exp %133 : vector<2x8x8xf32>
    %cst_51 = arith.constant dense<0.000000e+00> : vector<2x8xf32>
    %135 = vector.multi_reduction <add>, %134, %cst_51 [2] : vector<2x8x8xf32> to vector<2x8xf32>
    %136 = vector.shape_cast %135 : vector<2x8xf32> to vector<2x8x1xf32>
    %137 = vector.broadcast %136 : vector<2x8x1xf32> to vector<2x8x8xf32>
    %138 = arith.divf %134, %137 : vector<2x8x8xf32>
    %139 = arith.truncf %138 : vector<2x8x8xf32> to vector<2x8x8xbf16>
    %cst_52 = arith.constant dense<0.000000e+00> : vector<2x8x8xf32>
    %140 = tpu.matmul %139, %128, %cst_52 {dimension_numbers = #tpu.dot_dimension_numbers<[2], [1], [1], [2], [0, 0, 0, 1, 1, 2], [0], [0]>} : vector<2x8x8xbf16>, vector<2x8x8xbf16>, vector<2x8x8xf32> -> vector<2x8x8xf32>
    %141 = tpu.concatenate %95, %110, %125, %140 in 2 : vector<2x8x8xf32>, vector<2x8x8xf32>, vector<2x8x8xf32>, vector<2x8x8xf32> -> vector<2x8x32xf32>
    %142 = vector.shape_cast %141 : vector<2x8x32xf32> to vector<16x32xf32>
    %c288 = arith.constant 288 : index
    %c0_53 = arith.constant 0 : index
    %143 = vector.load %arg3[%c288, %c0_53] : memref<1280x128xbf16, #tpu.memory_space<vmem>>, vector<32x32xbf16>
    %144 = arith.truncf %142 : vector<16x32xf32> to vector<16x32xbf16>
    %cst_54 = arith.constant dense<0.000000e+00> : vector<16x32xf32>
    %145 = tpu.matmul %144, %143, %cst_54 {dimension_numbers = #tpu.dot_dimension_numbers<[1], [0], [0], [1], [0, 0, 1, 1], [], []>} : vector<16x32xbf16>, vector<32x32xbf16>, vector<16x32xf32> -> vector<16x32xf32>
    %c12 = arith.constant 12 : index
    %c0_55 = arith.constant 0 : index
    %146 = vector.load %arg4[%c12, %c0_55] : memref<72x128xf32, #tpu.memory_space<vmem>>, vector<1x32xf32>
    %147 = vector.broadcast %146 : vector<1x32xf32> to vector<16x32xf32>
    %148 = arith.addf %145, %147 : vector<16x32xf32>
    %149 = arith.addf %28, %148 : vector<16x32xf32>
    %c13 = arith.constant 13 : index
    %c0_56 = arith.constant 0 : index
    %150 = vector.load %arg4[%c13, %c0_56] : memref<72x128xf32, #tpu.memory_space<vmem>>, vector<1x32xf32>
    %c14 = arith.constant 14 : index
    %c0_57 = arith.constant 0 : index
    %151 = vector.load %arg4[%c14, %c0_57] : memref<72x128xf32, #tpu.memory_space<vmem>>, vector<1x32xf32>
    %cst_58 = arith.constant dense<0.000000e+00> : vector<16xf32>
    %152 = vector.multi_reduction <add>, %149, %cst_58 [1] : vector<16x32xf32> to vector<16xf32>
    %153 = vector.shape_cast %152 : vector<16xf32> to vector<16x1xf32>
    %cst_59 = arith.constant 3.200000e+01 : f32
    %154 = vector.broadcast %cst_59 : f32 to vector<16x1xf32>
    %155 = arith.divf %153, %154 : vector<16x1xf32>
    %156 = vector.broadcast %155 : vector<16x1xf32> to vector<16x32xf32>
    %157 = arith.subf %149, %156 : vector<16x32xf32>
    %158 = arith.mulf %157, %157 : vector<16x32xf32>
    %cst_60 = arith.constant dense<0.000000e+00> : vector<16xf32>
    %159 = vector.multi_reduction <add>, %158, %cst_60 [1] : vector<16x32xf32> to vector<16xf32>
    %160 = vector.shape_cast %159 : vector<16xf32> to vector<16x1xf32>
    %cst_61 = arith.constant 3.200000e+01 : f32
    %161 = vector.broadcast %cst_61 : f32 to vector<16x1xf32>
    %162 = arith.divf %160, %161 : vector<16x1xf32>
    %163 = vector.broadcast %155 : vector<16x1xf32> to vector<16x32xf32>
    %164 = arith.subf %149, %163 : vector<16x32xf32>
    %cst_62 = arith.constant 9.99999974E-6 : f32
    %165 = vector.broadcast %cst_62 : f32 to vector<16x1xf32>
    %166 = arith.addf %162, %165 : vector<16x1xf32>
    %167 = math.rsqrt %166 : vector<16x1xf32>
    %168 = vector.broadcast %167 : vector<16x1xf32> to vector<16x32xf32>
    %169 = arith.mulf %164, %168 : vector<16x32xf32>
    %170 = vector.broadcast %150 : vector<1x32xf32> to vector<16x32xf32>
    %171 = arith.mulf %169, %170 : vector<16x32xf32>
    %172 = vector.broadcast %151 : vector<1x32xf32> to vector<16x32xf32>
    %173 = arith.addf %171, %172 : vector<16x32xf32>
    %c320 = arith.constant 320 : index
    %c0_63 = arith.constant 0 : index
    %174 = vector.load %arg3[%c320, %c0_63] : memref<1280x128xbf16, #tpu.memory_space<vmem>>, vector<32x64xbf16>
    %175 = arith.truncf %173 : vector<16x32xf32> to vector<16x32xbf16>
    %cst_64 = arith.constant dense<0.000000e+00> : vector<16x64xf32>
    %176 = tpu.matmul %175, %174, %cst_64 {dimension_numbers = #tpu.dot_dimension_numbers<[1], [0], [0], [1], [0, 0, 1, 1], [], []>} : vector<16x32xbf16>, vector<32x64xbf16>, vector<16x64xf32> -> vector<16x64xf32>
    %c15 = arith.constant 15 : index
    %c0_65 = arith.constant 0 : index
    %177 = vector.load %arg4[%c15, %c0_65] : memref<72x128xf32, #tpu.memory_space<vmem>>, vector<1x64xf32>
    %178 = vector.broadcast %177 : vector<1x64xf32> to vector<16x64xf32>
    %179 = arith.addf %176, %178 : vector<16x64xf32>
    %cst_66 = arith.constant 0.000000e+00 : f32
    %180 = vector.broadcast %cst_66 : f32 to vector<16x64xf32>
    %181 = arith.maximumf %179, %180 : vector<16x64xf32>
    %c352 = arith.constant 352 : index
    %c0_67 = arith.constant 0 : index
    %182 = vector.load %arg3[%c352, %c0_67] : memref<1280x128xbf16, #tpu.memory_space<vmem>>, vector<64x32xbf16>
    %183 = arith.truncf %181 : vector<16x64xf32> to vector<16x64xbf16>
    %cst_68 = arith.constant dense<0.000000e+00> : vector<16x32xf32>
    %184 = tpu.matmul %183, %182, %cst_68 {dimension_numbers = #tpu.dot_dimension_numbers<[1], [0], [0], [1], [0, 0, 1, 1], [], []>} : vector<16x64xbf16>, vector<64x32xbf16>, vector<16x32xf32> -> vector<16x32xf32>
    %c16_69 = arith.constant 16 : index
    %c0_70 = arith.constant 0 : index
    %185 = vector.load %arg4[%c16_69, %c0_70] : memref<72x128xf32, #tpu.memory_space<vmem>>, vector<1x32xf32>
    %186 = vector.broadcast %185 : vector<1x32xf32> to vector<16x32xf32>
    %187 = arith.addf %184, %186 : vector<16x32xf32>
    %188 = arith.addf %173, %187 : vector<16x32xf32>
    %c17 = arith.constant 17 : index
    %c0_71 = arith.constant 0 : index
    %189 = vector.load %arg4[%c17, %c0_71] : memref<72x128xf32, #tpu.memory_space<vmem>>, vector<1x32xf32>
    %c18 = arith.constant 18 : index
    %c0_72 = arith.constant 0 : index
    %190 = vector.load %arg4[%c18, %c0_72] : memref<72x128xf32, #tpu.memory_space<vmem>>, vector<1x32xf32>
    %cst_73 = arith.constant dense<0.000000e+00> : vector<16xf32>
    %191 = vector.multi_reduction <add>, %188, %cst_73 [1] : vector<16x32xf32> to vector<16xf32>
    %192 = vector.shape_cast %191 : vector<16xf32> to vector<16x1xf32>
    %cst_74 = arith.constant 3.200000e+01 : f32
    %193 = vector.broadcast %cst_74 : f32 to vector<16x1xf32>
    %194 = arith.divf %192, %193 : vector<16x1xf32>
    %195 = vector.broadcast %194 : vector<16x1xf32> to vector<16x32xf32>
    %196 = arith.subf %188, %195 : vector<16x32xf32>
    %197 = arith.mulf %196, %196 : vector<16x32xf32>
    %cst_75 = arith.constant dense<0.000000e+00> : vector<16xf32>
    %198 = vector.multi_reduction <add>, %197, %cst_75 [1] : vector<16x32xf32> to vector<16xf32>
    %199 = vector.shape_cast %198 : vector<16xf32> to vector<16x1xf32>
    %cst_76 = arith.constant 3.200000e+01 : f32
    %200 = vector.broadcast %cst_76 : f32 to vector<16x1xf32>
    %201 = arith.divf %199, %200 : vector<16x1xf32>
    %202 = vector.broadcast %194 : vector<16x1xf32> to vector<16x32xf32>
    %203 = arith.subf %188, %202 : vector<16x32xf32>
    %cst_77 = arith.constant 9.99999974E-6 : f32
    %204 = vector.broadcast %cst_77 : f32 to vector<16x1xf32>
    %205 = arith.addf %201, %204 : vector<16x1xf32>
    %206 = math.rsqrt %205 : vector<16x1xf32>
    %207 = vector.broadcast %206 : vector<16x1xf32> to vector<16x32xf32>
    %208 = arith.mulf %203, %207 : vector<16x32xf32>
    %209 = vector.broadcast %189 : vector<1x32xf32> to vector<16x32xf32>
    %210 = arith.mulf %208, %209 : vector<16x32xf32>
    %211 = vector.broadcast %190 : vector<1x32xf32> to vector<16x32xf32>
    %212 = arith.addf %210, %211 : vector<16x32xf32>
    %213 = arith.addf %212, %57 : vector<16x32xf32>
    %c416 = arith.constant 416 : index
    %c0_78 = arith.constant 0 : index
    %214 = vector.load %arg3[%c416, %c0_78] : memref<1280x128xbf16, #tpu.memory_space<vmem>>, vector<32x64xbf16>
    %215 = arith.truncf %213 : vector<16x32xf32> to vector<16x32xbf16>
    %cst_79 = arith.constant dense<0.000000e+00> : vector<16x64xf32>
    %216 = tpu.matmul %215, %214, %cst_79 {dimension_numbers = #tpu.dot_dimension_numbers<[1], [0], [0], [1], [0, 0, 1, 1], [], []>} : vector<16x32xbf16>, vector<32x64xbf16>, vector<16x64xf32> -> vector<16x64xf32>
    %c19 = arith.constant 19 : index
    %c0_80 = arith.constant 0 : index
    %217 = vector.load %arg4[%c19, %c0_80] : memref<72x128xf32, #tpu.memory_space<vmem>>, vector<1x64xf32>
    %218 = vector.broadcast %217 : vector<1x64xf32> to vector<16x64xf32>
    %219 = arith.addf %216, %218 : vector<16x64xf32>
    %220 = vector.extract_strided_slice %219 {offsets = [0, 0], sizes = [16, 32], strides = [1, 1]} : vector<16x64xf32> to vector<16x32xf32>
    %cst_81 = arith.constant 0.353553385 : f32
    %221 = vector.broadcast %cst_81 : f32 to vector<16x32xf32>
    %222 = arith.mulf %220, %221 : vector<16x32xf32>
    %223 = vector.extract_strided_slice %219 {offsets = [0, 32], sizes = [16, 32], strides = [1, 1]} : vector<16x64xf32> to vector<16x32xf32>
    %c448 = arith.constant 448 : index
    %c0_82 = arith.constant 0 : index
    %224 = vector.load %arg3[%c448, %c0_82] : memref<1280x128xbf16, #tpu.memory_space<vmem>>, vector<32x32xbf16>
    %225 = arith.truncf %212 : vector<16x32xf32> to vector<16x32xbf16>
    %cst_83 = arith.constant dense<0.000000e+00> : vector<16x32xf32>
    %226 = tpu.matmul %225, %224, %cst_83 {dimension_numbers = #tpu.dot_dimension_numbers<[1], [0], [0], [1], [0, 0, 1, 1], [], []>} : vector<16x32xbf16>, vector<32x32xbf16>, vector<16x32xf32> -> vector<16x32xf32>
    %c20 = arith.constant 20 : index
    %c0_84 = arith.constant 0 : index
    %227 = vector.load %arg4[%c20, %c0_84] : memref<72x128xf32, #tpu.memory_space<vmem>>, vector<1x32xf32>
    %228 = vector.broadcast %227 : vector<1x32xf32> to vector<16x32xf32>
    %229 = arith.addf %226, %228 : vector<16x32xf32>
    %230 = vector.shape_cast %222 : vector<16x32xf32> to vector<2x8x32xf32>
    %231 = arith.truncf %230 : vector<2x8x32xf32> to vector<2x8x32xbf16>
    %232 = vector.shape_cast %223 : vector<16x32xf32> to vector<2x8x32xf32>
    %233 = arith.truncf %232 : vector<2x8x32xf32> to vector<2x8x32xbf16>
    %234 = vector.shape_cast %229 : vector<16x32xf32> to vector<2x8x32xf32>
    %235 = arith.truncf %234 : vector<2x8x32xf32> to vector<2x8x32xbf16>
    %236 = vector.extract_strided_slice %231 {offsets = [0, 0, 0], sizes = [2, 8, 8], strides = [1, 1, 1]} : vector<2x8x32xbf16> to vector<2x8x8xbf16>
    %237 = vector.extract_strided_slice %233 {offsets = [0, 0, 0], sizes = [2, 8, 8], strides = [1, 1, 1]} : vector<2x8x32xbf16> to vector<2x8x8xbf16>
    %238 = vector.extract_strided_slice %235 {offsets = [0, 0, 0], sizes = [2, 8, 8], strides = [1, 1, 1]} : vector<2x8x32xbf16> to vector<2x8x8xbf16>
    %cst_85 = arith.constant dense<0.000000e+00> : vector<2x8x8xf32>
    %239 = tpu.matmul %236, %237, %cst_85 {dimension_numbers = #tpu.dot_dimension_numbers<[2], [2], [1], [1], [0, 0, 0, 1, 1, 1], [0], [0]>} : vector<2x8x8xbf16>, vector<2x8x8xbf16>, vector<2x8x8xf32> -> vector<2x8x8xf32>
    %cst_86 = arith.constant dense<0xFF800000> : vector<2x8xf32>
    %240 = vector.multi_reduction <maximumf>, %239, %cst_86 [2] : vector<2x8x8xf32> to vector<2x8xf32>
    %241 = vector.shape_cast %240 : vector<2x8xf32> to vector<2x8x1xf32>
    %242 = vector.broadcast %241 : vector<2x8x1xf32> to vector<2x8x8xf32>
    %243 = arith.subf %239, %242 : vector<2x8x8xf32>
    %244 = math.exp %243 : vector<2x8x8xf32>
    %cst_87 = arith.constant dense<0.000000e+00> : vector<2x8xf32>
    %245 = vector.multi_reduction <add>, %244, %cst_87 [2] : vector<2x8x8xf32> to vector<2x8xf32>
    %246 = vector.shape_cast %245 : vector<2x8xf32> to vector<2x8x1xf32>
    %247 = vector.broadcast %246 : vector<2x8x1xf32> to vector<2x8x8xf32>
    %248 = arith.divf %244, %247 : vector<2x8x8xf32>
    %249 = arith.truncf %248 : vector<2x8x8xf32> to vector<2x8x8xbf16>
    %cst_88 = arith.constant dense<0.000000e+00> : vector<2x8x8xf32>
    %250 = tpu.matmul %249, %238, %cst_88 {dimension_numbers = #tpu.dot_dimension_numbers<[2], [1], [1], [2], [0, 0, 0, 1, 1, 2], [0], [0]>} : vector<2x8x8xbf16>, vector<2x8x8xbf16>, vector<2x8x8xf32> -> vector<2x8x8xf32>
    %251 = vector.extract_strided_slice %231 {offsets = [0, 0, 8], sizes = [2, 8, 8], strides = [1, 1, 1]} : vector<2x8x32xbf16> to vector<2x8x8xbf16>
    %252 = vector.extract_strided_slice %233 {offsets = [0, 0, 8], sizes = [2, 8, 8], strides = [1, 1, 1]} : vector<2x8x32xbf16> to vector<2x8x8xbf16>
    %253 = vector.extract_strided_slice %235 {offsets = [0, 0, 8], sizes = [2, 8, 8], strides = [1, 1, 1]} : vector<2x8x32xbf16> to vector<2x8x8xbf16>
    %cst_89 = arith.constant dense<0.000000e+00> : vector<2x8x8xf32>
    %254 = tpu.matmul %251, %252, %cst_89 {dimension_numbers = #tpu.dot_dimension_numbers<[2], [2], [1], [1], [0, 0, 0, 1, 1, 1], [0], [0]>} : vector<2x8x8xbf16>, vector<2x8x8xbf16>, vector<2x8x8xf32> -> vector<2x8x8xf32>
    %cst_90 = arith.constant dense<0xFF800000> : vector<2x8xf32>
    %255 = vector.multi_reduction <maximumf>, %254, %cst_90 [2] : vector<2x8x8xf32> to vector<2x8xf32>
    %256 = vector.shape_cast %255 : vector<2x8xf32> to vector<2x8x1xf32>
    %257 = vector.broadcast %256 : vector<2x8x1xf32> to vector<2x8x8xf32>
    %258 = arith.subf %254, %257 : vector<2x8x8xf32>
    %259 = math.exp %258 : vector<2x8x8xf32>
    %cst_91 = arith.constant dense<0.000000e+00> : vector<2x8xf32>
    %260 = vector.multi_reduction <add>, %259, %cst_91 [2] : vector<2x8x8xf32> to vector<2x8xf32>
    %261 = vector.shape_cast %260 : vector<2x8xf32> to vector<2x8x1xf32>
    %262 = vector.broadcast %261 : vector<2x8x1xf32> to vector<2x8x8xf32>
    %263 = arith.divf %259, %262 : vector<2x8x8xf32>
    %264 = arith.truncf %263 : vector<2x8x8xf32> to vector<2x8x8xbf16>
    %cst_92 = arith.constant dense<0.000000e+00> : vector<2x8x8xf32>
    %265 = tpu.matmul %264, %253, %cst_92 {dimension_numbers = #tpu.dot_dimension_numbers<[2], [1], [1], [2], [0, 0, 0, 1, 1, 2], [0], [0]>} : vector<2x8x8xbf16>, vector<2x8x8xbf16>, vector<2x8x8xf32> -> vector<2x8x8xf32>
    %266 = vector.extract_strided_slice %231 {offsets = [0, 0, 16], sizes = [2, 8, 8], strides = [1, 1, 1]} : vector<2x8x32xbf16> to vector<2x8x8xbf16>
    %267 = vector.extract_strided_slice %233 {offsets = [0, 0, 16], sizes = [2, 8, 8], strides = [1, 1, 1]} : vector<2x8x32xbf16> to vector<2x8x8xbf16>
    %268 = vector.extract_strided_slice %235 {offsets = [0, 0, 16], sizes = [2, 8, 8], strides = [1, 1, 1]} : vector<2x8x32xbf16> to vector<2x8x8xbf16>
    %cst_93 = arith.constant dense<0.000000e+00> : vector<2x8x8xf32>
    %269 = tpu.matmul %266, %267, %cst_93 {dimension_numbers = #tpu.dot_dimension_numbers<[2], [2], [1], [1], [0, 0, 0, 1, 1, 1], [0], [0]>} : vector<2x8x8xbf16>, vector<2x8x8xbf16>, vector<2x8x8xf32> -> vector<2x8x8xf32>
    %cst_94 = arith.constant dense<0xFF800000> : vector<2x8xf32>
    %270 = vector.multi_reduction <maximumf>, %269, %cst_94 [2] : vector<2x8x8xf32> to vector<2x8xf32>
    %271 = vector.shape_cast %270 : vector<2x8xf32> to vector<2x8x1xf32>
    %272 = vector.broadcast %271 : vector<2x8x1xf32> to vector<2x8x8xf32>
    %273 = arith.subf %269, %272 : vector<2x8x8xf32>
    %274 = math.exp %273 : vector<2x8x8xf32>
    %cst_95 = arith.constant dense<0.000000e+00> : vector<2x8xf32>
    %275 = vector.multi_reduction <add>, %274, %cst_95 [2] : vector<2x8x8xf32> to vector<2x8xf32>
    %276 = vector.shape_cast %275 : vector<2x8xf32> to vector<2x8x1xf32>
    %277 = vector.broadcast %276 : vector<2x8x1xf32> to vector<2x8x8xf32>
    %278 = arith.divf %274, %277 : vector<2x8x8xf32>
    %279 = arith.truncf %278 : vector<2x8x8xf32> to vector<2x8x8xbf16>
    %cst_96 = arith.constant dense<0.000000e+00> : vector<2x8x8xf32>
    %280 = tpu.matmul %279, %268, %cst_96 {dimension_numbers = #tpu.dot_dimension_numbers<[2], [1], [1], [2], [0, 0, 0, 1, 1, 2], [0], [0]>} : vector<2x8x8xbf16>, vector<2x8x8xbf16>, vector<2x8x8xf32> -> vector<2x8x8xf32>
    %281 = vector.extract_strided_slice %231 {offsets = [0, 0, 24], sizes = [2, 8, 8], strides = [1, 1, 1]} : vector<2x8x32xbf16> to vector<2x8x8xbf16>
    %282 = vector.extract_strided_slice %233 {offsets = [0, 0, 24], sizes = [2, 8, 8], strides = [1, 1, 1]} : vector<2x8x32xbf16> to vector<2x8x8xbf16>
    %283 = vector.extract_strided_slice %235 {offsets = [0, 0, 24], sizes = [2, 8, 8], strides = [1, 1, 1]} : vector<2x8x32xbf16> to vector<2x8x8xbf16>
    %cst_97 = arith.constant dense<0.000000e+00> : vector<2x8x8xf32>
    %284 = tpu.matmul %281, %282, %cst_97 {dimension_numbers = #tpu.dot_dimension_numbers<[2], [2], [1], [1], [0, 0, 0, 1, 1, 1], [0], [0]>} : vector<2x8x8xbf16>, vector<2x8x8xbf16>, vector<2x8x8xf32> -> vector<2x8x8xf32>
    %cst_98 = arith.constant dense<0xFF800000> : vector<2x8xf32>
    %285 = vector.multi_reduction <maximumf>, %284, %cst_98 [2] : vector<2x8x8xf32> to vector<2x8xf32>
    %286 = vector.shape_cast %285 : vector<2x8xf32> to vector<2x8x1xf32>
    %287 = vector.broadcast %286 : vector<2x8x1xf32> to vector<2x8x8xf32>
    %288 = arith.subf %284, %287 : vector<2x8x8xf32>
    %289 = math.exp %288 : vector<2x8x8xf32>
    %cst_99 = arith.constant dense<0.000000e+00> : vector<2x8xf32>
    %290 = vector.multi_reduction <add>, %289, %cst_99 [2] : vector<2x8x8xf32> to vector<2x8xf32>
    %291 = vector.shape_cast %290 : vector<2x8xf32> to vector<2x8x1xf32>
    %292 = vector.broadcast %291 : vector<2x8x1xf32> to vector<2x8x8xf32>
    %293 = arith.divf %289, %292 : vector<2x8x8xf32>
    %294 = arith.truncf %293 : vector<2x8x8xf32> to vector<2x8x8xbf16>
    %cst_100 = arith.constant dense<0.000000e+00> : vector<2x8x8xf32>
    %295 = tpu.matmul %294, %283, %cst_100 {dimension_numbers = #tpu.dot_dimension_numbers<[2], [1], [1], [2], [0, 0, 0, 1, 1, 2], [0], [0]>} : vector<2x8x8xbf16>, vector<2x8x8xbf16>, vector<2x8x8xf32> -> vector<2x8x8xf32>
    %296 = tpu.concatenate %250, %265, %280, %295 in 2 : vector<2x8x8xf32>, vector<2x8x8xf32>, vector<2x8x8xf32>, vector<2x8x8xf32> -> vector<2x8x32xf32>
    %297 = vector.shape_cast %296 : vector<2x8x32xf32> to vector<16x32xf32>
    %c480 = arith.constant 480 : index
    %c0_101 = arith.constant 0 : index
    %298 = vector.load %arg3[%c480, %c0_101] : memref<1280x128xbf16, #tpu.memory_space<vmem>>, vector<32x32xbf16>
    %299 = arith.truncf %297 : vector<16x32xf32> to vector<16x32xbf16>
    %cst_102 = arith.constant dense<0.000000e+00> : vector<16x32xf32>
    %300 = tpu.matmul %299, %298, %cst_102 {dimension_numbers = #tpu.dot_dimension_numbers<[1], [0], [0], [1], [0, 0, 1, 1], [], []>} : vector<16x32xbf16>, vector<32x32xbf16>, vector<16x32xf32> -> vector<16x32xf32>
    %c21 = arith.constant 21 : index
    %c0_103 = arith.constant 0 : index
    %301 = vector.load %arg4[%c21, %c0_103] : memref<72x128xf32, #tpu.memory_space<vmem>>, vector<1x32xf32>
    %302 = vector.broadcast %301 : vector<1x32xf32> to vector<16x32xf32>
    %303 = arith.addf %300, %302 : vector<16x32xf32>
    %304 = arith.addf %212, %303 : vector<16x32xf32>
    %c22 = arith.constant 22 : index
    %c0_104 = arith.constant 0 : index
    %305 = vector.load %arg4[%c22, %c0_104] : memref<72x128xf32, #tpu.memory_space<vmem>>, vector<1x32xf32>
    %c23 = arith.constant 23 : index
    %c0_105 = arith.constant 0 : index
    %306 = vector.load %arg4[%c23, %c0_105] : memref<72x128xf32, #tpu.memory_space<vmem>>, vector<1x32xf32>
    %cst_106 = arith.constant dense<0.000000e+00> : vector<16xf32>
    %307 = vector.multi_reduction <add>, %304, %cst_106 [1] : vector<16x32xf32> to vector<16xf32>
    %308 = vector.shape_cast %307 : vector<16xf32> to vector<16x1xf32>
    %cst_107 = arith.constant 3.200000e+01 : f32
    %309 = vector.broadcast %cst_107 : f32 to vector<16x1xf32>
    %310 = arith.divf %308, %309 : vector<16x1xf32>
    %311 = vector.broadcast %310 : vector<16x1xf32> to vector<16x32xf32>
    %312 = arith.subf %304, %311 : vector<16x32xf32>
    %313 = arith.mulf %312, %312 : vector<16x32xf32>
    %cst_108 = arith.constant dense<0.000000e+00> : vector<16xf32>
    %314 = vector.multi_reduction <add>, %313, %cst_108 [1] : vector<16x32xf32> to vector<16xf32>
    %315 = vector.shape_cast %314 : vector<16xf32> to vector<16x1xf32>
    %cst_109 = arith.constant 3.200000e+01 : f32
    %316 = vector.broadcast %cst_109 : f32 to vector<16x1xf32>
    %317 = arith.divf %315, %316 : vector<16x1xf32>
    %318 = vector.broadcast %310 : vector<16x1xf32> to vector<16x32xf32>
    %319 = arith.subf %304, %318 : vector<16x32xf32>
    %cst_110 = arith.constant 9.99999974E-6 : f32
    %320 = vector.broadcast %cst_110 : f32 to vector<16x1xf32>
    %321 = arith.addf %317, %320 : vector<16x1xf32>
    %322 = math.rsqrt %321 : vector<16x1xf32>
    %323 = vector.broadcast %322 : vector<16x1xf32> to vector<16x32xf32>
    %324 = arith.mulf %319, %323 : vector<16x32xf32>
    %325 = vector.broadcast %305 : vector<1x32xf32> to vector<16x32xf32>
    %326 = arith.mulf %324, %325 : vector<16x32xf32>
    %327 = vector.broadcast %306 : vector<1x32xf32> to vector<16x32xf32>
    %328 = arith.addf %326, %327 : vector<16x32xf32>
    %c512 = arith.constant 512 : index
    %c0_111 = arith.constant 0 : index
    %329 = vector.load %arg3[%c512, %c0_111] : memref<1280x128xbf16, #tpu.memory_space<vmem>>, vector<32x64xbf16>
    %330 = arith.truncf %328 : vector<16x32xf32> to vector<16x32xbf16>
    %cst_112 = arith.constant dense<0.000000e+00> : vector<16x64xf32>
    %331 = tpu.matmul %330, %329, %cst_112 {dimension_numbers = #tpu.dot_dimension_numbers<[1], [0], [0], [1], [0, 0, 1, 1], [], []>} : vector<16x32xbf16>, vector<32x64xbf16>, vector<16x64xf32> -> vector<16x64xf32>
    %c24 = arith.constant 24 : index
    %c0_113 = arith.constant 0 : index
    %332 = vector.load %arg4[%c24, %c0_113] : memref<72x128xf32, #tpu.memory_space<vmem>>, vector<1x64xf32>
    %333 = vector.broadcast %332 : vector<1x64xf32> to vector<16x64xf32>
    %334 = arith.addf %331, %333 : vector<16x64xf32>
    %cst_114 = arith.constant 0.000000e+00 : f32
    %335 = vector.broadcast %cst_114 : f32 to vector<16x64xf32>
    %336 = arith.maximumf %334, %335 : vector<16x64xf32>
    %c544 = arith.constant 544 : index
    %c0_115 = arith.constant 0 : index
    %337 = vector.load %arg3[%c544, %c0_115] : memref<1280x128xbf16, #tpu.memory_space<vmem>>, vector<64x32xbf16>
    %338 = arith.truncf %336 : vector<16x64xf32> to vector<16x64xbf16>
    %cst_116 = arith.constant dense<0.000000e+00> : vector<16x32xf32>
    %339 = tpu.matmul %338, %337, %cst_116 {dimension_numbers = #tpu.dot_dimension_numbers<[1], [0], [0], [1], [0, 0, 1, 1], [], []>} : vector<16x64xbf16>, vector<64x32xbf16>, vector<16x32xf32> -> vector<16x32xf32>
    %c25 = arith.constant 25 : index
    %c0_117 = arith.constant 0 : index
    %340 = vector.load %arg4[%c25, %c0_117] : memref<72x128xf32, #tpu.memory_space<vmem>>, vector<1x32xf32>
    %341 = vector.broadcast %340 : vector<1x32xf32> to vector<16x32xf32>
    %342 = arith.addf %339, %341 : vector<16x32xf32>
    %343 = arith.addf %328, %342 : vector<16x32xf32>
    %c26 = arith.constant 26 : index
    %c0_118 = arith.constant 0 : index
    %344 = vector.load %arg4[%c26, %c0_118] : memref<72x128xf32, #tpu.memory_space<vmem>>, vector<1x32xf32>
    %c27 = arith.constant 27 : index
    %c0_119 = arith.constant 0 : index
    %345 = vector.load %arg4[%c27, %c0_119] : memref<72x128xf32, #tpu.memory_space<vmem>>, vector<1x32xf32>
    %cst_120 = arith.constant dense<0.000000e+00> : vector<16xf32>
    %346 = vector.multi_reduction <add>, %343, %cst_120 [1] : vector<16x32xf32> to vector<16xf32>
    %347 = vector.shape_cast %346 : vector<16xf32> to vector<16x1xf32>
    %cst_121 = arith.constant 3.200000e+01 : f32
    %348 = vector.broadcast %cst_121 : f32 to vector<16x1xf32>
    %349 = arith.divf %347, %348 : vector<16x1xf32>
    %350 = vector.broadcast %349 : vector<16x1xf32> to vector<16x32xf32>
    %351 = arith.subf %343, %350 : vector<16x32xf32>
    %352 = arith.mulf %351, %351 : vector<16x32xf32>
    %cst_122 = arith.constant dense<0.000000e+00> : vector<16xf32>
    %353 = vector.multi_reduction <add>, %352, %cst_122 [1] : vector<16x32xf32> to vector<16xf32>
    %354 = vector.shape_cast %353 : vector<16xf32> to vector<16x1xf32>
    %cst_123 = arith.constant 3.200000e+01 : f32
    %355 = vector.broadcast %cst_123 : f32 to vector<16x1xf32>
    %356 = arith.divf %354, %355 : vector<16x1xf32>
    %357 = vector.broadcast %349 : vector<16x1xf32> to vector<16x32xf32>
    %358 = arith.subf %343, %357 : vector<16x32xf32>
    %cst_124 = arith.constant 9.99999974E-6 : f32
    %359 = vector.broadcast %cst_124 : f32 to vector<16x1xf32>
    %360 = arith.addf %356, %359 : vector<16x1xf32>
    %361 = math.rsqrt %360 : vector<16x1xf32>
    %362 = vector.broadcast %361 : vector<16x1xf32> to vector<16x32xf32>
    %363 = arith.mulf %358, %362 : vector<16x32xf32>
    %364 = vector.broadcast %344 : vector<1x32xf32> to vector<16x32xf32>
    %365 = arith.mulf %363, %364 : vector<16x32xf32>
    %366 = vector.broadcast %345 : vector<1x32xf32> to vector<16x32xf32>
    %367 = arith.addf %365, %366 : vector<16x32xf32>
    %c32 = arith.constant 32 : index
    %c0_125 = arith.constant 0 : index
    %368 = vector.load %arg4[%c32, %c0_125] : memref<72x128xf32, #tpu.memory_space<vmem>>, vector<8x32xf32>
    %369 = tpu.concatenate %368, %368 in 0 : vector<8x32xf32>, vector<8x32xf32> -> vector<16x32xf32>
    %cst_126 = arith.constant 0.000000e+00 : f32
    %370 = vector.broadcast %cst_126 : f32 to vector<16x32xf32>
    %371 = arith.addf %367, %57 : vector<16x32xf32>
    %372 = arith.addf %370, %369 : vector<16x32xf32>
    %c608 = arith.constant 608 : index
    %c0_127 = arith.constant 0 : index
    %373 = vector.load %arg3[%c608, %c0_127] : memref<1280x128xbf16, #tpu.memory_space<vmem>>, vector<32x64xbf16>
    %374 = arith.truncf %372 : vector<16x32xf32> to vector<16x32xbf16>
    %cst_128 = arith.constant dense<0.000000e+00> : vector<16x64xf32>
    %375 = tpu.matmul %374, %373, %cst_128 {dimension_numbers = #tpu.dot_dimension_numbers<[1], [0], [0], [1], [0, 0, 1, 1], [], []>} : vector<16x32xbf16>, vector<32x64xbf16>, vector<16x64xf32> -> vector<16x64xf32>
    %c40 = arith.constant 40 : index
    %c0_129 = arith.constant 0 : index
    %376 = vector.load %arg4[%c40, %c0_129] : memref<72x128xf32, #tpu.memory_space<vmem>>, vector<1x64xf32>
    %377 = vector.broadcast %376 : vector<1x64xf32> to vector<16x64xf32>
    %378 = arith.addf %375, %377 : vector<16x64xf32>
    %379 = vector.extract_strided_slice %378 {offsets = [0, 0], sizes = [16, 32], strides = [1, 1]} : vector<16x64xf32> to vector<16x32xf32>
    %cst_130 = arith.constant 0.353553385 : f32
    %380 = vector.broadcast %cst_130 : f32 to vector<16x32xf32>
    %381 = arith.mulf %379, %380 : vector<16x32xf32>
    %382 = vector.extract_strided_slice %378 {offsets = [0, 32], sizes = [16, 32], strides = [1, 1]} : vector<16x64xf32> to vector<16x32xf32>
    %c640 = arith.constant 640 : index
    %c0_131 = arith.constant 0 : index
    %383 = vector.load %arg3[%c640, %c0_131] : memref<1280x128xbf16, #tpu.memory_space<vmem>>, vector<32x32xbf16>
    %384 = arith.truncf %370 : vector<16x32xf32> to vector<16x32xbf16>
    %cst_132 = arith.constant dense<0.000000e+00> : vector<16x32xf32>
    %385 = tpu.matmul %384, %383, %cst_132 {dimension_numbers = #tpu.dot_dimension_numbers<[1], [0], [0], [1], [0, 0, 1, 1], [], []>} : vector<16x32xbf16>, vector<32x32xbf16>, vector<16x32xf32> -> vector<16x32xf32>
    %c41 = arith.constant 41 : index
    %c0_133 = arith.constant 0 : index
    %386 = vector.load %arg4[%c41, %c0_133] : memref<72x128xf32, #tpu.memory_space<vmem>>, vector<1x32xf32>
    %387 = vector.broadcast %386 : vector<1x32xf32> to vector<16x32xf32>
    %388 = arith.addf %385, %387 : vector<16x32xf32>
    %389 = vector.shape_cast %381 : vector<16x32xf32> to vector<2x8x32xf32>
    %390 = arith.truncf %389 : vector<2x8x32xf32> to vector<2x8x32xbf16>
    %391 = vector.shape_cast %382 : vector<16x32xf32> to vector<2x8x32xf32>
    %392 = arith.truncf %391 : vector<2x8x32xf32> to vector<2x8x32xbf16>
    %393 = vector.shape_cast %388 : vector<16x32xf32> to vector<2x8x32xf32>
    %394 = arith.truncf %393 : vector<2x8x32xf32> to vector<2x8x32xbf16>
    %395 = vector.extract_strided_slice %390 {offsets = [0, 0, 0], sizes = [2, 8, 8], strides = [1, 1, 1]} : vector<2x8x32xbf16> to vector<2x8x8xbf16>
    %396 = vector.extract_strided_slice %392 {offsets = [0, 0, 0], sizes = [2, 8, 8], strides = [1, 1, 1]} : vector<2x8x32xbf16> to vector<2x8x8xbf16>
    %397 = vector.extract_strided_slice %394 {offsets = [0, 0, 0], sizes = [2, 8, 8], strides = [1, 1, 1]} : vector<2x8x32xbf16> to vector<2x8x8xbf16>
    %cst_134 = arith.constant dense<0.000000e+00> : vector<2x8x8xf32>
    %398 = tpu.matmul %395, %396, %cst_134 {dimension_numbers = #tpu.dot_dimension_numbers<[2], [2], [1], [1], [0, 0, 0, 1, 1, 1], [0], [0]>} : vector<2x8x8xbf16>, vector<2x8x8xbf16>, vector<2x8x8xf32> -> vector<2x8x8xf32>
    %cst_135 = arith.constant dense<0xFF800000> : vector<2x8xf32>
    %399 = vector.multi_reduction <maximumf>, %398, %cst_135 [2] : vector<2x8x8xf32> to vector<2x8xf32>
    %400 = vector.shape_cast %399 : vector<2x8xf32> to vector<2x8x1xf32>
    %401 = vector.broadcast %400 : vector<2x8x1xf32> to vector<2x8x8xf32>
    %402 = arith.subf %398, %401 : vector<2x8x8xf32>
    %403 = math.exp %402 : vector<2x8x8xf32>
    %cst_136 = arith.constant dense<0.000000e+00> : vector<2x8xf32>
    %404 = vector.multi_reduction <add>, %403, %cst_136 [2] : vector<2x8x8xf32> to vector<2x8xf32>
    %405 = vector.shape_cast %404 : vector<2x8xf32> to vector<2x8x1xf32>
    %406 = vector.broadcast %405 : vector<2x8x1xf32> to vector<2x8x8xf32>
    %407 = arith.divf %403, %406 : vector<2x8x8xf32>
    %408 = arith.truncf %407 : vector<2x8x8xf32> to vector<2x8x8xbf16>
    %cst_137 = arith.constant dense<0.000000e+00> : vector<2x8x8xf32>
    %409 = tpu.matmul %408, %397, %cst_137 {dimension_numbers = #tpu.dot_dimension_numbers<[2], [1], [1], [2], [0, 0, 0, 1, 1, 2], [0], [0]>} : vector<2x8x8xbf16>, vector<2x8x8xbf16>, vector<2x8x8xf32> -> vector<2x8x8xf32>
    %410 = vector.extract_strided_slice %390 {offsets = [0, 0, 8], sizes = [2, 8, 8], strides = [1, 1, 1]} : vector<2x8x32xbf16> to vector<2x8x8xbf16>
    %411 = vector.extract_strided_slice %392 {offsets = [0, 0, 8], sizes = [2, 8, 8], strides = [1, 1, 1]} : vector<2x8x32xbf16> to vector<2x8x8xbf16>
    %412 = vector.extract_strided_slice %394 {offsets = [0, 0, 8], sizes = [2, 8, 8], strides = [1, 1, 1]} : vector<2x8x32xbf16> to vector<2x8x8xbf16>
    %cst_138 = arith.constant dense<0.000000e+00> : vector<2x8x8xf32>
    %413 = tpu.matmul %410, %411, %cst_138 {dimension_numbers = #tpu.dot_dimension_numbers<[2], [2], [1], [1], [0, 0, 0, 1, 1, 1], [0], [0]>} : vector<2x8x8xbf16>, vector<2x8x8xbf16>, vector<2x8x8xf32> -> vector<2x8x8xf32>
    %cst_139 = arith.constant dense<0xFF800000> : vector<2x8xf32>
    %414 = vector.multi_reduction <maximumf>, %413, %cst_139 [2] : vector<2x8x8xf32> to vector<2x8xf32>
    %415 = vector.shape_cast %414 : vector<2x8xf32> to vector<2x8x1xf32>
    %416 = vector.broadcast %415 : vector<2x8x1xf32> to vector<2x8x8xf32>
    %417 = arith.subf %413, %416 : vector<2x8x8xf32>
    %418 = math.exp %417 : vector<2x8x8xf32>
    %cst_140 = arith.constant dense<0.000000e+00> : vector<2x8xf32>
    %419 = vector.multi_reduction <add>, %418, %cst_140 [2] : vector<2x8x8xf32> to vector<2x8xf32>
    %420 = vector.shape_cast %419 : vector<2x8xf32> to vector<2x8x1xf32>
    %421 = vector.broadcast %420 : vector<2x8x1xf32> to vector<2x8x8xf32>
    %422 = arith.divf %418, %421 : vector<2x8x8xf32>
    %423 = arith.truncf %422 : vector<2x8x8xf32> to vector<2x8x8xbf16>
    %cst_141 = arith.constant dense<0.000000e+00> : vector<2x8x8xf32>
    %424 = tpu.matmul %423, %412, %cst_141 {dimension_numbers = #tpu.dot_dimension_numbers<[2], [1], [1], [2], [0, 0, 0, 1, 1, 2], [0], [0]>} : vector<2x8x8xbf16>, vector<2x8x8xbf16>, vector<2x8x8xf32> -> vector<2x8x8xf32>
    %425 = vector.extract_strided_slice %390 {offsets = [0, 0, 16], sizes = [2, 8, 8], strides = [1, 1, 1]} : vector<2x8x32xbf16> to vector<2x8x8xbf16>
    %426 = vector.extract_strided_slice %392 {offsets = [0, 0, 16], sizes = [2, 8, 8], strides = [1, 1, 1]} : vector<2x8x32xbf16> to vector<2x8x8xbf16>
    %427 = vector.extract_strided_slice %394 {offsets = [0, 0, 16], sizes = [2, 8, 8], strides = [1, 1, 1]} : vector<2x8x32xbf16> to vector<2x8x8xbf16>
    %cst_142 = arith.constant dense<0.000000e+00> : vector<2x8x8xf32>
    %428 = tpu.matmul %425, %426, %cst_142 {dimension_numbers = #tpu.dot_dimension_numbers<[2], [2], [1], [1], [0, 0, 0, 1, 1, 1], [0], [0]>} : vector<2x8x8xbf16>, vector<2x8x8xbf16>, vector<2x8x8xf32> -> vector<2x8x8xf32>
    %cst_143 = arith.constant dense<0xFF800000> : vector<2x8xf32>
    %429 = vector.multi_reduction <maximumf>, %428, %cst_143 [2] : vector<2x8x8xf32> to vector<2x8xf32>
    %430 = vector.shape_cast %429 : vector<2x8xf32> to vector<2x8x1xf32>
    %431 = vector.broadcast %430 : vector<2x8x1xf32> to vector<2x8x8xf32>
    %432 = arith.subf %428, %431 : vector<2x8x8xf32>
    %433 = math.exp %432 : vector<2x8x8xf32>
    %cst_144 = arith.constant dense<0.000000e+00> : vector<2x8xf32>
    %434 = vector.multi_reduction <add>, %433, %cst_144 [2] : vector<2x8x8xf32> to vector<2x8xf32>
    %435 = vector.shape_cast %434 : vector<2x8xf32> to vector<2x8x1xf32>
    %436 = vector.broadcast %435 : vector<2x8x1xf32> to vector<2x8x8xf32>
    %437 = arith.divf %433, %436 : vector<2x8x8xf32>
    %438 = arith.truncf %437 : vector<2x8x8xf32> to vector<2x8x8xbf16>
    %cst_145 = arith.constant dense<0.000000e+00> : vector<2x8x8xf32>
    %439 = tpu.matmul %438, %427, %cst_145 {dimension_numbers = #tpu.dot_dimension_numbers<[2], [1], [1], [2], [0, 0, 0, 1, 1, 2], [0], [0]>} : vector<2x8x8xbf16>, vector<2x8x8xbf16>, vector<2x8x8xf32> -> vector<2x8x8xf32>
    %440 = vector.extract_strided_slice %390 {offsets = [0, 0, 24], sizes = [2, 8, 8], strides = [1, 1, 1]} : vector<2x8x32xbf16> to vector<2x8x8xbf16>
    %441 = vector.extract_strided_slice %392 {offsets = [0, 0, 24], sizes = [2, 8, 8], strides = [1, 1, 1]} : vector<2x8x32xbf16> to vector<2x8x8xbf16>
    %442 = vector.extract_strided_slice %394 {offsets = [0, 0, 24], sizes = [2, 8, 8], strides = [1, 1, 1]} : vector<2x8x32xbf16> to vector<2x8x8xbf16>
    %cst_146 = arith.constant dense<0.000000e+00> : vector<2x8x8xf32>
    %443 = tpu.matmul %440, %441, %cst_146 {dimension_numbers = #tpu.dot_dimension_numbers<[2], [2], [1], [1], [0, 0, 0, 1, 1, 1], [0], [0]>} : vector<2x8x8xbf16>, vector<2x8x8xbf16>, vector<2x8x8xf32> -> vector<2x8x8xf32>
    %cst_147 = arith.constant dense<0xFF800000> : vector<2x8xf32>
    %444 = vector.multi_reduction <maximumf>, %443, %cst_147 [2] : vector<2x8x8xf32> to vector<2x8xf32>
    %445 = vector.shape_cast %444 : vector<2x8xf32> to vector<2x8x1xf32>
    %446 = vector.broadcast %445 : vector<2x8x1xf32> to vector<2x8x8xf32>
    %447 = arith.subf %443, %446 : vector<2x8x8xf32>
    %448 = math.exp %447 : vector<2x8x8xf32>
    %cst_148 = arith.constant dense<0.000000e+00> : vector<2x8xf32>
    %449 = vector.multi_reduction <add>, %448, %cst_148 [2] : vector<2x8x8xf32> to vector<2x8xf32>
    %450 = vector.shape_cast %449 : vector<2x8xf32> to vector<2x8x1xf32>
    %451 = vector.broadcast %450 : vector<2x8x1xf32> to vector<2x8x8xf32>
    %452 = arith.divf %448, %451 : vector<2x8x8xf32>
    %453 = arith.truncf %452 : vector<2x8x8xf32> to vector<2x8x8xbf16>
    %cst_149 = arith.constant dense<0.000000e+00> : vector<2x8x8xf32>
    %454 = tpu.matmul %453, %442, %cst_149 {dimension_numbers = #tpu.dot_dimension_numbers<[2], [1], [1], [2], [0, 0, 0, 1, 1, 2], [0], [0]>} : vector<2x8x8xbf16>, vector<2x8x8xbf16>, vector<2x8x8xf32> -> vector<2x8x8xf32>
    %455 = tpu.concatenate %409, %424, %439, %454 in 2 : vector<2x8x8xf32>, vector<2x8x8xf32>, vector<2x8x8xf32>, vector<2x8x8xf32> -> vector<2x8x32xf32>
    %456 = vector.shape_cast %455 : vector<2x8x32xf32> to vector<16x32xf32>
    %c672 = arith.constant 672 : index
    %c0_150 = arith.constant 0 : index
    %457 = vector.load %arg3[%c672, %c0_150] : memref<1280x128xbf16, #tpu.memory_space<vmem>>, vector<32x32xbf16>
    %458 = arith.truncf %456 : vector<16x32xf32> to vector<16x32xbf16>
    %cst_151 = arith.constant dense<0.000000e+00> : vector<16x32xf32>
    %459 = tpu.matmul %458, %457, %cst_151 {dimension_numbers = #tpu.dot_dimension_numbers<[1], [0], [0], [1], [0, 0, 1, 1], [], []>} : vector<16x32xbf16>, vector<32x32xbf16>, vector<16x32xf32> -> vector<16x32xf32>
    %c42 = arith.constant 42 : index
    %c0_152 = arith.constant 0 : index
    %460 = vector.load %arg4[%c42, %c0_152] : memref<72x128xf32, #tpu.memory_space<vmem>>, vector<1x32xf32>
    %461 = vector.broadcast %460 : vector<1x32xf32> to vector<16x32xf32>
    %462 = arith.addf %459, %461 : vector<16x32xf32>
    %463 = arith.addf %370, %462 : vector<16x32xf32>
    %c43 = arith.constant 43 : index
    %c0_153 = arith.constant 0 : index
    %464 = vector.load %arg4[%c43, %c0_153] : memref<72x128xf32, #tpu.memory_space<vmem>>, vector<1x32xf32>
    %c44 = arith.constant 44 : index
    %c0_154 = arith.constant 0 : index
    %465 = vector.load %arg4[%c44, %c0_154] : memref<72x128xf32, #tpu.memory_space<vmem>>, vector<1x32xf32>
    %cst_155 = arith.constant dense<0.000000e+00> : vector<16xf32>
    %466 = vector.multi_reduction <add>, %463, %cst_155 [1] : vector<16x32xf32> to vector<16xf32>
    %467 = vector.shape_cast %466 : vector<16xf32> to vector<16x1xf32>
    %cst_156 = arith.constant 3.200000e+01 : f32
    %468 = vector.broadcast %cst_156 : f32 to vector<16x1xf32>
    %469 = arith.divf %467, %468 : vector<16x1xf32>
    %470 = vector.broadcast %469 : vector<16x1xf32> to vector<16x32xf32>
    %471 = arith.subf %463, %470 : vector<16x32xf32>
    %472 = arith.mulf %471, %471 : vector<16x32xf32>
    %cst_157 = arith.constant dense<0.000000e+00> : vector<16xf32>
    %473 = vector.multi_reduction <add>, %472, %cst_157 [1] : vector<16x32xf32> to vector<16xf32>
    %474 = vector.shape_cast %473 : vector<16xf32> to vector<16x1xf32>
    %cst_158 = arith.constant 3.200000e+01 : f32
    %475 = vector.broadcast %cst_158 : f32 to vector<16x1xf32>
    %476 = arith.divf %474, %475 : vector<16x1xf32>
    %477 = vector.broadcast %469 : vector<16x1xf32> to vector<16x32xf32>
    %478 = arith.subf %463, %477 : vector<16x32xf32>
    %cst_159 = arith.constant 9.99999974E-6 : f32
    %479 = vector.broadcast %cst_159 : f32 to vector<16x1xf32>
    %480 = arith.addf %476, %479 : vector<16x1xf32>
    %481 = math.rsqrt %480 : vector<16x1xf32>
    %482 = vector.broadcast %481 : vector<16x1xf32> to vector<16x32xf32>
    %483 = arith.mulf %478, %482 : vector<16x32xf32>
    %484 = vector.broadcast %464 : vector<1x32xf32> to vector<16x32xf32>
    %485 = arith.mulf %483, %484 : vector<16x32xf32>
    %486 = vector.broadcast %465 : vector<1x32xf32> to vector<16x32xf32>
    %487 = arith.addf %485, %486 : vector<16x32xf32>
    %488 = arith.addf %487, %369 : vector<16x32xf32>
    %c704 = arith.constant 704 : index
    %c0_160 = arith.constant 0 : index
    %489 = vector.load %arg3[%c704, %c0_160] : memref<1280x128xbf16, #tpu.memory_space<vmem>>, vector<32x32xbf16>
    %490 = arith.truncf %488 : vector<16x32xf32> to vector<16x32xbf16>
    %cst_161 = arith.constant dense<0.000000e+00> : vector<16x32xf32>
    %491 = tpu.matmul %490, %489, %cst_161 {dimension_numbers = #tpu.dot_dimension_numbers<[1], [0], [0], [1], [0, 0, 1, 1], [], []>} : vector<16x32xbf16>, vector<32x32xbf16>, vector<16x32xf32> -> vector<16x32xf32>
    %c45 = arith.constant 45 : index
    %c0_162 = arith.constant 0 : index
    %492 = vector.load %arg4[%c45, %c0_162] : memref<72x128xf32, #tpu.memory_space<vmem>>, vector<1x32xf32>
    %493 = vector.broadcast %492 : vector<1x32xf32> to vector<16x32xf32>
    %494 = arith.addf %491, %493 : vector<16x32xf32>
    %cst_163 = arith.constant 0.353553385 : f32
    %495 = vector.broadcast %cst_163 : f32 to vector<16x32xf32>
    %496 = arith.mulf %494, %495 : vector<16x32xf32>
    %c736 = arith.constant 736 : index
    %c0_164 = arith.constant 0 : index
    %497 = vector.load %arg3[%c736, %c0_164] : memref<1280x128xbf16, #tpu.memory_space<vmem>>, vector<32x32xbf16>
    %498 = arith.truncf %371 : vector<16x32xf32> to vector<16x32xbf16>
    %cst_165 = arith.constant dense<0.000000e+00> : vector<16x32xf32>
    %499 = tpu.matmul %498, %497, %cst_165 {dimension_numbers = #tpu.dot_dimension_numbers<[1], [0], [0], [1], [0, 0, 1, 1], [], []>} : vector<16x32xbf16>, vector<32x32xbf16>, vector<16x32xf32> -> vector<16x32xf32>
    %c46 = arith.constant 46 : index
    %c0_166 = arith.constant 0 : index
    %500 = vector.load %arg4[%c46, %c0_166] : memref<72x128xf32, #tpu.memory_space<vmem>>, vector<1x32xf32>
    %501 = vector.broadcast %500 : vector<1x32xf32> to vector<16x32xf32>
    %502 = arith.addf %499, %501 : vector<16x32xf32>
    %c768 = arith.constant 768 : index
    %c0_167 = arith.constant 0 : index
    %503 = vector.load %arg3[%c768, %c0_167] : memref<1280x128xbf16, #tpu.memory_space<vmem>>, vector<32x32xbf16>
    %504 = arith.truncf %367 : vector<16x32xf32> to vector<16x32xbf16>
    %cst_168 = arith.constant dense<0.000000e+00> : vector<16x32xf32>
    %505 = tpu.matmul %504, %503, %cst_168 {dimension_numbers = #tpu.dot_dimension_numbers<[1], [0], [0], [1], [0, 0, 1, 1], [], []>} : vector<16x32xbf16>, vector<32x32xbf16>, vector<16x32xf32> -> vector<16x32xf32>
    %c47 = arith.constant 47 : index
    %c0_169 = arith.constant 0 : index
    %506 = vector.load %arg4[%c47, %c0_169] : memref<72x128xf32, #tpu.memory_space<vmem>>, vector<1x32xf32>
    %507 = vector.broadcast %506 : vector<1x32xf32> to vector<16x32xf32>
    %508 = arith.addf %505, %507 : vector<16x32xf32>
    %509 = vector.shape_cast %496 : vector<16x32xf32> to vector<2x8x32xf32>
    %510 = arith.truncf %509 : vector<2x8x32xf32> to vector<2x8x32xbf16>
    %511 = vector.shape_cast %502 : vector<16x32xf32> to vector<2x8x32xf32>
    %512 = arith.truncf %511 : vector<2x8x32xf32> to vector<2x8x32xbf16>
    %513 = vector.shape_cast %508 : vector<16x32xf32> to vector<2x8x32xf32>
    %514 = arith.truncf %513 : vector<2x8x32xf32> to vector<2x8x32xbf16>
    %515 = vector.extract_strided_slice %510 {offsets = [0, 0, 0], sizes = [2, 8, 8], strides = [1, 1, 1]} : vector<2x8x32xbf16> to vector<2x8x8xbf16>
    %516 = vector.extract_strided_slice %512 {offsets = [0, 0, 0], sizes = [2, 8, 8], strides = [1, 1, 1]} : vector<2x8x32xbf16> to vector<2x8x8xbf16>
    %517 = vector.extract_strided_slice %514 {offsets = [0, 0, 0], sizes = [2, 8, 8], strides = [1, 1, 1]} : vector<2x8x32xbf16> to vector<2x8x8xbf16>
    %cst_170 = arith.constant dense<0.000000e+00> : vector<2x8x8xf32>
    %518 = tpu.matmul %515, %516, %cst_170 {dimension_numbers = #tpu.dot_dimension_numbers<[2], [2], [1], [1], [0, 0, 0, 1, 1, 1], [0], [0]>} : vector<2x8x8xbf16>, vector<2x8x8xbf16>, vector<2x8x8xf32> -> vector<2x8x8xf32>
    %cst_171 = arith.constant dense<0xFF800000> : vector<2x8xf32>
    %519 = vector.multi_reduction <maximumf>, %518, %cst_171 [2] : vector<2x8x8xf32> to vector<2x8xf32>
    %520 = vector.shape_cast %519 : vector<2x8xf32> to vector<2x8x1xf32>
    %521 = vector.broadcast %520 : vector<2x8x1xf32> to vector<2x8x8xf32>
    %522 = arith.subf %518, %521 : vector<2x8x8xf32>
    %523 = math.exp %522 : vector<2x8x8xf32>
    %cst_172 = arith.constant dense<0.000000e+00> : vector<2x8xf32>
    %524 = vector.multi_reduction <add>, %523, %cst_172 [2] : vector<2x8x8xf32> to vector<2x8xf32>
    %525 = vector.shape_cast %524 : vector<2x8xf32> to vector<2x8x1xf32>
    %526 = vector.broadcast %525 : vector<2x8x1xf32> to vector<2x8x8xf32>
    %527 = arith.divf %523, %526 : vector<2x8x8xf32>
    %528 = arith.truncf %527 : vector<2x8x8xf32> to vector<2x8x8xbf16>
    %cst_173 = arith.constant dense<0.000000e+00> : vector<2x8x8xf32>
    %529 = tpu.matmul %528, %517, %cst_173 {dimension_numbers = #tpu.dot_dimension_numbers<[2], [1], [1], [2], [0, 0, 0, 1, 1, 2], [0], [0]>} : vector<2x8x8xbf16>, vector<2x8x8xbf16>, vector<2x8x8xf32> -> vector<2x8x8xf32>
    %530 = vector.extract_strided_slice %510 {offsets = [0, 0, 8], sizes = [2, 8, 8], strides = [1, 1, 1]} : vector<2x8x32xbf16> to vector<2x8x8xbf16>
    %531 = vector.extract_strided_slice %512 {offsets = [0, 0, 8], sizes = [2, 8, 8], strides = [1, 1, 1]} : vector<2x8x32xbf16> to vector<2x8x8xbf16>
    %532 = vector.extract_strided_slice %514 {offsets = [0, 0, 8], sizes = [2, 8, 8], strides = [1, 1, 1]} : vector<2x8x32xbf16> to vector<2x8x8xbf16>
    %cst_174 = arith.constant dense<0.000000e+00> : vector<2x8x8xf32>
    %533 = tpu.matmul %530, %531, %cst_174 {dimension_numbers = #tpu.dot_dimension_numbers<[2], [2], [1], [1], [0, 0, 0, 1, 1, 1], [0], [0]>} : vector<2x8x8xbf16>, vector<2x8x8xbf16>, vector<2x8x8xf32> -> vector<2x8x8xf32>
    %cst_175 = arith.constant dense<0xFF800000> : vector<2x8xf32>
    %534 = vector.multi_reduction <maximumf>, %533, %cst_175 [2] : vector<2x8x8xf32> to vector<2x8xf32>
    %535 = vector.shape_cast %534 : vector<2x8xf32> to vector<2x8x1xf32>
    %536 = vector.broadcast %535 : vector<2x8x1xf32> to vector<2x8x8xf32>
    %537 = arith.subf %533, %536 : vector<2x8x8xf32>
    %538 = math.exp %537 : vector<2x8x8xf32>
    %cst_176 = arith.constant dense<0.000000e+00> : vector<2x8xf32>
    %539 = vector.multi_reduction <add>, %538, %cst_176 [2] : vector<2x8x8xf32> to vector<2x8xf32>
    %540 = vector.shape_cast %539 : vector<2x8xf32> to vector<2x8x1xf32>
    %541 = vector.broadcast %540 : vector<2x8x1xf32> to vector<2x8x8xf32>
    %542 = arith.divf %538, %541 : vector<2x8x8xf32>
    %543 = arith.truncf %542 : vector<2x8x8xf32> to vector<2x8x8xbf16>
    %cst_177 = arith.constant dense<0.000000e+00> : vector<2x8x8xf32>
    %544 = tpu.matmul %543, %532, %cst_177 {dimension_numbers = #tpu.dot_dimension_numbers<[2], [1], [1], [2], [0, 0, 0, 1, 1, 2], [0], [0]>} : vector<2x8x8xbf16>, vector<2x8x8xbf16>, vector<2x8x8xf32> -> vector<2x8x8xf32>
    %545 = vector.extract_strided_slice %510 {offsets = [0, 0, 16], sizes = [2, 8, 8], strides = [1, 1, 1]} : vector<2x8x32xbf16> to vector<2x8x8xbf16>
    %546 = vector.extract_strided_slice %512 {offsets = [0, 0, 16], sizes = [2, 8, 8], strides = [1, 1, 1]} : vector<2x8x32xbf16> to vector<2x8x8xbf16>
    %547 = vector.extract_strided_slice %514 {offsets = [0, 0, 16], sizes = [2, 8, 8], strides = [1, 1, 1]} : vector<2x8x32xbf16> to vector<2x8x8xbf16>
    %cst_178 = arith.constant dense<0.000000e+00> : vector<2x8x8xf32>
    %548 = tpu.matmul %545, %546, %cst_178 {dimension_numbers = #tpu.dot_dimension_numbers<[2], [2], [1], [1], [0, 0, 0, 1, 1, 1], [0], [0]>} : vector<2x8x8xbf16>, vector<2x8x8xbf16>, vector<2x8x8xf32> -> vector<2x8x8xf32>
    %cst_179 = arith.constant dense<0xFF800000> : vector<2x8xf32>
    %549 = vector.multi_reduction <maximumf>, %548, %cst_179 [2] : vector<2x8x8xf32> to vector<2x8xf32>
    %550 = vector.shape_cast %549 : vector<2x8xf32> to vector<2x8x1xf32>
    %551 = vector.broadcast %550 : vector<2x8x1xf32> to vector<2x8x8xf32>
    %552 = arith.subf %548, %551 : vector<2x8x8xf32>
    %553 = math.exp %552 : vector<2x8x8xf32>
    %cst_180 = arith.constant dense<0.000000e+00> : vector<2x8xf32>
    %554 = vector.multi_reduction <add>, %553, %cst_180 [2] : vector<2x8x8xf32> to vector<2x8xf32>
    %555 = vector.shape_cast %554 : vector<2x8xf32> to vector<2x8x1xf32>
    %556 = vector.broadcast %555 : vector<2x8x1xf32> to vector<2x8x8xf32>
    %557 = arith.divf %553, %556 : vector<2x8x8xf32>
    %558 = arith.truncf %557 : vector<2x8x8xf32> to vector<2x8x8xbf16>
    %cst_181 = arith.constant dense<0.000000e+00> : vector<2x8x8xf32>
    %559 = tpu.matmul %558, %547, %cst_181 {dimension_numbers = #tpu.dot_dimension_numbers<[2], [1], [1], [2], [0, 0, 0, 1, 1, 2], [0], [0]>} : vector<2x8x8xbf16>, vector<2x8x8xbf16>, vector<2x8x8xf32> -> vector<2x8x8xf32>
    %560 = vector.extract_strided_slice %510 {offsets = [0, 0, 24], sizes = [2, 8, 8], strides = [1, 1, 1]} : vector<2x8x32xbf16> to vector<2x8x8xbf16>
    %561 = vector.extract_strided_slice %512 {offsets = [0, 0, 24], sizes = [2, 8, 8], strides = [1, 1, 1]} : vector<2x8x32xbf16> to vector<2x8x8xbf16>
    %562 = vector.extract_strided_slice %514 {offsets = [0, 0, 24], sizes = [2, 8, 8], strides = [1, 1, 1]} : vector<2x8x32xbf16> to vector<2x8x8xbf16>
    %cst_182 = arith.constant dense<0.000000e+00> : vector<2x8x8xf32>
    %563 = tpu.matmul %560, %561, %cst_182 {dimension_numbers = #tpu.dot_dimension_numbers<[2], [2], [1], [1], [0, 0, 0, 1, 1, 1], [0], [0]>} : vector<2x8x8xbf16>, vector<2x8x8xbf16>, vector<2x8x8xf32> -> vector<2x8x8xf32>
    %cst_183 = arith.constant dense<0xFF800000> : vector<2x8xf32>
    %564 = vector.multi_reduction <maximumf>, %563, %cst_183 [2] : vector<2x8x8xf32> to vector<2x8xf32>
    %565 = vector.shape_cast %564 : vector<2x8xf32> to vector<2x8x1xf32>
    %566 = vector.broadcast %565 : vector<2x8x1xf32> to vector<2x8x8xf32>
    %567 = arith.subf %563, %566 : vector<2x8x8xf32>
    %568 = math.exp %567 : vector<2x8x8xf32>
    %cst_184 = arith.constant dense<0.000000e+00> : vector<2x8xf32>
    %569 = vector.multi_reduction <add>, %568, %cst_184 [2] : vector<2x8x8xf32> to vector<2x8xf32>
    %570 = vector.shape_cast %569 : vector<2x8xf32> to vector<2x8x1xf32>
    %571 = vector.broadcast %570 : vector<2x8x1xf32> to vector<2x8x8xf32>
    %572 = arith.divf %568, %571 : vector<2x8x8xf32>
    %573 = arith.truncf %572 : vector<2x8x8xf32> to vector<2x8x8xbf16>
    %cst_185 = arith.constant dense<0.000000e+00> : vector<2x8x8xf32>
    %574 = tpu.matmul %573, %562, %cst_185 {dimension_numbers = #tpu.dot_dimension_numbers<[2], [1], [1], [2], [0, 0, 0, 1, 1, 2], [0], [0]>} : vector<2x8x8xbf16>, vector<2x8x8xbf16>, vector<2x8x8xf32> -> vector<2x8x8xf32>
    %575 = tpu.concatenate %529, %544, %559, %574 in 2 : vector<2x8x8xf32>, vector<2x8x8xf32>, vector<2x8x8xf32>, vector<2x8x8xf32> -> vector<2x8x32xf32>
    %576 = vector.shape_cast %575 : vector<2x8x32xf32> to vector<16x32xf32>
    %c800 = arith.constant 800 : index
    %c0_186 = arith.constant 0 : index
    %577 = vector.load %arg3[%c800, %c0_186] : memref<1280x128xbf16, #tpu.memory_space<vmem>>, vector<32x32xbf16>
    %578 = arith.truncf %576 : vector<16x32xf32> to vector<16x32xbf16>
    %cst_187 = arith.constant dense<0.000000e+00> : vector<16x32xf32>
    %579 = tpu.matmul %578, %577, %cst_187 {dimension_numbers = #tpu.dot_dimension_numbers<[1], [0], [0], [1], [0, 0, 1, 1], [], []>} : vector<16x32xbf16>, vector<32x32xbf16>, vector<16x32xf32> -> vector<16x32xf32>
    %c48 = arith.constant 48 : index
    %c0_188 = arith.constant 0 : index
    %580 = vector.load %arg4[%c48, %c0_188] : memref<72x128xf32, #tpu.memory_space<vmem>>, vector<1x32xf32>
    %581 = vector.broadcast %580 : vector<1x32xf32> to vector<16x32xf32>
    %582 = arith.addf %579, %581 : vector<16x32xf32>
    %583 = arith.addf %487, %582 : vector<16x32xf32>
    %c49 = arith.constant 49 : index
    %c0_189 = arith.constant 0 : index
    %584 = vector.load %arg4[%c49, %c0_189] : memref<72x128xf32, #tpu.memory_space<vmem>>, vector<1x32xf32>
    %c50 = arith.constant 50 : index
    %c0_190 = arith.constant 0 : index
    %585 = vector.load %arg4[%c50, %c0_190] : memref<72x128xf32, #tpu.memory_space<vmem>>, vector<1x32xf32>
    %cst_191 = arith.constant dense<0.000000e+00> : vector<16xf32>
    %586 = vector.multi_reduction <add>, %583, %cst_191 [1] : vector<16x32xf32> to vector<16xf32>
    %587 = vector.shape_cast %586 : vector<16xf32> to vector<16x1xf32>
    %cst_192 = arith.constant 3.200000e+01 : f32
    %588 = vector.broadcast %cst_192 : f32 to vector<16x1xf32>
    %589 = arith.divf %587, %588 : vector<16x1xf32>
    %590 = vector.broadcast %589 : vector<16x1xf32> to vector<16x32xf32>
    %591 = arith.subf %583, %590 : vector<16x32xf32>
    %592 = arith.mulf %591, %591 : vector<16x32xf32>
    %cst_193 = arith.constant dense<0.000000e+00> : vector<16xf32>
    %593 = vector.multi_reduction <add>, %592, %cst_193 [1] : vector<16x32xf32> to vector<16xf32>
    %594 = vector.shape_cast %593 : vector<16xf32> to vector<16x1xf32>
    %cst_194 = arith.constant 3.200000e+01 : f32
    %595 = vector.broadcast %cst_194 : f32 to vector<16x1xf32>
    %596 = arith.divf %594, %595 : vector<16x1xf32>
    %597 = vector.broadcast %589 : vector<16x1xf32> to vector<16x32xf32>
    %598 = arith.subf %583, %597 : vector<16x32xf32>
    %cst_195 = arith.constant 9.99999974E-6 : f32
    %599 = vector.broadcast %cst_195 : f32 to vector<16x1xf32>
    %600 = arith.addf %596, %599 : vector<16x1xf32>
    %601 = math.rsqrt %600 : vector<16x1xf32>
    %602 = vector.broadcast %601 : vector<16x1xf32> to vector<16x32xf32>
    %603 = arith.mulf %598, %602 : vector<16x32xf32>
    %604 = vector.broadcast %584 : vector<1x32xf32> to vector<16x32xf32>
    %605 = arith.mulf %603, %604 : vector<16x32xf32>
    %606 = vector.broadcast %585 : vector<1x32xf32> to vector<16x32xf32>
    %607 = arith.addf %605, %606 : vector<16x32xf32>
    %c832 = arith.constant 832 : index
    %c0_196 = arith.constant 0 : index
    %608 = vector.load %arg3[%c832, %c0_196] : memref<1280x128xbf16, #tpu.memory_space<vmem>>, vector<32x64xbf16>
    %609 = arith.truncf %607 : vector<16x32xf32> to vector<16x32xbf16>
    %cst_197 = arith.constant dense<0.000000e+00> : vector<16x64xf32>
    %610 = tpu.matmul %609, %608, %cst_197 {dimension_numbers = #tpu.dot_dimension_numbers<[1], [0], [0], [1], [0, 0, 1, 1], [], []>} : vector<16x32xbf16>, vector<32x64xbf16>, vector<16x64xf32> -> vector<16x64xf32>
    %c51 = arith.constant 51 : index
    %c0_198 = arith.constant 0 : index
    %611 = vector.load %arg4[%c51, %c0_198] : memref<72x128xf32, #tpu.memory_space<vmem>>, vector<1x64xf32>
    %612 = vector.broadcast %611 : vector<1x64xf32> to vector<16x64xf32>
    %613 = arith.addf %610, %612 : vector<16x64xf32>
    %cst_199 = arith.constant 0.000000e+00 : f32
    %614 = vector.broadcast %cst_199 : f32 to vector<16x64xf32>
    %615 = arith.maximumf %613, %614 : vector<16x64xf32>
    %c864 = arith.constant 864 : index
    %c0_200 = arith.constant 0 : index
    %616 = vector.load %arg3[%c864, %c0_200] : memref<1280x128xbf16, #tpu.memory_space<vmem>>, vector<64x32xbf16>
    %617 = arith.truncf %615 : vector<16x64xf32> to vector<16x64xbf16>
    %cst_201 = arith.constant dense<0.000000e+00> : vector<16x32xf32>
    %618 = tpu.matmul %617, %616, %cst_201 {dimension_numbers = #tpu.dot_dimension_numbers<[1], [0], [0], [1], [0, 0, 1, 1], [], []>} : vector<16x64xbf16>, vector<64x32xbf16>, vector<16x32xf32> -> vector<16x32xf32>
    %c52 = arith.constant 52 : index
    %c0_202 = arith.constant 0 : index
    %619 = vector.load %arg4[%c52, %c0_202] : memref<72x128xf32, #tpu.memory_space<vmem>>, vector<1x32xf32>
    %620 = vector.broadcast %619 : vector<1x32xf32> to vector<16x32xf32>
    %621 = arith.addf %618, %620 : vector<16x32xf32>
    %622 = arith.addf %607, %621 : vector<16x32xf32>
    %c53 = arith.constant 53 : index
    %c0_203 = arith.constant 0 : index
    %623 = vector.load %arg4[%c53, %c0_203] : memref<72x128xf32, #tpu.memory_space<vmem>>, vector<1x32xf32>
    %c54 = arith.constant 54 : index
    %c0_204 = arith.constant 0 : index
    %624 = vector.load %arg4[%c54, %c0_204] : memref<72x128xf32, #tpu.memory_space<vmem>>, vector<1x32xf32>
    %cst_205 = arith.constant dense<0.000000e+00> : vector<16xf32>
    %625 = vector.multi_reduction <add>, %622, %cst_205 [1] : vector<16x32xf32> to vector<16xf32>
    %626 = vector.shape_cast %625 : vector<16xf32> to vector<16x1xf32>
    %cst_206 = arith.constant 3.200000e+01 : f32
    %627 = vector.broadcast %cst_206 : f32 to vector<16x1xf32>
    %628 = arith.divf %626, %627 : vector<16x1xf32>
    %629 = vector.broadcast %628 : vector<16x1xf32> to vector<16x32xf32>
    %630 = arith.subf %622, %629 : vector<16x32xf32>
    %631 = arith.mulf %630, %630 : vector<16x32xf32>
    %cst_207 = arith.constant dense<0.000000e+00> : vector<16xf32>
    %632 = vector.multi_reduction <add>, %631, %cst_207 [1] : vector<16x32xf32> to vector<16xf32>
    %633 = vector.shape_cast %632 : vector<16xf32> to vector<16x1xf32>
    %cst_208 = arith.constant 3.200000e+01 : f32
    %634 = vector.broadcast %cst_208 : f32 to vector<16x1xf32>
    %635 = arith.divf %633, %634 : vector<16x1xf32>
    %636 = vector.broadcast %628 : vector<16x1xf32> to vector<16x32xf32>
    %637 = arith.subf %622, %636 : vector<16x32xf32>
    %cst_209 = arith.constant 9.99999974E-6 : f32
    %638 = vector.broadcast %cst_209 : f32 to vector<16x1xf32>
    %639 = arith.addf %635, %638 : vector<16x1xf32>
    %640 = math.rsqrt %639 : vector<16x1xf32>
    %641 = vector.broadcast %640 : vector<16x1xf32> to vector<16x32xf32>
    %642 = arith.mulf %637, %641 : vector<16x32xf32>
    %643 = vector.broadcast %623 : vector<1x32xf32> to vector<16x32xf32>
    %644 = arith.mulf %642, %643 : vector<16x32xf32>
    %645 = vector.broadcast %624 : vector<1x32xf32> to vector<16x32xf32>
    %646 = arith.addf %644, %645 : vector<16x32xf32>
    %647 = arith.addf %646, %369 : vector<16x32xf32>
    %c928 = arith.constant 928 : index
    %c0_210 = arith.constant 0 : index
    %648 = vector.load %arg3[%c928, %c0_210] : memref<1280x128xbf16, #tpu.memory_space<vmem>>, vector<32x64xbf16>
    %649 = arith.truncf %647 : vector<16x32xf32> to vector<16x32xbf16>
    %cst_211 = arith.constant dense<0.000000e+00> : vector<16x64xf32>
    %650 = tpu.matmul %649, %648, %cst_211 {dimension_numbers = #tpu.dot_dimension_numbers<[1], [0], [0], [1], [0, 0, 1, 1], [], []>} : vector<16x32xbf16>, vector<32x64xbf16>, vector<16x64xf32> -> vector<16x64xf32>
    %c55 = arith.constant 55 : index
    %c0_212 = arith.constant 0 : index
    %651 = vector.load %arg4[%c55, %c0_212] : memref<72x128xf32, #tpu.memory_space<vmem>>, vector<1x64xf32>
    %652 = vector.broadcast %651 : vector<1x64xf32> to vector<16x64xf32>
    %653 = arith.addf %650, %652 : vector<16x64xf32>
    %654 = vector.extract_strided_slice %653 {offsets = [0, 0], sizes = [16, 32], strides = [1, 1]} : vector<16x64xf32> to vector<16x32xf32>
    %cst_213 = arith.constant 0.353553385 : f32
    %655 = vector.broadcast %cst_213 : f32 to vector<16x32xf32>
    %656 = arith.mulf %654, %655 : vector<16x32xf32>
    %657 = vector.extract_strided_slice %653 {offsets = [0, 32], sizes = [16, 32], strides = [1, 1]} : vector<16x64xf32> to vector<16x32xf32>
    %c960 = arith.constant 960 : index
    %c0_214 = arith.constant 0 : index
    %658 = vector.load %arg3[%c960, %c0_214] : memref<1280x128xbf16, #tpu.memory_space<vmem>>, vector<32x32xbf16>
    %659 = arith.truncf %646 : vector<16x32xf32> to vector<16x32xbf16>
    %cst_215 = arith.constant dense<0.000000e+00> : vector<16x32xf32>
    %660 = tpu.matmul %659, %658, %cst_215 {dimension_numbers = #tpu.dot_dimension_numbers<[1], [0], [0], [1], [0, 0, 1, 1], [], []>} : vector<16x32xbf16>, vector<32x32xbf16>, vector<16x32xf32> -> vector<16x32xf32>
    %c56 = arith.constant 56 : index
    %c0_216 = arith.constant 0 : index
    %661 = vector.load %arg4[%c56, %c0_216] : memref<72x128xf32, #tpu.memory_space<vmem>>, vector<1x32xf32>
    %662 = vector.broadcast %661 : vector<1x32xf32> to vector<16x32xf32>
    %663 = arith.addf %660, %662 : vector<16x32xf32>
    %664 = vector.shape_cast %656 : vector<16x32xf32> to vector<2x8x32xf32>
    %665 = arith.truncf %664 : vector<2x8x32xf32> to vector<2x8x32xbf16>
    %666 = vector.shape_cast %657 : vector<16x32xf32> to vector<2x8x32xf32>
    %667 = arith.truncf %666 : vector<2x8x32xf32> to vector<2x8x32xbf16>
    %668 = vector.shape_cast %663 : vector<16x32xf32> to vector<2x8x32xf32>
    %669 = arith.truncf %668 : vector<2x8x32xf32> to vector<2x8x32xbf16>
    %670 = vector.extract_strided_slice %665 {offsets = [0, 0, 0], sizes = [2, 8, 8], strides = [1, 1, 1]} : vector<2x8x32xbf16> to vector<2x8x8xbf16>
    %671 = vector.extract_strided_slice %667 {offsets = [0, 0, 0], sizes = [2, 8, 8], strides = [1, 1, 1]} : vector<2x8x32xbf16> to vector<2x8x8xbf16>
    %672 = vector.extract_strided_slice %669 {offsets = [0, 0, 0], sizes = [2, 8, 8], strides = [1, 1, 1]} : vector<2x8x32xbf16> to vector<2x8x8xbf16>
    %cst_217 = arith.constant dense<0.000000e+00> : vector<2x8x8xf32>
    %673 = tpu.matmul %670, %671, %cst_217 {dimension_numbers = #tpu.dot_dimension_numbers<[2], [2], [1], [1], [0, 0, 0, 1, 1, 1], [0], [0]>} : vector<2x8x8xbf16>, vector<2x8x8xbf16>, vector<2x8x8xf32> -> vector<2x8x8xf32>
    %cst_218 = arith.constant dense<0xFF800000> : vector<2x8xf32>
    %674 = vector.multi_reduction <maximumf>, %673, %cst_218 [2] : vector<2x8x8xf32> to vector<2x8xf32>
    %675 = vector.shape_cast %674 : vector<2x8xf32> to vector<2x8x1xf32>
    %676 = vector.broadcast %675 : vector<2x8x1xf32> to vector<2x8x8xf32>
    %677 = arith.subf %673, %676 : vector<2x8x8xf32>
    %678 = math.exp %677 : vector<2x8x8xf32>
    %cst_219 = arith.constant dense<0.000000e+00> : vector<2x8xf32>
    %679 = vector.multi_reduction <add>, %678, %cst_219 [2] : vector<2x8x8xf32> to vector<2x8xf32>
    %680 = vector.shape_cast %679 : vector<2x8xf32> to vector<2x8x1xf32>
    %681 = vector.broadcast %680 : vector<2x8x1xf32> to vector<2x8x8xf32>
    %682 = arith.divf %678, %681 : vector<2x8x8xf32>
    %683 = arith.truncf %682 : vector<2x8x8xf32> to vector<2x8x8xbf16>
    %cst_220 = arith.constant dense<0.000000e+00> : vector<2x8x8xf32>
    %684 = tpu.matmul %683, %672, %cst_220 {dimension_numbers = #tpu.dot_dimension_numbers<[2], [1], [1], [2], [0, 0, 0, 1, 1, 2], [0], [0]>} : vector<2x8x8xbf16>, vector<2x8x8xbf16>, vector<2x8x8xf32> -> vector<2x8x8xf32>
    %685 = vector.extract_strided_slice %665 {offsets = [0, 0, 8], sizes = [2, 8, 8], strides = [1, 1, 1]} : vector<2x8x32xbf16> to vector<2x8x8xbf16>
    %686 = vector.extract_strided_slice %667 {offsets = [0, 0, 8], sizes = [2, 8, 8], strides = [1, 1, 1]} : vector<2x8x32xbf16> to vector<2x8x8xbf16>
    %687 = vector.extract_strided_slice %669 {offsets = [0, 0, 8], sizes = [2, 8, 8], strides = [1, 1, 1]} : vector<2x8x32xbf16> to vector<2x8x8xbf16>
    %cst_221 = arith.constant dense<0.000000e+00> : vector<2x8x8xf32>
    %688 = tpu.matmul %685, %686, %cst_221 {dimension_numbers = #tpu.dot_dimension_numbers<[2], [2], [1], [1], [0, 0, 0, 1, 1, 1], [0], [0]>} : vector<2x8x8xbf16>, vector<2x8x8xbf16>, vector<2x8x8xf32> -> vector<2x8x8xf32>
    %cst_222 = arith.constant dense<0xFF800000> : vector<2x8xf32>
    %689 = vector.multi_reduction <maximumf>, %688, %cst_222 [2] : vector<2x8x8xf32> to vector<2x8xf32>
    %690 = vector.shape_cast %689 : vector<2x8xf32> to vector<2x8x1xf32>
    %691 = vector.broadcast %690 : vector<2x8x1xf32> to vector<2x8x8xf32>
    %692 = arith.subf %688, %691 : vector<2x8x8xf32>
    %693 = math.exp %692 : vector<2x8x8xf32>
    %cst_223 = arith.constant dense<0.000000e+00> : vector<2x8xf32>
    %694 = vector.multi_reduction <add>, %693, %cst_223 [2] : vector<2x8x8xf32> to vector<2x8xf32>
    %695 = vector.shape_cast %694 : vector<2x8xf32> to vector<2x8x1xf32>
    %696 = vector.broadcast %695 : vector<2x8x1xf32> to vector<2x8x8xf32>
    %697 = arith.divf %693, %696 : vector<2x8x8xf32>
    %698 = arith.truncf %697 : vector<2x8x8xf32> to vector<2x8x8xbf16>
    %cst_224 = arith.constant dense<0.000000e+00> : vector<2x8x8xf32>
    %699 = tpu.matmul %698, %687, %cst_224 {dimension_numbers = #tpu.dot_dimension_numbers<[2], [1], [1], [2], [0, 0, 0, 1, 1, 2], [0], [0]>} : vector<2x8x8xbf16>, vector<2x8x8xbf16>, vector<2x8x8xf32> -> vector<2x8x8xf32>
    %700 = vector.extract_strided_slice %665 {offsets = [0, 0, 16], sizes = [2, 8, 8], strides = [1, 1, 1]} : vector<2x8x32xbf16> to vector<2x8x8xbf16>
    %701 = vector.extract_strided_slice %667 {offsets = [0, 0, 16], sizes = [2, 8, 8], strides = [1, 1, 1]} : vector<2x8x32xbf16> to vector<2x8x8xbf16>
    %702 = vector.extract_strided_slice %669 {offsets = [0, 0, 16], sizes = [2, 8, 8], strides = [1, 1, 1]} : vector<2x8x32xbf16> to vector<2x8x8xbf16>
    %cst_225 = arith.constant dense<0.000000e+00> : vector<2x8x8xf32>
    %703 = tpu.matmul %700, %701, %cst_225 {dimension_numbers = #tpu.dot_dimension_numbers<[2], [2], [1], [1], [0, 0, 0, 1, 1, 1], [0], [0]>} : vector<2x8x8xbf16>, vector<2x8x8xbf16>, vector<2x8x8xf32> -> vector<2x8x8xf32>
    %cst_226 = arith.constant dense<0xFF800000> : vector<2x8xf32>
    %704 = vector.multi_reduction <maximumf>, %703, %cst_226 [2] : vector<2x8x8xf32> to vector<2x8xf32>
    %705 = vector.shape_cast %704 : vector<2x8xf32> to vector<2x8x1xf32>
    %706 = vector.broadcast %705 : vector<2x8x1xf32> to vector<2x8x8xf32>
    %707 = arith.subf %703, %706 : vector<2x8x8xf32>
    %708 = math.exp %707 : vector<2x8x8xf32>
    %cst_227 = arith.constant dense<0.000000e+00> : vector<2x8xf32>
    %709 = vector.multi_reduction <add>, %708, %cst_227 [2] : vector<2x8x8xf32> to vector<2x8xf32>
    %710 = vector.shape_cast %709 : vector<2x8xf32> to vector<2x8x1xf32>
    %711 = vector.broadcast %710 : vector<2x8x1xf32> to vector<2x8x8xf32>
    %712 = arith.divf %708, %711 : vector<2x8x8xf32>
    %713 = arith.truncf %712 : vector<2x8x8xf32> to vector<2x8x8xbf16>
    %cst_228 = arith.constant dense<0.000000e+00> : vector<2x8x8xf32>
    %714 = tpu.matmul %713, %702, %cst_228 {dimension_numbers = #tpu.dot_dimension_numbers<[2], [1], [1], [2], [0, 0, 0, 1, 1, 2], [0], [0]>} : vector<2x8x8xbf16>, vector<2x8x8xbf16>, vector<2x8x8xf32> -> vector<2x8x8xf32>
    %715 = vector.extract_strided_slice %665 {offsets = [0, 0, 24], sizes = [2, 8, 8], strides = [1, 1, 1]} : vector<2x8x32xbf16> to vector<2x8x8xbf16>
    %716 = vector.extract_strided_slice %667 {offsets = [0, 0, 24], sizes = [2, 8, 8], strides = [1, 1, 1]} : vector<2x8x32xbf16> to vector<2x8x8xbf16>
    %717 = vector.extract_strided_slice %669 {offsets = [0, 0, 24], sizes = [2, 8, 8], strides = [1, 1, 1]} : vector<2x8x32xbf16> to vector<2x8x8xbf16>
    %cst_229 = arith.constant dense<0.000000e+00> : vector<2x8x8xf32>
    %718 = tpu.matmul %715, %716, %cst_229 {dimension_numbers = #tpu.dot_dimension_numbers<[2], [2], [1], [1], [0, 0, 0, 1, 1, 1], [0], [0]>} : vector<2x8x8xbf16>, vector<2x8x8xbf16>, vector<2x8x8xf32> -> vector<2x8x8xf32>
    %cst_230 = arith.constant dense<0xFF800000> : vector<2x8xf32>
    %719 = vector.multi_reduction <maximumf>, %718, %cst_230 [2] : vector<2x8x8xf32> to vector<2x8xf32>
    %720 = vector.shape_cast %719 : vector<2x8xf32> to vector<2x8x1xf32>
    %721 = vector.broadcast %720 : vector<2x8x1xf32> to vector<2x8x8xf32>
    %722 = arith.subf %718, %721 : vector<2x8x8xf32>
    %723 = math.exp %722 : vector<2x8x8xf32>
    %cst_231 = arith.constant dense<0.000000e+00> : vector<2x8xf32>
    %724 = vector.multi_reduction <add>, %723, %cst_231 [2] : vector<2x8x8xf32> to vector<2x8xf32>
    %725 = vector.shape_cast %724 : vector<2x8xf32> to vector<2x8x1xf32>
    %726 = vector.broadcast %725 : vector<2x8x1xf32> to vector<2x8x8xf32>
    %727 = arith.divf %723, %726 : vector<2x8x8xf32>
    %728 = arith.truncf %727 : vector<2x8x8xf32> to vector<2x8x8xbf16>
    %cst_232 = arith.constant dense<0.000000e+00> : vector<2x8x8xf32>
    %729 = tpu.matmul %728, %717, %cst_232 {dimension_numbers = #tpu.dot_dimension_numbers<[2], [1], [1], [2], [0, 0, 0, 1, 1, 2], [0], [0]>} : vector<2x8x8xbf16>, vector<2x8x8xbf16>, vector<2x8x8xf32> -> vector<2x8x8xf32>
    %730 = tpu.concatenate %684, %699, %714, %729 in 2 : vector<2x8x8xf32>, vector<2x8x8xf32>, vector<2x8x8xf32>, vector<2x8x8xf32> -> vector<2x8x32xf32>
    %731 = vector.shape_cast %730 : vector<2x8x32xf32> to vector<16x32xf32>
    %c992 = arith.constant 992 : index
    %c0_233 = arith.constant 0 : index
    %732 = vector.load %arg3[%c992, %c0_233] : memref<1280x128xbf16, #tpu.memory_space<vmem>>, vector<32x32xbf16>
    %733 = arith.truncf %731 : vector<16x32xf32> to vector<16x32xbf16>
    %cst_234 = arith.constant dense<0.000000e+00> : vector<16x32xf32>
    %734 = tpu.matmul %733, %732, %cst_234 {dimension_numbers = #tpu.dot_dimension_numbers<[1], [0], [0], [1], [0, 0, 1, 1], [], []>} : vector<16x32xbf16>, vector<32x32xbf16>, vector<16x32xf32> -> vector<16x32xf32>
    %c57 = arith.constant 57 : index
    %c0_235 = arith.constant 0 : index
    %735 = vector.load %arg4[%c57, %c0_235] : memref<72x128xf32, #tpu.memory_space<vmem>>, vector<1x32xf32>
    %736 = vector.broadcast %735 : vector<1x32xf32> to vector<16x32xf32>
    %737 = arith.addf %734, %736 : vector<16x32xf32>
    %738 = arith.addf %646, %737 : vector<16x32xf32>
    %c58 = arith.constant 58 : index
    %c0_236 = arith.constant 0 : index
    %739 = vector.load %arg4[%c58, %c0_236] : memref<72x128xf32, #tpu.memory_space<vmem>>, vector<1x32xf32>
    %c59 = arith.constant 59 : index
    %c0_237 = arith.constant 0 : index
    %740 = vector.load %arg4[%c59, %c0_237] : memref<72x128xf32, #tpu.memory_space<vmem>>, vector<1x32xf32>
    %cst_238 = arith.constant dense<0.000000e+00> : vector<16xf32>
    %741 = vector.multi_reduction <add>, %738, %cst_238 [1] : vector<16x32xf32> to vector<16xf32>
    %742 = vector.shape_cast %741 : vector<16xf32> to vector<16x1xf32>
    %cst_239 = arith.constant 3.200000e+01 : f32
    %743 = vector.broadcast %cst_239 : f32 to vector<16x1xf32>
    %744 = arith.divf %742, %743 : vector<16x1xf32>
    %745 = vector.broadcast %744 : vector<16x1xf32> to vector<16x32xf32>
    %746 = arith.subf %738, %745 : vector<16x32xf32>
    %747 = arith.mulf %746, %746 : vector<16x32xf32>
    %cst_240 = arith.constant dense<0.000000e+00> : vector<16xf32>
    %748 = vector.multi_reduction <add>, %747, %cst_240 [1] : vector<16x32xf32> to vector<16xf32>
    %749 = vector.shape_cast %748 : vector<16xf32> to vector<16x1xf32>
    %cst_241 = arith.constant 3.200000e+01 : f32
    %750 = vector.broadcast %cst_241 : f32 to vector<16x1xf32>
    %751 = arith.divf %749, %750 : vector<16x1xf32>
    %752 = vector.broadcast %744 : vector<16x1xf32> to vector<16x32xf32>
    %753 = arith.subf %738, %752 : vector<16x32xf32>
    %cst_242 = arith.constant 9.99999974E-6 : f32
    %754 = vector.broadcast %cst_242 : f32 to vector<16x1xf32>
    %755 = arith.addf %751, %754 : vector<16x1xf32>
    %756 = math.rsqrt %755 : vector<16x1xf32>
    %757 = vector.broadcast %756 : vector<16x1xf32> to vector<16x32xf32>
    %758 = arith.mulf %753, %757 : vector<16x32xf32>
    %759 = vector.broadcast %739 : vector<1x32xf32> to vector<16x32xf32>
    %760 = arith.mulf %758, %759 : vector<16x32xf32>
    %761 = vector.broadcast %740 : vector<1x32xf32> to vector<16x32xf32>
    %762 = arith.addf %760, %761 : vector<16x32xf32>
    %763 = arith.addf %762, %369 : vector<16x32xf32>
    %c1024 = arith.constant 1024 : index
    %c0_243 = arith.constant 0 : index
    %764 = vector.load %arg3[%c1024, %c0_243] : memref<1280x128xbf16, #tpu.memory_space<vmem>>, vector<32x32xbf16>
    %765 = arith.truncf %763 : vector<16x32xf32> to vector<16x32xbf16>
    %cst_244 = arith.constant dense<0.000000e+00> : vector<16x32xf32>
    %766 = tpu.matmul %765, %764, %cst_244 {dimension_numbers = #tpu.dot_dimension_numbers<[1], [0], [0], [1], [0, 0, 1, 1], [], []>} : vector<16x32xbf16>, vector<32x32xbf16>, vector<16x32xf32> -> vector<16x32xf32>
    %c60 = arith.constant 60 : index
    %c0_245 = arith.constant 0 : index
    %767 = vector.load %arg4[%c60, %c0_245] : memref<72x128xf32, #tpu.memory_space<vmem>>, vector<1x32xf32>
    %768 = vector.broadcast %767 : vector<1x32xf32> to vector<16x32xf32>
    %769 = arith.addf %766, %768 : vector<16x32xf32>
    %cst_246 = arith.constant 0.353553385 : f32
    %770 = vector.broadcast %cst_246 : f32 to vector<16x32xf32>
    %771 = arith.mulf %769, %770 : vector<16x32xf32>
    %c1056 = arith.constant 1056 : index
    %c0_247 = arith.constant 0 : index
    %772 = vector.load %arg3[%c1056, %c0_247] : memref<1280x128xbf16, #tpu.memory_space<vmem>>, vector<32x32xbf16>
    %773 = arith.truncf %371 : vector<16x32xf32> to vector<16x32xbf16>
    %cst_248 = arith.constant dense<0.000000e+00> : vector<16x32xf32>
    %774 = tpu.matmul %773, %772, %cst_248 {dimension_numbers = #tpu.dot_dimension_numbers<[1], [0], [0], [1], [0, 0, 1, 1], [], []>} : vector<16x32xbf16>, vector<32x32xbf16>, vector<16x32xf32> -> vector<16x32xf32>
    %c61 = arith.constant 61 : index
    %c0_249 = arith.constant 0 : index
    %775 = vector.load %arg4[%c61, %c0_249] : memref<72x128xf32, #tpu.memory_space<vmem>>, vector<1x32xf32>
    %776 = vector.broadcast %775 : vector<1x32xf32> to vector<16x32xf32>
    %777 = arith.addf %774, %776 : vector<16x32xf32>
    %c1088 = arith.constant 1088 : index
    %c0_250 = arith.constant 0 : index
    %778 = vector.load %arg3[%c1088, %c0_250] : memref<1280x128xbf16, #tpu.memory_space<vmem>>, vector<32x32xbf16>
    %779 = arith.truncf %367 : vector<16x32xf32> to vector<16x32xbf16>
    %cst_251 = arith.constant dense<0.000000e+00> : vector<16x32xf32>
    %780 = tpu.matmul %779, %778, %cst_251 {dimension_numbers = #tpu.dot_dimension_numbers<[1], [0], [0], [1], [0, 0, 1, 1], [], []>} : vector<16x32xbf16>, vector<32x32xbf16>, vector<16x32xf32> -> vector<16x32xf32>
    %c62 = arith.constant 62 : index
    %c0_252 = arith.constant 0 : index
    %781 = vector.load %arg4[%c62, %c0_252] : memref<72x128xf32, #tpu.memory_space<vmem>>, vector<1x32xf32>
    %782 = vector.broadcast %781 : vector<1x32xf32> to vector<16x32xf32>
    %783 = arith.addf %780, %782 : vector<16x32xf32>
    %784 = vector.shape_cast %771 : vector<16x32xf32> to vector<2x8x32xf32>
    %785 = arith.truncf %784 : vector<2x8x32xf32> to vector<2x8x32xbf16>
    %786 = vector.shape_cast %777 : vector<16x32xf32> to vector<2x8x32xf32>
    %787 = arith.truncf %786 : vector<2x8x32xf32> to vector<2x8x32xbf16>
    %788 = vector.shape_cast %783 : vector<16x32xf32> to vector<2x8x32xf32>
    %789 = arith.truncf %788 : vector<2x8x32xf32> to vector<2x8x32xbf16>
    %790 = vector.extract_strided_slice %785 {offsets = [0, 0, 0], sizes = [2, 8, 8], strides = [1, 1, 1]} : vector<2x8x32xbf16> to vector<2x8x8xbf16>
    %791 = vector.extract_strided_slice %787 {offsets = [0, 0, 0], sizes = [2, 8, 8], strides = [1, 1, 1]} : vector<2x8x32xbf16> to vector<2x8x8xbf16>
    %792 = vector.extract_strided_slice %789 {offsets = [0, 0, 0], sizes = [2, 8, 8], strides = [1, 1, 1]} : vector<2x8x32xbf16> to vector<2x8x8xbf16>
    %cst_253 = arith.constant dense<0.000000e+00> : vector<2x8x8xf32>
    %793 = tpu.matmul %790, %791, %cst_253 {dimension_numbers = #tpu.dot_dimension_numbers<[2], [2], [1], [1], [0, 0, 0, 1, 1, 1], [0], [0]>} : vector<2x8x8xbf16>, vector<2x8x8xbf16>, vector<2x8x8xf32> -> vector<2x8x8xf32>
    %cst_254 = arith.constant dense<0xFF800000> : vector<2x8xf32>
    %794 = vector.multi_reduction <maximumf>, %793, %cst_254 [2] : vector<2x8x8xf32> to vector<2x8xf32>
    %795 = vector.shape_cast %794 : vector<2x8xf32> to vector<2x8x1xf32>
    %796 = vector.broadcast %795 : vector<2x8x1xf32> to vector<2x8x8xf32>
    %797 = arith.subf %793, %796 : vector<2x8x8xf32>
    %798 = math.exp %797 : vector<2x8x8xf32>
    %cst_255 = arith.constant dense<0.000000e+00> : vector<2x8xf32>
    %799 = vector.multi_reduction <add>, %798, %cst_255 [2] : vector<2x8x8xf32> to vector<2x8xf32>
    %800 = vector.shape_cast %799 : vector<2x8xf32> to vector<2x8x1xf32>
    %801 = vector.broadcast %800 : vector<2x8x1xf32> to vector<2x8x8xf32>
    %802 = arith.divf %798, %801 : vector<2x8x8xf32>
    %803 = arith.truncf %802 : vector<2x8x8xf32> to vector<2x8x8xbf16>
    %cst_256 = arith.constant dense<0.000000e+00> : vector<2x8x8xf32>
    %804 = tpu.matmul %803, %792, %cst_256 {dimension_numbers = #tpu.dot_dimension_numbers<[2], [1], [1], [2], [0, 0, 0, 1, 1, 2], [0], [0]>} : vector<2x8x8xbf16>, vector<2x8x8xbf16>, vector<2x8x8xf32> -> vector<2x8x8xf32>
    %805 = vector.extract_strided_slice %785 {offsets = [0, 0, 8], sizes = [2, 8, 8], strides = [1, 1, 1]} : vector<2x8x32xbf16> to vector<2x8x8xbf16>
    %806 = vector.extract_strided_slice %787 {offsets = [0, 0, 8], sizes = [2, 8, 8], strides = [1, 1, 1]} : vector<2x8x32xbf16> to vector<2x8x8xbf16>
    %807 = vector.extract_strided_slice %789 {offsets = [0, 0, 8], sizes = [2, 8, 8], strides = [1, 1, 1]} : vector<2x8x32xbf16> to vector<2x8x8xbf16>
    %cst_257 = arith.constant dense<0.000000e+00> : vector<2x8x8xf32>
    %808 = tpu.matmul %805, %806, %cst_257 {dimension_numbers = #tpu.dot_dimension_numbers<[2], [2], [1], [1], [0, 0, 0, 1, 1, 1], [0], [0]>} : vector<2x8x8xbf16>, vector<2x8x8xbf16>, vector<2x8x8xf32> -> vector<2x8x8xf32>
    %cst_258 = arith.constant dense<0xFF800000> : vector<2x8xf32>
    %809 = vector.multi_reduction <maximumf>, %808, %cst_258 [2] : vector<2x8x8xf32> to vector<2x8xf32>
    %810 = vector.shape_cast %809 : vector<2x8xf32> to vector<2x8x1xf32>
    %811 = vector.broadcast %810 : vector<2x8x1xf32> to vector<2x8x8xf32>
    %812 = arith.subf %808, %811 : vector<2x8x8xf32>
    %813 = math.exp %812 : vector<2x8x8xf32>
    %cst_259 = arith.constant dense<0.000000e+00> : vector<2x8xf32>
    %814 = vector.multi_reduction <add>, %813, %cst_259 [2] : vector<2x8x8xf32> to vector<2x8xf32>
    %815 = vector.shape_cast %814 : vector<2x8xf32> to vector<2x8x1xf32>
    %816 = vector.broadcast %815 : vector<2x8x1xf32> to vector<2x8x8xf32>
    %817 = arith.divf %813, %816 : vector<2x8x8xf32>
    %818 = arith.truncf %817 : vector<2x8x8xf32> to vector<2x8x8xbf16>
    %cst_260 = arith.constant dense<0.000000e+00> : vector<2x8x8xf32>
    %819 = tpu.matmul %818, %807, %cst_260 {dimension_numbers = #tpu.dot_dimension_numbers<[2], [1], [1], [2], [0, 0, 0, 1, 1, 2], [0], [0]>} : vector<2x8x8xbf16>, vector<2x8x8xbf16>, vector<2x8x8xf32> -> vector<2x8x8xf32>
    %820 = vector.extract_strided_slice %785 {offsets = [0, 0, 16], sizes = [2, 8, 8], strides = [1, 1, 1]} : vector<2x8x32xbf16> to vector<2x8x8xbf16>
    %821 = vector.extract_strided_slice %787 {offsets = [0, 0, 16], sizes = [2, 8, 8], strides = [1, 1, 1]} : vector<2x8x32xbf16> to vector<2x8x8xbf16>
    %822 = vector.extract_strided_slice %789 {offsets = [0, 0, 16], sizes = [2, 8, 8], strides = [1, 1, 1]} : vector<2x8x32xbf16> to vector<2x8x8xbf16>
    %cst_261 = arith.constant dense<0.000000e+00> : vector<2x8x8xf32>
    %823 = tpu.matmul %820, %821, %cst_261 {dimension_numbers = #tpu.dot_dimension_numbers<[2], [2], [1], [1], [0, 0, 0, 1, 1, 1], [0], [0]>} : vector<2x8x8xbf16>, vector<2x8x8xbf16>, vector<2x8x8xf32> -> vector<2x8x8xf32>
    %cst_262 = arith.constant dense<0xFF800000> : vector<2x8xf32>
    %824 = vector.multi_reduction <maximumf>, %823, %cst_262 [2] : vector<2x8x8xf32> to vector<2x8xf32>
    %825 = vector.shape_cast %824 : vector<2x8xf32> to vector<2x8x1xf32>
    %826 = vector.broadcast %825 : vector<2x8x1xf32> to vector<2x8x8xf32>
    %827 = arith.subf %823, %826 : vector<2x8x8xf32>
    %828 = math.exp %827 : vector<2x8x8xf32>
    %cst_263 = arith.constant dense<0.000000e+00> : vector<2x8xf32>
    %829 = vector.multi_reduction <add>, %828, %cst_263 [2] : vector<2x8x8xf32> to vector<2x8xf32>
    %830 = vector.shape_cast %829 : vector<2x8xf32> to vector<2x8x1xf32>
    %831 = vector.broadcast %830 : vector<2x8x1xf32> to vector<2x8x8xf32>
    %832 = arith.divf %828, %831 : vector<2x8x8xf32>
    %833 = arith.truncf %832 : vector<2x8x8xf32> to vector<2x8x8xbf16>
    %cst_264 = arith.constant dense<0.000000e+00> : vector<2x8x8xf32>
    %834 = tpu.matmul %833, %822, %cst_264 {dimension_numbers = #tpu.dot_dimension_numbers<[2], [1], [1], [2], [0, 0, 0, 1, 1, 2], [0], [0]>} : vector<2x8x8xbf16>, vector<2x8x8xbf16>, vector<2x8x8xf32> -> vector<2x8x8xf32>
    %835 = vector.extract_strided_slice %785 {offsets = [0, 0, 24], sizes = [2, 8, 8], strides = [1, 1, 1]} : vector<2x8x32xbf16> to vector<2x8x8xbf16>
    %836 = vector.extract_strided_slice %787 {offsets = [0, 0, 24], sizes = [2, 8, 8], strides = [1, 1, 1]} : vector<2x8x32xbf16> to vector<2x8x8xbf16>
    %837 = vector.extract_strided_slice %789 {offsets = [0, 0, 24], sizes = [2, 8, 8], strides = [1, 1, 1]} : vector<2x8x32xbf16> to vector<2x8x8xbf16>
    %cst_265 = arith.constant dense<0.000000e+00> : vector<2x8x8xf32>
    %838 = tpu.matmul %835, %836, %cst_265 {dimension_numbers = #tpu.dot_dimension_numbers<[2], [2], [1], [1], [0, 0, 0, 1, 1, 1], [0], [0]>} : vector<2x8x8xbf16>, vector<2x8x8xbf16>, vector<2x8x8xf32> -> vector<2x8x8xf32>
    %cst_266 = arith.constant dense<0xFF800000> : vector<2x8xf32>
    %839 = vector.multi_reduction <maximumf>, %838, %cst_266 [2] : vector<2x8x8xf32> to vector<2x8xf32>
    %840 = vector.shape_cast %839 : vector<2x8xf32> to vector<2x8x1xf32>
    %841 = vector.broadcast %840 : vector<2x8x1xf32> to vector<2x8x8xf32>
    %842 = arith.subf %838, %841 : vector<2x8x8xf32>
    %843 = math.exp %842 : vector<2x8x8xf32>
    %cst_267 = arith.constant dense<0.000000e+00> : vector<2x8xf32>
    %844 = vector.multi_reduction <add>, %843, %cst_267 [2] : vector<2x8x8xf32> to vector<2x8xf32>
    %845 = vector.shape_cast %844 : vector<2x8xf32> to vector<2x8x1xf32>
    %846 = vector.broadcast %845 : vector<2x8x1xf32> to vector<2x8x8xf32>
    %847 = arith.divf %843, %846 : vector<2x8x8xf32>
    %848 = arith.truncf %847 : vector<2x8x8xf32> to vector<2x8x8xbf16>
    %cst_268 = arith.constant dense<0.000000e+00> : vector<2x8x8xf32>
    %849 = tpu.matmul %848, %837, %cst_268 {dimension_numbers = #tpu.dot_dimension_numbers<[2], [1], [1], [2], [0, 0, 0, 1, 1, 2], [0], [0]>} : vector<2x8x8xbf16>, vector<2x8x8xbf16>, vector<2x8x8xf32> -> vector<2x8x8xf32>
    %850 = tpu.concatenate %804, %819, %834, %849 in 2 : vector<2x8x8xf32>, vector<2x8x8xf32>, vector<2x8x8xf32>, vector<2x8x8xf32> -> vector<2x8x32xf32>
    %851 = vector.shape_cast %850 : vector<2x8x32xf32> to vector<16x32xf32>
    %c1120 = arith.constant 1120 : index
    %c0_269 = arith.constant 0 : index
    %852 = vector.load %arg3[%c1120, %c0_269] : memref<1280x128xbf16, #tpu.memory_space<vmem>>, vector<32x32xbf16>
    %853 = arith.truncf %851 : vector<16x32xf32> to vector<16x32xbf16>
    %cst_270 = arith.constant dense<0.000000e+00> : vector<16x32xf32>
    %854 = tpu.matmul %853, %852, %cst_270 {dimension_numbers = #tpu.dot_dimension_numbers<[1], [0], [0], [1], [0, 0, 1, 1], [], []>} : vector<16x32xbf16>, vector<32x32xbf16>, vector<16x32xf32> -> vector<16x32xf32>
    %c63 = arith.constant 63 : index
    %c0_271 = arith.constant 0 : index
    %855 = vector.load %arg4[%c63, %c0_271] : memref<72x128xf32, #tpu.memory_space<vmem>>, vector<1x32xf32>
    %856 = vector.broadcast %855 : vector<1x32xf32> to vector<16x32xf32>
    %857 = arith.addf %854, %856 : vector<16x32xf32>
    %858 = arith.addf %762, %857 : vector<16x32xf32>
    %c64 = arith.constant 64 : index
    %c0_272 = arith.constant 0 : index
    %859 = vector.load %arg4[%c64, %c0_272] : memref<72x128xf32, #tpu.memory_space<vmem>>, vector<1x32xf32>
    %c65 = arith.constant 65 : index
    %c0_273 = arith.constant 0 : index
    %860 = vector.load %arg4[%c65, %c0_273] : memref<72x128xf32, #tpu.memory_space<vmem>>, vector<1x32xf32>
    %cst_274 = arith.constant dense<0.000000e+00> : vector<16xf32>
    %861 = vector.multi_reduction <add>, %858, %cst_274 [1] : vector<16x32xf32> to vector<16xf32>
    %862 = vector.shape_cast %861 : vector<16xf32> to vector<16x1xf32>
    %cst_275 = arith.constant 3.200000e+01 : f32
    %863 = vector.broadcast %cst_275 : f32 to vector<16x1xf32>
    %864 = arith.divf %862, %863 : vector<16x1xf32>
    %865 = vector.broadcast %864 : vector<16x1xf32> to vector<16x32xf32>
    %866 = arith.subf %858, %865 : vector<16x32xf32>
    %867 = arith.mulf %866, %866 : vector<16x32xf32>
    %cst_276 = arith.constant dense<0.000000e+00> : vector<16xf32>
    %868 = vector.multi_reduction <add>, %867, %cst_276 [1] : vector<16x32xf32> to vector<16xf32>
    %869 = vector.shape_cast %868 : vector<16xf32> to vector<16x1xf32>
    %cst_277 = arith.constant 3.200000e+01 : f32
    %870 = vector.broadcast %cst_277 : f32 to vector<16x1xf32>
    %871 = arith.divf %869, %870 : vector<16x1xf32>
    %872 = vector.broadcast %864 : vector<16x1xf32> to vector<16x32xf32>
    %873 = arith.subf %858, %872 : vector<16x32xf32>
    %cst_278 = arith.constant 9.99999974E-6 : f32
    %874 = vector.broadcast %cst_278 : f32 to vector<16x1xf32>
    %875 = arith.addf %871, %874 : vector<16x1xf32>
    %876 = math.rsqrt %875 : vector<16x1xf32>
    %877 = vector.broadcast %876 : vector<16x1xf32> to vector<16x32xf32>
    %878 = arith.mulf %873, %877 : vector<16x32xf32>
    %879 = vector.broadcast %859 : vector<1x32xf32> to vector<16x32xf32>
    %880 = arith.mulf %878, %879 : vector<16x32xf32>
    %881 = vector.broadcast %860 : vector<1x32xf32> to vector<16x32xf32>
    %882 = arith.addf %880, %881 : vector<16x32xf32>
    %c1152 = arith.constant 1152 : index
    %c0_279 = arith.constant 0 : index
    %883 = vector.load %arg3[%c1152, %c0_279] : memref<1280x128xbf16, #tpu.memory_space<vmem>>, vector<32x64xbf16>
    %884 = arith.truncf %882 : vector<16x32xf32> to vector<16x32xbf16>
    %cst_280 = arith.constant dense<0.000000e+00> : vector<16x64xf32>
    %885 = tpu.matmul %884, %883, %cst_280 {dimension_numbers = #tpu.dot_dimension_numbers<[1], [0], [0], [1], [0, 0, 1, 1], [], []>} : vector<16x32xbf16>, vector<32x64xbf16>, vector<16x64xf32> -> vector<16x64xf32>
    %c66 = arith.constant 66 : index
    %c0_281 = arith.constant 0 : index
    %886 = vector.load %arg4[%c66, %c0_281] : memref<72x128xf32, #tpu.memory_space<vmem>>, vector<1x64xf32>
    %887 = vector.broadcast %886 : vector<1x64xf32> to vector<16x64xf32>
    %888 = arith.addf %885, %887 : vector<16x64xf32>
    %cst_282 = arith.constant 0.000000e+00 : f32
    %889 = vector.broadcast %cst_282 : f32 to vector<16x64xf32>
    %890 = arith.maximumf %888, %889 : vector<16x64xf32>
    %c1184 = arith.constant 1184 : index
    %c0_283 = arith.constant 0 : index
    %891 = vector.load %arg3[%c1184, %c0_283] : memref<1280x128xbf16, #tpu.memory_space<vmem>>, vector<64x32xbf16>
    %892 = arith.truncf %890 : vector<16x64xf32> to vector<16x64xbf16>
    %cst_284 = arith.constant dense<0.000000e+00> : vector<16x32xf32>
    %893 = tpu.matmul %892, %891, %cst_284 {dimension_numbers = #tpu.dot_dimension_numbers<[1], [0], [0], [1], [0, 0, 1, 1], [], []>} : vector<16x64xbf16>, vector<64x32xbf16>, vector<16x32xf32> -> vector<16x32xf32>
    %c67 = arith.constant 67 : index
    %c0_285 = arith.constant 0 : index
    %894 = vector.load %arg4[%c67, %c0_285] : memref<72x128xf32, #tpu.memory_space<vmem>>, vector<1x32xf32>
    %895 = vector.broadcast %894 : vector<1x32xf32> to vector<16x32xf32>
    %896 = arith.addf %893, %895 : vector<16x32xf32>
    %897 = arith.addf %882, %896 : vector<16x32xf32>
    %c68 = arith.constant 68 : index
    %c0_286 = arith.constant 0 : index
    %898 = vector.load %arg4[%c68, %c0_286] : memref<72x128xf32, #tpu.memory_space<vmem>>, vector<1x32xf32>
    %c69 = arith.constant 69 : index
    %c0_287 = arith.constant 0 : index
    %899 = vector.load %arg4[%c69, %c0_287] : memref<72x128xf32, #tpu.memory_space<vmem>>, vector<1x32xf32>
    %cst_288 = arith.constant dense<0.000000e+00> : vector<16xf32>
    %900 = vector.multi_reduction <add>, %897, %cst_288 [1] : vector<16x32xf32> to vector<16xf32>
    %901 = vector.shape_cast %900 : vector<16xf32> to vector<16x1xf32>
    %cst_289 = arith.constant 3.200000e+01 : f32
    %902 = vector.broadcast %cst_289 : f32 to vector<16x1xf32>
    %903 = arith.divf %901, %902 : vector<16x1xf32>
    %904 = vector.broadcast %903 : vector<16x1xf32> to vector<16x32xf32>
    %905 = arith.subf %897, %904 : vector<16x32xf32>
    %906 = arith.mulf %905, %905 : vector<16x32xf32>
    %cst_290 = arith.constant dense<0.000000e+00> : vector<16xf32>
    %907 = vector.multi_reduction <add>, %906, %cst_290 [1] : vector<16x32xf32> to vector<16xf32>
    %908 = vector.shape_cast %907 : vector<16xf32> to vector<16x1xf32>
    %cst_291 = arith.constant 3.200000e+01 : f32
    %909 = vector.broadcast %cst_291 : f32 to vector<16x1xf32>
    %910 = arith.divf %908, %909 : vector<16x1xf32>
    %911 = vector.broadcast %903 : vector<16x1xf32> to vector<16x32xf32>
    %912 = arith.subf %897, %911 : vector<16x32xf32>
    %cst_292 = arith.constant 9.99999974E-6 : f32
    %913 = vector.broadcast %cst_292 : f32 to vector<16x1xf32>
    %914 = arith.addf %910, %913 : vector<16x1xf32>
    %915 = math.rsqrt %914 : vector<16x1xf32>
    %916 = vector.broadcast %915 : vector<16x1xf32> to vector<16x32xf32>
    %917 = arith.mulf %912, %916 : vector<16x32xf32>
    %918 = vector.broadcast %898 : vector<1x32xf32> to vector<16x32xf32>
    %919 = arith.mulf %917, %918 : vector<16x32xf32>
    %920 = vector.broadcast %899 : vector<1x32xf32> to vector<16x32xf32>
    %921 = arith.addf %919, %920 : vector<16x32xf32>
    %c1248 = arith.constant 1248 : index
    %c0_293 = arith.constant 0 : index
    %922 = vector.load %arg3[%c1248, %c0_293] : memref<1280x128xbf16, #tpu.memory_space<vmem>>, vector<32x128xbf16>
    %923 = arith.truncf %921 : vector<16x32xf32> to vector<16x32xbf16>
    %cst_294 = arith.constant dense<0.000000e+00> : vector<16x128xf32>
    %924 = tpu.matmul %923, %922, %cst_294 {dimension_numbers = #tpu.dot_dimension_numbers<[1], [0], [0], [1], [0, 0, 1, 1], [], []>} : vector<16x32xbf16>, vector<32x128xbf16>, vector<16x128xf32> -> vector<16x128xf32>
    %c70 = arith.constant 70 : index
    %c0_295 = arith.constant 0 : index
    %925 = vector.load %arg4[%c70, %c0_295] : memref<72x128xf32, #tpu.memory_space<vmem>>, vector<1x128xf32>
    %926 = vector.broadcast %925 : vector<1x128xf32> to vector<16x128xf32>
    %927 = arith.addf %924, %926 : vector<16x128xf32>
    %c0_296 = arith.constant 0 : index
    %c0_297 = arith.constant 0 : index
    %928 = vector.load %arg5[%c0_296, %c0_297] : memref<16x128xf32, #tpu.memory_space<vmem>>, vector<16x128xf32>
    tpu.vector_store %arg5[%c0_296, %c0_297], %927 {strides = array<i32>} : memref<16x128xf32, #tpu.memory_space<vmem>>, vector<16x128xf32>,
    return
  }
  func.func @transform_0(%arg0: i32) -> (i32, i32) {
    %c0_i32 = arith.constant 0 : i32
    %c0_i32_0 = arith.constant 0 : i32
    %c0_i32_1 = arith.constant 0 : i32
    return %c0_i32, %c0_i32_0 : i32, i32
  }
  func.func @transform_1(%arg0: i32) -> (i32, i32) {
    %c0_i32 = arith.constant 0 : i32
    %c0_i32_0 = arith.constant 0 : i32
    %c0_i32_1 = arith.constant 0 : i32
    return %c0_i32, %c0_i32_0 : i32, i32
  }
  func.func @transform_2(%arg0: i32) -> (i32, i32) {
    %c0_i32 = arith.constant 0 : i32
    %c0_i32_0 = arith.constant 0 : i32
    %c0_i32_1 = arith.constant 0 : i32
    return %c0_i32, %c0_i32_0 : i32, i32
  }
  func.func @transform_3(%arg0: i32) -> (i32, i32) {
    %c0_i32 = arith.constant 0 : i32
    %c0_i32_0 = arith.constant 0 : i32
    %c0_i32_1 = arith.constant 0 : i32
    return %c0_i32, %c0_i32_0 : i32, i32
  }
  func.func @transform_4(%arg0: i32) -> (i32, i32) {
    %c0_i32 = arith.constant 0 : i32
    %c0_i32_0 = arith.constant 0 : i32
    %c0_i32_1 = arith.constant 0 : i32
    return %c0_i32, %c0_i32_0 : i32, i32
  }
}

</mosaic_0001>

<llo_original>
// kernel: tpu_custom_call.1
$region0: #{tpu_custom_call.1}
  #allocation0 [shape = 'u32[]', space=smem, size = 0x4, offset = 0x4, fixed_abs, tag = 'smem constant byte address 0x4 - core index']
  #allocation1 [shape = 'u32[72,128]{1,0:T(1,128)}', space=vmem, size = 0x9000, scoped, tag = 'internal scratch']
  %s0 = inlined_call_operand.vmem [shape: f32[16,4], index: 0, kind: input, shape index: {}]
  %s1 = inlined_call_operand.vmem [shape: f32[16,4], index: 1, kind: input, shape index: {}]
  %s2 = inlined_call_operand.hbm [shape: bf16[1280,128], index: 2, kind: input, shape index: {}]
  %s3 = inlined_call_operand.hbm [shape: f32[72,128], index: 3, kind: input, shape index: {}]
  %s4 = inlined_call_operand.hbm [shape: f32[16,128], index: 4, kind: output, shape index: {}]
  %s5 = sld [smem:[#allocation0]]
  $region34: #{tpu_custom_call.1} parent=0
    _
  %s7 = ssub.s32 1, %s5
  %s8 = scalar_select 0, %s7, %s5
  $region1: #{tpu_custom_call.1} parent=0
    #allocation2 [shape = 'u8[327680]{0}', space=vmem, size = 0x50000, scoped, tag = 'input window, operand 2, single buffered']
    #allocation3 [shape = 's32[1]{0}', space=sflag, size = 0x4, scoped, tag = 'scoped memory for tpu_custom_call.1']
    #allocation4 [shape = 's32[1]{0}', space=sflag, size = 0x4, scoped, tag = 'scoped memory for tpu_custom_call.1']
    #allocation5 [shape = 'u8[36864]{0}', space=vmem, size = 0x9000, scoped, tag = 'input window, operand 3, single buffered']
    #allocation6 [shape = 's32[1]{0}', space=sflag, size = 0x4, scoped, tag = 'scoped memory for tpu_custom_call.1']
    #allocation7 [shape = 'u8[8192]{0}', space=vmem, size = 0x2000, scoped, tag = 'output window, operand 0, single buffered']
    %9 = vsyncpa [#allocation3], 0
    %10 = vsyncpa [#allocation6], 0
    %11 = vsyncpa [#allocation4], 0
    // Predicated region
    $region2: #{tpu_custom_call.1} parent=1 // pred_check
      _
    $region3: #{tpu_custom_call.1} parent=1 // pred_check_branch
      %13 = sbr.rel (0) target = $region5
    $region4: #{tpu_custom_call.1} parent=1 // pred_region
      _
    $region5: #{tpu_custom_call.1} parent=1 // pred_fallthru
      _
    // Predicated region
    $region6: #{tpu_custom_call.1} parent=1 // pred_check
      _
    $region7: #{tpu_custom_call.1} parent=1 // pred_check_branch
      %15 = sbr.rel (0) target = $region9
    $region8: #{tpu_custom_call.1} parent=1 // pred_region
      _
    $region9: #{tpu_custom_call.1} parent=1 // pred_fallthru
      _
    // Predicated region
    $region10: #{tpu_custom_call.1} parent=1 // pred_check
      _
    $region11: #{tpu_custom_call.1} parent=1 // pred_check_branch
      %17 = sbr.rel (0) target = $region13
    $region12: #{tpu_custom_call.1} parent=1 // pred_region
      %19 = vsyncadd [#allocation3], 0
      %s20 = sshll.u32 %s2, 4
      %s21 = int_to_ptr.hbm [resolvable:$true] %s20
      %s22 = sshll.u32 [#allocation2], 4
      %s23 = int_to_ptr.vmem [resolvable:$true] %s22
      %28 = dma.hbm_to_vmem [thread:$0]  %s21, 10240, %s23, [#allocation3], 64, 64, 4
    $region13: #{tpu_custom_call.1} parent=1 // pred_fallthru
      _
    // Predicated region
    $region14: #{tpu_custom_call.1} parent=1 // pred_check
      _
    $region15: #{tpu_custom_call.1} parent=1 // pred_check_branch
      %30 = sbr.rel (0) target = $region17
    $region16: #{tpu_custom_call.1} parent=1 // pred_region
      %32 = vsyncadd [#allocation6], 0
      %s33 = sshll.u32 %s3, 4
      %s34 = int_to_ptr.hbm [resolvable:$true] %s33
      %s35 = sshll.u32 [#allocation5], 4
      %s36 = int_to_ptr.vmem [resolvable:$true] %s35
      %41 = dma.hbm_to_vmem [thread:$0]  %s34, 1152, %s36, [#allocation6], 128, 128, 8
    $region17: #{tpu_custom_call.1} parent=1 // pred_fallthru
      _
    // Predicated region
    $region18: #{tpu_custom_call.1} parent=1 // pred_check
      _
    $region19: #{tpu_custom_call.1} parent=1 // pred_check_branch
      %43 = sbr.rel (0) target = $region21
    $region20: #{tpu_custom_call.1} parent=1 // pred_region
      %45 = dma.done [#allocation3], 10240
    $region21: #{tpu_custom_call.1} parent=1 // pred_fallthru
      _
    // Predicated region
    $region22: #{tpu_custom_call.1} parent=1 // pred_check
      _
    $region23: #{tpu_custom_call.1} parent=1 // pred_check_branch
      %47 = sbr.rel (0) target = $region25
    $region24: #{tpu_custom_call.1} parent=1 // pred_region
      %49 = dma.done [#allocation6], 1152
    $region25: #{tpu_custom_call.1} parent=1 // pred_fallthru
      _
    %v51 = vld [vmem:[%s0] sm:$0xff]
    %v52 = vld [vmem:[%s0 + $0x8] sm:$0xff]
    %v53 = vld [vmem:[#allocation2] sm:$0x3]
    %v54 = vpack.c.bf16 %v52, %v51
    %vm55 = vcmask 31744
    %v57 = vsel %vm55, %v54, 0
    %vm59 = vcmask 1041408
    %v61 = vsel %vm59, %v53, 0
    %63 = vmatpush.bf16.msra.mxu0 0
    %64 = vmatpush.bf16.msra.mxu0 0
    %65 = vmatpush.bf16.msra.mxu0 0
    %66 = vmatpush.bf16.msra.mxu0 0
    %67 = vmatpush.bf16.msra.mxu0 0
    %68 = vmatpush.bf16.msra.mxu0 0
    %69 = vmatpush.bf16.msra.mxu0 0
    %70 = vmatpush.bf16.msra.mxu0 %v61
    %71 = vmatmul.bf16.gmra.mxu0 %v57
    %v72 = vpop.f32.mrf.mxu0
    %v73 = vadd.f32 0.0, %v72
    %v74 = vpop.f32.mrf.mxu0
    %v75 = vadd.f32 0.0, %v74
    %76 = vdwg.mxu0
    %v77 = vld [vmem:[#allocation5] sm:$0x1]
    %v78 = vperm.slane %v77, 0
    %v79 = vmul.f32 %v73, %v78
    %v80 = vmul.f32 %v75, %v78
    %v81 = vld [vmem:[#allocation5 + $0x1] sm:$0x1]
    %v82 = vperm.slane %v81, 0
    %v83 = vadd.f32 %v79, %v82
    %v84 = vadd.f32 %v80, %v82
    %v85 = vmax.f32 %v83, 0.0
    %v86 = vmax.f32 %v84, 0.0
    %v87 = vld [vmem:[#allocation2 + $0x8] sm:$0xf]
    %v88 = vld [vmem:[#allocation2 + $0xc] sm:$0xf]
    %v89 = vld [vmem:[#allocation2 + $0x10] sm:$0xf]
    %v90 = vld [vmem:[#allocation2 + $0x14] sm:$0xf]
    %v91 = vld [vmem:[#allocation2 + $0x18] sm:$0xf]
    %v92 = vld [vmem:[#allocation2 + $0x1c] sm:$0xf]
    %v93 = vld [vmem:[#allocation2 + $0x20] sm:$0xf]
    %v94 = vld [vmem:[#allocation2 + $0x24] sm:$0xf]
    %v95 = vpack.c.bf16 %v86, %v85
    %v104 = vunpack.c.l.b16 %v87
    %v105 = vunpack.c.l.b16 %v88
    %v106 = vunpack.c.l.b16 %v89
    %v107 = vunpack.c.l.b16 %v90
    %v108 = vunpack.c.l.b16 %v91
    %v109 = vunpack.c.l.b16 %v92
    %v110 = vunpack.c.l.b16 %v93
    %v111 = vunpack.c.l.b16 %v94
    %v112 = vpack.c.b16 %v105, %v104
    %v113 = vpack.c.b16 %v107, %v106
    %v114 = vpack.c.b16 %v109, %v108
    %v115 = vpack.c.b16 %v111, %v110
    %vm120 = vcmask 523264
    %v122 = vsel %vm120, %v95, 0
    %124 = vmatpush.bf16.msra.mxu0 0
    %125 = vmatpush.bf16.msra.mxu0 0
    %126 = vmatpush.bf16.msra.mxu0 0
    %127 = vmatpush.bf16.msra.mxu0 0
    %128 = vmatpush.bf16.msra.mxu0 %v115
    %129 = vmatpush.bf16.msra.mxu0 %v114
    %130 = vmatpush.bf16.msra.mxu0 %v113
    %131 = vmatpush.bf16.msra.mxu0 %v112
    %132 = vmatmul.bf16.gmra.mxu0 %v122
    %v133 = vpop.f32.mrf.mxu0
    %v134 = vadd.f32 0.0, %v133
    %v135 = vpop.f32.mrf.mxu0
    %v136 = vadd.f32 0.0, %v135
    %137 = vdwg.mxu0
    %v138 = vld [vmem:[#allocation5 + $0x2] sm:$0x1]
    %v139 = vperm.slane %v138, 0
    %v140 = vmul.f32 %v134, %v139
    %v141 = vmul.f32 %v136, %v139
    %v142 = vld [vmem:[#allocation5 + $0x3] sm:$0x1]
    %v143 = vperm.slane %v142, 0
    %v144 = vadd.f32 %v140, %v143
    %v145 = vadd.f32 %v141, %v143
    %v146 = vmax.f32 %v144, 0.0
    %v147 = vmax.f32 %v145, 0.0
    %v148 = vld [vmem:[#allocation2 + $0x28] sm:$0xf]
    %v149 = vld [vmem:[#allocation2 + $0x2c] sm:$0xf]
    %v150 = vld [vmem:[#allocation2 + $0x30] sm:$0xf]
    %v151 = vld [vmem:[#allocation2 + $0x34] sm:$0xf]
    %v152 = vpack.c.bf16 %v147, %v146
    %v153 = vld [vmem:[#allocation5 + $0x4] sm:$0x1]
    %v154 = vperm.slane %v153, 0
    %v159 = vunpack.c.l.b16 %v148
    %v160 = vunpack.c.l.b16 %v149
    %v161 = vunpack.c.l.b16 %v150
    %v162 = vunpack.c.l.b16 %v151
    %v163 = vpack.c.b16 %v160, %v159
    %v164 = vpack.c.b16 %v162, %v161
    %vm167 = vcmask 261120
    %v169 = vsel %vm167, %v152, 0
    %171 = vmatpush.bf16.msra.mxu0 0
    %172 = vmatpush.bf16.msra.mxu0 0
    %173 = vmatpush.bf16.msra.mxu0 0
    %174 = vmatpush.bf16.msra.mxu0 0
    %175 = vmatpush.bf16.msra.mxu0 0
    %176 = vmatpush.bf16.msra.mxu0 0
    %177 = vmatpush.bf16.msra.mxu0 %v164
    %178 = vmatpush.bf16.msra.mxu0 %v163
    %179 = vmatmul.bf16.gmra.mxu0 %v169
    %v180 = vpop.f32.mrf.mxu0
    %v181 = vadd.f32 %v154, %v180
    %v182 = vpop.f32.mrf.mxu0
    %v183 = vadd.f32 %v154, %v182
    %184 = vdwg.mxu0
    %v185 = vld [vmem:[%s1] sm:$0xff]
    %v186 = vld [vmem:[%s1 + $0x8] sm:$0xff]
    %v187 = vld [vmem:[#allocation2 + $0x38] sm:$0x3]
    %v188 = vpack.c.bf16 %v186, %v185
    %v190 = vsel %vm55, %v188, 0
    %v193 = vsel %vm59, %v187, 0
    %195 = vmatpush.bf16.msra.mxu0 0
    %196 = vmatpush.bf16.msra.mxu0 0
    %197 = vmatpush.bf16.msra.mxu0 0
    %198 = vmatpush.bf16.msra.mxu0 0
    %199 = vmatpush.bf16.msra.mxu0 0
    %200 = vmatpush.bf16.msra.mxu0 0
    %201 = vmatpush.bf16.msra.mxu0 0
    %202 = vmatpush.bf16.msra.mxu0 %v193
    %203 = vmatmul.bf16.gmra.mxu0 %v190
    %v204 = vpop.f32.mrf.mxu0
    %v205 = vadd.f32 0.0, %v204
    %v206 = vpop.f32.mrf.mxu0
    %v207 = vadd.f32 0.0, %v206
    %208 = vdwg.mxu0
    %v209 = vld [vmem:[#allocation5 + $0x5] sm:$0x1]
    %v210 = vperm.slane %v209, 0
    %v211 = vmul.f32 %v205, %v210
    %v212 = vmul.f32 %v207, %v210
    %v213 = vld [vmem:[#allocation5 + $0x6] sm:$0x1]
    %v214 = vperm.slane %v213, 0
    %v215 = vadd.f32 %v211, %v214
    %v216 = vadd.f32 %v212, %v214
    %v217 = vmax.f32 %v215, 0.0
    %v218 = vmax.f32 %v216, 0.0
    %v219 = vld [vmem:[#allocation2 + $0x40] sm:$0xf]
    %v220 = vld [vmem:[#allocation2 + $0x44] sm:$0xf]
    %v221 = vld [vmem:[#allocation2 + $0x48] sm:$0xf]
    %v222 = vld [vmem:[#allocation2 + $0x4c] sm:$0xf]
    %v223 = vld [vmem:[#allocation2 + $0x50] sm:$0xf]
    %v224 = vld [vmem:[#allocation2 + $0x54] sm:$0xf]
    %v225 = vld [vmem:[#allocation2 + $0x58] sm:$0xf]
    %v226 = vld [vmem:[#allocation2 + $0x5c] sm:$0xf]
    %v227 = vpack.c.bf16 %v218, %v217
    %v236 = vunpack.c.l.b16 %v219
    %v237 = vunpack.c.l.b16 %v220
    %v238 = vunpack.c.l.b16 %v221
    %v239 = vunpack.c.l.b16 %v222
    %v240 = vunpack.c.l.b16 %v223
    %v241 = vunpack.c.l.b16 %v224
    %v242 = vunpack.c.l.b16 %v225
    %v243 = vunpack.c.l.b16 %v226
    %v244 = vpack.c.b16 %v237, %v236
    %v245 = vpack.c.b16 %v239, %v238
    %v246 = vpack.c.b16 %v241, %v240
    %v247 = vpack.c.b16 %v243, %v242
    %v253 = vsel %vm120, %v227, 0
    %255 = vmatpush.bf16.msra.mxu0 0
    %256 = vmatpush.bf16.msra.mxu0 0
    %257 = vmatpush.bf16.msra.mxu0 0
    %258 = vmatpush.bf16.msra.mxu0 0
    %259 = vmatpush.bf16.msra.mxu0 %v247
    %260 = vmatpush.bf16.msra.mxu0 %v246
    %261 = vmatpush.bf16.msra.mxu0 %v245
    %262 = vmatpush.bf16.msra.mxu0 %v244
    %263 = vmatmul.bf16.gmra.mxu0 %v253
    %v264 = vpop.f32.mrf.mxu0
    %v265 = vadd.f32 0.0, %v264
    %v266 = vpop.f32.mrf.mxu0
    %v267 = vadd.f32 0.0, %v266
    %268 = vdwg.mxu0
    %v269 = vld [vmem:[#allocation5 + $0x7] sm:$0x1]
    %v270 = vperm.slane %v269, 0
    %v271 = vmul.f32 %v265, %v270
    %v272 = vmul.f32 %v267, %v270
    %v273 = vld [vmem:[#allocation5 + $0x8] sm:$0x1]
    %v274 = vperm.slane %v273, 0
    %v275 = vadd.f32 %v271, %v274
    %v276 = vadd.f32 %v272, %v274
    %v277 = vmax.f32 %v275, 0.0
    %v278 = vmax.f32 %v276, 0.0
    %v279 = vld [vmem:[#allocation2 + $0x60] sm:$0xf]
    %v280 = vld [vmem:[#allocation2 + $0x64] sm:$0xf]
    %v281 = vld [vmem:[#allocation2 + $0x68] sm:$0xf]
    %v282 = vld [vmem:[#allocation2 + $0x6c] sm:$0xf]
    %v283 = vpack.c.bf16 %v278, %v277
    %v284 = vld [vmem:[#allocation5 + $0x9] sm:$0x1]
    %v285 = vperm.slane %v284, 0
    %v290 = vunpack.c.l.b16 %v279
    %v291 = vunpack.c.l.b16 %v280
    %v292 = vunpack.c.l.b16 %v281
    %v293 = vunpack.c.l.b16 %v282
    %v294 = vpack.c.b16 %v291, %v290
    %v295 = vpack.c.b16 %v293, %v292
    %v299 = vsel %vm167, %v283, 0
    %301 = vmatpush.bf16.msra.mxu0 0
    %302 = vmatpush.bf16.msra.mxu0 0
    %303 = vmatpush.bf16.msra.mxu0 0
    %304 = vmatpush.bf16.msra.mxu0 0
    %305 = vmatpush.bf16.msra.mxu0 0
    %306 = vmatpush.bf16.msra.mxu0 0
    %307 = vmatpush.bf16.msra.mxu0 %v295
    %308 = vmatpush.bf16.msra.mxu0 %v294
    %309 = vmatmul.bf16.gmra.mxu0 %v299
    %v310 = vpop.f32.mrf.mxu0
    %v311 = vadd.f32 %v285, %v310
    %v312 = vpop.f32.mrf.mxu0
    %v313 = vadd.f32 %v285, %v312
    %314 = vdwg.mxu0
    %v315 = vadd.f32 %v181, %v311
    %v316 = vadd.f32 %v183, %v313
    %v317 = vld [vmem:[#allocation2 + $0x70] sm:$0xf]
    %v318 = vld [vmem:[#allocation2 + $0x74] sm:$0xf]
    %v319 = vld [vmem:[#allocation2 + $0x78] sm:$0xf]
    %v320 = vld [vmem:[#allocation2 + $0x7c] sm:$0xf]
    %v321 = vpack.c.bf16 %v316, %v315
    %v322 = vld [vmem:[#allocation5 + $0xa] sm:$0x1]
    %v323 = vperm.slane %v322, 0
    %v328 = vunpack.c.l.b16 %v317
    %v329 = vunpack.c.l.b16 %v318
    %v330 = vunpack.c.l.b16 %v319
    %v331 = vunpack.c.l.b16 %v320
    %v332 = vpack.c.b16 %v329, %v328
    %v333 = vpack.c.b16 %v331, %v330
    %v337 = vsel %vm167, %v321, 0
    %339 = vmatpush.bf16.msra.mxu0 0
    %340 = vmatpush.bf16.msra.mxu0 0
    %341 = vmatpush.bf16.msra.mxu0 0
    %342 = vmatpush.bf16.msra.mxu0 0
    %343 = vmatpush.bf16.msra.mxu0 0
    %344 = vmatpush.bf16.msra.mxu0 0
    %345 = vmatpush.bf16.msra.mxu0 %v333
    %346 = vmatpush.bf16.msra.mxu0 %v332
    %347 = vmatmul.bf16.gmra.mxu0 %v337
    %v348 = vpop.f32.mrf.mxu0
    %v349 = vadd.f32 %v323, %v348
    %v350 = vpop.f32.mrf.mxu0
    %v351 = vadd.f32 %v323, %v350
    %352 = vdwg.mxu0
    %v353 = vmul.f32 %v349, 0.35355338
    %v354 = vmul.f32 %v351, 0.35355338
    %v355 = vld [vmem:[#allocation2 + $0x80] sm:$0xf]
    %v356 = vld [vmem:[#allocation2 + $0x84] sm:$0xf]
    %v357 = vld [vmem:[#allocation2 + $0x88] sm:$0xf]
    %v358 = vld [vmem:[#allocation2 + $0x8c] sm:$0xf]
    %v359 = vpack.c.bf16 %v183, %v181
    %v360 = vld [vmem:[#allocation5 + $0xb] sm:$0x1]
    %v361 = vperm.slane %v360, 0
    %v366 = vunpack.c.l.b16 %v355
    %v367 = vunpack.c.l.b16 %v356
    %v368 = vunpack.c.l.b16 %v357
    %v369 = vunpack.c.l.b16 %v358
    %v370 = vpack.c.b16 %v367, %v366
    %v371 = vpack.c.b16 %v369, %v368
    %v375 = vsel %vm167, %v359, 0
    %377 = vmatpush.bf16.msra.mxu0 0
    %378 = vmatpush.bf16.msra.mxu0 0
    %379 = vmatpush.bf16.msra.mxu0 0
    %380 = vmatpush.bf16.msra.mxu0 0
    %381 = vmatpush.bf16.msra.mxu0 0
    %382 = vmatpush.bf16.msra.mxu0 0
    %383 = vmatpush.bf16.msra.mxu0 %v371
    %384 = vmatpush.bf16.msra.mxu0 %v370
    %385 = vmatmul.bf16.gmra.mxu0 %v375
    %v386 = vpop.f32.mrf.mxu0
    %v387 = vadd.f32 %v361, %v386
    %v388 = vpop.f32.mrf.mxu0
    %v389 = vadd.f32 %v361, %v388
    %390 = vdwg.mxu0
    %v391 = vpack.c.bf16 %v353, %v353
    %v392 = vpack.c.bf16 %v354, %v354
    %v393 = vpack.c.bf16 %v349, %v349
    %v394 = vpack.c.bf16 %v351, %v351
    %v395 = vpack.c.bf16 %v387, %v387
    %v396 = vpack.c.bf16 %v389, %v389
    %v398 = vunpack.c.l.b16 %v393
    %v399 = vpack.c.b16 %v398, %v398
    %400 = vrot.lane.b32.xlu0 %v399, 96
    %v401 = vpop.permute.xlu0 %400
    %vm402 = vcmask 64512
    %v404 = vsel %vm402, %v391, 0
    %v407 = vsel %vm402, %v401, 0
    %409 = vmatpush.bf16.xpose.msra.mxu0 0
    %410 = vmatpush.bf16.xpose.msra.mxu0 0
    %411 = vmatpush.bf16.xpose.msra.mxu0 0
    %412 = vmatpush.bf16.xpose.msra.mxu0 0
    %413 = vmatpush.bf16.xpose.msra.mxu0 0
    %414 = vmatpush.bf16.xpose.msra.mxu0 0
    %415 = vmatpush.bf16.xpose.msra.mxu0 0
    %416 = vmatpush.bf16.xpose.msra.mxu0 %v407
    %417 = vmatmul.bf16.gmra.mxu0 %v404
    %v418 = vpop.f32.mrf.mxu0
    %v419 = vadd.f32 0.0, %v418
    %v420 = vpop.f32.mrf.mxu0
    %421 = vdwg.mxu0
    %v423 = vunpack.c.l.b16 %v394
    %v424 = vpack.c.b16 %v423, %v423
    %425 = vrot.lane.b32.xlu0 %v424, 96
    %v426 = vpop.permute.xlu0 %425
    %v428 = vsel %vm402, %v392, 0
    %v431 = vsel %vm402, %v426, 0
    %433 = vmatpush.bf16.xpose.msra.mxu0 0
    %434 = vmatpush.bf16.xpose.msra.mxu0 0
    %435 = vmatpush.bf16.xpose.msra.mxu0 0
    %436 = vmatpush.bf16.xpose.msra.mxu0 0
    %437 = vmatpush.bf16.xpose.msra.mxu0 0
    %438 = vmatpush.bf16.xpose.msra.mxu0 0
    %439 = vmatpush.bf16.xpose.msra.mxu0 0
    %440 = vmatpush.bf16.xpose.msra.mxu0 %v431
    %441 = vmatmul.bf16.gmra.mxu0 %v428
    %v442 = vpop.f32.mrf.mxu0
    %v443 = vadd.f32 0.0, %v442
    %v444 = vpop.f32.mrf.mxu0
    %445 = vdwg.mxu0
    %v446 = vsel %vm402, %v419, -inf
    %447 = vmax.xlane.f32.xlu0 %v446
    %v448 = vpop.xlane.xlu0 %447
    %v449 = vsel %vm402, %v443, -inf
    %450 = vmax.xlane.f32.xlu0 %v449
    %v451 = vpop.xlane.xlu0 %450
    %v452 = vsub.f32 %v419, %v448
    %v453 = vsub.f32 %v443, %v451
    %v454 = vmul.f32 %v452, 1.442695
    %v455 = vpow.pop %v454
    %v456 = vmul.f32 %v453, 1.442695
    %v457 = vpow.pop %v456
    %v458 = vsel %vm402, %v455, 0.0
    %459 = vadd.xlane.f32.xlu0 %v458
    %v460 = vpop.xlane.xlu0 %459
    %v461 = vsel %vm402, %v457, 0.0
    %462 = vadd.xlane.f32.xlu0 %v461
    %v463 = vpop.xlane.xlu0 %462
    %v464 = vrcp.pop %v460
    %v465 = vmul.f32 %v460, %v464
    %v466 = vsub.f32 1.0, %v465
    %v467 = vmul.f32 %v464, %v466
    %v468 = vadd.f32 %v464, %v467
    %vm469 = vweird.f32 %v460
    %vm470 = vweird.f32 %v464
    %vm471 = vmor %vm469, %vm470
    %v472 = vsel %vm471, %v464, %v468
    %v473 = vand.u32 2147483647, %v460
    %vm474 = vcmp.eq.f32.partialorder %v473, 8.507059e+37
    %v475 = vand.u32 %v460, 2147483648
    %v476 = vor.u32 1.1754944e-38, %v475
    %v477 = vsel %vm474, %v476, %v472
    %v478 = vmul.f32 %v455, %v477
    %v479 = vrcp.pop %v463
    %v480 = vmul.f32 %v463, %v479
    %v481 = vsub.f32 1.0, %v480
    %v482 = vmul.f32 %v479, %v481
    %v483 = vadd.f32 %v479, %v482
    %vm484 = vweird.f32 %v463
    %vm485 = vweird.f32 %v479
    %vm486 = vmor %vm484, %vm485
    %v487 = vsel %vm486, %v479, %v483
    %v488 = vand.u32 2147483647, %v463
    %vm489 = vcmp.eq.f32.partialorder %v488, 8.507059e+37
    %v490 = vand.u32 %v463, 2147483648
    %v491 = vor.u32 1.1754944e-38, %v490
    %v492 = vsel %vm489, %v491, %v487
    %v493 = vmul.f32 %v457, %v492
    %v494 = vpack.c.bf16 %v478, %v478
    %v495 = vpack.c.bf16 %v493, %v493
    %v497 = vsel %vm402, %v494, 0
    %vm499 = vcmask 1043456
    %v501 = vsel %vm499, %v395, 0
    %503 = vmatpush.bf16.msra.mxu0 0
    %504 = vmatpush.bf16.msra.mxu0 0
    %505 = vmatpush.bf16.msra.mxu0 0
    %506 = vmatpush.bf16.msra.mxu0 0
    %507 = vmatpush.bf16.msra.mxu0 0
    %508 = vmatpush.bf16.msra.mxu0 0
    %509 = vmatpush.bf16.msra.mxu0 0
    %510 = vmatpush.bf16.msra.mxu0 %v501
    %511 = vmatmul.bf16.gmra.mxu0 %v497
    %v512 = vpop.f32.mrf.mxu0
    %v513 = vadd.f32 0.0, %v512
    %v514 = vpop.f32.mrf.mxu0
    %515 = vdwg.mxu0
    %v517 = vsel %vm402, %v495, 0
    %v520 = vsel %vm499, %v396, 0
    %522 = vmatpush.bf16.msra.mxu0 0
    %523 = vmatpush.bf16.msra.mxu0 0
    %524 = vmatpush.bf16.msra.mxu0 0
    %525 = vmatpush.bf16.msra.mxu0 0
    %526 = vmatpush.bf16.msra.mxu0 0
    %527 = vmatpush.bf16.msra.mxu0 0
    %528 = vmatpush.bf16.msra.mxu0 0
    %529 = vmatpush.bf16.msra.mxu0 %v520
    %530 = vmatmul.bf16.gmra.mxu0 %v517
    %v531 = vpop.f32.mrf.mxu0
    %v532 = vadd.f32 0.0, %v531
    %v533 = vpop.f32.mrf.mxu0
    %534 = vdwg.mxu0
    %v536 = vunpack.c.l.b16 %v391
    %v537 = vpack.c.b16 %v536, %v536
    %538 = vrot.lane.b32.xlu0 %v537, 120
    %v539 = vpop.permute.xlu0 %538
    %540 = vrot.lane.b32.xlu0 %v399, 88
    %v541 = vpop.permute.xlu0 %540
    %v543 = vsel %vm402, %v539, 0
    %v546 = vsel %vm402, %v541, 0
    %548 = vmatpush.bf16.xpose.msra.mxu0 0
    %549 = vmatpush.bf16.xpose.msra.mxu0 0
    %550 = vmatpush.bf16.xpose.msra.mxu0 0
    %551 = vmatpush.bf16.xpose.msra.mxu0 0
    %552 = vmatpush.bf16.xpose.msra.mxu0 0
    %553 = vmatpush.bf16.xpose.msra.mxu0 0
    %554 = vmatpush.bf16.xpose.msra.mxu0 0
    %555 = vmatpush.bf16.xpose.msra.mxu0 %v546
    %556 = vmatmul.bf16.gmra.mxu0 %v543
    %v557 = vpop.f32.mrf.mxu0
    %v558 = vadd.f32 0.0, %v557
    %v559 = vpop.f32.mrf.mxu0
    %560 = vdwg.mxu0
    %v562 = vunpack.c.l.b16 %v392
    %v563 = vpack.c.b16 %v562, %v562
    %564 = vrot.lane.b32.xlu0 %v563, 120
    %v565 = vpop.permute.xlu0 %564
    %566 = vrot.lane.b32.xlu0 %v424, 88
    %v567 = vpop.permute.xlu0 %566
    %v569 = vsel %vm402, %v565, 0
    %v572 = vsel %vm402, %v567, 0
    %574 = vmatpush.bf16.xpose.msra.mxu0 0
    %575 = vmatpush.bf16.xpose.msra.mxu0 0
    %576 = vmatpush.bf16.xpose.msra.mxu0 0
    %577 = vmatpush.bf16.xpose.msra.mxu0 0
    %578 = vmatpush.bf16.xpose.msra.mxu0 0
    %579 = vmatpush.bf16.xpose.msra.mxu0 0
    %580 = vmatpush.bf16.xpose.msra.mxu0 0
    %581 = vmatpush.bf16.xpose.msra.mxu0 %v572
    %582 = vmatmul.bf16.gmra.mxu0 %v569
    %v583 = vpop.f32.mrf.mxu0
    %v584 = vadd.f32 0.0, %v583
    %v585 = vpop.f32.mrf.mxu0
    %586 = vdwg.mxu0
    %v587 = vsel %vm402, %v558, -inf
    %588 = vmax.xlane.f32.xlu0 %v587
    %v589 = vpop.xlane.xlu0 %588
    %v590 = vsel %vm402, %v584, -inf
    %591 = vmax.xlane.f32.xlu0 %v590
    %v592 = vpop.xlane.xlu0 %591
    %v593 = vsub.f32 %v558, %v589
    %v594 = vsub.f32 %v584, %v592
    %v595 = vmul.f32 %v593, 1.442695
    %v596 = vpow.pop %v595
    %v597 = vmul.f32 %v594, 1.442695
    %v598 = vpow.pop %v597
    %v599 = vsel %vm402, %v596, 0.0
    %600 = vadd.xlane.f32.xlu0 %v599
    %v601 = vpop.xlane.xlu0 %600
    %v602 = vsel %vm402, %v598, 0.0
    %603 = vadd.xlane.f32.xlu0 %v602
    %v604 = vpop.xlane.xlu0 %603
    %v605 = vrcp.pop %v601
    %v606 = vmul.f32 %v601, %v605
    %v607 = vsub.f32 1.0, %v606
    %v608 = vmul.f32 %v605, %v607
    %v609 = vadd.f32 %v605, %v608
    %vm610 = vweird.f32 %v601
    %vm611 = vweird.f32 %v605
    %vm612 = vmor %vm610, %vm611
    %v613 = vsel %vm612, %v605, %v609
    %v614 = vand.u32 2147483647, %v601
    %vm615 = vcmp.eq.f32.partialorder %v614, 8.507059e+37
    %v616 = vand.u32 %v601, 2147483648
    %v617 = vor.u32 1.1754944e-38, %v616
    %v618 = vsel %vm615, %v617, %v613
    %v619 = vmul.f32 %v596, %v618
    %v620 = vrcp.pop %v604
    %v621 = vmul.f32 %v604, %v620
    %v622 = vsub.f32 1.0, %v621
    %v623 = vmul.f32 %v620, %v622
    %v624 = vadd.f32 %v620, %v623
    %vm625 = vweird.f32 %v604
    %vm626 = vweird.f32 %v620
    %vm627 = vmor %vm625, %vm626
    %v628 = vsel %vm627, %v620, %v624
    %v629 = vand.u32 2147483647, %v604
    %vm630 = vcmp.eq.f32.partialorder %v629, 8.507059e+37
    %v631 = vand.u32 %v604, 2147483648
    %v632 = vor.u32 1.1754944e-38, %v631
    %v633 = vsel %vm630, %v632, %v628
    %v634 = vmul.f32 %v598, %v633
    %v635 = vpack.c.bf16 %v619, %v619
    %v636 = vpack.c.bf16 %v634, %v634
    %v638 = vunpack.c.l.b16 %v395
    %v639 = vpack.c.b16 %v638, %v638
    %640 = vrot.lane.b32.xlu0 %v639, 120
    %v641 = vpop.permute.xlu0 %640
    %v643 = vsel %vm402, %v635, 0
    %v646 = vsel %vm499, %v641, 0
    %648 = vmatpush.bf16.msra.mxu0 0
    %649 = vmatpush.bf16.msra.mxu0 0
    %650 = vmatpush.bf16.msra.mxu0 0
    %651 = vmatpush.bf16.msra.mxu0 0
    %652 = vmatpush.bf16.msra.mxu0 0
    %653 = vmatpush.bf16.msra.mxu0 0
    %654 = vmatpush.bf16.msra.mxu0 0
    %655 = vmatpush.bf16.msra.mxu0 %v646
    %656 = vmatmul.bf16.gmra.mxu0 %v643
    %v657 = vpop.f32.mrf.mxu0
    %v658 = vadd.f32 0.0, %v657
    %v659 = vpop.f32.mrf.mxu0
    %660 = vdwg.mxu0
    %v662 = vunpack.c.l.b16 %v396
    %v663 = vpack.c.b16 %v662, %v662
    %664 = vrot.lane.b32.xlu0 %v663, 120
    %v665 = vpop.permute.xlu0 %664
    %v667 = vsel %vm402, %v636, 0
    %v670 = vsel %vm499, %v665, 0
    %672 = vmatpush.bf16.msra.mxu0 0
    %673 = vmatpush.bf16.msra.mxu0 0
    %674 = vmatpush.bf16.msra.mxu0 0
    %675 = vmatpush.bf16.msra.mxu0 0
    %676 = vmatpush.bf16.msra.mxu0 0
    %677 = vmatpush.bf16.msra.mxu0 0
    %678 = vmatpush.bf16.msra.mxu0 0
    %679 = vmatpush.bf16.msra.mxu0 %v670
    %680 = vmatmul.bf16.gmra.mxu0 %v667
    %v681 = vpop.f32.mrf.mxu0
    %v682 = vadd.f32 0.0, %v681
    %v683 = vpop.f32.mrf.mxu0
    %684 = vdwg.mxu0
    %685 = vrot.lane.b32.xlu0 %v537, 112
    %v686 = vpop.permute.xlu0 %685
    %687 = vrot.lane.b32.xlu0 %v399, 80
    %v688 = vpop.permute.xlu0 %687
    %v690 = vsel %vm402, %v686, 0
    %v693 = vsel %vm402, %v688, 0
    %695 = vmatpush.bf16.xpose.msra.mxu0 0
    %696 = vmatpush.bf16.xpose.msra.mxu0 0
    %697 = vmatpush.bf16.xpose.msra.mxu0 0
    %698 = vmatpush.bf16.xpose.msra.mxu0 0
    %699 = vmatpush.bf16.xpose.msra.mxu0 0
    %700 = vmatpush.bf16.xpose.msra.mxu0 0
    %701 = vmatpush.bf16.xpose.msra.mxu0 0
    %702 = vmatpush.bf16.xpose.msra.mxu0 %v693
    %703 = vmatmul.bf16.gmra.mxu0 %v690
    %v704 = vpop.f32.mrf.mxu0
    %v705 = vadd.f32 0.0, %v704
    %v706 = vpop.f32.mrf.mxu0
    %707 = vdwg.mxu0
    %708 = vrot.lane.b32.xlu0 %v563, 112
    %v709 = vpop.permute.xlu0 %708
    %710 = vrot.lane.b32.xlu0 %v424, 80
    %v711 = vpop.permute.xlu0 %710
    %v713 = vsel %vm402, %v709, 0
    %v716 = vsel %vm402, %v711, 0
    %718 = vmatpush.bf16.xpose.msra.mxu0 0
    %719 = vmatpush.bf16.xpose.msra.mxu0 0
    %720 = vmatpush.bf16.xpose.msra.mxu0 0
    %721 = vmatpush.bf16.xpose.msra.mxu0 0
    %722 = vmatpush.bf16.xpose.msra.mxu0 0
    %723 = vmatpush.bf16.xpose.msra.mxu0 0
    %724 = vmatpush.bf16.xpose.msra.mxu0 0
    %725 = vmatpush.bf16.xpose.msra.mxu0 %v716
    %726 = vmatmul.bf16.gmra.mxu0 %v713
    %v727 = vpop.f32.mrf.mxu0
    %v728 = vadd.f32 0.0, %v727
    %v729 = vpop.f32.mrf.mxu0
    %730 = vdwg.mxu0
    %v731 = vsel %vm402, %v705, -inf
    %732 = vmax.xlane.f32.xlu0 %v731
    %v733 = vpop.xlane.xlu0 %732
    %v734 = vsel %vm402, %v728, -inf
    %735 = vmax.xlane.f32.xlu0 %v734
    %v736 = vpop.xlane.xlu0 %735
    %v737 = vsub.f32 %v705, %v733
    %v738 = vsub.f32 %v728, %v736
    %v739 = vmul.f32 %v737, 1.442695
    %v740 = vpow.pop %v739
    %v741 = vmul.f32 %v738, 1.442695
    %v742 = vpow.pop %v741
    %v743 = vsel %vm402, %v740, 0.0
    %744 = vadd.xlane.f32.xlu0 %v743
    %v745 = vpop.xlane.xlu0 %744
    %v746 = vsel %vm402, %v742, 0.0
    %747 = vadd.xlane.f32.xlu0 %v746
    %v748 = vpop.xlane.xlu0 %747
    %v749 = vrcp.pop %v745
    %v750 = vmul.f32 %v745, %v749
    %v751 = vsub.f32 1.0, %v750
    %v752 = vmul.f32 %v749, %v751
    %v753 = vadd.f32 %v749, %v752
    %vm754 = vweird.f32 %v745
    %vm755 = vweird.f32 %v749
    %vm756 = vmor %vm754, %vm755
    %v757 = vsel %vm756, %v749, %v753
    %v758 = vand.u32 2147483647, %v745
    %vm759 = vcmp.eq.f32.partialorder %v758, 8.507059e+37
    %v760 = vand.u32 %v745, 2147483648
    %v761 = vor.u32 1.1754944e-38, %v760
    %v762 = vsel %vm759, %v761, %v757
    %v763 = vmul.f32 %v740, %v762
    %v764 = vrcp.pop %v748
    %v765 = vmul.f32 %v748, %v764
    %v766 = vsub.f32 1.0, %v765
    %v767 = vmul.f32 %v764, %v766
    %v768 = vadd.f32 %v764, %v767
    %vm769 = vweird.f32 %v748
    %vm770 = vweird.f32 %v764
    %vm771 = vmor %vm769, %vm770
    %v772 = vsel %vm771, %v764, %v768
    %v773 = vand.u32 2147483647, %v748
    %vm774 = vcmp.eq.f32.partialorder %v773, 8.507059e+37
    %v775 = vand.u32 %v748, 2147483648
    %v776 = vor.u32 1.1754944e-38, %v775
    %v777 = vsel %vm774, %v776, %v772
    %v778 = vmul.f32 %v742, %v777
    %v779 = vpack.c.bf16 %v763, %v763
    %v780 = vpack.c.bf16 %v778, %v778
    %781 = vrot.lane.b32.xlu0 %v639, 112
    %v782 = vpop.permute.xlu0 %781
    %v784 = vsel %vm402, %v779, 0
    %v787 = vsel %vm499, %v782, 0
    %789 = vmatpush.bf16.msra.mxu0 0
    %790 = vmatpush.bf16.msra.mxu0 0
    %791 = vmatpush.bf16.msra.mxu0 0
    %792 = vmatpush.bf16.msra.mxu0 0
    %793 = vmatpush.bf16.msra.mxu0 0
    %794 = vmatpush.bf16.msra.mxu0 0
    %795 = vmatpush.bf16.msra.mxu0 0
    %796 = vmatpush.bf16.msra.mxu0 %v787
    %797 = vmatmul.bf16.gmra.mxu0 %v784
    %v798 = vpop.f32.mrf.mxu0
    %v799 = vadd.f32 0.0, %v798
    %v800 = vpop.f32.mrf.mxu0
    %801 = vdwg.mxu0
    %802 = vrot.lane.b32.xlu0 %v663, 112
    %v803 = vpop.permute.xlu0 %802
    %v805 = vsel %vm402, %v780, 0
    %v808 = vsel %vm499, %v803, 0
    %810 = vmatpush.bf16.msra.mxu0 0
    %811 = vmatpush.bf16.msra.mxu0 0
    %812 = vmatpush.bf16.msra.mxu0 0
    %813 = vmatpush.bf16.msra.mxu0 0
    %814 = vmatpush.bf16.msra.mxu0 0
    %815 = vmatpush.bf16.msra.mxu0 0
    %816 = vmatpush.bf16.msra.mxu0 0
    %817 = vmatpush.bf16.msra.mxu0 %v808
    %818 = vmatmul.bf16.gmra.mxu0 %v805
    %v819 = vpop.f32.mrf.mxu0
    %v820 = vadd.f32 0.0, %v819
    %v821 = vpop.f32.mrf.mxu0
    %822 = vdwg.mxu0
    %823 = vrot.lane.b32.xlu0 %v537, 104
    %v824 = vpop.permute.xlu0 %823
    %825 = vrot.lane.b32.xlu0 %v399, 72
    %v826 = vpop.permute.xlu0 %825
    %v828 = vsel %vm402, %v824, 0
    %v831 = vsel %vm402, %v826, 0
    %833 = vmatpush.bf16.xpose.msra.mxu0 0
    %834 = vmatpush.bf16.xpose.msra.mxu0 0
    %835 = vmatpush.bf16.xpose.msra.mxu0 0
    %836 = vmatpush.bf16.xpose.msra.mxu0 0
    %837 = vmatpush.bf16.xpose.msra.mxu0 0
    %838 = vmatpush.bf16.xpose.msra.mxu0 0
    %839 = vmatpush.bf16.xpose.msra.mxu0 0
    %840 = vmatpush.bf16.xpose.msra.mxu0 %v831
    %841 = vmatmul.bf16.gmra.mxu0 %v828
    %v842 = vpop.f32.mrf.mxu0
    %v843 = vadd.f32 0.0, %v842
    %v844 = vpop.f32.mrf.mxu0
    %845 = vdwg.mxu0
    %846 = vrot.lane.b32.xlu0 %v563, 104
    %v847 = vpop.permute.xlu0 %846
    %848 = vrot.lane.b32.xlu0 %v424, 72
    %v849 = vpop.permute.xlu0 %848
    %v851 = vsel %vm402, %v847, 0
    %v854 = vsel %vm402, %v849, 0
    %856 = vmatpush.bf16.xpose.msra.mxu0 0
    %857 = vmatpush.bf16.xpose.msra.mxu0 0
    %858 = vmatpush.bf16.xpose.msra.mxu0 0
    %859 = vmatpush.bf16.xpose.msra.mxu0 0
    %860 = vmatpush.bf16.xpose.msra.mxu0 0
    %861 = vmatpush.bf16.xpose.msra.mxu0 0
    %862 = vmatpush.bf16.xpose.msra.mxu0 0
    %863 = vmatpush.bf16.xpose.msra.mxu0 %v854
    %864 = vmatmul.bf16.gmra.mxu0 %v851
    %v865 = vpop.f32.mrf.mxu0
    %v866 = vadd.f32 0.0, %v865
    %v867 = vpop.f32.mrf.mxu0
    %868 = vdwg.mxu0
    %v869 = vsel %vm402, %v843, -inf
    %870 = vmax.xlane.f32.xlu0 %v869
    %v871 = vpop.xlane.xlu0 %870
    %v872 = vsel %vm402, %v866, -inf
    %873 = vmax.xlane.f32.xlu0 %v872
    %v874 = vpop.xlane.xlu0 %873
    %v875 = vsub.f32 %v843, %v871
    %v876 = vsub.f32 %v866, %v874
    %v877 = vmul.f32 %v875, 1.442695
    %v878 = vpow.pop %v877
    %v879 = vmul.f32 %v876, 1.442695
    %v880 = vpow.pop %v879
    %v881 = vsel %vm402, %v878, 0.0
    %882 = vadd.xlane.f32.xlu0 %v881
    %v883 = vpop.xlane.xlu0 %882
    %v884 = vsel %vm402, %v880, 0.0
    %885 = vadd.xlane.f32.xlu0 %v884
    %v886 = vpop.xlane.xlu0 %885
    %v887 = vrcp.pop %v883
    %v888 = vmul.f32 %v883, %v887
    %v889 = vsub.f32 1.0, %v888
    %v890 = vmul.f32 %v887, %v889
    %v891 = vadd.f32 %v887, %v890
    %vm892 = vweird.f32 %v883
    %vm893 = vweird.f32 %v887
    %vm894 = vmor %vm892, %vm893
    %v895 = vsel %vm894, %v887, %v891
    %v896 = vand.u32 2147483647, %v883
    %vm897 = vcmp.eq.f32.partialorder %v896, 8.507059e+37
    %v898 = vand.u32 %v883, 2147483648
    %v899 = vor.u32 1.1754944e-38, %v898
    %v900 = vsel %vm897, %v899, %v895
    %v901 = vmul.f32 %v878, %v900
    %v902 = vrcp.pop %v886
    %v903 = vmul.f32 %v886, %v902
    %v904 = vsub.f32 1.0, %v903
    %v905 = vmul.f32 %v902, %v904
    %v906 = vadd.f32 %v902, %v905
    %vm907 = vweird.f32 %v886
    %vm908 = vweird.f32 %v902
    %vm909 = vmor %vm907, %vm908
    %v910 = vsel %vm909, %v902, %v906
    %v911 = vand.u32 2147483647, %v886
    %vm912 = vcmp.eq.f32.partialorder %v911, 8.507059e+37
    %v913 = vand.u32 %v886, 2147483648
    %v914 = vor.u32 1.1754944e-38, %v913
    %v915 = vsel %vm912, %v914, %v910
    %v916 = vmul.f32 %v880, %v915
    %v917 = vpack.c.bf16 %v901, %v901
    %v918 = vpack.c.bf16 %v916, %v916
    %919 = vrot.lane.b32.xlu0 %v639, 104
    %v920 = vpop.permute.xlu0 %919
    %v922 = vsel %vm402, %v917, 0
    %v925 = vsel %vm499, %v920, 0
    %927 = vmatpush.bf16.msra.mxu0 0
    %928 = vmatpush.bf16.msra.mxu0 0
    %929 = vmatpush.bf16.msra.mxu0 0
    %930 = vmatpush.bf16.msra.mxu0 0
    %931 = vmatpush.bf16.msra.mxu0 0
    %932 = vmatpush.bf16.msra.mxu0 0
    %933 = vmatpush.bf16.msra.mxu0 0
    %934 = vmatpush.bf16.msra.mxu0 %v925
    %935 = vmatmul.bf16.gmra.mxu0 %v922
    %v936 = vpop.f32.mrf.mxu0
    %v937 = vadd.f32 0.0, %v936
    %v938 = vpop.f32.mrf.mxu0
    %939 = vdwg.mxu0
    %940 = vrot.lane.b32.xlu0 %v663, 104
    %v941 = vpop.permute.xlu0 %940
    %v943 = vsel %vm402, %v918, 0
    %v946 = vsel %vm499, %v941, 0
    %948 = vmatpush.bf16.msra.mxu0 0
    %949 = vmatpush.bf16.msra.mxu0 0
    %950 = vmatpush.bf16.msra.mxu0 0
    %951 = vmatpush.bf16.msra.mxu0 0
    %952 = vmatpush.bf16.msra.mxu0 0
    %953 = vmatpush.bf16.msra.mxu0 0
    %954 = vmatpush.bf16.msra.mxu0 0
    %955 = vmatpush.bf16.msra.mxu0 %v946
    %956 = vmatmul.bf16.gmra.mxu0 %v943
    %v957 = vpop.f32.mrf.mxu0
    %v958 = vadd.f32 0.0, %v957
    %v959 = vpop.f32.mrf.mxu0
    %960 = vdwg.mxu0
    %963 = vrot.lane.b32.xlu0 %v658, 8
    %v964 = vpop.permute.xlu0 %963
    %965 = vrot.lane.b32.xlu0 %v682, 8
    %v966 = vpop.permute.xlu0 %965
    %971 = vrot.lane.b32.xlu0 %v799, 16
    %v972 = vpop.permute.xlu0 %971
    %973 = vrot.lane.b32.xlu0 %v820, 16
    %v974 = vpop.permute.xlu0 %973
    %979 = vrot.lane.b32.xlu0 %v937, 24
    %v980 = vpop.permute.xlu0 %979
    %981 = vrot.lane.b32.xlu0 %v958, 24
    %v982 = vpop.permute.xlu0 %981
    %v985 = vsel %vm402, %v513, %v964
    %v986 = vsel %vm402, %v532, %v966
    %vm987 = vcmask 130048
    %v988 = vsel %vm987, %v985, %v972
    %v989 = vsel %vm987, %v986, %v974
    %vm990 = vcmask 195584
    %v991 = vsel %vm990, %v988, %v980
    %v992 = vsel %vm990, %v989, %v982
    %v993 = vld [vmem:[#allocation2 + $0x90] sm:$0xf]
    %v994 = vld [vmem:[#allocation2 + $0x94] sm:$0xf]
    %v995 = vld [vmem:[#allocation2 + $0x98] sm:$0xf]
    %v996 = vld [vmem:[#allocation2 + $0x9c] sm:$0xf]
    %v997 = vpack.c.bf16 %v992, %v991
    %v998 = vld [vmem:[#allocation5 + $0xc] sm:$0x1]
    %v999 = vperm.slane %v998, 0
    %v1004 = vunpack.c.l.b16 %v993
    %v1005 = vunpack.c.l.b16 %v994
    %v1006 = vunpack.c.l.b16 %v995
    %v1007 = vunpack.c.l.b16 %v996
    %v1008 = vpack.c.b16 %v1005, %v1004
    %v1009 = vpack.c.b16 %v1007, %v1006
    %v1013 = vsel %vm167, %v997, 0
    %1015 = vmatpush.bf16.msra.mxu0 0
    %1016 = vmatpush.bf16.msra.mxu0 0
    %1017 = vmatpush.bf16.msra.mxu0 0
    %1018 = vmatpush.bf16.msra.mxu0 0
    %1019 = vmatpush.bf16.msra.mxu0 0
    %1020 = vmatpush.bf16.msra.mxu0 0
    %1021 = vmatpush.bf16.msra.mxu0 %v1009
    %1022 = vmatpush.bf16.msra.mxu0 %v1008
    %1023 = vmatmul.bf16.gmra.mxu0 %v1013
    %v1024 = vpop.f32.mrf.mxu0
    %v1025 = vadd.f32 %v999, %v1024
    %v1026 = vpop.f32.mrf.mxu0
    %v1027 = vadd.f32 %v999, %v1026
    %1028 = vdwg.mxu0
    %v1029 = vadd.f32 %v181, %v1025
    %v1030 = vadd.f32 %v183, %v1027
    %v1031 = vld [vmem:[#allocation5 + $0xd] sm:$0x1]
    %v1032 = vld [vmem:[#allocation5 + $0xe] sm:$0x1]
    %v1033 = vsel %vm167, %v1029, 0.0
    %1034 = vadd.xlane.f32.xlu0 %v1033
    %v1035 = vpop.xlane.xlu0 %1034
    %v1036 = vsel %vm167, %v1030, 0.0
    %1037 = vadd.xlane.f32.xlu0 %v1036
    %v1038 = vpop.xlane.xlu0 %1037
    %v1039 = vrcp.pop 32.0
    %v1040 = vmul.f32 32.0, %v1039
    %v1041 = vsub.f32 1.0, %v1040
    %v1042 = vmul.f32 %v1039, %v1041
    %v1043 = vadd.f32 %v1039, %v1042
    %vm1044 = vweird.f32 %v1039
    %v1045 = vsel %vm1044, %v1039, %v1043
    %v1046 = vmul.f32 %v1035, %v1045
    %v1047 = vmul.f32 %v1038, %v1045
    %v1048 = vsub.f32 %v1029, %v1046
    %v1049 = vsub.f32 %v1030, %v1047
    %v1050 = vmul.f32 %v1048, %v1048
    %v1051 = vmul.f32 %v1049, %v1049
    %v1052 = vsel %vm167, %v1050, 0.0
    %1053 = vadd.xlane.f32.xlu0 %v1052
    %v1054 = vpop.xlane.xlu0 %1053
    %v1055 = vsel %vm167, %v1051, 0.0
    %1056 = vadd.xlane.f32.xlu0 %v1055
    %v1057 = vpop.xlane.xlu0 %1056
    %v1058 = vmul.f32 %v1054, %v1045
    %v1059 = vmul.f32 %v1057, %v1045
    %v1060 = vadd.f32 %v1058, 1e-05
    %v1061 = vadd.f32 %v1059, 1e-05
    %v1062 = vrsqrt.pop %v1060
    %v1063 = vmul.f32 %v1062, %v1060
    %v1064 = vmul.f32 %v1063, %v1062
    %v1065 = vmul.f32 0.5, %v1064
    %v1066 = vsub.f32 1.5, %v1065
    %v1067 = vmul.f32 %v1062, %v1066
    %vm1068 = vweird.f32 %v1060
    %vm1069 = vweird.f32 %v1062
    %vm1070 = vmor %vm1068, %vm1069
    %v1071 = vsel %vm1070, %v1062, %v1067
    %v1072 = vrsqrt.pop %v1061
    %v1073 = vmul.f32 %v1072, %v1061
    %v1074 = vmul.f32 %v1073, %v1072
    %v1075 = vmul.f32 0.5, %v1074
    %v1076 = vsub.f32 1.5, %v1075
    %v1077 = vmul.f32 %v1072, %v1076
    %vm1078 = vweird.f32 %v1061
    %vm1079 = vweird.f32 %v1072
    %vm1080 = vmor %vm1078, %vm1079
    %v1081 = vsel %vm1080, %v1072, %v1077
    %v1082 = vmul.f32 %v1048, %v1071
    %v1083 = vmul.f32 %v1049, %v1081
    %v1084 = vperm.slane %v1031, 0
    %v1085 = vmul.f32 %v1082, %v1084
    %v1086 = vmul.f32 %v1083, %v1084
    %v1087 = vperm.slane %v1032, 0
    %v1088 = vadd.f32 %v1085, %v1087
    %v1089 = vadd.f32 %v1086, %v1087
    %v1090 = vld [vmem:[#allocation2 + $0xa0] sm:$0xf]
    %v1091 = vld [vmem:[#allocation2 + $0xa4] sm:$0xf]
    %v1092 = vld [vmem:[#allocation2 + $0xa8] sm:$0xf]
    %v1093 = vld [vmem:[#allocation2 + $0xac] sm:$0xf]
    %v1094 = vpack.c.bf16 %v1089, %v1088
    %v1095 = vld [vmem:[#allocation5 + $0xf] sm:$0x1]
    %v1096 = vperm.slane %v1095, 0
    %v1101 = vunpack.c.l.b16 %v1090
    %v1102 = vunpack.c.l.b16 %v1091
    %v1103 = vunpack.c.l.b16 %v1092
    %v1104 = vunpack.c.l.b16 %v1093
    %v1105 = vpack.c.b16 %v1102, %v1101
    %v1106 = vpack.c.b16 %v1104, %v1103
    %v1110 = vsel %vm167, %v1094, 0
    %1112 = vmatpush.bf16.msra.mxu0 0
    %1113 = vmatpush.bf16.msra.mxu0 0
    %1114 = vmatpush.bf16.msra.mxu0 0
    %1115 = vmatpush.bf16.msra.mxu0 0
    %1116 = vmatpush.bf16.msra.mxu0 0
    %1117 = vmatpush.bf16.msra.mxu0 0
    %1118 = vmatpush.bf16.msra.mxu0 %v1106
    %1119 = vmatpush.bf16.msra.mxu0 %v1105
    %1120 = vmatmul.bf16.gmra.mxu0 %v1110
    %v1121 = vpop.f32.mrf.mxu0
    %v1122 = vadd.f32 %v1096, %v1121
    %v1123 = vpop.f32.mrf.mxu0
    %v1124 = vadd.f32 %v1096, %v1123
    %1125 = vdwg.mxu0
    %v1126 = vmax.f32 %v1122, 0.0
    %v1127 = vmax.f32 %v1124, 0.0
    %v1128 = vld [vmem:[#allocation2 + $0xb0] sm:$0xf]
    %v1129 = vld [vmem:[#allocation2 + $0xb4] sm:$0xf]
    %v1130 = vld [vmem:[#allocation2 + $0xb8] sm:$0xf]
    %v1131 = vld [vmem:[#allocation2 + $0xbc] sm:$0xf]
    %v1132 = vld [vmem:[#allocation2 + $0xc0] sm:$0xf]
    %v1133 = vld [vmem:[#allocation2 + $0xc4] sm:$0xf]
    %v1134 = vld [vmem:[#allocation2 + $0xc8] sm:$0xf]
    %v1135 = vld [vmem:[#allocation2 + $0xcc] sm:$0xf]
    %v1136 = vpack.c.bf16 %v1127, %v1126
    %v1137 = vld [vmem:[#allocation5 + $0x10] sm:$0x1]
    %v1138 = vperm.slane %v1137, 0
    %v1147 = vunpack.c.l.b16 %v1128
    %v1148 = vunpack.c.l.b16 %v1129
    %v1149 = vunpack.c.l.b16 %v1130
    %v1150 = vunpack.c.l.b16 %v1131
    %v1151 = vunpack.c.l.b16 %v1132
    %v1152 = vunpack.c.l.b16 %v1133
    %v1153 = vunpack.c.l.b16 %v1134
    %v1154 = vunpack.c.l.b16 %v1135
    %v1155 = vpack.c.b16 %v1148, %v1147
    %v1156 = vpack.c.b16 %v1150, %v1149
    %v1157 = vpack.c.b16 %v1152, %v1151
    %v1158 = vpack.c.b16 %v1154, %v1153
    %v1164 = vsel %vm120, %v1136, 0
    %1166 = vmatpush.bf16.msra.mxu0 0
    %1167 = vmatpush.bf16.msra.mxu0 0
    %1168 = vmatpush.bf16.msra.mxu0 0
    %1169 = vmatpush.bf16.msra.mxu0 0
    %1170 = vmatpush.bf16.msra.mxu0 %v1158
    %1171 = vmatpush.bf16.msra.mxu0 %v1157
    %1172 = vmatpush.bf16.msra.mxu0 %v1156
    %1173 = vmatpush.bf16.msra.mxu0 %v1155
    %1174 = vmatmul.bf16.gmra.mxu0 %v1164
    %v1175 = vpop.f32.mrf.mxu0
    %v1176 = vadd.f32 %v1138, %v1175
    %v1177 = vpop.f32.mrf.mxu0
    %v1178 = vadd.f32 %v1138, %v1177
    %1179 = vdwg.mxu0
    %v1180 = vadd.f32 %v1088, %v1176
    %v1181 = vadd.f32 %v1089, %v1178
    %v1182 = vld [vmem:[#allocation5 + $0x11] sm:$0x1]
    %v1183 = vld [vmem:[#allocation5 + $0x12] sm:$0x1]
    %v1184 = vsel %vm167, %v1180, 0.0
    %1185 = vadd.xlane.f32.xlu0 %v1184
    %v1186 = vpop.xlane.xlu0 %1185
    %v1187 = vsel %vm167, %v1181, 0.0
    %1188 = vadd.xlane.f32.xlu0 %v1187
    %v1189 = vpop.xlane.xlu0 %1188
    %v1190 = vmul.f32 %v1186, %v1045
    %v1191 = vmul.f32 %v1189, %v1045
    %v1192 = vsub.f32 %v1180, %v1190
    %v1193 = vsub.f32 %v1181, %v1191
    %v1194 = vmul.f32 %v1192, %v1192
    %v1195 = vmul.f32 %v1193, %v1193
    %v1196 = vsel %vm167, %v1194, 0.0
    %1197 = vadd.xlane.f32.xlu0 %v1196
    %v1198 = vpop.xlane.xlu0 %1197
    %v1199 = vsel %vm167, %v1195, 0.0
    %1200 = vadd.xlane.f32.xlu0 %v1199
    %v1201 = vpop.xlane.xlu0 %1200
    %v1202 = vmul.f32 %v1198, %v1045
    %v1203 = vmul.f32 %v1201, %v1045
    %v1204 = vadd.f32 %v1202, 1e-05
    %v1205 = vadd.f32 %v1203, 1e-05
    %v1206 = vrsqrt.pop %v1204
    %v1207 = vmul.f32 %v1206, %v1204
    %v1208 = vmul.f32 %v1207, %v1206
    %v1209 = vmul.f32 0.5, %v1208
    %v1210 = vsub.f32 1.5, %v1209
    %v1211 = vmul.f32 %v1206, %v1210
    %vm1212 = vweird.f32 %v1204
    %vm1213 = vweird.f32 %v1206
    %vm1214 = vmor %vm1212, %vm1213
    %v1215 = vsel %vm1214, %v1206, %v1211
    %v1216 = vrsqrt.pop %v1205
    %v1217 = vmul.f32 %v1216, %v1205
    %v1218 = vmul.f32 %v1217, %v1216
    %v1219 = vmul.f32 0.5, %v1218
    %v1220 = vsub.f32 1.5, %v1219
    %v1221 = vmul.f32 %v1216, %v1220
    %vm1222 = vweird.f32 %v1205
    %vm1223 = vweird.f32 %v1216
    %vm1224 = vmor %vm1222, %vm1223
    %v1225 = vsel %vm1224, %v1216, %v1221
    %v1226 = vmul.f32 %v1192, %v1215
    %v1227 = vmul.f32 %v1193, %v1225
    %v1228 = vperm.slane %v1182, 0
    %v1229 = vmul.f32 %v1226, %v1228
    %v1230 = vmul.f32 %v1227, %v1228
    %v1231 = vperm.slane %v1183, 0
    %v1232 = vadd.f32 %v1229, %v1231
    %v1233 = vadd.f32 %v1230, %v1231
    %v1234 = vadd.f32 %v1232, %v311
    %v1235 = vadd.f32 %v1233, %v313
    %v1236 = vld [vmem:[#allocation2 + $0xd0] sm:$0xf]
    %v1237 = vld [vmem:[#allocation2 + $0xd4] sm:$0xf]
    %v1238 = vld [vmem:[#allocation2 + $0xd8] sm:$0xf]
    %v1239 = vld [vmem:[#allocation2 + $0xdc] sm:$0xf]
    %v1240 = vpack.c.bf16 %v1235, %v1234
    %v1241 = vld [vmem:[#allocation5 + $0x13] sm:$0x1]
    %v1242 = vperm.slane %v1241, 0
    %v1247 = vunpack.c.l.b16 %v1236
    %v1248 = vunpack.c.l.b16 %v1237
    %v1249 = vunpack.c.l.b16 %v1238
    %v1250 = vunpack.c.l.b16 %v1239
    %v1251 = vpack.c.b16 %v1248, %v1247
    %v1252 = vpack.c.b16 %v1250, %v1249
    %v1256 = vsel %vm167, %v1240, 0
    %1258 = vmatpush.bf16.msra.mxu0 0
    %1259 = vmatpush.bf16.msra.mxu0 0
    %1260 = vmatpush.bf16.msra.mxu0 0
    %1261 = vmatpush.bf16.msra.mxu0 0
    %1262 = vmatpush.bf16.msra.mxu0 0
    %1263 = vmatpush.bf16.msra.mxu0 0
    %1264 = vmatpush.bf16.msra.mxu0 %v1252
    %1265 = vmatpush.bf16.msra.mxu0 %v1251
    %1266 = vmatmul.bf16.gmra.mxu0 %v1256
    %v1267 = vpop.f32.mrf.mxu0
    %v1268 = vadd.f32 %v1242, %v1267
    %v1269 = vpop.f32.mrf.mxu0
    %v1270 = vadd.f32 %v1242, %v1269
    %1271 = vdwg.mxu0
    %v1272 = vmul.f32 %v1268, 0.35355338
    %v1273 = vmul.f32 %v1270, 0.35355338
    %v1274 = vld [vmem:[#allocation2 + $0xe0] sm:$0xf]
    %v1275 = vld [vmem:[#allocation2 + $0xe4] sm:$0xf]
    %v1276 = vld [vmem:[#allocation2 + $0xe8] sm:$0xf]
    %v1277 = vld [vmem:[#allocation2 + $0xec] sm:$0xf]
    %v1278 = vpack.c.bf16 %v1233, %v1232
    %v1279 = vld [vmem:[#allocation5 + $0x14] sm:$0x1]
    %v1280 = vperm.slane %v1279, 0
    %v1285 = vunpack.c.l.b16 %v1274
    %v1286 = vunpack.c.l.b16 %v1275
    %v1287 = vunpack.c.l.b16 %v1276
    %v1288 = vunpack.c.l.b16 %v1277
    %v1289 = vpack.c.b16 %v1286, %v1285
    %v1290 = vpack.c.b16 %v1288, %v1287
    %v1294 = vsel %vm167, %v1278, 0
    %1296 = vmatpush.bf16.msra.mxu0 0
    %1297 = vmatpush.bf16.msra.mxu0 0
    %1298 = vmatpush.bf16.msra.mxu0 0
    %1299 = vmatpush.bf16.msra.mxu0 0
    %1300 = vmatpush.bf16.msra.mxu0 0
    %1301 = vmatpush.bf16.msra.mxu0 0
    %1302 = vmatpush.bf16.msra.mxu0 %v1290
    %1303 = vmatpush.bf16.msra.mxu0 %v1289
    %1304 = vmatmul.bf16.gmra.mxu0 %v1294
    %v1305 = vpop.f32.mrf.mxu0
    %v1306 = vadd.f32 %v1280, %v1305
    %v1307 = vpop.f32.mrf.mxu0
    %v1308 = vadd.f32 %v1280, %v1307
    %1309 = vdwg.mxu0
    %v1310 = vpack.c.bf16 %v1272, %v1272
    %v1311 = vpack.c.bf16 %v1273, %v1273
    %v1312 = vpack.c.bf16 %v1268, %v1268
    %v1313 = vpack.c.bf16 %v1270, %v1270
    %v1314 = vpack.c.bf16 %v1306, %v1306
    %v1315 = vpack.c.bf16 %v1308, %v1308
    %v1317 = vunpack.c.l.b16 %v1312
    %v1318 = vpack.c.b16 %v1317, %v1317
    %1319 = vrot.lane.b32.xlu0 %v1318, 96
    %v1320 = vpop.permute.xlu0 %1319
    %v1322 = vsel %vm402, %v1310, 0
    %v1325 = vsel %vm402, %v1320, 0
    %1327 = vmatpush.bf16.xpose.msra.mxu0 0
    %1328 = vmatpush.bf16.xpose.msra.mxu0 0
    %1329 = vmatpush.bf16.xpose.msra.mxu0 0
    %1330 = vmatpush.bf16.xpose.msra.mxu0 0
    %1331 = vmatpush.bf16.xpose.msra.mxu0 0
    %1332 = vmatpush.bf16.xpose.msra.mxu0 0
    %1333 = vmatpush.bf16.xpose.msra.mxu0 0
    %1334 = vmatpush.bf16.xpose.msra.mxu0 %v1325
    %1335 = vmatmul.bf16.gmra.mxu0 %v1322
    %v1336 = vpop.f32.mrf.mxu0
    %v1337 = vadd.f32 0.0, %v1336
    %v1338 = vpop.f32.mrf.mxu0
    %1339 = vdwg.mxu0
    %v1341 = vunpack.c.l.b16 %v1313
    %v1342 = vpack.c.b16 %v1341, %v1341
    %1343 = vrot.lane.b32.xlu0 %v1342, 96
    %v1344 = vpop.permute.xlu0 %1343
    %v1346 = vsel %vm402, %v1311, 0
    %v1349 = vsel %vm402, %v1344, 0
    %1351 = vmatpush.bf16.xpose.msra.mxu0 0
    %1352 = vmatpush.bf16.xpose.msra.mxu0 0
    %1353 = vmatpush.bf16.xpose.msra.mxu0 0
    %1354 = vmatpush.bf16.xpose.msra.mxu0 0
    %1355 = vmatpush.bf16.xpose.msra.mxu0 0
    %1356 = vmatpush.bf16.xpose.msra.mxu0 0
    %1357 = vmatpush.bf16.xpose.msra.mxu0 0
    %1358 = vmatpush.bf16.xpose.msra.mxu0 %v1349
    %1359 = vmatmul.bf16.gmra.mxu0 %v1346
    %v1360 = vpop.f32.mrf.mxu0
    %v1361 = vadd.f32 0.0, %v1360
    %v1362 = vpop.f32.mrf.mxu0
    %1363 = vdwg.mxu0
    %v1364 = vsel %vm402, %v1337, -inf
    %1365 = vmax.xlane.f32.xlu0 %v1364
    %v1366 = vpop.xlane.xlu0 %1365
    %v1367 = vsel %vm402, %v1361, -inf
    %1368 = vmax.xlane.f32.xlu0 %v1367
    %v1369 = vpop.xlane.xlu0 %1368
    %v1370 = vsub.f32 %v1337, %v1366
    %v1371 = vsub.f32 %v1361, %v1369
    %v1372 = vmul.f32 %v1370, 1.442695
    %v1373 = vpow.pop %v1372
    %v1374 = vmul.f32 %v1371, 1.442695
    %v1375 = vpow.pop %v1374
    %v1376 = vsel %vm402, %v1373, 0.0
    %1377 = vadd.xlane.f32.xlu0 %v1376
    %v1378 = vpop.xlane.xlu0 %1377
    %v1379 = vsel %vm402, %v1375, 0.0
    %1380 = vadd.xlane.f32.xlu0 %v1379
    %v1381 = vpop.xlane.xlu0 %1380
    %v1382 = vrcp.pop %v1378
    %v1383 = vmul.f32 %v1378, %v1382
    %v1384 = vsub.f32 1.0, %v1383
    %v1385 = vmul.f32 %v1382, %v1384
    %v1386 = vadd.f32 %v1382, %v1385
    %vm1387 = vweird.f32 %v1378
    %vm1388 = vweird.f32 %v1382
    %vm1389 = vmor %vm1387, %vm1388
    %v1390 = vsel %vm1389, %v1382, %v1386
    %v1391 = vand.u32 2147483647, %v1378
    %vm1392 = vcmp.eq.f32.partialorder %v1391, 8.507059e+37
    %v1393 = vand.u32 %v1378, 2147483648
    %v1394 = vor.u32 1.1754944e-38, %v1393
    %v1395 = vsel %vm1392, %v1394, %v1390
    %v1396 = vmul.f32 %v1373, %v1395
    %v1397 = vrcp.pop %v1381
    %v1398 = vmul.f32 %v1381, %v1397
    %v1399 = vsub.f32 1.0, %v1398
    %v1400 = vmul.f32 %v1397, %v1399
    %v1401 = vadd.f32 %v1397, %v1400
    %vm1402 = vweird.f32 %v1381
    %vm1403 = vweird.f32 %v1397
    %vm1404 = vmor %vm1402, %vm1403
    %v1405 = vsel %vm1404, %v1397, %v1401
    %v1406 = vand.u32 2147483647, %v1381
    %vm1407 = vcmp.eq.f32.partialorder %v1406, 8.507059e+37
    %v1408 = vand.u32 %v1381, 2147483648
    %v1409 = vor.u32 1.1754944e-38, %v1408
    %v1410 = vsel %vm1407, %v1409, %v1405
    %v1411 = vmul.f32 %v1375, %v1410
    %v1412 = vpack.c.bf16 %v1396, %v1396
    %v1413 = vpack.c.bf16 %v1411, %v1411
    %v1415 = vsel %vm402, %v1412, 0
    %v1418 = vsel %vm499, %v1314, 0
    %1420 = vmatpush.bf16.msra.mxu0 0
    %1421 = vmatpush.bf16.msra.mxu0 0
    %1422 = vmatpush.bf16.msra.mxu0 0
    %1423 = vmatpush.bf16.msra.mxu0 0
    %1424 = vmatpush.bf16.msra.mxu0 0
    %1425 = vmatpush.bf16.msra.mxu0 0
    %1426 = vmatpush.bf16.msra.mxu0 0
    %1427 = vmatpush.bf16.msra.mxu0 %v1418
    %1428 = vmatmul.bf16.gmra.mxu0 %v1415
    %v1429 = vpop.f32.mrf.mxu0
    %v1430 = vadd.f32 0.0, %v1429
    %v1431 = vpop.f32.mrf.mxu0
    %1432 = vdwg.mxu0
    %v1434 = vsel %vm402, %v1413, 0
    %v1437 = vsel %vm499, %v1315, 0
    %1439 = vmatpush.bf16.msra.mxu0 0
    %1440 = vmatpush.bf16.msra.mxu0 0
    %1441 = vmatpush.bf16.msra.mxu0 0
    %1442 = vmatpush.bf16.msra.mxu0 0
    %1443 = vmatpush.bf16.msra.mxu0 0
    %1444 = vmatpush.bf16.msra.mxu0 0
    %1445 = vmatpush.bf16.msra.mxu0 0
    %1446 = vmatpush.bf16.msra.mxu0 %v1437
    %1447 = vmatmul.bf16.gmra.mxu0 %v1434
    %v1448 = vpop.f32.mrf.mxu0
    %v1449 = vadd.f32 0.0, %v1448
    %v1450 = vpop.f32.mrf.mxu0
    %1451 = vdwg.mxu0
    %v1453 = vunpack.c.l.b16 %v1310
    %v1454 = vpack.c.b16 %v1453, %v1453
    %1455 = vrot.lane.b32.xlu0 %v1454, 120
    %v1456 = vpop.permute.xlu0 %1455
    %1457 = vrot.lane.b32.xlu0 %v1318, 88
    %v1458 = vpop.permute.xlu0 %1457
    %v1460 = vsel %vm402, %v1456, 0
    %v1463 = vsel %vm402, %v1458, 0
    %1465 = vmatpush.bf16.xpose.msra.mxu0 0
    %1466 = vmatpush.bf16.xpose.msra.mxu0 0
    %1467 = vmatpush.bf16.xpose.msra.mxu0 0
    %1468 = vmatpush.bf16.xpose.msra.mxu0 0
    %1469 = vmatpush.bf16.xpose.msra.mxu0 0
    %1470 = vmatpush.bf16.xpose.msra.mxu0 0
    %1471 = vmatpush.bf16.xpose.msra.mxu0 0
    %1472 = vmatpush.bf16.xpose.msra.mxu0 %v1463
    %1473 = vmatmul.bf16.gmra.mxu0 %v1460
    %v1474 = vpop.f32.mrf.mxu0
    %v1475 = vadd.f32 0.0, %v1474
    %v1476 = vpop.f32.mrf.mxu0
    %1477 = vdwg.mxu0
    %v1479 = vunpack.c.l.b16 %v1311
    %v1480 = vpack.c.b16 %v1479, %v1479
    %1481 = vrot.lane.b32.xlu0 %v1480, 120
    %v1482 = vpop.permute.xlu0 %1481
    %1483 = vrot.lane.b32.xlu0 %v1342, 88
    %v1484 = vpop.permute.xlu0 %1483
    %v1486 = vsel %vm402, %v1482, 0
    %v1489 = vsel %vm402, %v1484, 0
    %1491 = vmatpush.bf16.xpose.msra.mxu0 0
    %1492 = vmatpush.bf16.xpose.msra.mxu0 0
    %1493 = vmatpush.bf16.xpose.msra.mxu0 0
    %1494 = vmatpush.bf16.xpose.msra.mxu0 0
    %1495 = vmatpush.bf16.xpose.msra.mxu0 0
    %1496 = vmatpush.bf16.xpose.msra.mxu0 0
    %1497 = vmatpush.bf16.xpose.msra.mxu0 0
    %1498 = vmatpush.bf16.xpose.msra.mxu0 %v1489
    %1499 = vmatmul.bf16.gmra.mxu0 %v1486
    %v1500 = vpop.f32.mrf.mxu0
    %v1501 = vadd.f32 0.0, %v1500
    %v1502 = vpop.f32.mrf.mxu0
    %1503 = vdwg.mxu0
    %v1504 = vsel %vm402, %v1475, -inf
    %1505 = vmax.xlane.f32.xlu0 %v1504
    %v1506 = vpop.xlane.xlu0 %1505
    %v1507 = vsel %vm402, %v1501, -inf
    %1508 = vmax.xlane.f32.xlu0 %v1507
    %v1509 = vpop.xlane.xlu0 %1508
    %v1510 = vsub.f32 %v1475, %v1506
    %v1511 = vsub.f32 %v1501, %v1509
    %v1512 = vmul.f32 %v1510, 1.442695
    %v1513 = vpow.pop %v1512
    %v1514 = vmul.f32 %v1511, 1.442695
    %v1515 = vpow.pop %v1514
    %v1516 = vsel %vm402, %v1513, 0.0
    %1517 = vadd.xlane.f32.xlu0 %v1516
    %v1518 = vpop.xlane.xlu0 %1517
    %v1519 = vsel %vm402, %v1515, 0.0
    %1520 = vadd.xlane.f32.xlu0 %v1519
    %v1521 = vpop.xlane.xlu0 %1520
    %v1522 = vrcp.pop %v1518
    %v1523 = vmul.f32 %v1518, %v1522
    %v1524 = vsub.f32 1.0, %v1523
    %v1525 = vmul.f32 %v1522, %v1524
    %v1526 = vadd.f32 %v1522, %v1525
    %vm1527 = vweird.f32 %v1518
    %vm1528 = vweird.f32 %v1522
    %vm1529 = vmor %vm1527, %vm1528
    %v1530 = vsel %vm1529, %v1522, %v1526
    %v1531 = vand.u32 2147483647, %v1518
    %vm1532 = vcmp.eq.f32.partialorder %v1531, 8.507059e+37
    %v1533 = vand.u32 %v1518, 2147483648
    %v1534 = vor.u32 1.1754944e-38, %v1533
    %v1535 = vsel %vm1532, %v1534, %v1530
    %v1536 = vmul.f32 %v1513, %v1535
    %v1537 = vrcp.pop %v1521
    %v1538 = vmul.f32 %v1521, %v1537
    %v1539 = vsub.f32 1.0, %v1538
    %v1540 = vmul.f32 %v1537, %v1539
    %v1541 = vadd.f32 %v1537, %v1540
    %vm1542 = vweird.f32 %v1521
    %vm1543 = vweird.f32 %v1537
    %vm1544 = vmor %vm1542, %vm1543
    %v1545 = vsel %vm1544, %v1537, %v1541
    %v1546 = vand.u32 2147483647, %v1521
    %vm1547 = vcmp.eq.f32.partialorder %v1546, 8.507059e+37
    %v1548 = vand.u32 %v1521, 2147483648
    %v1549 = vor.u32 1.1754944e-38, %v1548
    %v1550 = vsel %vm1547, %v1549, %v1545
    %v1551 = vmul.f32 %v1515, %v1550
    %v1552 = vpack.c.bf16 %v1536, %v1536
    %v1553 = vpack.c.bf16 %v1551, %v1551
    %v1555 = vunpack.c.l.b16 %v1314
    %v1556 = vpack.c.b16 %v1555, %v1555
    %1557 = vrot.lane.b32.xlu0 %v1556, 120
    %v1558 = vpop.permute.xlu0 %1557
    %v1560 = vsel %vm402, %v1552, 0
    %v1563 = vsel %vm499, %v1558, 0
    %1565 = vmatpush.bf16.msra.mxu0 0
    %1566 = vmatpush.bf16.msra.mxu0 0
    %1567 = vmatpush.bf16.msra.mxu0 0
    %1568 = vmatpush.bf16.msra.mxu0 0
    %1569 = vmatpush.bf16.msra.mxu0 0
    %1570 = vmatpush.bf16.msra.mxu0 0
    %1571 = vmatpush.bf16.msra.mxu0 0
    %1572 = vmatpush.bf16.msra.mxu0 %v1563
    %1573 = vmatmul.bf16.gmra.mxu0 %v1560
    %v1574 = vpop.f32.mrf.mxu0
    %v1575 = vadd.f32 0.0, %v1574
    %v1576 = vpop.f32.mrf.mxu0
    %1577 = vdwg.mxu0
    %v1579 = vunpack.c.l.b16 %v1315
    %v1580 = vpack.c.b16 %v1579, %v1579
    %1581 = vrot.lane.b32.xlu0 %v1580, 120
    %v1582 = vpop.permute.xlu0 %1581
    %v1584 = vsel %vm402, %v1553, 0
    %v1587 = vsel %vm499, %v1582, 0
    %1589 = vmatpush.bf16.msra.mxu0 0
    %1590 = vmatpush.bf16.msra.mxu0 0
    %1591 = vmatpush.bf16.msra.mxu0 0
    %1592 = vmatpush.bf16.msra.mxu0 0
    %1593 = vmatpush.bf16.msra.mxu0 0
    %1594 = vmatpush.bf16.msra.mxu0 0
    %1595 = vmatpush.bf16.msra.mxu0 0
    %1596 = vmatpush.bf16.msra.mxu0 %v1587
    %1597 = vmatmul.bf16.gmra.mxu0 %v1584
    %v1598 = vpop.f32.mrf.mxu0
    %v1599 = vadd.f32 0.0, %v1598
    %v1600 = vpop.f32.mrf.mxu0
    %1601 = vdwg.mxu0
    %1602 = vrot.lane.b32.xlu0 %v1454, 112
    %v1603 = vpop.permute.xlu0 %1602
    %1604 = vrot.lane.b32.xlu0 %v1318, 80
    %v1605 = vpop.permute.xlu0 %1604
    %v1607 = vsel %vm402, %v1603, 0
    %v1610 = vsel %vm402, %v1605, 0
    %1612 = vmatpush.bf16.xpose.msra.mxu0 0
    %1613 = vmatpush.bf16.xpose.msra.mxu0 0
    %1614 = vmatpush.bf16.xpose.msra.mxu0 0
    %1615 = vmatpush.bf16.xpose.msra.mxu0 0
    %1616 = vmatpush.bf16.xpose.msra.mxu0 0
    %1617 = vmatpush.bf16.xpose.msra.mxu0 0
    %1618 = vmatpush.bf16.xpose.msra.mxu0 0
    %1619 = vmatpush.bf16.xpose.msra.mxu0 %v1610
    %1620 = vmatmul.bf16.gmra.mxu0 %v1607
    %v1621 = vpop.f32.mrf.mxu0
    %v1622 = vadd.f32 0.0, %v1621
    %v1623 = vpop.f32.mrf.mxu0
    %1624 = vdwg.mxu0
    %1625 = vrot.lane.b32.xlu0 %v1480, 112
    %v1626 = vpop.permute.xlu0 %1625
    %1627 = vrot.lane.b32.xlu0 %v1342, 80
    %v1628 = vpop.permute.xlu0 %1627
    %v1630 = vsel %vm402, %v1626, 0
    %v1633 = vsel %vm402, %v1628, 0
    %1635 = vmatpush.bf16.xpose.msra.mxu0 0
    %1636 = vmatpush.bf16.xpose.msra.mxu0 0
    %1637 = vmatpush.bf16.xpose.msra.mxu0 0
    %1638 = vmatpush.bf16.xpose.msra.mxu0 0
    %1639 = vmatpush.bf16.xpose.msra.mxu0 0
    %1640 = vmatpush.bf16.xpose.msra.mxu0 0
    %1641 = vmatpush.bf16.xpose.msra.mxu0 0
    %1642 = vmatpush.bf16.xpose.msra.mxu0 %v1633
    %1643 = vmatmul.bf16.gmra.mxu0 %v1630
    %v1644 = vpop.f32.mrf.mxu0
    %v1645 = vadd.f32 0.0, %v1644
    %v1646 = vpop.f32.mrf.mxu0
    %1647 = vdwg.mxu0
    %v1648 = vsel %vm402, %v1622, -inf
    %1649 = vmax.xlane.f32.xlu0 %v1648
    %v1650 = vpop.xlane.xlu0 %1649
    %v1651 = vsel %vm402, %v1645, -inf
    %1652 = vmax.xlane.f32.xlu0 %v1651
    %v1653 = vpop.xlane.xlu0 %1652
    %v1654 = vsub.f32 %v1622, %v1650
    %v1655 = vsub.f32 %v1645, %v1653
    %v1656 = vmul.f32 %v1654, 1.442695
    %v1657 = vpow.pop %v1656
    %v1658 = vmul.f32 %v1655, 1.442695
    %v1659 = vpow.pop %v1658
    %v1660 = vsel %vm402, %v1657, 0.0
    %1661 = vadd.xlane.f32.xlu0 %v1660
    %v1662 = vpop.xlane.xlu0 %1661
    %v1663 = vsel %vm402, %v1659, 0.0
    %1664 = vadd.xlane.f32.xlu0 %v1663
    %v1665 = vpop.xlane.xlu0 %1664
    %v1666 = vrcp.pop %v1662
    %v1667 = vmul.f32 %v1662, %v1666
    %v1668 = vsub.f32 1.0, %v1667
    %v1669 = vmul.f32 %v1666, %v1668
    %v1670 = vadd.f32 %v1666, %v1669
    %vm1671 = vweird.f32 %v1662
    %vm1672 = vweird.f32 %v1666
    %vm1673 = vmor %vm1671, %vm1672
    %v1674 = vsel %vm1673, %v1666, %v1670
    %v1675 = vand.u32 2147483647, %v1662
    %vm1676 = vcmp.eq.f32.partialorder %v1675, 8.507059e+37
    %v1677 = vand.u32 %v1662, 2147483648
    %v1678 = vor.u32 1.1754944e-38, %v1677
    %v1679 = vsel %vm1676, %v1678, %v1674
    %v1680 = vmul.f32 %v1657, %v1679
    %v1681 = vrcp.pop %v1665
    %v1682 = vmul.f32 %v1665, %v1681
    %v1683 = vsub.f32 1.0, %v1682
    %v1684 = vmul.f32 %v1681, %v1683
    %v1685 = vadd.f32 %v1681, %v1684
    %vm1686 = vweird.f32 %v1665
    %vm1687 = vweird.f32 %v1681
    %vm1688 = vmor %vm1686, %vm1687
    %v1689 = vsel %vm1688, %v1681, %v1685
    %v1690 = vand.u32 2147483647, %v1665
    %vm1691 = vcmp.eq.f32.partialorder %v1690, 8.507059e+37
    %v1692 = vand.u32 %v1665, 2147483648
    %v1693 = vor.u32 1.1754944e-38, %v1692
    %v1694 = vsel %vm1691, %v1693, %v1689
    %v1695 = vmul.f32 %v1659, %v1694
    %v1696 = vpack.c.bf16 %v1680, %v1680
    %v1697 = vpack.c.bf16 %v1695, %v1695
    %1698 = vrot.lane.b32.xlu0 %v1556, 112
    %v1699 = vpop.permute.xlu0 %1698
    %v1701 = vsel %vm402, %v1696, 0
    %v1704 = vsel %vm499, %v1699, 0
    %1706 = vmatpush.bf16.msra.mxu0 0
    %1707 = vmatpush.bf16.msra.mxu0 0
    %1708 = vmatpush.bf16.msra.mxu0 0
    %1709 = vmatpush.bf16.msra.mxu0 0
    %1710 = vmatpush.bf16.msra.mxu0 0
    %1711 = vmatpush.bf16.msra.mxu0 0
    %1712 = vmatpush.bf16.msra.mxu0 0
    %1713 = vmatpush.bf16.msra.mxu0 %v1704
    %1714 = vmatmul.bf16.gmra.mxu0 %v1701
    %v1715 = vpop.f32.mrf.mxu0
    %v1716 = vadd.f32 0.0, %v1715
    %v1717 = vpop.f32.mrf.mxu0
    %1718 = vdwg.mxu0
    %1719 = vrot.lane.b32.xlu0 %v1580, 112
    %v1720 = vpop.permute.xlu0 %1719
    %v1722 = vsel %vm402, %v1697, 0
    %v1725 = vsel %vm499, %v1720, 0
    %1727 = vmatpush.bf16.msra.mxu0 0
    %1728 = vmatpush.bf16.msra.mxu0 0
    %1729 = vmatpush.bf16.msra.mxu0 0
    %1730 = vmatpush.bf16.msra.mxu0 0
    %1731 = vmatpush.bf16.msra.mxu0 0
    %1732 = vmatpush.bf16.msra.mxu0 0
    %1733 = vmatpush.bf16.msra.mxu0 0
    %1734 = vmatpush.bf16.msra.mxu0 %v1725
    %1735 = vmatmul.bf16.gmra.mxu0 %v1722
    %v1736 = vpop.f32.mrf.mxu0
    %v1737 = vadd.f32 0.0, %v1736
    %v1738 = vpop.f32.mrf.mxu0
    %1739 = vdwg.mxu0
    %1740 = vrot.lane.b32.xlu0 %v1454, 104
    %v1741 = vpop.permute.xlu0 %1740
    %1742 = vrot.lane.b32.xlu0 %v1318, 72
    %v1743 = vpop.permute.xlu0 %1742
    %v1745 = vsel %vm402, %v1741, 0
    %v1748 = vsel %vm402, %v1743, 0
    %1750 = vmatpush.bf16.xpose.msra.mxu0 0
    %1751 = vmatpush.bf16.xpose.msra.mxu0 0
    %1752 = vmatpush.bf16.xpose.msra.mxu0 0
    %1753 = vmatpush.bf16.xpose.msra.mxu0 0
    %1754 = vmatpush.bf16.xpose.msra.mxu0 0
    %1755 = vmatpush.bf16.xpose.msra.mxu0 0
    %1756 = vmatpush.bf16.xpose.msra.mxu0 0
    %1757 = vmatpush.bf16.xpose.msra.mxu0 %v1748
    %1758 = vmatmul.bf16.gmra.mxu0 %v1745
    %v1759 = vpop.f32.mrf.mxu0
    %v1760 = vadd.f32 0.0, %v1759
    %v1761 = vpop.f32.mrf.mxu0
    %1762 = vdwg.mxu0
    %1763 = vrot.lane.b32.xlu0 %v1480, 104
    %v1764 = vpop.permute.xlu0 %1763
    %1765 = vrot.lane.b32.xlu0 %v1342, 72
    %v1766 = vpop.permute.xlu0 %1765
    %v1768 = vsel %vm402, %v1764, 0
    %v1771 = vsel %vm402, %v1766, 0
    %1773 = vmatpush.bf16.xpose.msra.mxu0 0
    %1774 = vmatpush.bf16.xpose.msra.mxu0 0
    %1775 = vmatpush.bf16.xpose.msra.mxu0 0
    %1776 = vmatpush.bf16.xpose.msra.mxu0 0
    %1777 = vmatpush.bf16.xpose.msra.mxu0 0
    %1778 = vmatpush.bf16.xpose.msra.mxu0 0
    %1779 = vmatpush.bf16.xpose.msra.mxu0 0
    %1780 = vmatpush.bf16.xpose.msra.mxu0 %v1771
    %1781 = vmatmul.bf16.gmra.mxu0 %v1768
    %v1782 = vpop.f32.mrf.mxu0
    %v1783 = vadd.f32 0.0, %v1782
    %v1784 = vpop.f32.mrf.mxu0
    %1785 = vdwg.mxu0
    %v1786 = vsel %vm402, %v1760, -inf
    %1787 = vmax.xlane.f32.xlu0 %v1786
    %v1788 = vpop.xlane.xlu0 %1787
    %v1789 = vsel %vm402, %v1783, -inf
    %1790 = vmax.xlane.f32.xlu0 %v1789
    %v1791 = vpop.xlane.xlu0 %1790
    %v1792 = vsub.f32 %v1760, %v1788
    %v1793 = vsub.f32 %v1783, %v1791
    %v1794 = vmul.f32 %v1792, 1.442695
    %v1795 = vpow.pop %v1794
    %v1796 = vmul.f32 %v1793, 1.442695
    %v1797 = vpow.pop %v1796
    %v1798 = vsel %vm402, %v1795, 0.0
    %1799 = vadd.xlane.f32.xlu0 %v1798
    %v1800 = vpop.xlane.xlu0 %1799
    %v1801 = vsel %vm402, %v1797, 0.0
    %1802 = vadd.xlane.f32.xlu0 %v1801
    %v1803 = vpop.xlane.xlu0 %1802
    %v1804 = vrcp.pop %v1800
    %v1805 = vmul.f32 %v1800, %v1804
    %v1806 = vsub.f32 1.0, %v1805
    %v1807 = vmul.f32 %v1804, %v1806
    %v1808 = vadd.f32 %v1804, %v1807
    %vm1809 = vweird.f32 %v1800
    %vm1810 = vweird.f32 %v1804
    %vm1811 = vmor %vm1809, %vm1810
    %v1812 = vsel %vm1811, %v1804, %v1808
    %v1813 = vand.u32 2147483647, %v1800
    %vm1814 = vcmp.eq.f32.partialorder %v1813, 8.507059e+37
    %v1815 = vand.u32 %v1800, 2147483648
    %v1816 = vor.u32 1.1754944e-38, %v1815
    %v1817 = vsel %vm1814, %v1816, %v1812
    %v1818 = vmul.f32 %v1795, %v1817
    %v1819 = vrcp.pop %v1803
    %v1820 = vmul.f32 %v1803, %v1819
    %v1821 = vsub.f32 1.0, %v1820
    %v1822 = vmul.f32 %v1819, %v1821
    %v1823 = vadd.f32 %v1819, %v1822
    %vm1824 = vweird.f32 %v1803
    %vm1825 = vweird.f32 %v1819
    %vm1826 = vmor %vm1824, %vm1825
    %v1827 = vsel %vm1826, %v1819, %v1823
    %v1828 = vand.u32 2147483647, %v1803
    %vm1829 = vcmp.eq.f32.partialorder %v1828, 8.507059e+37
    %v1830 = vand.u32 %v1803, 2147483648
    %v1831 = vor.u32 1.1754944e-38, %v1830
    %v1832 = vsel %vm1829, %v1831, %v1827
    %v1833 = vmul.f32 %v1797, %v1832
    %v1834 = vpack.c.bf16 %v1818, %v1818
    %v1835 = vpack.c.bf16 %v1833, %v1833
    %1836 = vrot.lane.b32.xlu0 %v1556, 104
    %v1837 = vpop.permute.xlu0 %1836
    %v1839 = vsel %vm402, %v1834, 0
    %v1842 = vsel %vm499, %v1837, 0
    %1844 = vmatpush.bf16.msra.mxu0 0
    %1845 = vmatpush.bf16.msra.mxu0 0
    %1846 = vmatpush.bf16.msra.mxu0 0
    %1847 = vmatpush.bf16.msra.mxu0 0
    %1848 = vmatpush.bf16.msra.mxu0 0
    %1849 = vmatpush.bf16.msra.mxu0 0
    %1850 = vmatpush.bf16.msra.mxu0 0
    %1851 = vmatpush.bf16.msra.mxu0 %v1842
    %1852 = vmatmul.bf16.gmra.mxu0 %v1839
    %v1853 = vpop.f32.mrf.mxu0
    %v1854 = vadd.f32 0.0, %v1853
    %v1855 = vpop.f32.mrf.mxu0
    %1856 = vdwg.mxu0
    %1857 = vrot.lane.b32.xlu0 %v1580, 104
    %v1858 = vpop.permute.xlu0 %1857
    %v1860 = vsel %vm402, %v1835, 0
    %v1863 = vsel %vm499, %v1858, 0
    %1865 = vmatpush.bf16.msra.mxu0 0
    %1866 = vmatpush.bf16.msra.mxu0 0
    %1867 = vmatpush.bf16.msra.mxu0 0
    %1868 = vmatpush.bf16.msra.mxu0 0
    %1869 = vmatpush.bf16.msra.mxu0 0
    %1870 = vmatpush.bf16.msra.mxu0 0
    %1871 = vmatpush.bf16.msra.mxu0 0
    %1872 = vmatpush.bf16.msra.mxu0 %v1863
    %1873 = vmatmul.bf16.gmra.mxu0 %v1860
    %v1874 = vpop.f32.mrf.mxu0
    %v1875 = vadd.f32 0.0, %v1874
    %v1876 = vpop.f32.mrf.mxu0
    %1877 = vdwg.mxu0
    %1880 = vrot.lane.b32.xlu0 %v1575, 8
    %v1881 = vpop.permute.xlu0 %1880
    %1882 = vrot.lane.b32.xlu0 %v1599, 8
    %v1883 = vpop.permute.xlu0 %1882
    %1888 = vrot.lane.b32.xlu0 %v1716, 16
    %v1889 = vpop.permute.xlu0 %1888
    %1890 = vrot.lane.b32.xlu0 %v1737, 16
    %v1891 = vpop.permute.xlu0 %1890
    %1896 = vrot.lane.b32.xlu0 %v1854, 24
    %v1897 = vpop.permute.xlu0 %1896
    %1898 = vrot.lane.b32.xlu0 %v1875, 24
    %v1899 = vpop.permute.xlu0 %1898
    %v1902 = vsel %vm402, %v1430, %v1881
    %v1903 = vsel %vm402, %v1449, %v1883
    %v1904 = vsel %vm987, %v1902, %v1889
    %v1905 = vsel %vm987, %v1903, %v1891
    %v1906 = vsel %vm990, %v1904, %v1897
    %v1907 = vsel %vm990, %v1905, %v1899
    %v1908 = vld [vmem:[#allocation2 + $0xf0] sm:$0xf]
    %v1909 = vld [vmem:[#allocation2 + $0xf4] sm:$0xf]
    %v1910 = vld [vmem:[#allocation2 + $0xf8] sm:$0xf]
    %v1911 = vld [vmem:[#allocation2 + $0xfc] sm:$0xf]
    %v1912 = vpack.c.bf16 %v1907, %v1906
    %v1913 = vld [vmem:[#allocation5 + $0x15] sm:$0x1]
    %v1914 = vperm.slane %v1913, 0
    %v1919 = vunpack.c.l.b16 %v1908
    %v1920 = vunpack.c.l.b16 %v1909
    %v1921 = vunpack.c.l.b16 %v1910
    %v1922 = vunpack.c.l.b16 %v1911
    %v1923 = vpack.c.b16 %v1920, %v1919
    %v1924 = vpack.c.b16 %v1922, %v1921
    %v1928 = vsel %vm167, %v1912, 0
    %1930 = vmatpush.bf16.msra.mxu0 0
    %1931 = vmatpush.bf16.msra.mxu0 0
    %1932 = vmatpush.bf16.msra.mxu0 0
    %1933 = vmatpush.bf16.msra.mxu0 0
    %1934 = vmatpush.bf16.msra.mxu0 0
    %1935 = vmatpush.bf16.msra.mxu0 0
    %1936 = vmatpush.bf16.msra.mxu0 %v1924
    %1937 = vmatpush.bf16.msra.mxu0 %v1923
    %1938 = vmatmul.bf16.gmra.mxu0 %v1928
    %v1939 = vpop.f32.mrf.mxu0
    %v1940 = vadd.f32 %v1914, %v1939
    %v1941 = vpop.f32.mrf.mxu0
    %v1942 = vadd.f32 %v1914, %v1941
    %1943 = vdwg.mxu0
    %v1944 = vadd.f32 %v1232, %v1940
    %v1945 = vadd.f32 %v1233, %v1942
    %v1946 = vld [vmem:[#allocation5 + $0x16] sm:$0x1]
    %v1947 = vld [vmem:[#allocation5 + $0x17] sm:$0x1]
    %v1948 = vsel %vm167, %v1944, 0.0
    %1949 = vadd.xlane.f32.xlu0 %v1948
    %v1950 = vpop.xlane.xlu0 %1949
    %v1951 = vsel %vm167, %v1945, 0.0
    %1952 = vadd.xlane.f32.xlu0 %v1951
    %v1953 = vpop.xlane.xlu0 %1952
    %v1954 = vmul.f32 %v1950, %v1045
    %v1955 = vmul.f32 %v1953, %v1045
    %v1956 = vsub.f32 %v1944, %v1954
    %v1957 = vsub.f32 %v1945, %v1955
    %v1958 = vmul.f32 %v1956, %v1956
    %v1959 = vmul.f32 %v1957, %v1957
    %v1960 = vsel %vm167, %v1958, 0.0
    %1961 = vadd.xlane.f32.xlu0 %v1960
    %v1962 = vpop.xlane.xlu0 %1961
    %v1963 = vsel %vm167, %v1959, 0.0
    %1964 = vadd.xlane.f32.xlu0 %v1963
    %v1965 = vpop.xlane.xlu0 %1964
    %v1966 = vmul.f32 %v1962, %v1045
    %v1967 = vmul.f32 %v1965, %v1045
    %v1968 = vadd.f32 %v1966, 1e-05
    %v1969 = vadd.f32 %v1967, 1e-05
    %v1970 = vrsqrt.pop %v1968
    %v1971 = vmul.f32 %v1970, %v1968
    %v1972 = vmul.f32 %v1971, %v1970
    %v1973 = vmul.f32 0.5, %v1972
    %v1974 = vsub.f32 1.5, %v1973
    %v1975 = vmul.f32 %v1970, %v1974
    %vm1976 = vweird.f32 %v1968
    %vm1977 = vweird.f32 %v1970
    %vm1978 = vmor %vm1976, %vm1977
    %v1979 = vsel %vm1978, %v1970, %v1975
    %v1980 = vrsqrt.pop %v1969
    %v1981 = vmul.f32 %v1980, %v1969
    %v1982 = vmul.f32 %v1981, %v1980
    %v1983 = vmul.f32 0.5, %v1982
    %v1984 = vsub.f32 1.5, %v1983
    %v1985 = vmul.f32 %v1980, %v1984
    %vm1986 = vweird.f32 %v1969
    %vm1987 = vweird.f32 %v1980
    %vm1988 = vmor %vm1986, %vm1987
    %v1989 = vsel %vm1988, %v1980, %v1985
    %v1990 = vmul.f32 %v1956, %v1979
    %v1991 = vmul.f32 %v1957, %v1989
    %v1992 = vperm.slane %v1946, 0
    %v1993 = vmul.f32 %v1990, %v1992
    %v1994 = vmul.f32 %v1991, %v1992
    %v1995 = vperm.slane %v1947, 0
    %v1996 = vadd.f32 %v1993, %v1995
    %v1997 = vadd.f32 %v1994, %v1995
    %v1998 = vld [vmem:[#allocation2 + $0x100] sm:$0xf]
    %v1999 = vld [vmem:[#allocation2 + $0x104] sm:$0xf]
    %v2000 = vld [vmem:[#allocation2 + $0x108] sm:$0xf]
    %v2001 = vld [vmem:[#allocation2 + $0x10c] sm:$0xf]
    %v2002 = vpack.c.bf16 %v1997, %v1996
    %v2003 = vld [vmem:[#allocation5 + $0x18] sm:$0x1]
    %v2004 = vperm.slane %v2003, 0
    %v2009 = vunpack.c.l.b16 %v1998
    %v2010 = vunpack.c.l.b16 %v1999
    %v2011 = vunpack.c.l.b16 %v2000
    %v2012 = vunpack.c.l.b16 %v2001
    %v2013 = vpack.c.b16 %v2010, %v2009
    %v2014 = vpack.c.b16 %v2012, %v2011
    %v2018 = vsel %vm167, %v2002, 0
    %2020 = vmatpush.bf16.msra.mxu0 0
    %2021 = vmatpush.bf16.msra.mxu0 0
    %2022 = vmatpush.bf16.msra.mxu0 0
    %2023 = vmatpush.bf16.msra.mxu0 0
    %2024 = vmatpush.bf16.msra.mxu0 0
    %2025 = vmatpush.bf16.msra.mxu0 0
    %2026 = vmatpush.bf16.msra.mxu0 %v2014
    %2027 = vmatpush.bf16.msra.mxu0 %v2013
    %2028 = vmatmul.bf16.gmra.mxu0 %v2018
    %v2029 = vpop.f32.mrf.mxu0
    %v2030 = vadd.f32 %v2004, %v2029
    %v2031 = vpop.f32.mrf.mxu0
    %v2032 = vadd.f32 %v2004, %v2031
    %2033 = vdwg.mxu0
    %v2034 = vmax.f32 %v2030, 0.0
    %v2035 = vmax.f32 %v2032, 0.0
    %v2036 = vld [vmem:[#allocation2 + $0x110] sm:$0xf]
    %v2037 = vld [vmem:[#allocation2 + $0x114] sm:$0xf]
    %v2038 = vld [vmem:[#allocation2 + $0x118] sm:$0xf]
    %v2039 = vld [vmem:[#allocation2 + $0x11c] sm:$0xf]
    %v2040 = vld [vmem:[#allocation2 + $0x120] sm:$0xf]
    %v2041 = vld [vmem:[#allocation2 + $0x124] sm:$0xf]
    %v2042 = vld [vmem:[#allocation2 + $0x128] sm:$0xf]
    %v2043 = vld [vmem:[#allocation2 + $0x12c] sm:$0xf]
    %v2044 = vpack.c.bf16 %v2035, %v2034
    %v2045 = vld [vmem:[#allocation5 + $0x19] sm:$0x1]
    %v2046 = vperm.slane %v2045, 0
    %v2055 = vunpack.c.l.b16 %v2036
    %v2056 = vunpack.c.l.b16 %v2037
    %v2057 = vunpack.c.l.b16 %v2038
    %v2058 = vunpack.c.l.b16 %v2039
    %v2059 = vunpack.c.l.b16 %v2040
    %v2060 = vunpack.c.l.b16 %v2041
    %v2061 = vunpack.c.l.b16 %v2042
    %v2062 = vunpack.c.l.b16 %v2043
    %v2063 = vpack.c.b16 %v2056, %v2055
    %v2064 = vpack.c.b16 %v2058, %v2057
    %v2065 = vpack.c.b16 %v2060, %v2059
    %v2066 = vpack.c.b16 %v2062, %v2061
    %v2072 = vsel %vm120, %v2044, 0
    %2074 = vmatpush.bf16.msra.mxu0 0
    %2075 = vmatpush.bf16.msra.mxu0 0
    %2076 = vmatpush.bf16.msra.mxu0 0
    %2077 = vmatpush.bf16.msra.mxu0 0
    %2078 = vmatpush.bf16.msra.mxu0 %v2066
    %2079 = vmatpush.bf16.msra.mxu0 %v2065
    %2080 = vmatpush.bf16.msra.mxu0 %v2064
    %2081 = vmatpush.bf16.msra.mxu0 %v2063
    %2082 = vmatmul.bf16.gmra.mxu0 %v2072
    %v2083 = vpop.f32.mrf.mxu0
    %v2084 = vadd.f32 %v2046, %v2083
    %v2085 = vpop.f32.mrf.mxu0
    %v2086 = vadd.f32 %v2046, %v2085
    %2087 = vdwg.mxu0
    %v2088 = vadd.f32 %v1996, %v2084
    %v2089 = vadd.f32 %v1997, %v2086
    %v2090 = vld [vmem:[#allocation5 + $0x1a] sm:$0x1]
    %v2091 = vld [vmem:[#allocation5 + $0x1b] sm:$0x1]
    %v2092 = vsel %vm167, %v2088, 0.0
    %2093 = vadd.xlane.f32.xlu0 %v2092
    %v2094 = vpop.xlane.xlu0 %2093
    %v2095 = vsel %vm167, %v2089, 0.0
    %2096 = vadd.xlane.f32.xlu0 %v2095
    %v2097 = vpop.xlane.xlu0 %2096
    %v2098 = vmul.f32 %v2094, %v1045
    %v2099 = vmul.f32 %v2097, %v1045
    %v2100 = vsub.f32 %v2088, %v2098
    %v2101 = vsub.f32 %v2089, %v2099
    %v2102 = vmul.f32 %v2100, %v2100
    %v2103 = vmul.f32 %v2101, %v2101
    %v2104 = vsel %vm167, %v2102, 0.0
    %2105 = vadd.xlane.f32.xlu0 %v2104
    %v2106 = vpop.xlane.xlu0 %2105
    %v2107 = vsel %vm167, %v2103, 0.0
    %2108 = vadd.xlane.f32.xlu0 %v2107
    %v2109 = vpop.xlane.xlu0 %2108
    %v2110 = vmul.f32 %v2106, %v1045
    %v2111 = vmul.f32 %v2109, %v1045
    %v2112 = vadd.f32 %v2110, 1e-05
    %v2113 = vadd.f32 %v2111, 1e-05
    %v2114 = vrsqrt.pop %v2112
    %v2115 = vmul.f32 %v2114, %v2112
    %v2116 = vmul.f32 %v2115, %v2114
    %v2117 = vmul.f32 0.5, %v2116
    %v2118 = vsub.f32 1.5, %v2117
    %v2119 = vmul.f32 %v2114, %v2118
    %vm2120 = vweird.f32 %v2112
    %vm2121 = vweird.f32 %v2114
    %vm2122 = vmor %vm2120, %vm2121
    %v2123 = vsel %vm2122, %v2114, %v2119
    %v2124 = vrsqrt.pop %v2113
    %v2125 = vmul.f32 %v2124, %v2113
    %v2126 = vmul.f32 %v2125, %v2124
    %v2127 = vmul.f32 0.5, %v2126
    %v2128 = vsub.f32 1.5, %v2127
    %v2129 = vmul.f32 %v2124, %v2128
    %vm2130 = vweird.f32 %v2113
    %vm2131 = vweird.f32 %v2124
    %vm2132 = vmor %vm2130, %vm2131
    %v2133 = vsel %vm2132, %v2124, %v2129
    %v2134 = vmul.f32 %v2100, %v2123
    %v2135 = vmul.f32 %v2101, %v2133
    %v2136 = vperm.slane %v2090, 0
    %v2137 = vmul.f32 %v2134, %v2136
    %v2138 = vmul.f32 %v2135, %v2136
    %v2139 = vperm.slane %v2091, 0
    %v2140 = vadd.f32 %v2137, %v2139
    %v2141 = vadd.f32 %v2138, %v2139
    %v2142 = vld [vmem:[#allocation5 + $0x20] sm:$0xff]
    %v2143 = vadd.f32 %v2140, %v311
    %v2144 = vadd.f32 %v2141, %v313
    %v2145 = vadd.f32 %v2142, 0.0
    %v2146 = vld [vmem:[#allocation2 + $0x130] sm:$0xf]
    %v2147 = vld [vmem:[#allocation2 + $0x134] sm:$0xf]
    %v2148 = vld [vmem:[#allocation2 + $0x138] sm:$0xf]
    %v2149 = vld [vmem:[#allocation2 + $0x13c] sm:$0xf]
    %v2150 = vpack.c.bf16 %v2145, %v2145
    %v2151 = vld [vmem:[#allocation5 + $0x28] sm:$0x1]
    %v2152 = vperm.slane %v2151, 0
    %v2157 = vunpack.c.l.b16 %v2146
    %v2158 = vunpack.c.l.b16 %v2147
    %v2159 = vunpack.c.l.b16 %v2148
    %v2160 = vunpack.c.l.b16 %v2149
    %v2161 = vpack.c.b16 %v2158, %v2157
    %v2162 = vpack.c.b16 %v2160, %v2159
    %v2166 = vsel %vm167, %v2150, 0
    %2168 = vmatpush.bf16.msra.mxu0 0
    %2169 = vmatpush.bf16.msra.mxu0 0
    %2170 = vmatpush.bf16.msra.mxu0 0
    %2171 = vmatpush.bf16.msra.mxu0 0
    %2172 = vmatpush.bf16.msra.mxu0 0
    %2173 = vmatpush.bf16.msra.mxu0 0
    %2174 = vmatpush.bf16.msra.mxu0 %v2162
    %2175 = vmatpush.bf16.msra.mxu0 %v2161
    %2176 = vmatmul.bf16.gmra.mxu0 %v2166
    %v2177 = vpop.f32.mrf.mxu0
    %v2178 = vadd.f32 %v2152, %v2177
    %v2179 = vpop.f32.mrf.mxu0
    %v2180 = vadd.f32 %v2152, %v2179
    %2181 = vdwg.mxu0
    %v2182 = vmul.f32 %v2178, 0.35355338
    %v2183 = vmul.f32 %v2180, 0.35355338
    %v2184 = vld [vmem:[#allocation2 + $0x140] sm:$0xf]
    %v2185 = vld [vmem:[#allocation2 + $0x144] sm:$0xf]
    %v2186 = vld [vmem:[#allocation2 + $0x148] sm:$0xf]
    %v2187 = vld [vmem:[#allocation2 + $0x14c] sm:$0xf]
    %v2188 = vld [vmem:[#allocation5 + $0x29] sm:$0x1]
    %v2189 = vperm.slane %v2188, 0
    %v2194 = vunpack.c.l.b16 %v2184
    %v2195 = vunpack.c.l.b16 %v2185
    %v2196 = vunpack.c.l.b16 %v2186
    %v2197 = vunpack.c.l.b16 %v2187
    %v2198 = vpack.c.b16 %v2195, %v2194
    %v2199 = vpack.c.b16 %v2197, %v2196
    %v2203 = vsel %vm167, 0, 0
    %2205 = vmatpush.bf16.msra.mxu0 0
    %2206 = vmatpush.bf16.msra.mxu0 0
    %2207 = vmatpush.bf16.msra.mxu0 0
    %2208 = vmatpush.bf16.msra.mxu0 0
    %2209 = vmatpush.bf16.msra.mxu0 0
    %2210 = vmatpush.bf16.msra.mxu0 0
    %2211 = vmatpush.bf16.msra.mxu0 %v2199
    %2212 = vmatpush.bf16.msra.mxu0 %v2198
    %2213 = vmatmul.bf16.gmra.mxu0 %v2203
    %v2214 = vpop.f32.mrf.mxu0
    %v2215 = vadd.f32 %v2189, %v2214
    %v2216 = vpop.f32.mrf.mxu0
    %v2217 = vadd.f32 %v2189, %v2216
    %2218 = vdwg.mxu0
    %v2219 = vpack.c.bf16 %v2182, %v2182
    %v2220 = vpack.c.bf16 %v2183, %v2183
    %v2221 = vpack.c.bf16 %v2178, %v2178
    %v2222 = vpack.c.bf16 %v2180, %v2180
    %v2223 = vpack.c.bf16 %v2215, %v2215
    %v2224 = vpack.c.bf16 %v2217, %v2217
    %v2226 = vunpack.c.l.b16 %v2221
    %v2227 = vpack.c.b16 %v2226, %v2226
    %2228 = vrot.lane.b32.xlu0 %v2227, 96
    %v2229 = vpop.permute.xlu0 %2228
    %v2231 = vsel %vm402, %v2219, 0
    %v2234 = vsel %vm402, %v2229, 0
    %2236 = vmatpush.bf16.xpose.msra.mxu0 0
    %2237 = vmatpush.bf16.xpose.msra.mxu0 0
    %2238 = vmatpush.bf16.xpose.msra.mxu0 0
    %2239 = vmatpush.bf16.xpose.msra.mxu0 0
    %2240 = vmatpush.bf16.xpose.msra.mxu0 0
    %2241 = vmatpush.bf16.xpose.msra.mxu0 0
    %2242 = vmatpush.bf16.xpose.msra.mxu0 0
    %2243 = vmatpush.bf16.xpose.msra.mxu0 %v2234
    %2244 = vmatmul.bf16.gmra.mxu0 %v2231
    %v2245 = vpop.f32.mrf.mxu0
    %v2246 = vadd.f32 0.0, %v2245
    %v2247 = vpop.f32.mrf.mxu0
    %2248 = vdwg.mxu0
    %v2250 = vunpack.c.l.b16 %v2222
    %v2251 = vpack.c.b16 %v2250, %v2250
    %2252 = vrot.lane.b32.xlu0 %v2251, 96
    %v2253 = vpop.permute.xlu0 %2252
    %v2255 = vsel %vm402, %v2220, 0
    %v2258 = vsel %vm402, %v2253, 0
    %2260 = vmatpush.bf16.xpose.msra.mxu0 0
    %2261 = vmatpush.bf16.xpose.msra.mxu0 0
    %2262 = vmatpush.bf16.xpose.msra.mxu0 0
    %2263 = vmatpush.bf16.xpose.msra.mxu0 0
    %2264 = vmatpush.bf16.xpose.msra.mxu0 0
    %2265 = vmatpush.bf16.xpose.msra.mxu0 0
    %2266 = vmatpush.bf16.xpose.msra.mxu0 0
    %2267 = vmatpush.bf16.xpose.msra.mxu0 %v2258
    %2268 = vmatmul.bf16.gmra.mxu0 %v2255
    %v2269 = vpop.f32.mrf.mxu0
    %v2270 = vadd.f32 0.0, %v2269
    %v2271 = vpop.f32.mrf.mxu0
    %2272 = vdwg.mxu0
    %v2273 = vsel %vm402, %v2246, -inf
    %2274 = vmax.xlane.f32.xlu0 %v2273
    %v2275 = vpop.xlane.xlu0 %2274
    %v2276 = vsel %vm402, %v2270, -inf
    %2277 = vmax.xlane.f32.xlu0 %v2276
    %v2278 = vpop.xlane.xlu0 %2277
    %v2279 = vsub.f32 %v2246, %v2275
    %v2280 = vsub.f32 %v2270, %v2278
    %v2281 = vmul.f32 %v2279, 1.442695
    %v2282 = vpow.pop %v2281
    %v2283 = vmul.f32 %v2280, 1.442695
    %v2284 = vpow.pop %v2283
    %v2285 = vsel %vm402, %v2282, 0.0
    %2286 = vadd.xlane.f32.xlu0 %v2285
    %v2287 = vpop.xlane.xlu0 %2286
    %v2288 = vsel %vm402, %v2284, 0.0
    %2289 = vadd.xlane.f32.xlu0 %v2288
    %v2290 = vpop.xlane.xlu0 %2289
    %v2291 = vrcp.pop %v2287
    %v2292 = vmul.f32 %v2287, %v2291
    %v2293 = vsub.f32 1.0, %v2292
    %v2294 = vmul.f32 %v2291, %v2293
    %v2295 = vadd.f32 %v2291, %v2294
    %vm2296 = vweird.f32 %v2287
    %vm2297 = vweird.f32 %v2291
    %vm2298 = vmor %vm2296, %vm2297
    %v2299 = vsel %vm2298, %v2291, %v2295
    %v2300 = vand.u32 2147483647, %v2287
    %vm2301 = vcmp.eq.f32.partialorder %v2300, 8.507059e+37
    %v2302 = vand.u32 %v2287, 2147483648
    %v2303 = vor.u32 1.1754944e-38, %v2302
    %v2304 = vsel %vm2301, %v2303, %v2299
    %v2305 = vmul.f32 %v2282, %v2304
    %v2306 = vrcp.pop %v2290
    %v2307 = vmul.f32 %v2290, %v2306
    %v2308 = vsub.f32 1.0, %v2307
    %v2309 = vmul.f32 %v2306, %v2308
    %v2310 = vadd.f32 %v2306, %v2309
    %vm2311 = vweird.f32 %v2290
    %vm2312 = vweird.f32 %v2306
    %vm2313 = vmor %vm2311, %vm2312
    %v2314 = vsel %vm2313, %v2306, %v2310
    %v2315 = vand.u32 2147483647, %v2290
    %vm2316 = vcmp.eq.f32.partialorder %v2315, 8.507059e+37
    %v2317 = vand.u32 %v2290, 2147483648
    %v2318 = vor.u32 1.1754944e-38, %v2317
    %v2319 = vsel %vm2316, %v2318, %v2314
    %v2320 = vmul.f32 %v2284, %v2319
    %v2321 = vpack.c.bf16 %v2305, %v2305
    %v2322 = vpack.c.bf16 %v2320, %v2320
    %v2324 = vsel %vm402, %v2321, 0
    %v2327 = vsel %vm499, %v2223, 0
    %2329 = vmatpush.bf16.msra.mxu0 0
    %2330 = vmatpush.bf16.msra.mxu0 0
    %2331 = vmatpush.bf16.msra.mxu0 0
    %2332 = vmatpush.bf16.msra.mxu0 0
    %2333 = vmatpush.bf16.msra.mxu0 0
    %2334 = vmatpush.bf16.msra.mxu0 0
    %2335 = vmatpush.bf16.msra.mxu0 0
    %2336 = vmatpush.bf16.msra.mxu0 %v2327
    %2337 = vmatmul.bf16.gmra.mxu0 %v2324
    %v2338 = vpop.f32.mrf.mxu0
    %v2339 = vadd.f32 0.0, %v2338
    %v2340 = vpop.f32.mrf.mxu0
    %2341 = vdwg.mxu0
    %v2343 = vsel %vm402, %v2322, 0
    %v2346 = vsel %vm499, %v2224, 0
    %2348 = vmatpush.bf16.msra.mxu0 0
    %2349 = vmatpush.bf16.msra.mxu0 0
    %2350 = vmatpush.bf16.msra.mxu0 0
    %2351 = vmatpush.bf16.msra.mxu0 0
    %2352 = vmatpush.bf16.msra.mxu0 0
    %2353 = vmatpush.bf16.msra.mxu0 0
    %2354 = vmatpush.bf16.msra.mxu0 0
    %2355 = vmatpush.bf16.msra.mxu0 %v2346
    %2356 = vmatmul.bf16.gmra.mxu0 %v2343
    %v2357 = vpop.f32.mrf.mxu0
    %v2358 = vadd.f32 0.0, %v2357
    %v2359 = vpop.f32.mrf.mxu0
    %2360 = vdwg.mxu0
    %v2362 = vunpack.c.l.b16 %v2219
    %v2363 = vpack.c.b16 %v2362, %v2362
    %2364 = vrot.lane.b32.xlu0 %v2363, 120
    %v2365 = vpop.permute.xlu0 %2364
    %2366 = vrot.lane.b32.xlu0 %v2227, 88
    %v2367 = vpop.permute.xlu0 %2366
    %v2369 = vsel %vm402, %v2365, 0
    %v2372 = vsel %vm402, %v2367, 0
    %2374 = vmatpush.bf16.xpose.msra.mxu0 0
    %2375 = vmatpush.bf16.xpose.msra.mxu0 0
    %2376 = vmatpush.bf16.xpose.msra.mxu0 0
    %2377 = vmatpush.bf16.xpose.msra.mxu0 0
    %2378 = vmatpush.bf16.xpose.msra.mxu0 0
    %2379 = vmatpush.bf16.xpose.msra.mxu0 0
    %2380 = vmatpush.bf16.xpose.msra.mxu0 0
    %2381 = vmatpush.bf16.xpose.msra.mxu0 %v2372
    %2382 = vmatmul.bf16.gmra.mxu0 %v2369
    %v2383 = vpop.f32.mrf.mxu0
    %v2384 = vadd.f32 0.0, %v2383
    %v2385 = vpop.f32.mrf.mxu0
    %2386 = vdwg.mxu0
    %v2388 = vunpack.c.l.b16 %v2220
    %v2389 = vpack.c.b16 %v2388, %v2388
    %2390 = vrot.lane.b32.xlu0 %v2389, 120
    %v2391 = vpop.permute.xlu0 %2390
    %2392 = vrot.lane.b32.xlu0 %v2251, 88
    %v2393 = vpop.permute.xlu0 %2392
    %v2395 = vsel %vm402, %v2391, 0
    %v2398 = vsel %vm402, %v2393, 0
    %2400 = vmatpush.bf16.xpose.msra.mxu0 0
    %2401 = vmatpush.bf16.xpose.msra.mxu0 0
    %2402 = vmatpush.bf16.xpose.msra.mxu0 0
    %2403 = vmatpush.bf16.xpose.msra.mxu0 0
    %2404 = vmatpush.bf16.xpose.msra.mxu0 0
    %2405 = vmatpush.bf16.xpose.msra.mxu0 0
    %2406 = vmatpush.bf16.xpose.msra.mxu0 0
    %2407 = vmatpush.bf16.xpose.msra.mxu0 %v2398
    %2408 = vmatmul.bf16.gmra.mxu0 %v2395
    %v2409 = vpop.f32.mrf.mxu0
    %v2410 = vadd.f32 0.0, %v2409
    %v2411 = vpop.f32.mrf.mxu0
    %2412 = vdwg.mxu0
    %v2413 = vsel %vm402, %v2384, -inf
    %2414 = vmax.xlane.f32.xlu0 %v2413
    %v2415 = vpop.xlane.xlu0 %2414
    %v2416 = vsel %vm402, %v2410, -inf
    %2417 = vmax.xlane.f32.xlu0 %v2416
    %v2418 = vpop.xlane.xlu0 %2417
    %v2419 = vsub.f32 %v2384, %v2415
    %v2420 = vsub.f32 %v2410, %v2418
    %v2421 = vmul.f32 %v2419, 1.442695
    %v2422 = vpow.pop %v2421
    %v2423 = vmul.f32 %v2420, 1.442695
    %v2424 = vpow.pop %v2423
    %v2425 = vsel %vm402, %v2422, 0.0
    %2426 = vadd.xlane.f32.xlu0 %v2425
    %v2427 = vpop.xlane.xlu0 %2426
    %v2428 = vsel %vm402, %v2424, 0.0
    %2429 = vadd.xlane.f32.xlu0 %v2428
    %v2430 = vpop.xlane.xlu0 %2429
    %v2431 = vrcp.pop %v2427
    %v2432 = vmul.f32 %v2427, %v2431
    %v2433 = vsub.f32 1.0, %v2432
    %v2434 = vmul.f32 %v2431, %v2433
    %v2435 = vadd.f32 %v2431, %v2434
    %vm2436 = vweird.f32 %v2427
    %vm2437 = vweird.f32 %v2431
    %vm2438 = vmor %vm2436, %vm2437
    %v2439 = vsel %vm2438, %v2431, %v2435
    %v2440 = vand.u32 2147483647, %v2427
    %vm2441 = vcmp.eq.f32.partialorder %v2440, 8.507059e+37
    %v2442 = vand.u32 %v2427, 2147483648
    %v2443 = vor.u32 1.1754944e-38, %v2442
    %v2444 = vsel %vm2441, %v2443, %v2439
    %v2445 = vmul.f32 %v2422, %v2444
    %v2446 = vrcp.pop %v2430
    %v2447 = vmul.f32 %v2430, %v2446
    %v2448 = vsub.f32 1.0, %v2447
    %v2449 = vmul.f32 %v2446, %v2448
    %v2450 = vadd.f32 %v2446, %v2449
    %vm2451 = vweird.f32 %v2430
    %vm2452 = vweird.f32 %v2446
    %vm2453 = vmor %vm2451, %vm2452
    %v2454 = vsel %vm2453, %v2446, %v2450
    %v2455 = vand.u32 2147483647, %v2430
    %vm2456 = vcmp.eq.f32.partialorder %v2455, 8.507059e+37
    %v2457 = vand.u32 %v2430, 2147483648
    %v2458 = vor.u32 1.1754944e-38, %v2457
    %v2459 = vsel %vm2456, %v2458, %v2454
    %v2460 = vmul.f32 %v2424, %v2459
    %v2461 = vpack.c.bf16 %v2445, %v2445
    %v2462 = vpack.c.bf16 %v2460, %v2460
    %v2464 = vunpack.c.l.b16 %v2223
    %v2465 = vpack.c.b16 %v2464, %v2464
    %2466 = vrot.lane.b32.xlu0 %v2465, 120
    %v2467 = vpop.permute.xlu0 %2466
    %v2469 = vsel %vm402, %v2461, 0
    %v2472 = vsel %vm499, %v2467, 0
    %2474 = vmatpush.bf16.msra.mxu0 0
    %2475 = vmatpush.bf16.msra.mxu0 0
    %2476 = vmatpush.bf16.msra.mxu0 0
    %2477 = vmatpush.bf16.msra.mxu0 0
    %2478 = vmatpush.bf16.msra.mxu0 0
    %2479 = vmatpush.bf16.msra.mxu0 0
    %2480 = vmatpush.bf16.msra.mxu0 0
    %2481 = vmatpush.bf16.msra.mxu0 %v2472
    %2482 = vmatmul.bf16.gmra.mxu0 %v2469
    %v2483 = vpop.f32.mrf.mxu0
    %v2484 = vadd.f32 0.0, %v2483
    %v2485 = vpop.f32.mrf.mxu0
    %2486 = vdwg.mxu0
    %v2488 = vunpack.c.l.b16 %v2224
    %v2489 = vpack.c.b16 %v2488, %v2488
    %2490 = vrot.lane.b32.xlu0 %v2489, 120
    %v2491 = vpop.permute.xlu0 %2490
    %v2493 = vsel %vm402, %v2462, 0
    %v2496 = vsel %vm499, %v2491, 0
    %2498 = vmatpush.bf16.msra.mxu0 0
    %2499 = vmatpush.bf16.msra.mxu0 0
    %2500 = vmatpush.bf16.msra.mxu0 0
    %2501 = vmatpush.bf16.msra.mxu0 0
    %2502 = vmatpush.bf16.msra.mxu0 0
    %2503 = vmatpush.bf16.msra.mxu0 0
    %2504 = vmatpush.bf16.msra.mxu0 0
    %2505 = vmatpush.bf16.msra.mxu0 %v2496
    %2506 = vmatmul.bf16.gmra.mxu0 %v2493
    %v2507 = vpop.f32.mrf.mxu0
    %v2508 = vadd.f32 0.0, %v2507
    %v2509 = vpop.f32.mrf.mxu0
    %2510 = vdwg.mxu0
    %2511 = vrot.lane.b32.xlu0 %v2363, 112
    %v2512 = vpop.permute.xlu0 %2511
    %2513 = vrot.lane.b32.xlu0 %v2227, 80
    %v2514 = vpop.permute.xlu0 %2513
    %v2516 = vsel %vm402, %v2512, 0
    %v2519 = vsel %vm402, %v2514, 0
    %2521 = vmatpush.bf16.xpose.msra.mxu0 0
    %2522 = vmatpush.bf16.xpose.msra.mxu0 0
    %2523 = vmatpush.bf16.xpose.msra.mxu0 0
    %2524 = vmatpush.bf16.xpose.msra.mxu0 0
    %2525 = vmatpush.bf16.xpose.msra.mxu0 0
    %2526 = vmatpush.bf16.xpose.msra.mxu0 0
    %2527 = vmatpush.bf16.xpose.msra.mxu0 0
    %2528 = vmatpush.bf16.xpose.msra.mxu0 %v2519
    %2529 = vmatmul.bf16.gmra.mxu0 %v2516
    %v2530 = vpop.f32.mrf.mxu0
    %v2531 = vadd.f32 0.0, %v2530
    %v2532 = vpop.f32.mrf.mxu0
    %2533 = vdwg.mxu0
    %2534 = vrot.lane.b32.xlu0 %v2389, 112
    %v2535 = vpop.permute.xlu0 %2534
    %2536 = vrot.lane.b32.xlu0 %v2251, 80
    %v2537 = vpop.permute.xlu0 %2536
    %v2539 = vsel %vm402, %v2535, 0
    %v2542 = vsel %vm402, %v2537, 0
    %2544 = vmatpush.bf16.xpose.msra.mxu0 0
    %2545 = vmatpush.bf16.xpose.msra.mxu0 0
    %2546 = vmatpush.bf16.xpose.msra.mxu0 0
    %2547 = vmatpush.bf16.xpose.msra.mxu0 0
    %2548 = vmatpush.bf16.xpose.msra.mxu0 0
    %2549 = vmatpush.bf16.xpose.msra.mxu0 0
    %2550 = vmatpush.bf16.xpose.msra.mxu0 0
    %2551 = vmatpush.bf16.xpose.msra.mxu0 %v2542
    %2552 = vmatmul.bf16.gmra.mxu0 %v2539
    %v2553 = vpop.f32.mrf.mxu0
    %v2554 = vadd.f32 0.0, %v2553
    %v2555 = vpop.f32.mrf.mxu0
    %2556 = vdwg.mxu0
    %v2557 = vsel %vm402, %v2531, -inf
    %2558 = vmax.xlane.f32.xlu0 %v2557
    %v2559 = vpop.xlane.xlu0 %2558
    %v2560 = vsel %vm402, %v2554, -inf
    %2561 = vmax.xlane.f32.xlu0 %v2560
    %v2562 = vpop.xlane.xlu0 %2561
    %v2563 = vsub.f32 %v2531, %v2559
    %v2564 = vsub.f32 %v2554, %v2562
    %v2565 = vmul.f32 %v2563, 1.442695
    %v2566 = vpow.pop %v2565
    %v2567 = vmul.f32 %v2564, 1.442695
    %v2568 = vpow.pop %v2567
    %v2569 = vsel %vm402, %v2566, 0.0
    %2570 = vadd.xlane.f32.xlu0 %v2569
    %v2571 = vpop.xlane.xlu0 %2570
    %v2572 = vsel %vm402, %v2568, 0.0
    %2573 = vadd.xlane.f32.xlu0 %v2572
    %v2574 = vpop.xlane.xlu0 %2573
    %v2575 = vrcp.pop %v2571
    %v2576 = vmul.f32 %v2571, %v2575
    %v2577 = vsub.f32 1.0, %v2576
    %v2578 = vmul.f32 %v2575, %v2577
    %v2579 = vadd.f32 %v2575, %v2578
    %vm2580 = vweird.f32 %v2571
    %vm2581 = vweird.f32 %v2575
    %vm2582 = vmor %vm2580, %vm2581
    %v2583 = vsel %vm2582, %v2575, %v2579
    %v2584 = vand.u32 2147483647, %v2571
    %vm2585 = vcmp.eq.f32.partialorder %v2584, 8.507059e+37
    %v2586 = vand.u32 %v2571, 2147483648
    %v2587 = vor.u32 1.1754944e-38, %v2586
    %v2588 = vsel %vm2585, %v2587, %v2583
    %v2589 = vmul.f32 %v2566, %v2588
    %v2590 = vrcp.pop %v2574
    %v2591 = vmul.f32 %v2574, %v2590
    %v2592 = vsub.f32 1.0, %v2591
    %v2593 = vmul.f32 %v2590, %v2592
    %v2594 = vadd.f32 %v2590, %v2593
    %vm2595 = vweird.f32 %v2574
    %vm2596 = vweird.f32 %v2590
    %vm2597 = vmor %vm2595, %vm2596
    %v2598 = vsel %vm2597, %v2590, %v2594
    %v2599 = vand.u32 2147483647, %v2574
    %vm2600 = vcmp.eq.f32.partialorder %v2599, 8.507059e+37
    %v2601 = vand.u32 %v2574, 2147483648
    %v2602 = vor.u32 1.1754944e-38, %v2601
    %v2603 = vsel %vm2600, %v2602, %v2598
    %v2604 = vmul.f32 %v2568, %v2603
    %v2605 = vpack.c.bf16 %v2589, %v2589
    %v2606 = vpack.c.bf16 %v2604, %v2604
    %2607 = vrot.lane.b32.xlu0 %v2465, 112
    %v2608 = vpop.permute.xlu0 %2607
    %v2610 = vsel %vm402, %v2605, 0
    %v2613 = vsel %vm499, %v2608, 0
    %2615 = vmatpush.bf16.msra.mxu0 0
    %2616 = vmatpush.bf16.msra.mxu0 0
    %2617 = vmatpush.bf16.msra.mxu0 0
    %2618 = vmatpush.bf16.msra.mxu0 0
    %2619 = vmatpush.bf16.msra.mxu0 0
    %2620 = vmatpush.bf16.msra.mxu0 0
    %2621 = vmatpush.bf16.msra.mxu0 0
    %2622 = vmatpush.bf16.msra.mxu0 %v2613
    %2623 = vmatmul.bf16.gmra.mxu0 %v2610
    %v2624 = vpop.f32.mrf.mxu0
    %v2625 = vadd.f32 0.0, %v2624
    %v2626 = vpop.f32.mrf.mxu0
    %2627 = vdwg.mxu0
    %2628 = vrot.lane.b32.xlu0 %v2489, 112
    %v2629 = vpop.permute.xlu0 %2628
    %v2631 = vsel %vm402, %v2606, 0
    %v2634 = vsel %vm499, %v2629, 0
    %2636 = vmatpush.bf16.msra.mxu0 0
    %2637 = vmatpush.bf16.msra.mxu0 0
    %2638 = vmatpush.bf16.msra.mxu0 0
    %2639 = vmatpush.bf16.msra.mxu0 0
    %2640 = vmatpush.bf16.msra.mxu0 0
    %2641 = vmatpush.bf16.msra.mxu0 0
    %2642 = vmatpush.bf16.msra.mxu0 0
    %2643 = vmatpush.bf16.msra.mxu0 %v2634
    %2644 = vmatmul.bf16.gmra.mxu0 %v2631
    %v2645 = vpop.f32.mrf.mxu0
    %v2646 = vadd.f32 0.0, %v2645
    %v2647 = vpop.f32.mrf.mxu0
    %2648 = vdwg.mxu0
    %2649 = vrot.lane.b32.xlu0 %v2363, 104
    %v2650 = vpop.permute.xlu0 %2649
    %2651 = vrot.lane.b32.xlu0 %v2227, 72
    %v2652 = vpop.permute.xlu0 %2651
    %v2654 = vsel %vm402, %v2650, 0
    %v2657 = vsel %vm402, %v2652, 0
    %2659 = vmatpush.bf16.xpose.msra.mxu0 0
    %2660 = vmatpush.bf16.xpose.msra.mxu0 0
    %2661 = vmatpush.bf16.xpose.msra.mxu0 0
    %2662 = vmatpush.bf16.xpose.msra.mxu0 0
    %2663 = vmatpush.bf16.xpose.msra.mxu0 0
    %2664 = vmatpush.bf16.xpose.msra.mxu0 0
    %2665 = vmatpush.bf16.xpose.msra.mxu0 0
    %2666 = vmatpush.bf16.xpose.msra.mxu0 %v2657
    %2667 = vmatmul.bf16.gmra.mxu0 %v2654
    %v2668 = vpop.f32.mrf.mxu0
    %v2669 = vadd.f32 0.0, %v2668
    %v2670 = vpop.f32.mrf.mxu0
    %2671 = vdwg.mxu0
    %2672 = vrot.lane.b32.xlu0 %v2389, 104
    %v2673 = vpop.permute.xlu0 %2672
    %2674 = vrot.lane.b32.xlu0 %v2251, 72
    %v2675 = vpop.permute.xlu0 %2674
    %v2677 = vsel %vm402, %v2673, 0
    %v2680 = vsel %vm402, %v2675, 0
    %2682 = vmatpush.bf16.xpose.msra.mxu0 0
    %2683 = vmatpush.bf16.xpose.msra.mxu0 0
    %2684 = vmatpush.bf16.xpose.msra.mxu0 0
    %2685 = vmatpush.bf16.xpose.msra.mxu0 0
    %2686 = vmatpush.bf16.xpose.msra.mxu0 0
    %2687 = vmatpush.bf16.xpose.msra.mxu0 0
    %2688 = vmatpush.bf16.xpose.msra.mxu0 0
    %2689 = vmatpush.bf16.xpose.msra.mxu0 %v2680
    %2690 = vmatmul.bf16.gmra.mxu0 %v2677
    %v2691 = vpop.f32.mrf.mxu0
    %v2692 = vadd.f32 0.0, %v2691
    %v2693 = vpop.f32.mrf.mxu0
    %2694 = vdwg.mxu0
    %v2695 = vsel %vm402, %v2669, -inf
    %2696 = vmax.xlane.f32.xlu0 %v2695
    %v2697 = vpop.xlane.xlu0 %2696
    %v2698 = vsel %vm402, %v2692, -inf
    %2699 = vmax.xlane.f32.xlu0 %v2698
    %v2700 = vpop.xlane.xlu0 %2699
    %v2701 = vsub.f32 %v2669, %v2697
    %v2702 = vsub.f32 %v2692, %v2700
    %v2703 = vmul.f32 %v2701, 1.442695
    %v2704 = vpow.pop %v2703
    %v2705 = vmul.f32 %v2702, 1.442695
    %v2706 = vpow.pop %v2705
    %v2707 = vsel %vm402, %v2704, 0.0
    %2708 = vadd.xlane.f32.xlu0 %v2707
    %v2709 = vpop.xlane.xlu0 %2708
    %v2710 = vsel %vm402, %v2706, 0.0
    %2711 = vadd.xlane.f32.xlu0 %v2710
    %v2712 = vpop.xlane.xlu0 %2711
    %v2713 = vrcp.pop %v2709
    %v2714 = vmul.f32 %v2709, %v2713
    %v2715 = vsub.f32 1.0, %v2714
    %v2716 = vmul.f32 %v2713, %v2715
    %v2717 = vadd.f32 %v2713, %v2716
    %vm2718 = vweird.f32 %v2709
    %vm2719 = vweird.f32 %v2713
    %vm2720 = vmor %vm2718, %vm2719
    %v2721 = vsel %vm2720, %v2713, %v2717
    %v2722 = vand.u32 2147483647, %v2709
    %vm2723 = vcmp.eq.f32.partialorder %v2722, 8.507059e+37
    %v2724 = vand.u32 %v2709, 2147483648
    %v2725 = vor.u32 1.1754944e-38, %v2724
    %v2726 = vsel %vm2723, %v2725, %v2721
    %v2727 = vmul.f32 %v2704, %v2726
    %v2728 = vrcp.pop %v2712
    %v2729 = vmul.f32 %v2712, %v2728
    %v2730 = vsub.f32 1.0, %v2729
    %v2731 = vmul.f32 %v2728, %v2730
    %v2732 = vadd.f32 %v2728, %v2731
    %vm2733 = vweird.f32 %v2712
    %vm2734 = vweird.f32 %v2728
    %vm2735 = vmor %vm2733, %vm2734
    %v2736 = vsel %vm2735, %v2728, %v2732
    %v2737 = vand.u32 2147483647, %v2712
    %vm2738 = vcmp.eq.f32.partialorder %v2737, 8.507059e+37
    %v2739 = vand.u32 %v2712, 2147483648
    %v2740 = vor.u32 1.1754944e-38, %v2739
    %v2741 = vsel %vm2738, %v2740, %v2736
    %v2742 = vmul.f32 %v2706, %v2741
    %v2743 = vpack.c.bf16 %v2727, %v2727
    %v2744 = vpack.c.bf16 %v2742, %v2742
    %2745 = vrot.lane.b32.xlu0 %v2465, 104
    %v2746 = vpop.permute.xlu0 %2745
    %v2748 = vsel %vm402, %v2743, 0
    %v2751 = vsel %vm499, %v2746, 0
    %2753 = vmatpush.bf16.msra.mxu0 0
    %2754 = vmatpush.bf16.msra.mxu0 0
    %2755 = vmatpush.bf16.msra.mxu0 0
    %2756 = vmatpush.bf16.msra.mxu0 0
    %2757 = vmatpush.bf16.msra.mxu0 0
    %2758 = vmatpush.bf16.msra.mxu0 0
    %2759 = vmatpush.bf16.msra.mxu0 0
    %2760 = vmatpush.bf16.msra.mxu0 %v2751
    %2761 = vmatmul.bf16.gmra.mxu0 %v2748
    %v2762 = vpop.f32.mrf.mxu0
    %v2763 = vadd.f32 0.0, %v2762
    %v2764 = vpop.f32.mrf.mxu0
    %2765 = vdwg.mxu0
    %2766 = vrot.lane.b32.xlu0 %v2489, 104
    %v2767 = vpop.permute.xlu0 %2766
    %v2769 = vsel %vm402, %v2744, 0
    %v2772 = vsel %vm499, %v2767, 0
    %2774 = vmatpush.bf16.msra.mxu0 0
    %2775 = vmatpush.bf16.msra.mxu0 0
    %2776 = vmatpush.bf16.msra.mxu0 0
    %2777 = vmatpush.bf16.msra.mxu0 0
    %2778 = vmatpush.bf16.msra.mxu0 0
    %2779 = vmatpush.bf16.msra.mxu0 0
    %2780 = vmatpush.bf16.msra.mxu0 0
    %2781 = vmatpush.bf16.msra.mxu0 %v2772
    %2782 = vmatmul.bf16.gmra.mxu0 %v2769
    %v2783 = vpop.f32.mrf.mxu0
    %v2784 = vadd.f32 0.0, %v2783
    %v2785 = vpop.f32.mrf.mxu0
    %2786 = vdwg.mxu0
    %2789 = vrot.lane.b32.xlu0 %v2484, 8
    %v2790 = vpop.permute.xlu0 %2789
    %2791 = vrot.lane.b32.xlu0 %v2508, 8
    %v2792 = vpop.permute.xlu0 %2791
    %2797 = vrot.lane.b32.xlu0 %v2625, 16
    %v2798 = vpop.permute.xlu0 %2797
    %2799 = vrot.lane.b32.xlu0 %v2646, 16
    %v2800 = vpop.permute.xlu0 %2799
    %2805 = vrot.lane.b32.xlu0 %v2763, 24
    %v2806 = vpop.permute.xlu0 %2805
    %2807 = vrot.lane.b32.xlu0 %v2784, 24
    %v2808 = vpop.permute.xlu0 %2807
    %v2811 = vsel %vm402, %v2339, %v2790
    %v2812 = vsel %vm402, %v2358, %v2792
    %v2813 = vsel %vm987, %v2811, %v2798
    %v2814 = vsel %vm987, %v2812, %v2800
    %v2815 = vsel %vm990, %v2813, %v2806
    %v2816 = vsel %vm990, %v2814, %v2808
    %v2817 = vld [vmem:[#allocation2 + $0x150] sm:$0xf]
    %v2818 = vld [vmem:[#allocation2 + $0x154] sm:$0xf]
    %v2819 = vld [vmem:[#allocation2 + $0x158] sm:$0xf]
    %v2820 = vld [vmem:[#allocation2 + $0x15c] sm:$0xf]
    %v2821 = vpack.c.bf16 %v2816, %v2815
    %v2822 = vld [vmem:[#allocation5 + $0x2a] sm:$0x1]
    %v2823 = vperm.slane %v2822, 0
    %v2828 = vunpack.c.l.b16 %v2817
    %v2829 = vunpack.c.l.b16 %v2818
    %v2830 = vunpack.c.l.b16 %v2819
    %v2831 = vunpack.c.l.b16 %v2820
    %v2832 = vpack.c.b16 %v2829, %v2828
    %v2833 = vpack.c.b16 %v2831, %v2830
    %v2837 = vsel %vm167, %v2821, 0
    %2839 = vmatpush.bf16.msra.mxu0 0
    %2840 = vmatpush.bf16.msra.mxu0 0
    %2841 = vmatpush.bf16.msra.mxu0 0
    %2842 = vmatpush.bf16.msra.mxu0 0
    %2843 = vmatpush.bf16.msra.mxu0 0
    %2844 = vmatpush.bf16.msra.mxu0 0
    %2845 = vmatpush.bf16.msra.mxu0 %v2833
    %2846 = vmatpush.bf16.msra.mxu0 %v2832
    %2847 = vmatmul.bf16.gmra.mxu0 %v2837
    %v2848 = vpop.f32.mrf.mxu0
    %v2849 = vadd.f32 %v2823, %v2848
    %v2850 = vpop.f32.mrf.mxu0
    %v2851 = vadd.f32 %v2823, %v2850
    %2852 = vdwg.mxu0
    %v2853 = vadd.f32 %v2849, 0.0
    %v2854 = vadd.f32 %v2851, 0.0
    %v2855 = vld [vmem:[#allocation5 + $0x2b] sm:$0x1]
    %v2856 = vld [vmem:[#allocation5 + $0x2c] sm:$0x1]
    %v2857 = vsel %vm167, %v2853, 0.0
    %2858 = vadd.xlane.f32.xlu0 %v2857
    %v2859 = vpop.xlane.xlu0 %2858
    %v2860 = vsel %vm167, %v2854, 0.0
    %2861 = vadd.xlane.f32.xlu0 %v2860
    %v2862 = vpop.xlane.xlu0 %2861
    %v2863 = vmul.f32 %v2859, %v1045
    %v2864 = vmul.f32 %v2862, %v1045
    %v2865 = vsub.f32 %v2853, %v2863
    %v2866 = vsub.f32 %v2854, %v2864
    %v2867 = vmul.f32 %v2865, %v2865
    %v2868 = vmul.f32 %v2866, %v2866
    %v2869 = vsel %vm167, %v2867, 0.0
    %2870 = vadd.xlane.f32.xlu0 %v2869
    %v2871 = vpop.xlane.xlu0 %2870
    %v2872 = vsel %vm167, %v2868, 0.0
    %2873 = vadd.xlane.f32.xlu0 %v2872
    %v2874 = vpop.xlane.xlu0 %2873
    %v2875 = vmul.f32 %v2871, %v1045
    %v2876 = vmul.f32 %v2874, %v1045
    %v2877 = vadd.f32 %v2875, 1e-05
    %v2878 = vadd.f32 %v2876, 1e-05
    %v2879 = vrsqrt.pop %v2877
    %v2880 = vmul.f32 %v2879, %v2877
    %v2881 = vmul.f32 %v2880, %v2879
    %v2882 = vmul.f32 0.5, %v2881
    %v2883 = vsub.f32 1.5, %v2882
    %v2884 = vmul.f32 %v2879, %v2883
    %vm2885 = vweird.f32 %v2877
    %vm2886 = vweird.f32 %v2879
    %vm2887 = vmor %vm2885, %vm2886
    %v2888 = vsel %vm2887, %v2879, %v2884
    %v2889 = vrsqrt.pop %v2878
    %v2890 = vmul.f32 %v2889, %v2878
    %v2891 = vmul.f32 %v2890, %v2889
    %v2892 = vmul.f32 0.5, %v2891
    %v2893 = vsub.f32 1.5, %v2892
    %v2894 = vmul.f32 %v2889, %v2893
    %vm2895 = vweird.f32 %v2878
    %vm2896 = vweird.f32 %v2889
    %vm2897 = vmor %vm2895, %vm2896
    %v2898 = vsel %vm2897, %v2889, %v2894
    %v2899 = vmul.f32 %v2865, %v2888
    %v2900 = vmul.f32 %v2866, %v2898
    %v2901 = vperm.slane %v2855, 0
    %v2902 = vmul.f32 %v2899, %v2901
    %v2903 = vmul.f32 %v2900, %v2901
    %v2904 = vperm.slane %v2856, 0
    %v2905 = vadd.f32 %v2902, %v2904
    %v2906 = vadd.f32 %v2903, %v2904
    %v2907 = vadd.f32 %v2905, %v2142
    %v2908 = vadd.f32 %v2906, %v2142
    %v2909 = vld [vmem:[#allocation2 + $0x160] sm:$0xf]
    %v2910 = vld [vmem:[#allocation2 + $0x164] sm:$0xf]
    %v2911 = vld [vmem:[#allocation2 + $0x168] sm:$0xf]
    %v2912 = vld [vmem:[#allocation2 + $0x16c] sm:$0xf]
    %v2913 = vpack.c.bf16 %v2908, %v2907
    %v2914 = vld [vmem:[#allocation5 + $0x2d] sm:$0x1]
    %v2915 = vperm.slane %v2914, 0
    %v2920 = vunpack.c.l.b16 %v2909
    %v2921 = vunpack.c.l.b16 %v2910
    %v2922 = vunpack.c.l.b16 %v2911
    %v2923 = vunpack.c.l.b16 %v2912
    %v2924 = vpack.c.b16 %v2921, %v2920
    %v2925 = vpack.c.b16 %v2923, %v2922
    %v2929 = vsel %vm167, %v2913, 0
    %2931 = vmatpush.bf16.msra.mxu0 0
    %2932 = vmatpush.bf16.msra.mxu0 0
    %2933 = vmatpush.bf16.msra.mxu0 0
    %2934 = vmatpush.bf16.msra.mxu0 0
    %2935 = vmatpush.bf16.msra.mxu0 0
    %2936 = vmatpush.bf16.msra.mxu0 0
    %2937 = vmatpush.bf16.msra.mxu0 %v2925
    %2938 = vmatpush.bf16.msra.mxu0 %v2924
    %2939 = vmatmul.bf16.gmra.mxu0 %v2929
    %v2940 = vpop.f32.mrf.mxu0
    %v2941 = vadd.f32 %v2915, %v2940
    %v2942 = vpop.f32.mrf.mxu0
    %v2943 = vadd.f32 %v2915, %v2942
    %2944 = vdwg.mxu0
    %v2945 = vmul.f32 %v2941, 0.35355338
    %v2946 = vmul.f32 %v2943, 0.35355338
    %v2947 = vld [vmem:[#allocation2 + $0x170] sm:$0xf]
    %v2948 = vld [vmem:[#allocation2 + $0x174] sm:$0xf]
    %v2949 = vld [vmem:[#allocation2 + $0x178] sm:$0xf]
    %v2950 = vld [vmem:[#allocation2 + $0x17c] sm:$0xf]
    %v2951 = vpack.c.bf16 %v2144, %v2143
    %v2952 = vld [vmem:[#allocation5 + $0x2e] sm:$0x1]
    %v2953 = vperm.slane %v2952, 0
    %v2958 = vunpack.c.l.b16 %v2947
    %v2959 = vunpack.c.l.b16 %v2948
    %v2960 = vunpack.c.l.b16 %v2949
    %v2961 = vunpack.c.l.b16 %v2950
    %v2962 = vpack.c.b16 %v2959, %v2958
    %v2963 = vpack.c.b16 %v2961, %v2960
    %v2967 = vsel %vm167, %v2951, 0
    %2969 = vmatpush.bf16.msra.mxu0 0
    %2970 = vmatpush.bf16.msra.mxu0 0
    %2971 = vmatpush.bf16.msra.mxu0 0
    %2972 = vmatpush.bf16.msra.mxu0 0
    %2973 = vmatpush.bf16.msra.mxu0 0
    %2974 = vmatpush.bf16.msra.mxu0 0
    %2975 = vmatpush.bf16.msra.mxu0 %v2963
    %2976 = vmatpush.bf16.msra.mxu0 %v2962
    %2977 = vmatmul.bf16.gmra.mxu0 %v2967
    %v2978 = vpop.f32.mrf.mxu0
    %v2979 = vadd.f32 %v2953, %v2978
    %v2980 = vpop.f32.mrf.mxu0
    %v2981 = vadd.f32 %v2953, %v2980
    %2982 = vdwg.mxu0
    %v2983 = vld [vmem:[#allocation2 + $0x180] sm:$0xf]
    %v2984 = vld [vmem:[#allocation2 + $0x184] sm:$0xf]
    %v2985 = vld [vmem:[#allocation2 + $0x188] sm:$0xf]
    %v2986 = vld [vmem:[#allocation2 + $0x18c] sm:$0xf]
    %v2987 = vpack.c.bf16 %v2141, %v2140
    %v2988 = vld [vmem:[#allocation5 + $0x2f] sm:$0x1]
    %v2989 = vperm.slane %v2988, 0
    %v2994 = vunpack.c.l.b16 %v2983
    %v2995 = vunpack.c.l.b16 %v2984
    %v2996 = vunpack.c.l.b16 %v2985
    %v2997 = vunpack.c.l.b16 %v2986
    %v2998 = vpack.c.b16 %v2995, %v2994
    %v2999 = vpack.c.b16 %v2997, %v2996
    %v3003 = vsel %vm167, %v2987, 0
    %3005 = vmatpush.bf16.msra.mxu0 0
    %3006 = vmatpush.bf16.msra.mxu0 0
    %3007 = vmatpush.bf16.msra.mxu0 0
    %3008 = vmatpush.bf16.msra.mxu0 0
    %3009 = vmatpush.bf16.msra.mxu0 0
    %3010 = vmatpush.bf16.msra.mxu0 0
    %3011 = vmatpush.bf16.msra.mxu0 %v2999
    %3012 = vmatpush.bf16.msra.mxu0 %v2998
    %3013 = vmatmul.bf16.gmra.mxu0 %v3003
    %v3014 = vpop.f32.mrf.mxu0
    %v3015 = vadd.f32 %v2989, %v3014
    %v3016 = vpop.f32.mrf.mxu0
    %v3017 = vadd.f32 %v2989, %v3016
    %3018 = vdwg.mxu0
    %v3019 = vpack.c.bf16 %v2945, %v2945
    %v3020 = vpack.c.bf16 %v2946, %v2946
    %v3021 = vpack.c.bf16 %v2979, %v2979
    %v3022 = vpack.c.bf16 %v2981, %v2981
    %v3023 = vpack.c.bf16 %v3015, %v3015
    %v3024 = vpack.c.bf16 %v3017, %v3017
    %v3026 = vsel %vm402, %v3019, 0
    %v3029 = vsel %vm402, %v3021, 0
    %3031 = vmatpush.bf16.xpose.msra.mxu0 0
    %3032 = vmatpush.bf16.xpose.msra.mxu0 0
    %3033 = vmatpush.bf16.xpose.msra.mxu0 0
    %3034 = vmatpush.bf16.xpose.msra.mxu0 0
    %3035 = vmatpush.bf16.xpose.msra.mxu0 0
    %3036 = vmatpush.bf16.xpose.msra.mxu0 0
    %3037 = vmatpush.bf16.xpose.msra.mxu0 0
    %3038 = vmatpush.bf16.xpose.msra.mxu0 %v3029
    %3039 = vmatmul.bf16.gmra.mxu0 %v3026
    %v3040 = vpop.f32.mrf.mxu0
    %v3041 = vadd.f32 0.0, %v3040
    %v3042 = vpop.f32.mrf.mxu0
    %3043 = vdwg.mxu0
    %v3045 = vsel %vm402, %v3020, 0
    %v3048 = vsel %vm402, %v3022, 0
    %3050 = vmatpush.bf16.xpose.msra.mxu0 0
    %3051 = vmatpush.bf16.xpose.msra.mxu0 0
    %3052 = vmatpush.bf16.xpose.msra.mxu0 0
    %3053 = vmatpush.bf16.xpose.msra.mxu0 0
    %3054 = vmatpush.bf16.xpose.msra.mxu0 0
    %3055 = vmatpush.bf16.xpose.msra.mxu0 0
    %3056 = vmatpush.bf16.xpose.msra.mxu0 0
    %3057 = vmatpush.bf16.xpose.msra.mxu0 %v3048
    %3058 = vmatmul.bf16.gmra.mxu0 %v3045
    %v3059 = vpop.f32.mrf.mxu0
    %v3060 = vadd.f32 0.0, %v3059
    %v3061 = vpop.f32.mrf.mxu0
    %3062 = vdwg.mxu0
    %v3063 = vsel %vm402, %v3041, -inf
    %3064 = vmax.xlane.f32.xlu0 %v3063
    %v3065 = vpop.xlane.xlu0 %3064
    %v3066 = vsel %vm402, %v3060, -inf
    %3067 = vmax.xlane.f32.xlu0 %v3066
    %v3068 = vpop.xlane.xlu0 %3067
    %v3069 = vsub.f32 %v3041, %v3065
    %v3070 = vsub.f32 %v3060, %v3068
    %v3071 = vmul.f32 %v3069, 1.442695
    %v3072 = vpow.pop %v3071
    %v3073 = vmul.f32 %v3070, 1.442695
    %v3074 = vpow.pop %v3073
    %v3075 = vsel %vm402, %v3072, 0.0
    %3076 = vadd.xlane.f32.xlu0 %v3075
    %v3077 = vpop.xlane.xlu0 %3076
    %v3078 = vsel %vm402, %v3074, 0.0
    %3079 = vadd.xlane.f32.xlu0 %v3078
    %v3080 = vpop.xlane.xlu0 %3079
    %v3081 = vrcp.pop %v3077
    %v3082 = vmul.f32 %v3077, %v3081
    %v3083 = vsub.f32 1.0, %v3082
    %v3084 = vmul.f32 %v3081, %v3083
    %v3085 = vadd.f32 %v3081, %v3084
    %vm3086 = vweird.f32 %v3077
    %vm3087 = vweird.f32 %v3081
    %vm3088 = vmor %vm3086, %vm3087
    %v3089 = vsel %vm3088, %v3081, %v3085
    %v3090 = vand.u32 2147483647, %v3077
    %vm3091 = vcmp.eq.f32.partialorder %v3090, 8.507059e+37
    %v3092 = vand.u32 %v3077, 2147483648
    %v3093 = vor.u32 1.1754944e-38, %v3092
    %v3094 = vsel %vm3091, %v3093, %v3089
    %v3095 = vmul.f32 %v3072, %v3094
    %v3096 = vrcp.pop %v3080
    %v3097 = vmul.f32 %v3080, %v3096
    %v3098 = vsub.f32 1.0, %v3097
    %v3099 = vmul.f32 %v3096, %v3098
    %v3100 = vadd.f32 %v3096, %v3099
    %vm3101 = vweird.f32 %v3080
    %vm3102 = vweird.f32 %v3096
    %vm3103 = vmor %vm3101, %vm3102
    %v3104 = vsel %vm3103, %v3096, %v3100
    %v3105 = vand.u32 2147483647, %v3080
    %vm3106 = vcmp.eq.f32.partialorder %v3105, 8.507059e+37
    %v3107 = vand.u32 %v3080, 2147483648
    %v3108 = vor.u32 1.1754944e-38, %v3107
    %v3109 = vsel %vm3106, %v3108, %v3104
    %v3110 = vmul.f32 %v3074, %v3109
    %v3111 = vpack.c.bf16 %v3095, %v3095
    %v3112 = vpack.c.bf16 %v3110, %v3110
    %v3114 = vsel %vm402, %v3111, 0
    %v3117 = vsel %vm499, %v3023, 0
    %3119 = vmatpush.bf16.msra.mxu0 0
    %3120 = vmatpush.bf16.msra.mxu0 0
    %3121 = vmatpush.bf16.msra.mxu0 0
    %3122 = vmatpush.bf16.msra.mxu0 0
    %3123 = vmatpush.bf16.msra.mxu0 0
    %3124 = vmatpush.bf16.msra.mxu0 0
    %3125 = vmatpush.bf16.msra.mxu0 0
    %3126 = vmatpush.bf16.msra.mxu0 %v3117
    %3127 = vmatmul.bf16.gmra.mxu0 %v3114
    %v3128 = vpop.f32.mrf.mxu0
    %v3129 = vadd.f32 0.0, %v3128
    %v3130 = vpop.f32.mrf.mxu0
    %3131 = vdwg.mxu0
    %v3133 = vsel %vm402, %v3112, 0
    %v3136 = vsel %vm499, %v3024, 0
    %3138 = vmatpush.bf16.msra.mxu0 0
    %3139 = vmatpush.bf16.msra.mxu0 0
    %3140 = vmatpush.bf16.msra.mxu0 0
    %3141 = vmatpush.bf16.msra.mxu0 0
    %3142 = vmatpush.bf16.msra.mxu0 0
    %3143 = vmatpush.bf16.msra.mxu0 0
    %3144 = vmatpush.bf16.msra.mxu0 0
    %3145 = vmatpush.bf16.msra.mxu0 %v3136
    %3146 = vmatmul.bf16.gmra.mxu0 %v3133
    %v3147 = vpop.f32.mrf.mxu0
    %v3148 = vadd.f32 0.0, %v3147
    %v3149 = vpop.f32.mrf.mxu0
    %3150 = vdwg.mxu0
    %v3152 = vunpack.c.l.b16 %v3019
    %v3153 = vpack.c.b16 %v3152, %v3152
    %3154 = vrot.lane.b32.xlu0 %v3153, 120
    %v3155 = vpop.permute.xlu0 %3154
    %v3157 = vunpack.c.l.b16 %v3021
    %v3158 = vpack.c.b16 %v3157, %v3157
    %3159 = vrot.lane.b32.xlu0 %v3158, 120
    %v3160 = vpop.permute.xlu0 %3159
    %v3162 = vsel %vm402, %v3155, 0
    %v3165 = vsel %vm402, %v3160, 0
    %3167 = vmatpush.bf16.xpose.msra.mxu0 0
    %3168 = vmatpush.bf16.xpose.msra.mxu0 0
    %3169 = vmatpush.bf16.xpose.msra.mxu0 0
    %3170 = vmatpush.bf16.xpose.msra.mxu0 0
    %3171 = vmatpush.bf16.xpose.msra.mxu0 0
    %3172 = vmatpush.bf16.xpose.msra.mxu0 0
    %3173 = vmatpush.bf16.xpose.msra.mxu0 0
    %3174 = vmatpush.bf16.xpose.msra.mxu0 %v3165
    %3175 = vmatmul.bf16.gmra.mxu0 %v3162
    %v3176 = vpop.f32.mrf.mxu0
    %v3177 = vadd.f32 0.0, %v3176
    %v3178 = vpop.f32.mrf.mxu0
    %3179 = vdwg.mxu0
    %v3181 = vunpack.c.l.b16 %v3020
    %v3182 = vpack.c.b16 %v3181, %v3181
    %3183 = vrot.lane.b32.xlu0 %v3182, 120
    %v3184 = vpop.permute.xlu0 %3183
    %v3186 = vunpack.c.l.b16 %v3022
    %v3187 = vpack.c.b16 %v3186, %v3186
    %3188 = vrot.lane.b32.xlu0 %v3187, 120
    %v3189 = vpop.permute.xlu0 %3188
    %v3191 = vsel %vm402, %v3184, 0
    %v3194 = vsel %vm402, %v3189, 0
    %3196 = vmatpush.bf16.xpose.msra.mxu0 0
    %3197 = vmatpush.bf16.xpose.msra.mxu0 0
    %3198 = vmatpush.bf16.xpose.msra.mxu0 0
    %3199 = vmatpush.bf16.xpose.msra.mxu0 0
    %3200 = vmatpush.bf16.xpose.msra.mxu0 0
    %3201 = vmatpush.bf16.xpose.msra.mxu0 0
    %3202 = vmatpush.bf16.xpose.msra.mxu0 0
    %3203 = vmatpush.bf16.xpose.msra.mxu0 %v3194
    %3204 = vmatmul.bf16.gmra.mxu0 %v3191
    %v3205 = vpop.f32.mrf.mxu0
    %v3206 = vadd.f32 0.0, %v3205
    %v3207 = vpop.f32.mrf.mxu0
    %3208 = vdwg.mxu0
    %v3209 = vsel %vm402, %v3177, -inf
    %3210 = vmax.xlane.f32.xlu0 %v3209
    %v3211 = vpop.xlane.xlu0 %3210
    %v3212 = vsel %vm402, %v3206, -inf
    %3213 = vmax.xlane.f32.xlu0 %v3212
    %v3214 = vpop.xlane.xlu0 %3213
    %v3215 = vsub.f32 %v3177, %v3211
    %v3216 = vsub.f32 %v3206, %v3214
    %v3217 = vmul.f32 %v3215, 1.442695
    %v3218 = vpow.pop %v3217
    %v3219 = vmul.f32 %v3216, 1.442695
    %v3220 = vpow.pop %v3219
    %v3221 = vsel %vm402, %v3218, 0.0
    %3222 = vadd.xlane.f32.xlu0 %v3221
    %v3223 = vpop.xlane.xlu0 %3222
    %v3224 = vsel %vm402, %v3220, 0.0
    %3225 = vadd.xlane.f32.xlu0 %v3224
    %v3226 = vpop.xlane.xlu0 %3225
    %v3227 = vrcp.pop %v3223
    %v3228 = vmul.f32 %v3223, %v3227
    %v3229 = vsub.f32 1.0, %v3228
    %v3230 = vmul.f32 %v3227, %v3229
    %v3231 = vadd.f32 %v3227, %v3230
    %vm3232 = vweird.f32 %v3223
    %vm3233 = vweird.f32 %v3227
    %vm3234 = vmor %vm3232, %vm3233
    %v3235 = vsel %vm3234, %v3227, %v3231
    %v3236 = vand.u32 2147483647, %v3223
    %vm3237 = vcmp.eq.f32.partialorder %v3236, 8.507059e+37
    %v3238 = vand.u32 %v3223, 2147483648
    %v3239 = vor.u32 1.1754944e-38, %v3238
    %v3240 = vsel %vm3237, %v3239, %v3235
    %v3241 = vmul.f32 %v3218, %v3240
    %v3242 = vrcp.pop %v3226
    %v3243 = vmul.f32 %v3226, %v3242
    %v3244 = vsub.f32 1.0, %v3243
    %v3245 = vmul.f32 %v3242, %v3244
    %v3246 = vadd.f32 %v3242, %v3245
    %vm3247 = vweird.f32 %v3226
    %vm3248 = vweird.f32 %v3242
    %vm3249 = vmor %vm3247, %vm3248
    %v3250 = vsel %vm3249, %v3242, %v3246
    %v3251 = vand.u32 2147483647, %v3226
    %vm3252 = vcmp.eq.f32.partialorder %v3251, 8.507059e+37
    %v3253 = vand.u32 %v3226, 2147483648
    %v3254 = vor.u32 1.1754944e-38, %v3253
    %v3255 = vsel %vm3252, %v3254, %v3250
    %v3256 = vmul.f32 %v3220, %v3255
    %v3257 = vpack.c.bf16 %v3241, %v3241
    %v3258 = vpack.c.bf16 %v3256, %v3256
    %v3260 = vunpack.c.l.b16 %v3023
    %v3261 = vpack.c.b16 %v3260, %v3260
    %3262 = vrot.lane.b32.xlu0 %v3261, 120
    %v3263 = vpop.permute.xlu0 %3262
    %v3265 = vsel %vm402, %v3257, 0
    %v3268 = vsel %vm499, %v3263, 0
    %3270 = vmatpush.bf16.msra.mxu0 0
    %3271 = vmatpush.bf16.msra.mxu0 0
    %3272 = vmatpush.bf16.msra.mxu0 0
    %3273 = vmatpush.bf16.msra.mxu0 0
    %3274 = vmatpush.bf16.msra.mxu0 0
    %3275 = vmatpush.bf16.msra.mxu0 0
    %3276 = vmatpush.bf16.msra.mxu0 0
    %3277 = vmatpush.bf16.msra.mxu0 %v3268
    %3278 = vmatmul.bf16.gmra.mxu0 %v3265
    %v3279 = vpop.f32.mrf.mxu0
    %v3280 = vadd.f32 0.0, %v3279
    %v3281 = vpop.f32.mrf.mxu0
    %3282 = vdwg.mxu0
    %v3284 = vunpack.c.l.b16 %v3024
    %v3285 = vpack.c.b16 %v3284, %v3284
    %3286 = vrot.lane.b32.xlu0 %v3285, 120
    %v3287 = vpop.permute.xlu0 %3286
    %v3289 = vsel %vm402, %v3258, 0
    %v3292 = vsel %vm499, %v3287, 0
    %3294 = vmatpush.bf16.msra.mxu0 0
    %3295 = vmatpush.bf16.msra.mxu0 0
    %3296 = vmatpush.bf16.msra.mxu0 0
    %3297 = vmatpush.bf16.msra.mxu0 0
    %3298 = vmatpush.bf16.msra.mxu0 0
    %3299 = vmatpush.bf16.msra.mxu0 0
    %3300 = vmatpush.bf16.msra.mxu0 0
    %3301 = vmatpush.bf16.msra.mxu0 %v3292
    %3302 = vmatmul.bf16.gmra.mxu0 %v3289
    %v3303 = vpop.f32.mrf.mxu0
    %v3304 = vadd.f32 0.0, %v3303
    %v3305 = vpop.f32.mrf.mxu0
    %3306 = vdwg.mxu0
    %3307 = vrot.lane.b32.xlu0 %v3153, 112
    %v3308 = vpop.permute.xlu0 %3307
    %3309 = vrot.lane.b32.xlu0 %v3158, 112
    %v3310 = vpop.permute.xlu0 %3309
    %v3312 = vsel %vm402, %v3308, 0
    %v3315 = vsel %vm402, %v3310, 0
    %3317 = vmatpush.bf16.xpose.msra.mxu0 0
    %3318 = vmatpush.bf16.xpose.msra.mxu0 0
    %3319 = vmatpush.bf16.xpose.msra.mxu0 0
    %3320 = vmatpush.bf16.xpose.msra.mxu0 0
    %3321 = vmatpush.bf16.xpose.msra.mxu0 0
    %3322 = vmatpush.bf16.xpose.msra.mxu0 0
    %3323 = vmatpush.bf16.xpose.msra.mxu0 0
    %3324 = vmatpush.bf16.xpose.msra.mxu0 %v3315
    %3325 = vmatmul.bf16.gmra.mxu0 %v3312
    %v3326 = vpop.f32.mrf.mxu0
    %v3327 = vadd.f32 0.0, %v3326
    %v3328 = vpop.f32.mrf.mxu0
    %3329 = vdwg.mxu0
    %3330 = vrot.lane.b32.xlu0 %v3182, 112
    %v3331 = vpop.permute.xlu0 %3330
    %3332 = vrot.lane.b32.xlu0 %v3187, 112
    %v3333 = vpop.permute.xlu0 %3332
    %v3335 = vsel %vm402, %v3331, 0
    %v3338 = vsel %vm402, %v3333, 0
    %3340 = vmatpush.bf16.xpose.msra.mxu0 0
    %3341 = vmatpush.bf16.xpose.msra.mxu0 0
    %3342 = vmatpush.bf16.xpose.msra.mxu0 0
    %3343 = vmatpush.bf16.xpose.msra.mxu0 0
    %3344 = vmatpush.bf16.xpose.msra.mxu0 0
    %3345 = vmatpush.bf16.xpose.msra.mxu0 0
    %3346 = vmatpush.bf16.xpose.msra.mxu0 0
    %3347 = vmatpush.bf16.xpose.msra.mxu0 %v3338
    %3348 = vmatmul.bf16.gmra.mxu0 %v3335
    %v3349 = vpop.f32.mrf.mxu0
    %v3350 = vadd.f32 0.0, %v3349
    %v3351 = vpop.f32.mrf.mxu0
    %3352 = vdwg.mxu0
    %v3353 = vsel %vm402, %v3327, -inf
    %3354 = vmax.xlane.f32.xlu0 %v3353
    %v3355 = vpop.xlane.xlu0 %3354
    %v3356 = vsel %vm402, %v3350, -inf
    %3357 = vmax.xlane.f32.xlu0 %v3356
    %v3358 = vpop.xlane.xlu0 %3357
    %v3359 = vsub.f32 %v3327, %v3355
    %v3360 = vsub.f32 %v3350, %v3358
    %v3361 = vmul.f32 %v3359, 1.442695
    %v3362 = vpow.pop %v3361
    %v3363 = vmul.f32 %v3360, 1.442695
    %v3364 = vpow.pop %v3363
    %v3365 = vsel %vm402, %v3362, 0.0
    %3366 = vadd.xlane.f32.xlu0 %v3365
    %v3367 = vpop.xlane.xlu0 %3366
    %v3368 = vsel %vm402, %v3364, 0.0
    %3369 = vadd.xlane.f32.xlu0 %v3368
    %v3370 = vpop.xlane.xlu0 %3369
    %v3371 = vrcp.pop %v3367
    %v3372 = vmul.f32 %v3367, %v3371
    %v3373 = vsub.f32 1.0, %v3372
    %v3374 = vmul.f32 %v3371, %v3373
    %v3375 = vadd.f32 %v3371, %v3374
    %vm3376 = vweird.f32 %v3367
    %vm3377 = vweird.f32 %v3371
    %vm3378 = vmor %vm3376, %vm3377
    %v3379 = vsel %vm3378, %v3371, %v3375
    %v3380 = vand.u32 2147483647, %v3367
    %vm3381 = vcmp.eq.f32.partialorder %v3380, 8.507059e+37
    %v3382 = vand.u32 %v3367, 2147483648
    %v3383 = vor.u32 1.1754944e-38, %v3382
    %v3384 = vsel %vm3381, %v3383, %v3379
    %v3385 = vmul.f32 %v3362, %v3384
    %v3386 = vrcp.pop %v3370
    %v3387 = vmul.f32 %v3370, %v3386
    %v3388 = vsub.f32 1.0, %v3387
    %v3389 = vmul.f32 %v3386, %v3388
    %v3390 = vadd.f32 %v3386, %v3389
    %vm3391 = vweird.f32 %v3370
    %vm3392 = vweird.f32 %v3386
    %vm3393 = vmor %vm3391, %vm3392
    %v3394 = vsel %vm3393, %v3386, %v3390
    %v3395 = vand.u32 2147483647, %v3370
    %vm3396 = vcmp.eq.f32.partialorder %v3395, 8.507059e+37
    %v3397 = vand.u32 %v3370, 2147483648
    %v3398 = vor.u32 1.1754944e-38, %v3397
    %v3399 = vsel %vm3396, %v3398, %v3394
    %v3400 = vmul.f32 %v3364, %v3399
    %v3401 = vpack.c.bf16 %v3385, %v3385
    %v3402 = vpack.c.bf16 %v3400, %v3400
    %3403 = vrot.lane.b32.xlu0 %v3261, 112
    %v3404 = vpop.permute.xlu0 %3403
    %v3406 = vsel %vm402, %v3401, 0
    %v3409 = vsel %vm499, %v3404, 0
    %3411 = vmatpush.bf16.msra.mxu0 0
    %3412 = vmatpush.bf16.msra.mxu0 0
    %3413 = vmatpush.bf16.msra.mxu0 0
    %3414 = vmatpush.bf16.msra.mxu0 0
    %3415 = vmatpush.bf16.msra.mxu0 0
    %3416 = vmatpush.bf16.msra.mxu0 0
    %3417 = vmatpush.bf16.msra.mxu0 0
    %3418 = vmatpush.bf16.msra.mxu0 %v3409
    %3419 = vmatmul.bf16.gmra.mxu0 %v3406
    %v3420 = vpop.f32.mrf.mxu0
    %v3421 = vadd.f32 0.0, %v3420
    %v3422 = vpop.f32.mrf.mxu0
    %3423 = vdwg.mxu0
    %3424 = vrot.lane.b32.xlu0 %v3285, 112
    %v3425 = vpop.permute.xlu0 %3424
    %v3427 = vsel %vm402, %v3402, 0
    %v3430 = vsel %vm499, %v3425, 0
    %3432 = vmatpush.bf16.msra.mxu0 0
    %3433 = vmatpush.bf16.msra.mxu0 0
    %3434 = vmatpush.bf16.msra.mxu0 0
    %3435 = vmatpush.bf16.msra.mxu0 0
    %3436 = vmatpush.bf16.msra.mxu0 0
    %3437 = vmatpush.bf16.msra.mxu0 0
    %3438 = vmatpush.bf16.msra.mxu0 0
    %3439 = vmatpush.bf16.msra.mxu0 %v3430
    %3440 = vmatmul.bf16.gmra.mxu0 %v3427
    %v3441 = vpop.f32.mrf.mxu0
    %v3442 = vadd.f32 0.0, %v3441
    %v3443 = vpop.f32.mrf.mxu0
    %3444 = vdwg.mxu0
    %3445 = vrot.lane.b32.xlu0 %v3153, 104
    %v3446 = vpop.permute.xlu0 %3445
    %3447 = vrot.lane.b32.xlu0 %v3158, 104
    %v3448 = vpop.permute.xlu0 %3447
    %v3450 = vsel %vm402, %v3446, 0
    %v3453 = vsel %vm402, %v3448, 0
    %3455 = vmatpush.bf16.xpose.msra.mxu0 0
    %3456 = vmatpush.bf16.xpose.msra.mxu0 0
    %3457 = vmatpush.bf16.xpose.msra.mxu0 0
    %3458 = vmatpush.bf16.xpose.msra.mxu0 0
    %3459 = vmatpush.bf16.xpose.msra.mxu0 0
    %3460 = vmatpush.bf16.xpose.msra.mxu0 0
    %3461 = vmatpush.bf16.xpose.msra.mxu0 0
    %3462 = vmatpush.bf16.xpose.msra.mxu0 %v3453
    %3463 = vmatmul.bf16.gmra.mxu0 %v3450
    %v3464 = vpop.f32.mrf.mxu0
    %v3465 = vadd.f32 0.0, %v3464
    %v3466 = vpop.f32.mrf.mxu0
    %3467 = vdwg.mxu0
    %3468 = vrot.lane.b32.xlu0 %v3182, 104
    %v3469 = vpop.permute.xlu0 %3468
    %3470 = vrot.lane.b32.xlu0 %v3187, 104
    %v3471 = vpop.permute.xlu0 %3470
    %v3473 = vsel %vm402, %v3469, 0
    %v3476 = vsel %vm402, %v3471, 0
    %3478 = vmatpush.bf16.xpose.msra.mxu0 0
    %3479 = vmatpush.bf16.xpose.msra.mxu0 0
    %3480 = vmatpush.bf16.xpose.msra.mxu0 0
    %3481 = vmatpush.bf16.xpose.msra.mxu0 0
    %3482 = vmatpush.bf16.xpose.msra.mxu0 0
    %3483 = vmatpush.bf16.xpose.msra.mxu0 0
    %3484 = vmatpush.bf16.xpose.msra.mxu0 0
    %3485 = vmatpush.bf16.xpose.msra.mxu0 %v3476
    %3486 = vmatmul.bf16.gmra.mxu0 %v3473
    %v3487 = vpop.f32.mrf.mxu0
    %v3488 = vadd.f32 0.0, %v3487
    %v3489 = vpop.f32.mrf.mxu0
    %3490 = vdwg.mxu0
    %v3491 = vsel %vm402, %v3465, -inf
    %3492 = vmax.xlane.f32.xlu0 %v3491
    %v3493 = vpop.xlane.xlu0 %3492
    %v3494 = vsel %vm402, %v3488, -inf
    %3495 = vmax.xlane.f32.xlu0 %v3494
    %v3496 = vpop.xlane.xlu0 %3495
    %v3497 = vsub.f32 %v3465, %v3493
    %v3498 = vsub.f32 %v3488, %v3496
    %v3499 = vmul.f32 %v3497, 1.442695
    %v3500 = vpow.pop %v3499
    %v3501 = vmul.f32 %v3498, 1.442695
    %v3502 = vpow.pop %v3501
    %v3503 = vsel %vm402, %v3500, 0.0
    %3504 = vadd.xlane.f32.xlu0 %v3503
    %v3505 = vpop.xlane.xlu0 %3504
    %v3506 = vsel %vm402, %v3502, 0.0
    %3507 = vadd.xlane.f32.xlu0 %v3506
    %v3508 = vpop.xlane.xlu0 %3507
    %v3509 = vrcp.pop %v3505
    %v3510 = vmul.f32 %v3505, %v3509
    %v3511 = vsub.f32 1.0, %v3510
    %v3512 = vmul.f32 %v3509, %v3511
    %v3513 = vadd.f32 %v3509, %v3512
    %vm3514 = vweird.f32 %v3505
    %vm3515 = vweird.f32 %v3509
    %vm3516 = vmor %vm3514, %vm3515
    %v3517 = vsel %vm3516, %v3509, %v3513
    %v3518 = vand.u32 2147483647, %v3505
    %vm3519 = vcmp.eq.f32.partialorder %v3518, 8.507059e+37
    %v3520 = vand.u32 %v3505, 2147483648
    %v3521 = vor.u32 1.1754944e-38, %v3520
    %v3522 = vsel %vm3519, %v3521, %v3517
    %v3523 = vmul.f32 %v3500, %v3522
    %v3524 = vrcp.pop %v3508
    %v3525 = vmul.f32 %v3508, %v3524
    %v3526 = vsub.f32 1.0, %v3525
    %v3527 = vmul.f32 %v3524, %v3526
    %v3528 = vadd.f32 %v3524, %v3527
    %vm3529 = vweird.f32 %v3508
    %vm3530 = vweird.f32 %v3524
    %vm3531 = vmor %vm3529, %vm3530
    %v3532 = vsel %vm3531, %v3524, %v3528
    %v3533 = vand.u32 2147483647, %v3508
    %vm3534 = vcmp.eq.f32.partialorder %v3533, 8.507059e+37
    %v3535 = vand.u32 %v3508, 2147483648
    %v3536 = vor.u32 1.1754944e-38, %v3535
    %v3537 = vsel %vm3534, %v3536, %v3532
    %v3538 = vmul.f32 %v3502, %v3537
    %v3539 = vpack.c.bf16 %v3523, %v3523
    %v3540 = vpack.c.bf16 %v3538, %v3538
    %3541 = vrot.lane.b32.xlu0 %v3261, 104
    %v3542 = vpop.permute.xlu0 %3541
    %v3544 = vsel %vm402, %v3539, 0
    %v3547 = vsel %vm499, %v3542, 0
    %3549 = vmatpush.bf16.msra.mxu0 0
    %3550 = vmatpush.bf16.msra.mxu0 0
    %3551 = vmatpush.bf16.msra.mxu0 0
    %3552 = vmatpush.bf16.msra.mxu0 0
    %3553 = vmatpush.bf16.msra.mxu0 0
    %3554 = vmatpush.bf16.msra.mxu0 0
    %3555 = vmatpush.bf16.msra.mxu0 0
    %3556 = vmatpush.bf16.msra.mxu0 %v3547
    %3557 = vmatmul.bf16.gmra.mxu0 %v3544
    %v3558 = vpop.f32.mrf.mxu0
    %v3559 = vadd.f32 0.0, %v3558
    %v3560 = vpop.f32.mrf.mxu0
    %3561 = vdwg.mxu0
    %3562 = vrot.lane.b32.xlu0 %v3285, 104
    %v3563 = vpop.permute.xlu0 %3562
    %v3565 = vsel %vm402, %v3540, 0
    %v3568 = vsel %vm499, %v3563, 0
    %3570 = vmatpush.bf16.msra.mxu0 0
    %3571 = vmatpush.bf16.msra.mxu0 0
    %3572 = vmatpush.bf16.msra.mxu0 0
    %3573 = vmatpush.bf16.msra.mxu0 0
    %3574 = vmatpush.bf16.msra.mxu0 0
    %3575 = vmatpush.bf16.msra.mxu0 0
    %3576 = vmatpush.bf16.msra.mxu0 0
    %3577 = vmatpush.bf16.msra.mxu0 %v3568
    %3578 = vmatmul.bf16.gmra.mxu0 %v3565
    %v3579 = vpop.f32.mrf.mxu0
    %v3580 = vadd.f32 0.0, %v3579
    %v3581 = vpop.f32.mrf.mxu0
    %3582 = vdwg.mxu0
    %3585 = vrot.lane.b32.xlu0 %v3280, 8
    %v3586 = vpop.permute.xlu0 %3585
    %3587 = vrot.lane.b32.xlu0 %v3304, 8
    %v3588 = vpop.permute.xlu0 %3587
    %3593 = vrot.lane.b32.xlu0 %v3421, 16
    %v3594 = vpop.permute.xlu0 %3593
    %3595 = vrot.lane.b32.xlu0 %v3442, 16
    %v3596 = vpop.permute.xlu0 %3595
    %3601 = vrot.lane.b32.xlu0 %v3559, 24
    %v3602 = vpop.permute.xlu0 %3601
    %3603 = vrot.lane.b32.xlu0 %v3580, 24
    %v3604 = vpop.permute.xlu0 %3603
    %v3607 = vsel %vm402, %v3129, %v3586
    %v3608 = vsel %vm402, %v3148, %v3588
    %v3609 = vsel %vm987, %v3607, %v3594
    %v3610 = vsel %vm987, %v3608, %v3596
    %v3611 = vsel %vm990, %v3609, %v3602
    %v3612 = vsel %vm990, %v3610, %v3604
    %v3613 = vld [vmem:[#allocation2 + $0x190] sm:$0xf]
    %v3614 = vld [vmem:[#allocation2 + $0x194] sm:$0xf]
    %v3615 = vld [vmem:[#allocation2 + $0x198] sm:$0xf]
    %v3616 = vld [vmem:[#allocation2 + $0x19c] sm:$0xf]
    %v3617 = vpack.c.bf16 %v3612, %v3611
    %v3618 = vld [vmem:[#allocation5 + $0x30] sm:$0x1]
    %v3619 = vperm.slane %v3618, 0
    %v3624 = vunpack.c.l.b16 %v3613
    %v3625 = vunpack.c.l.b16 %v3614
    %v3626 = vunpack.c.l.b16 %v3615
    %v3627 = vunpack.c.l.b16 %v3616
    %v3628 = vpack.c.b16 %v3625, %v3624
    %v3629 = vpack.c.b16 %v3627, %v3626
    %v3633 = vsel %vm167, %v3617, 0
    %3635 = vmatpush.bf16.msra.mxu0 0
    %3636 = vmatpush.bf16.msra.mxu0 0
    %3637 = vmatpush.bf16.msra.mxu0 0
    %3638 = vmatpush.bf16.msra.mxu0 0
    %3639 = vmatpush.bf16.msra.mxu0 0
    %3640 = vmatpush.bf16.msra.mxu0 0
    %3641 = vmatpush.bf16.msra.mxu0 %v3629
    %3642 = vmatpush.bf16.msra.mxu0 %v3628
    %3643 = vmatmul.bf16.gmra.mxu0 %v3633
    %v3644 = vpop.f32.mrf.mxu0
    %v3645 = vadd.f32 %v3619, %v3644
    %v3646 = vpop.f32.mrf.mxu0
    %v3647 = vadd.f32 %v3619, %v3646
    %3648 = vdwg.mxu0
    %v3649 = vadd.f32 %v2905, %v3645
    %v3650 = vadd.f32 %v2906, %v3647
    %v3651 = vld [vmem:[#allocation5 + $0x31] sm:$0x1]
    %v3652 = vld [vmem:[#allocation5 + $0x32] sm:$0x1]
    %v3653 = vsel %vm167, %v3649, 0.0
    %3654 = vadd.xlane.f32.xlu0 %v3653
    %v3655 = vpop.xlane.xlu0 %3654
    %v3656 = vsel %vm167, %v3650, 0.0
    %3657 = vadd.xlane.f32.xlu0 %v3656
    %v3658 = vpop.xlane.xlu0 %3657
    %v3659 = vmul.f32 %v3655, %v1045
    %v3660 = vmul.f32 %v3658, %v1045
    %v3661 = vsub.f32 %v3649, %v3659
    %v3662 = vsub.f32 %v3650, %v3660
    %v3663 = vmul.f32 %v3661, %v3661
    %v3664 = vmul.f32 %v3662, %v3662
    %v3665 = vsel %vm167, %v3663, 0.0
    %3666 = vadd.xlane.f32.xlu0 %v3665
    %v3667 = vpop.xlane.xlu0 %3666
    %v3668 = vsel %vm167, %v3664, 0.0
    %3669 = vadd.xlane.f32.xlu0 %v3668
    %v3670 = vpop.xlane.xlu0 %3669
    %v3671 = vmul.f32 %v3667, %v1045
    %v3672 = vmul.f32 %v3670, %v1045
    %v3673 = vadd.f32 %v3671, 1e-05
    %v3674 = vadd.f32 %v3672, 1e-05
    %v3675 = vrsqrt.pop %v3673
    %v3676 = vmul.f32 %v3675, %v3673
    %v3677 = vmul.f32 %v3676, %v3675
    %v3678 = vmul.f32 0.5, %v3677
    %v3679 = vsub.f32 1.5, %v3678
    %v3680 = vmul.f32 %v3675, %v3679
    %vm3681 = vweird.f32 %v3673
    %vm3682 = vweird.f32 %v3675
    %vm3683 = vmor %vm3681, %vm3682
    %v3684 = vsel %vm3683, %v3675, %v3680
    %v3685 = vrsqrt.pop %v3674
    %v3686 = vmul.f32 %v3685, %v3674
    %v3687 = vmul.f32 %v3686, %v3685
    %v3688 = vmul.f32 0.5, %v3687
    %v3689 = vsub.f32 1.5, %v3688
    %v3690 = vmul.f32 %v3685, %v3689
    %vm3691 = vweird.f32 %v3674
    %vm3692 = vweird.f32 %v3685
    %vm3693 = vmor %vm3691, %vm3692
    %v3694 = vsel %vm3693, %v3685, %v3690
    %v3695 = vmul.f32 %v3661, %v3684
    %v3696 = vmul.f32 %v3662, %v3694
    %v3697 = vperm.slane %v3651, 0
    %v3698 = vmul.f32 %v3695, %v3697
    %v3699 = vmul.f32 %v3696, %v3697
    %v3700 = vperm.slane %v3652, 0
    %v3701 = vadd.f32 %v3698, %v3700
    %v3702 = vadd.f32 %v3699, %v3700
    %v3703 = vld [vmem:[#allocation2 + $0x1a0] sm:$0xf]
    %v3704 = vld [vmem:[#allocation2 + $0x1a4] sm:$0xf]
    %v3705 = vld [vmem:[#allocation2 + $0x1a8] sm:$0xf]
    %v3706 = vld [vmem:[#allocation2 + $0x1ac] sm:$0xf]
    %v3707 = vpack.c.bf16 %v3702, %v3701
    %v3708 = vld [vmem:[#allocation5 + $0x33] sm:$0x1]
    %v3709 = vperm.slane %v3708, 0
    %v3714 = vunpack.c.l.b16 %v3703
    %v3715 = vunpack.c.l.b16 %v3704
    %v3716 = vunpack.c.l.b16 %v3705
    %v3717 = vunpack.c.l.b16 %v3706
    %v3718 = vpack.c.b16 %v3715, %v3714
    %v3719 = vpack.c.b16 %v3717, %v3716
    %v3723 = vsel %vm167, %v3707, 0
    %3725 = vmatpush.bf16.msra.mxu0 0
    %3726 = vmatpush.bf16.msra.mxu0 0
    %3727 = vmatpush.bf16.msra.mxu0 0
    %3728 = vmatpush.bf16.msra.mxu0 0
    %3729 = vmatpush.bf16.msra.mxu0 0
    %3730 = vmatpush.bf16.msra.mxu0 0
    %3731 = vmatpush.bf16.msra.mxu0 %v3719
    %3732 = vmatpush.bf16.msra.mxu0 %v3718
    %3733 = vmatmul.bf16.gmra.mxu0 %v3723
    %v3734 = vpop.f32.mrf.mxu0
    %v3735 = vadd.f32 %v3709, %v3734
    %v3736 = vpop.f32.mrf.mxu0
    %v3737 = vadd.f32 %v3709, %v3736
    %3738 = vdwg.mxu0
    %v3739 = vmax.f32 %v3735, 0.0
    %v3740 = vmax.f32 %v3737, 0.0
    %v3741 = vld [vmem:[#allocation2 + $0x1b0] sm:$0xf]
    %v3742 = vld [vmem:[#allocation2 + $0x1b4] sm:$0xf]
    %v3743 = vld [vmem:[#allocation2 + $0x1b8] sm:$0xf]
    %v3744 = vld [vmem:[#allocation2 + $0x1bc] sm:$0xf]
    %v3745 = vld [vmem:[#allocation2 + $0x1c0] sm:$0xf]
    %v3746 = vld [vmem:[#allocation2 + $0x1c4] sm:$0xf]
    %v3747 = vld [vmem:[#allocation2 + $0x1c8] sm:$0xf]
    %v3748 = vld [vmem:[#allocation2 + $0x1cc] sm:$0xf]
    %v3749 = vpack.c.bf16 %v3740, %v3739
    %v3750 = vld [vmem:[#allocation5 + $0x34] sm:$0x1]
    %v3751 = vperm.slane %v3750, 0
    %v3760 = vunpack.c.l.b16 %v3741
    %v3761 = vunpack.c.l.b16 %v3742
    %v3762 = vunpack.c.l.b16 %v3743
    %v3763 = vunpack.c.l.b16 %v3744
    %v3764 = vunpack.c.l.b16 %v3745
    %v3765 = vunpack.c.l.b16 %v3746
    %v3766 = vunpack.c.l.b16 %v3747
    %v3767 = vunpack.c.l.b16 %v3748
    %v3768 = vpack.c.b16 %v3761, %v3760
    %v3769 = vpack.c.b16 %v3763, %v3762
    %v3770 = vpack.c.b16 %v3765, %v3764
    %v3771 = vpack.c.b16 %v3767, %v3766
    %v3777 = vsel %vm120, %v3749, 0
    %3779 = vmatpush.bf16.msra.mxu0 0
    %3780 = vmatpush.bf16.msra.mxu0 0
    %3781 = vmatpush.bf16.msra.mxu0 0
    %3782 = vmatpush.bf16.msra.mxu0 0
    %3783 = vmatpush.bf16.msra.mxu0 %v3771
    %3784 = vmatpush.bf16.msra.mxu0 %v3770
    %3785 = vmatpush.bf16.msra.mxu0 %v3769
    %3786 = vmatpush.bf16.msra.mxu0 %v3768
    %3787 = vmatmul.bf16.gmra.mxu0 %v3777
    %v3788 = vpop.f32.mrf.mxu0
    %v3789 = vadd.f32 %v3751, %v3788
    %v3790 = vpop.f32.mrf.mxu0
    %v3791 = vadd.f32 %v3751, %v3790
    %3792 = vdwg.mxu0
    %v3793 = vadd.f32 %v3701, %v3789
    %v3794 = vadd.f32 %v3702, %v3791
    %v3795 = vld [vmem:[#allocation5 + $0x35] sm:$0x1]
    %v3796 = vld [vmem:[#allocation5 + $0x36] sm:$0x1]
    %v3797 = vsel %vm167, %v3793, 0.0
    %3798 = vadd.xlane.f32.xlu0 %v3797
    %v3799 = vpop.xlane.xlu0 %3798
    %v3800 = vsel %vm167, %v3794, 0.0
    %3801 = vadd.xlane.f32.xlu0 %v3800
    %v3802 = vpop.xlane.xlu0 %3801
    %v3803 = vmul.f32 %v3799, %v1045
    %v3804 = vmul.f32 %v3802, %v1045
    %v3805 = vsub.f32 %v3793, %v3803
    %v3806 = vsub.f32 %v3794, %v3804
    %v3807 = vmul.f32 %v3805, %v3805
    %v3808 = vmul.f32 %v3806, %v3806
    %v3809 = vsel %vm167, %v3807, 0.0
    %3810 = vadd.xlane.f32.xlu0 %v3809
    %v3811 = vpop.xlane.xlu0 %3810
    %v3812 = vsel %vm167, %v3808, 0.0
    %3813 = vadd.xlane.f32.xlu0 %v3812
    %v3814 = vpop.xlane.xlu0 %3813
    %v3815 = vmul.f32 %v3811, %v1045
    %v3816 = vmul.f32 %v3814, %v1045
    %v3817 = vadd.f32 %v3815, 1e-05
    %v3818 = vadd.f32 %v3816, 1e-05
    %v3819 = vrsqrt.pop %v3817
    %v3820 = vmul.f32 %v3819, %v3817
    %v3821 = vmul.f32 %v3820, %v3819
    %v3822 = vmul.f32 0.5, %v3821
    %v3823 = vsub.f32 1.5, %v3822
    %v3824 = vmul.f32 %v3819, %v3823
    %vm3825 = vweird.f32 %v3817
    %vm3826 = vweird.f32 %v3819
    %vm3827 = vmor %vm3825, %vm3826
    %v3828 = vsel %vm3827, %v3819, %v3824
    %v3829 = vrsqrt.pop %v3818
    %v3830 = vmul.f32 %v3829, %v3818
    %v3831 = vmul.f32 %v3830, %v3829
    %v3832 = vmul.f32 0.5, %v3831
    %v3833 = vsub.f32 1.5, %v3832
    %v3834 = vmul.f32 %v3829, %v3833
    %vm3835 = vweird.f32 %v3818
    %vm3836 = vweird.f32 %v3829
    %vm3837 = vmor %vm3835, %vm3836
    %v3838 = vsel %vm3837, %v3829, %v3834
    %v3839 = vmul.f32 %v3805, %v3828
    %v3840 = vmul.f32 %v3806, %v3838
    %v3841 = vperm.slane %v3795, 0
    %v3842 = vmul.f32 %v3839, %v3841
    %v3843 = vmul.f32 %v3840, %v3841
    %v3844 = vperm.slane %v3796, 0
    %v3845 = vadd.f32 %v3842, %v3844
    %v3846 = vadd.f32 %v3843, %v3844
    %v3847 = vadd.f32 %v3845, %v2142
    %v3848 = vadd.f32 %v3846, %v2142
    %v3849 = vld [vmem:[#allocation2 + $0x1d0] sm:$0xf]
    %v3850 = vld [vmem:[#allocation2 + $0x1d4] sm:$0xf]
    %v3851 = vld [vmem:[#allocation2 + $0x1d8] sm:$0xf]
    %v3852 = vld [vmem:[#allocation2 + $0x1dc] sm:$0xf]
    %v3853 = vpack.c.bf16 %v3848, %v3847
    %v3854 = vld [vmem:[#allocation5 + $0x37] sm:$0x1]
    %v3855 = vperm.slane %v3854, 0
    %v3860 = vunpack.c.l.b16 %v3849
    %v3861 = vunpack.c.l.b16 %v3850
    %v3862 = vunpack.c.l.b16 %v3851
    %v3863 = vunpack.c.l.b16 %v3852
    %v3864 = vpack.c.b16 %v3861, %v3860
    %v3865 = vpack.c.b16 %v3863, %v3862
    %v3869 = vsel %vm167, %v3853, 0
    %3871 = vmatpush.bf16.msra.mxu0 0
    %3872 = vmatpush.bf16.msra.mxu0 0
    %3873 = vmatpush.bf16.msra.mxu0 0
    %3874 = vmatpush.bf16.msra.mxu0 0
    %3875 = vmatpush.bf16.msra.mxu0 0
    %3876 = vmatpush.bf16.msra.mxu0 0
    %3877 = vmatpush.bf16.msra.mxu0 %v3865
    %3878 = vmatpush.bf16.msra.mxu0 %v3864
    %3879 = vmatmul.bf16.gmra.mxu0 %v3869
    %v3880 = vpop.f32.mrf.mxu0
    %v3881 = vadd.f32 %v3855, %v3880
    %v3882 = vpop.f32.mrf.mxu0
    %v3883 = vadd.f32 %v3855, %v3882
    %3884 = vdwg.mxu0
    %v3885 = vmul.f32 %v3881, 0.35355338
    %v3886 = vmul.f32 %v3883, 0.35355338
    %v3887 = vld [vmem:[#allocation2 + $0x1e0] sm:$0xf]
    %v3888 = vld [vmem:[#allocation2 + $0x1e4] sm:$0xf]
    %v3889 = vld [vmem:[#allocation2 + $0x1e8] sm:$0xf]
    %v3890 = vld [vmem:[#allocation2 + $0x1ec] sm:$0xf]
    %v3891 = vpack.c.bf16 %v3846, %v3845
    %v3892 = vld [vmem:[#allocation5 + $0x38] sm:$0x1]
    %v3893 = vperm.slane %v3892, 0
    %v3898 = vunpack.c.l.b16 %v3887
    %v3899 = vunpack.c.l.b16 %v3888
    %v3900 = vunpack.c.l.b16 %v3889
    %v3901 = vunpack.c.l.b16 %v3890
    %v3902 = vpack.c.b16 %v3899, %v3898
    %v3903 = vpack.c.b16 %v3901, %v3900
    %v3907 = vsel %vm167, %v3891, 0
    %3909 = vmatpush.bf16.msra.mxu0 0
    %3910 = vmatpush.bf16.msra.mxu0 0
    %3911 = vmatpush.bf16.msra.mxu0 0
    %3912 = vmatpush.bf16.msra.mxu0 0
    %3913 = vmatpush.bf16.msra.mxu0 0
    %3914 = vmatpush.bf16.msra.mxu0 0
    %3915 = vmatpush.bf16.msra.mxu0 %v3903
    %3916 = vmatpush.bf16.msra.mxu0 %v3902
    %3917 = vmatmul.bf16.gmra.mxu0 %v3907
    %v3918 = vpop.f32.mrf.mxu0
    %v3919 = vadd.f32 %v3893, %v3918
    %v3920 = vpop.f32.mrf.mxu0
    %v3921 = vadd.f32 %v3893, %v3920
    %3922 = vdwg.mxu0
    %v3923 = vpack.c.bf16 %v3885, %v3885
    %v3924 = vpack.c.bf16 %v3886, %v3886
    %v3925 = vpack.c.bf16 %v3881, %v3881
    %v3926 = vpack.c.bf16 %v3883, %v3883
    %v3927 = vpack.c.bf16 %v3919, %v3919
    %v3928 = vpack.c.bf16 %v3921, %v3921
    %v3930 = vunpack.c.l.b16 %v3925
    %v3931 = vpack.c.b16 %v3930, %v3930
    %3932 = vrot.lane.b32.xlu0 %v3931, 96
    %v3933 = vpop.permute.xlu0 %3932
    %v3935 = vsel %vm402, %v3923, 0
    %v3938 = vsel %vm402, %v3933, 0
    %3940 = vmatpush.bf16.xpose.msra.mxu0 0
    %3941 = vmatpush.bf16.xpose.msra.mxu0 0
    %3942 = vmatpush.bf16.xpose.msra.mxu0 0
    %3943 = vmatpush.bf16.xpose.msra.mxu0 0
    %3944 = vmatpush.bf16.xpose.msra.mxu0 0
    %3945 = vmatpush.bf16.xpose.msra.mxu0 0
    %3946 = vmatpush.bf16.xpose.msra.mxu0 0
    %3947 = vmatpush.bf16.xpose.msra.mxu0 %v3938
    %3948 = vmatmul.bf16.gmra.mxu0 %v3935
    %v3949 = vpop.f32.mrf.mxu0
    %v3950 = vadd.f32 0.0, %v3949
    %v3951 = vpop.f32.mrf.mxu0
    %3952 = vdwg.mxu0
    %v3954 = vunpack.c.l.b16 %v3926
    %v3955 = vpack.c.b16 %v3954, %v3954
    %3956 = vrot.lane.b32.xlu0 %v3955, 96
    %v3957 = vpop.permute.xlu0 %3956
    %v3959 = vsel %vm402, %v3924, 0
    %v3962 = vsel %vm402, %v3957, 0
    %3964 = vmatpush.bf16.xpose.msra.mxu0 0
    %3965 = vmatpush.bf16.xpose.msra.mxu0 0
    %3966 = vmatpush.bf16.xpose.msra.mxu0 0
    %3967 = vmatpush.bf16.xpose.msra.mxu0 0
    %3968 = vmatpush.bf16.xpose.msra.mxu0 0
    %3969 = vmatpush.bf16.xpose.msra.mxu0 0
    %3970 = vmatpush.bf16.xpose.msra.mxu0 0
    %3971 = vmatpush.bf16.xpose.msra.mxu0 %v3962
    %3972 = vmatmul.bf16.gmra.mxu0 %v3959
    %v3973 = vpop.f32.mrf.mxu0
    %v3974 = vadd.f32 0.0, %v3973
    %v3975 = vpop.f32.mrf.mxu0
    %3976 = vdwg.mxu0
    %v3977 = vsel %vm402, %v3950, -inf
    %3978 = vmax.xlane.f32.xlu0 %v3977
    %v3979 = vpop.xlane.xlu0 %3978
    %v3980 = vsel %vm402, %v3974, -inf
    %3981 = vmax.xlane.f32.xlu0 %v3980
    %v3982 = vpop.xlane.xlu0 %3981
    %v3983 = vsub.f32 %v3950, %v3979
    %v3984 = vsub.f32 %v3974, %v3982
    %v3985 = vmul.f32 %v3983, 1.442695
    %v3986 = vpow.pop %v3985
    %v3987 = vmul.f32 %v3984, 1.442695
    %v3988 = vpow.pop %v3987
    %v3989 = vsel %vm402, %v3986, 0.0
    %3990 = vadd.xlane.f32.xlu0 %v3989
    %v3991 = vpop.xlane.xlu0 %3990
    %v3992 = vsel %vm402, %v3988, 0.0
    %3993 = vadd.xlane.f32.xlu0 %v3992
    %v3994 = vpop.xlane.xlu0 %3993
    %v3995 = vrcp.pop %v3991
    %v3996 = vmul.f32 %v3991, %v3995
    %v3997 = vsub.f32 1.0, %v3996
    %v3998 = vmul.f32 %v3995, %v3997
    %v3999 = vadd.f32 %v3995, %v3998
    %vm4000 = vweird.f32 %v3991
    %vm4001 = vweird.f32 %v3995
    %vm4002 = vmor %vm4000, %vm4001
    %v4003 = vsel %vm4002, %v3995, %v3999
    %v4004 = vand.u32 2147483647, %v3991
    %vm4005 = vcmp.eq.f32.partialorder %v4004, 8.507059e+37
    %v4006 = vand.u32 %v3991, 2147483648
    %v4007 = vor.u32 1.1754944e-38, %v4006
    %v4008 = vsel %vm4005, %v4007, %v4003
    %v4009 = vmul.f32 %v3986, %v4008
    %v4010 = vrcp.pop %v3994
    %v4011 = vmul.f32 %v3994, %v4010
    %v4012 = vsub.f32 1.0, %v4011
    %v4013 = vmul.f32 %v4010, %v4012
    %v4014 = vadd.f32 %v4010, %v4013
    %vm4015 = vweird.f32 %v3994
    %vm4016 = vweird.f32 %v4010
    %vm4017 = vmor %vm4015, %vm4016
    %v4018 = vsel %vm4017, %v4010, %v4014
    %v4019 = vand.u32 2147483647, %v3994
    %vm4020 = vcmp.eq.f32.partialorder %v4019, 8.507059e+37
    %v4021 = vand.u32 %v3994, 2147483648
    %v4022 = vor.u32 1.1754944e-38, %v4021
    %v4023 = vsel %vm4020, %v4022, %v4018
    %v4024 = vmul.f32 %v3988, %v4023
    %v4025 = vpack.c.bf16 %v4009, %v4009
    %v4026 = vpack.c.bf16 %v4024, %v4024
    %v4028 = vsel %vm402, %v4025, 0
    %v4031 = vsel %vm499, %v3927, 0
    %4033 = vmatpush.bf16.msra.mxu0 0
    %4034 = vmatpush.bf16.msra.mxu0 0
    %4035 = vmatpush.bf16.msra.mxu0 0
    %4036 = vmatpush.bf16.msra.mxu0 0
    %4037 = vmatpush.bf16.msra.mxu0 0
    %4038 = vmatpush.bf16.msra.mxu0 0
    %4039 = vmatpush.bf16.msra.mxu0 0
    %4040 = vmatpush.bf16.msra.mxu0 %v4031
    %4041 = vmatmul.bf16.gmra.mxu0 %v4028
    %v4042 = vpop.f32.mrf.mxu0
    %v4043 = vadd.f32 0.0, %v4042
    %v4044 = vpop.f32.mrf.mxu0
    %4045 = vdwg.mxu0
    %v4047 = vsel %vm402, %v4026, 0
    %v4050 = vsel %vm499, %v3928, 0
    %4052 = vmatpush.bf16.msra.mxu0 0
    %4053 = vmatpush.bf16.msra.mxu0 0
    %4054 = vmatpush.bf16.msra.mxu0 0
    %4055 = vmatpush.bf16.msra.mxu0 0
    %4056 = vmatpush.bf16.msra.mxu0 0
    %4057 = vmatpush.bf16.msra.mxu0 0
    %4058 = vmatpush.bf16.msra.mxu0 0
    %4059 = vmatpush.bf16.msra.mxu0 %v4050
    %4060 = vmatmul.bf16.gmra.mxu0 %v4047
    %v4061 = vpop.f32.mrf.mxu0
    %v4062 = vadd.f32 0.0, %v4061
    %v4063 = vpop.f32.mrf.mxu0
    %4064 = vdwg.mxu0
    %v4066 = vunpack.c.l.b16 %v3923
    %v4067 = vpack.c.b16 %v4066, %v4066
    %4068 = vrot.lane.b32.xlu0 %v4067, 120
    %v4069 = vpop.permute.xlu0 %4068
    %4070 = vrot.lane.b32.xlu0 %v3931, 88
    %v4071 = vpop.permute.xlu0 %4070
    %v4073 = vsel %vm402, %v4069, 0
    %v4076 = vsel %vm402, %v4071, 0
    %4078 = vmatpush.bf16.xpose.msra.mxu0 0
    %4079 = vmatpush.bf16.xpose.msra.mxu0 0
    %4080 = vmatpush.bf16.xpose.msra.mxu0 0
    %4081 = vmatpush.bf16.xpose.msra.mxu0 0
    %4082 = vmatpush.bf16.xpose.msra.mxu0 0
    %4083 = vmatpush.bf16.xpose.msra.mxu0 0
    %4084 = vmatpush.bf16.xpose.msra.mxu0 0
    %4085 = vmatpush.bf16.xpose.msra.mxu0 %v4076
    %4086 = vmatmul.bf16.gmra.mxu0 %v4073
    %v4087 = vpop.f32.mrf.mxu0
    %v4088 = vadd.f32 0.0, %v4087
    %v4089 = vpop.f32.mrf.mxu0
    %4090 = vdwg.mxu0
    %v4092 = vunpack.c.l.b16 %v3924
    %v4093 = vpack.c.b16 %v4092, %v4092
    %4094 = vrot.lane.b32.xlu0 %v4093, 120
    %v4095 = vpop.permute.xlu0 %4094
    %4096 = vrot.lane.b32.xlu0 %v3955, 88
    %v4097 = vpop.permute.xlu0 %4096
    %v4099 = vsel %vm402, %v4095, 0
    %v4102 = vsel %vm402, %v4097, 0
    %4104 = vmatpush.bf16.xpose.msra.mxu0 0
    %4105 = vmatpush.bf16.xpose.msra.mxu0 0
    %4106 = vmatpush.bf16.xpose.msra.mxu0 0
    %4107 = vmatpush.bf16.xpose.msra.mxu0 0
    %4108 = vmatpush.bf16.xpose.msra.mxu0 0
    %4109 = vmatpush.bf16.xpose.msra.mxu0 0
    %4110 = vmatpush.bf16.xpose.msra.mxu0 0
    %4111 = vmatpush.bf16.xpose.msra.mxu0 %v4102
    %4112 = vmatmul.bf16.gmra.mxu0 %v4099
    %v4113 = vpop.f32.mrf.mxu0
    %v4114 = vadd.f32 0.0, %v4113
    %v4115 = vpop.f32.mrf.mxu0
    %4116 = vdwg.mxu0
    %v4117 = vsel %vm402, %v4088, -inf
    %4118 = vmax.xlane.f32.xlu0 %v4117
    %v4119 = vpop.xlane.xlu0 %4118
    %v4120 = vsel %vm402, %v4114, -inf
    %4121 = vmax.xlane.f32.xlu0 %v4120
    %v4122 = vpop.xlane.xlu0 %4121
    %v4123 = vsub.f32 %v4088, %v4119
    %v4124 = vsub.f32 %v4114, %v4122
    %v4125 = vmul.f32 %v4123, 1.442695
    %v4126 = vpow.pop %v4125
    %v4127 = vmul.f32 %v4124, 1.442695
    %v4128 = vpow.pop %v4127
    %v4129 = vsel %vm402, %v4126, 0.0
    %4130 = vadd.xlane.f32.xlu0 %v4129
    %v4131 = vpop.xlane.xlu0 %4130
    %v4132 = vsel %vm402, %v4128, 0.0
    %4133 = vadd.xlane.f32.xlu0 %v4132
    %v4134 = vpop.xlane.xlu0 %4133
    %v4135 = vrcp.pop %v4131
    %v4136 = vmul.f32 %v4131, %v4135
    %v4137 = vsub.f32 1.0, %v4136
    %v4138 = vmul.f32 %v4135, %v4137
    %v4139 = vadd.f32 %v4135, %v4138
    %vm4140 = vweird.f32 %v4131
    %vm4141 = vweird.f32 %v4135
    %vm4142 = vmor %vm4140, %vm4141
    %v4143 = vsel %vm4142, %v4135, %v4139
    %v4144 = vand.u32 2147483647, %v4131
    %vm4145 = vcmp.eq.f32.partialorder %v4144, 8.507059e+37
    %v4146 = vand.u32 %v4131, 2147483648
    %v4147 = vor.u32 1.1754944e-38, %v4146
    %v4148 = vsel %vm4145, %v4147, %v4143
    %v4149 = vmul.f32 %v4126, %v4148
    %v4150 = vrcp.pop %v4134
    %v4151 = vmul.f32 %v4134, %v4150
    %v4152 = vsub.f32 1.0, %v4151
    %v4153 = vmul.f32 %v4150, %v4152
    %v4154 = vadd.f32 %v4150, %v4153
    %vm4155 = vweird.f32 %v4134
    %vm4156 = vweird.f32 %v4150
    %vm4157 = vmor %vm4155, %vm4156
    %v4158 = vsel %vm4157, %v4150, %v4154
    %v4159 = vand.u32 2147483647, %v4134
    %vm4160 = vcmp.eq.f32.partialorder %v4159, 8.507059e+37
    %v4161 = vand.u32 %v4134, 2147483648
    %v4162 = vor.u32 1.1754944e-38, %v4161
    %v4163 = vsel %vm4160, %v4162, %v4158
    %v4164 = vmul.f32 %v4128, %v4163
    %v4165 = vpack.c.bf16 %v4149, %v4149
    %v4166 = vpack.c.bf16 %v4164, %v4164
    %v4168 = vunpack.c.l.b16 %v3927
    %v4169 = vpack.c.b16 %v4168, %v4168
    %4170 = vrot.lane.b32.xlu0 %v4169, 120
    %v4171 = vpop.permute.xlu0 %4170
    %v4173 = vsel %vm402, %v4165, 0
    %v4176 = vsel %vm499, %v4171, 0
    %4178 = vmatpush.bf16.msra.mxu0 0
    %4179 = vmatpush.bf16.msra.mxu0 0
    %4180 = vmatpush.bf16.msra.mxu0 0
    %4181 = vmatpush.bf16.msra.mxu0 0
    %4182 = vmatpush.bf16.msra.mxu0 0
    %4183 = vmatpush.bf16.msra.mxu0 0
    %4184 = vmatpush.bf16.msra.mxu0 0
    %4185 = vmatpush.bf16.msra.mxu0 %v4176
    %4186 = vmatmul.bf16.gmra.mxu0 %v4173
    %v4187 = vpop.f32.mrf.mxu0
    %v4188 = vadd.f32 0.0, %v4187
    %v4189 = vpop.f32.mrf.mxu0
    %4190 = vdwg.mxu0
    %v4192 = vunpack.c.l.b16 %v3928
    %v4193 = vpack.c.b16 %v4192, %v4192
    %4194 = vrot.lane.b32.xlu0 %v4193, 120
    %v4195 = vpop.permute.xlu0 %4194
    %v4197 = vsel %vm402, %v4166, 0
    %v4200 = vsel %vm499, %v4195, 0
    %4202 = vmatpush.bf16.msra.mxu0 0
    %4203 = vmatpush.bf16.msra.mxu0 0
    %4204 = vmatpush.bf16.msra.mxu0 0
    %4205 = vmatpush.bf16.msra.mxu0 0
    %4206 = vmatpush.bf16.msra.mxu0 0
    %4207 = vmatpush.bf16.msra.mxu0 0
    %4208 = vmatpush.bf16.msra.mxu0 0
    %4209 = vmatpush.bf16.msra.mxu0 %v4200
    %4210 = vmatmul.bf16.gmra.mxu0 %v4197
    %v4211 = vpop.f32.mrf.mxu0
    %v4212 = vadd.f32 0.0, %v4211
    %v4213 = vpop.f32.mrf.mxu0
    %4214 = vdwg.mxu0
    %4215 = vrot.lane.b32.xlu0 %v4067, 112
    %v4216 = vpop.permute.xlu0 %4215
    %4217 = vrot.lane.b32.xlu0 %v3931, 80
    %v4218 = vpop.permute.xlu0 %4217
    %v4220 = vsel %vm402, %v4216, 0
    %v4223 = vsel %vm402, %v4218, 0
    %4225 = vmatpush.bf16.xpose.msra.mxu0 0
    %4226 = vmatpush.bf16.xpose.msra.mxu0 0
    %4227 = vmatpush.bf16.xpose.msra.mxu0 0
    %4228 = vmatpush.bf16.xpose.msra.mxu0 0
    %4229 = vmatpush.bf16.xpose.msra.mxu0 0
    %4230 = vmatpush.bf16.xpose.msra.mxu0 0
    %4231 = vmatpush.bf16.xpose.msra.mxu0 0
    %4232 = vmatpush.bf16.xpose.msra.mxu0 %v4223
    %4233 = vmatmul.bf16.gmra.mxu0 %v4220
    %v4234 = vpop.f32.mrf.mxu0
    %v4235 = vadd.f32 0.0, %v4234
    %v4236 = vpop.f32.mrf.mxu0
    %4237 = vdwg.mxu0
    %4238 = vrot.lane.b32.xlu0 %v4093, 112
    %v4239 = vpop.permute.xlu0 %4238
    %4240 = vrot.lane.b32.xlu0 %v3955, 80
    %v4241 = vpop.permute.xlu0 %4240
    %v4243 = vsel %vm402, %v4239, 0
    %v4246 = vsel %vm402, %v4241, 0
    %4248 = vmatpush.bf16.xpose.msra.mxu0 0
    %4249 = vmatpush.bf16.xpose.msra.mxu0 0
    %4250 = vmatpush.bf16.xpose.msra.mxu0 0
    %4251 = vmatpush.bf16.xpose.msra.mxu0 0
    %4252 = vmatpush.bf16.xpose.msra.mxu0 0
    %4253 = vmatpush.bf16.xpose.msra.mxu0 0
    %4254 = vmatpush.bf16.xpose.msra.mxu0 0
    %4255 = vmatpush.bf16.xpose.msra.mxu0 %v4246
    %4256 = vmatmul.bf16.gmra.mxu0 %v4243
    %v4257 = vpop.f32.mrf.mxu0
    %v4258 = vadd.f32 0.0, %v4257
    %v4259 = vpop.f32.mrf.mxu0
    %4260 = vdwg.mxu0
    %v4261 = vsel %vm402, %v4235, -inf
    %4262 = vmax.xlane.f32.xlu0 %v4261
    %v4263 = vpop.xlane.xlu0 %4262
    %v4264 = vsel %vm402, %v4258, -inf
    %4265 = vmax.xlane.f32.xlu0 %v4264
    %v4266 = vpop.xlane.xlu0 %4265
    %v4267 = vsub.f32 %v4235, %v4263
    %v4268 = vsub.f32 %v4258, %v4266
    %v4269 = vmul.f32 %v4267, 1.442695
    %v4270 = vpow.pop %v4269
    %v4271 = vmul.f32 %v4268, 1.442695
    %v4272 = vpow.pop %v4271
    %v4273 = vsel %vm402, %v4270, 0.0
    %4274 = vadd.xlane.f32.xlu0 %v4273
    %v4275 = vpop.xlane.xlu0 %4274
    %v4276 = vsel %vm402, %v4272, 0.0
    %4277 = vadd.xlane.f32.xlu0 %v4276
    %v4278 = vpop.xlane.xlu0 %4277
    %v4279 = vrcp.pop %v4275
    %v4280 = vmul.f32 %v4275, %v4279
    %v4281 = vsub.f32 1.0, %v4280
    %v4282 = vmul.f32 %v4279, %v4281
    %v4283 = vadd.f32 %v4279, %v4282
    %vm4284 = vweird.f32 %v4275
    %vm4285 = vweird.f32 %v4279
    %vm4286 = vmor %vm4284, %vm4285
    %v4287 = vsel %vm4286, %v4279, %v4283
    %v4288 = vand.u32 2147483647, %v4275
    %vm4289 = vcmp.eq.f32.partialorder %v4288, 8.507059e+37
    %v4290 = vand.u32 %v4275, 2147483648
    %v4291 = vor.u32 1.1754944e-38, %v4290
    %v4292 = vsel %vm4289, %v4291, %v4287
    %v4293 = vmul.f32 %v4270, %v4292
    %v4294 = vrcp.pop %v4278
    %v4295 = vmul.f32 %v4278, %v4294
    %v4296 = vsub.f32 1.0, %v4295
    %v4297 = vmul.f32 %v4294, %v4296
    %v4298 = vadd.f32 %v4294, %v4297
    %vm4299 = vweird.f32 %v4278
    %vm4300 = vweird.f32 %v4294
    %vm4301 = vmor %vm4299, %vm4300
    %v4302 = vsel %vm4301, %v4294, %v4298
    %v4303 = vand.u32 2147483647, %v4278
    %vm4304 = vcmp.eq.f32.partialorder %v4303, 8.507059e+37
    %v4305 = vand.u32 %v4278, 2147483648
    %v4306 = vor.u32 1.1754944e-38, %v4305
    %v4307 = vsel %vm4304, %v4306, %v4302
    %v4308 = vmul.f32 %v4272, %v4307
    %v4309 = vpack.c.bf16 %v4293, %v4293
    %v4310 = vpack.c.bf16 %v4308, %v4308
    %4311 = vrot.lane.b32.xlu0 %v4169, 112
    %v4312 = vpop.permute.xlu0 %4311
    %v4314 = vsel %vm402, %v4309, 0
    %v4317 = vsel %vm499, %v4312, 0
    %4319 = vmatpush.bf16.msra.mxu0 0
    %4320 = vmatpush.bf16.msra.mxu0 0
    %4321 = vmatpush.bf16.msra.mxu0 0
    %4322 = vmatpush.bf16.msra.mxu0 0
    %4323 = vmatpush.bf16.msra.mxu0 0
    %4324 = vmatpush.bf16.msra.mxu0 0
    %4325 = vmatpush.bf16.msra.mxu0 0
    %4326 = vmatpush.bf16.msra.mxu0 %v4317
    %4327 = vmatmul.bf16.gmra.mxu0 %v4314
    %v4328 = vpop.f32.mrf.mxu0
    %v4329 = vadd.f32 0.0, %v4328
    %v4330 = vpop.f32.mrf.mxu0
    %4331 = vdwg.mxu0
    %4332 = vrot.lane.b32.xlu0 %v4193, 112
    %v4333 = vpop.permute.xlu0 %4332
    %v4335 = vsel %vm402, %v4310, 0
    %v4338 = vsel %vm499, %v4333, 0
    %4340 = vmatpush.bf16.msra.mxu0 0
    %4341 = vmatpush.bf16.msra.mxu0 0
    %4342 = vmatpush.bf16.msra.mxu0 0
    %4343 = vmatpush.bf16.msra.mxu0 0
    %4344 = vmatpush.bf16.msra.mxu0 0
    %4345 = vmatpush.bf16.msra.mxu0 0
    %4346 = vmatpush.bf16.msra.mxu0 0
    %4347 = vmatpush.bf16.msra.mxu0 %v4338
    %4348 = vmatmul.bf16.gmra.mxu0 %v4335
    %v4349 = vpop.f32.mrf.mxu0
    %v4350 = vadd.f32 0.0, %v4349
    %v4351 = vpop.f32.mrf.mxu0
    %4352 = vdwg.mxu0
    %4353 = vrot.lane.b32.xlu0 %v4067, 104
    %v4354 = vpop.permute.xlu0 %4353
    %4355 = vrot.lane.b32.xlu0 %v3931, 72
    %v4356 = vpop.permute.xlu0 %4355
    %v4358 = vsel %vm402, %v4354, 0
    %v4361 = vsel %vm402, %v4356, 0
    %4363 = vmatpush.bf16.xpose.msra.mxu0 0
    %4364 = vmatpush.bf16.xpose.msra.mxu0 0
    %4365 = vmatpush.bf16.xpose.msra.mxu0 0
    %4366 = vmatpush.bf16.xpose.msra.mxu0 0
    %4367 = vmatpush.bf16.xpose.msra.mxu0 0
    %4368 = vmatpush.bf16.xpose.msra.mxu0 0
    %4369 = vmatpush.bf16.xpose.msra.mxu0 0
    %4370 = vmatpush.bf16.xpose.msra.mxu0 %v4361
    %4371 = vmatmul.bf16.gmra.mxu0 %v4358
    %v4372 = vpop.f32.mrf.mxu0
    %v4373 = vadd.f32 0.0, %v4372
    %v4374 = vpop.f32.mrf.mxu0
    %4375 = vdwg.mxu0
    %4376 = vrot.lane.b32.xlu0 %v4093, 104
    %v4377 = vpop.permute.xlu0 %4376
    %4378 = vrot.lane.b32.xlu0 %v3955, 72
    %v4379 = vpop.permute.xlu0 %4378
    %v4381 = vsel %vm402, %v4377, 0
    %v4384 = vsel %vm402, %v4379, 0
    %4386 = vmatpush.bf16.xpose.msra.mxu0 0
    %4387 = vmatpush.bf16.xpose.msra.mxu0 0
    %4388 = vmatpush.bf16.xpose.msra.mxu0 0
    %4389 = vmatpush.bf16.xpose.msra.mxu0 0
    %4390 = vmatpush.bf16.xpose.msra.mxu0 0
    %4391 = vmatpush.bf16.xpose.msra.mxu0 0
    %4392 = vmatpush.bf16.xpose.msra.mxu0 0
    %4393 = vmatpush.bf16.xpose.msra.mxu0 %v4384
    %4394 = vmatmul.bf16.gmra.mxu0 %v4381
    %v4395 = vpop.f32.mrf.mxu0
    %v4396 = vadd.f32 0.0, %v4395
    %v4397 = vpop.f32.mrf.mxu0
    %4398 = vdwg.mxu0
    %v4399 = vsel %vm402, %v4373, -inf
    %4400 = vmax.xlane.f32.xlu0 %v4399
    %v4401 = vpop.xlane.xlu0 %4400
    %v4402 = vsel %vm402, %v4396, -inf
    %4403 = vmax.xlane.f32.xlu0 %v4402
    %v4404 = vpop.xlane.xlu0 %4403
    %v4405 = vsub.f32 %v4373, %v4401
    %v4406 = vsub.f32 %v4396, %v4404
    %v4407 = vmul.f32 %v4405, 1.442695
    %v4408 = vpow.pop %v4407
    %v4409 = vmul.f32 %v4406, 1.442695
    %v4410 = vpow.pop %v4409
    %v4411 = vsel %vm402, %v4408, 0.0
    %4412 = vadd.xlane.f32.xlu0 %v4411
    %v4413 = vpop.xlane.xlu0 %4412
    %v4414 = vsel %vm402, %v4410, 0.0
    %4415 = vadd.xlane.f32.xlu0 %v4414
    %v4416 = vpop.xlane.xlu0 %4415
    %v4417 = vrcp.pop %v4413
    %v4418 = vmul.f32 %v4413, %v4417
    %v4419 = vsub.f32 1.0, %v4418
    %v4420 = vmul.f32 %v4417, %v4419
    %v4421 = vadd.f32 %v4417, %v4420
    %vm4422 = vweird.f32 %v4413
    %vm4423 = vweird.f32 %v4417
    %vm4424 = vmor %vm4422, %vm4423
    %v4425 = vsel %vm4424, %v4417, %v4421
    %v4426 = vand.u32 2147483647, %v4413
    %vm4427 = vcmp.eq.f32.partialorder %v4426, 8.507059e+37
    %v4428 = vand.u32 %v4413, 2147483648
    %v4429 = vor.u32 1.1754944e-38, %v4428
    %v4430 = vsel %vm4427, %v4429, %v4425
    %v4431 = vmul.f32 %v4408, %v4430
    %v4432 = vrcp.pop %v4416
    %v4433 = vmul.f32 %v4416, %v4432
    %v4434 = vsub.f32 1.0, %v4433
    %v4435 = vmul.f32 %v4432, %v4434
    %v4436 = vadd.f32 %v4432, %v4435
    %vm4437 = vweird.f32 %v4416
    %vm4438 = vweird.f32 %v4432
    %vm4439 = vmor %vm4437, %vm4438
    %v4440 = vsel %vm4439, %v4432, %v4436
    %v4441 = vand.u32 2147483647, %v4416
    %vm4442 = vcmp.eq.f32.partialorder %v4441, 8.507059e+37
    %v4443 = vand.u32 %v4416, 2147483648
    %v4444 = vor.u32 1.1754944e-38, %v4443
    %v4445 = vsel %vm4442, %v4444, %v4440
    %v4446 = vmul.f32 %v4410, %v4445
    %v4447 = vpack.c.bf16 %v4431, %v4431
    %v4448 = vpack.c.bf16 %v4446, %v4446
    %4449 = vrot.lane.b32.xlu0 %v4169, 104
    %v4450 = vpop.permute.xlu0 %4449
    %v4452 = vsel %vm402, %v4447, 0
    %v4455 = vsel %vm499, %v4450, 0
    %4457 = vmatpush.bf16.msra.mxu0 0
    %4458 = vmatpush.bf16.msra.mxu0 0
    %4459 = vmatpush.bf16.msra.mxu0 0
    %4460 = vmatpush.bf16.msra.mxu0 0
    %4461 = vmatpush.bf16.msra.mxu0 0
    %4462 = vmatpush.bf16.msra.mxu0 0
    %4463 = vmatpush.bf16.msra.mxu0 0
    %4464 = vmatpush.bf16.msra.mxu0 %v4455
    %4465 = vmatmul.bf16.gmra.mxu0 %v4452
    %v4466 = vpop.f32.mrf.mxu0
    %v4467 = vadd.f32 0.0, %v4466
    %v4468 = vpop.f32.mrf.mxu0
    %4469 = vdwg.mxu0
    %4470 = vrot.lane.b32.xlu0 %v4193, 104
    %v4471 = vpop.permute.xlu0 %4470
    %v4473 = vsel %vm402, %v4448, 0
    %v4476 = vsel %vm499, %v4471, 0
    %4478 = vmatpush.bf16.msra.mxu0 0
    %4479 = vmatpush.bf16.msra.mxu0 0
    %4480 = vmatpush.bf16.msra.mxu0 0
    %4481 = vmatpush.bf16.msra.mxu0 0
    %4482 = vmatpush.bf16.msra.mxu0 0
    %4483 = vmatpush.bf16.msra.mxu0 0
    %4484 = vmatpush.bf16.msra.mxu0 0
    %4485 = vmatpush.bf16.msra.mxu0 %v4476
    %4486 = vmatmul.bf16.gmra.mxu0 %v4473
    %v4487 = vpop.f32.mrf.mxu0
    %v4488 = vadd.f32 0.0, %v4487
    %v4489 = vpop.f32.mrf.mxu0
    %4490 = vdwg.mxu0
    %4493 = vrot.lane.b32.xlu0 %v4188, 8
    %v4494 = vpop.permute.xlu0 %4493
    %4495 = vrot.lane.b32.xlu0 %v4212, 8
    %v4496 = vpop.permute.xlu0 %4495
    %4501 = vrot.lane.b32.xlu0 %v4329, 16
    %v4502 = vpop.permute.xlu0 %4501
    %4503 = vrot.lane.b32.xlu0 %v4350, 16
    %v4504 = vpop.permute.xlu0 %4503
    %4509 = vrot.lane.b32.xlu0 %v4467, 24
    %v4510 = vpop.permute.xlu0 %4509
    %4511 = vrot.lane.b32.xlu0 %v4488, 24
    %v4512 = vpop.permute.xlu0 %4511
    %v4515 = vsel %vm402, %v4043, %v4494
    %v4516 = vsel %vm402, %v4062, %v4496
    %v4517 = vsel %vm987, %v4515, %v4502
    %v4518 = vsel %vm987, %v4516, %v4504
    %v4519 = vsel %vm990, %v4517, %v4510
    %v4520 = vsel %vm990, %v4518, %v4512
    %v4521 = vld [vmem:[#allocation2 + $0x1f0] sm:$0xf]
    %v4522 = vld [vmem:[#allocation2 + $0x1f4] sm:$0xf]
    %v4523 = vld [vmem:[#allocation2 + $0x1f8] sm:$0xf]
    %v4524 = vld [vmem:[#allocation2 + $0x1fc] sm:$0xf]
    %v4525 = vpack.c.bf16 %v4520, %v4519
    %v4526 = vld [vmem:[#allocation5 + $0x39] sm:$0x1]
    %v4527 = vperm.slane %v4526, 0
    %v4532 = vunpack.c.l.b16 %v4521
    %v4533 = vunpack.c.l.b16 %v4522
    %v4534 = vunpack.c.l.b16 %v4523
    %v4535 = vunpack.c.l.b16 %v4524
    %v4536 = vpack.c.b16 %v4533, %v4532
    %v4537 = vpack.c.b16 %v4535, %v4534
    %v4541 = vsel %vm167, %v4525, 0
    %4543 = vmatpush.bf16.msra.mxu0 0
    %4544 = vmatpush.bf16.msra.mxu0 0
    %4545 = vmatpush.bf16.msra.mxu0 0
    %4546 = vmatpush.bf16.msra.mxu0 0
    %4547 = vmatpush.bf16.msra.mxu0 0
    %4548 = vmatpush.bf16.msra.mxu0 0
    %4549 = vmatpush.bf16.msra.mxu0 %v4537
    %4550 = vmatpush.bf16.msra.mxu0 %v4536
    %4551 = vmatmul.bf16.gmra.mxu0 %v4541
    %v4552 = vpop.f32.mrf.mxu0
    %v4553 = vadd.f32 %v4527, %v4552
    %v4554 = vpop.f32.mrf.mxu0
    %v4555 = vadd.f32 %v4527, %v4554
    %4556 = vdwg.mxu0
    %v4557 = vadd.f32 %v3845, %v4553
    %v4558 = vadd.f32 %v3846, %v4555
    %v4559 = vld [vmem:[#allocation5 + $0x3a] sm:$0x1]
    %v4560 = vld [vmem:[#allocation5 + $0x3b] sm:$0x1]
    %v4561 = vsel %vm167, %v4557, 0.0
    %4562 = vadd.xlane.f32.xlu0 %v4561
    %v4563 = vpop.xlane.xlu0 %4562
    %v4564 = vsel %vm167, %v4558, 0.0
    %4565 = vadd.xlane.f32.xlu0 %v4564
    %v4566 = vpop.xlane.xlu0 %4565
    %v4567 = vmul.f32 %v4563, %v1045
    %v4568 = vmul.f32 %v4566, %v1045
    %v4569 = vsub.f32 %v4557, %v4567
    %v4570 = vsub.f32 %v4558, %v4568
    %v4571 = vmul.f32 %v4569, %v4569
    %v4572 = vmul.f32 %v4570, %v4570
    %v4573 = vsel %vm167, %v4571, 0.0
    %4574 = vadd.xlane.f32.xlu0 %v4573
    %v4575 = vpop.xlane.xlu0 %4574
    %v4576 = vsel %vm167, %v4572, 0.0
    %4577 = vadd.xlane.f32.xlu0 %v4576
    %v4578 = vpop.xlane.xlu0 %4577
    %v4579 = vmul.f32 %v4575, %v1045
    %v4580 = vmul.f32 %v4578, %v1045
    %v4581 = vadd.f32 %v4579, 1e-05
    %v4582 = vadd.f32 %v4580, 1e-05
    %v4583 = vrsqrt.pop %v4581
    %v4584 = vmul.f32 %v4583, %v4581
    %v4585 = vmul.f32 %v4584, %v4583
    %v4586 = vmul.f32 0.5, %v4585
    %v4587 = vsub.f32 1.5, %v4586
    %v4588 = vmul.f32 %v4583, %v4587
    %vm4589 = vweird.f32 %v4581
    %vm4590 = vweird.f32 %v4583
    %vm4591 = vmor %vm4589, %vm4590
    %v4592 = vsel %vm4591, %v4583, %v4588
    %v4593 = vrsqrt.pop %v4582
    %v4594 = vmul.f32 %v4593, %v4582
    %v4595 = vmul.f32 %v4594, %v4593
    %v4596 = vmul.f32 0.5, %v4595
    %v4597 = vsub.f32 1.5, %v4596
    %v4598 = vmul.f32 %v4593, %v4597
    %vm4599 = vweird.f32 %v4582
    %vm4600 = vweird.f32 %v4593
    %vm4601 = vmor %vm4599, %vm4600
    %v4602 = vsel %vm4601, %v4593, %v4598
    %v4603 = vmul.f32 %v4569, %v4592
    %v4604 = vmul.f32 %v4570, %v4602
    %v4605 = vperm.slane %v4559, 0
    %v4606 = vmul.f32 %v4603, %v4605
    %v4607 = vmul.f32 %v4604, %v4605
    %v4608 = vperm.slane %v4560, 0
    %v4609 = vadd.f32 %v4606, %v4608
    %v4610 = vadd.f32 %v4607, %v4608
    %v4611 = vadd.f32 %v4609, %v2142
    %v4612 = vadd.f32 %v4610, %v2142
    %v4613 = vld [vmem:[#allocation2 + $0x200] sm:$0xf]
    %v4614 = vld [vmem:[#allocation2 + $0x204] sm:$0xf]
    %v4615 = vld [vmem:[#allocation2 + $0x208] sm:$0xf]
    %v4616 = vld [vmem:[#allocation2 + $0x20c] sm:$0xf]
    %v4617 = vpack.c.bf16 %v4612, %v4611
    %v4618 = vld [vmem:[#allocation5 + $0x3c] sm:$0x1]
    %v4619 = vperm.slane %v4618, 0
    %v4624 = vunpack.c.l.b16 %v4613
    %v4625 = vunpack.c.l.b16 %v4614
    %v4626 = vunpack.c.l.b16 %v4615
    %v4627 = vunpack.c.l.b16 %v4616
    %v4628 = vpack.c.b16 %v4625, %v4624
    %v4629 = vpack.c.b16 %v4627, %v4626
    %v4633 = vsel %vm167, %v4617, 0
    %4635 = vmatpush.bf16.msra.mxu0 0
    %4636 = vmatpush.bf16.msra.mxu0 0
    %4637 = vmatpush.bf16.msra.mxu0 0
    %4638 = vmatpush.bf16.msra.mxu0 0
    %4639 = vmatpush.bf16.msra.mxu0 0
    %4640 = vmatpush.bf16.msra.mxu0 0
    %4641 = vmatpush.bf16.msra.mxu0 %v4629
    %4642 = vmatpush.bf16.msra.mxu0 %v4628
    %4643 = vmatmul.bf16.gmra.mxu0 %v4633
    %v4644 = vpop.f32.mrf.mxu0
    %v4645 = vadd.f32 %v4619, %v4644
    %v4646 = vpop.f32.mrf.mxu0
    %v4647 = vadd.f32 %v4619, %v4646
    %4648 = vdwg.mxu0
    %v4649 = vmul.f32 %v4645, 0.35355338
    %v4650 = vmul.f32 %v4647, 0.35355338
    %v4651 = vld [vmem:[#allocation2 + $0x210] sm:$0xf]
    %v4652 = vld [vmem:[#allocation2 + $0x214] sm:$0xf]
    %v4653 = vld [vmem:[#allocation2 + $0x218] sm:$0xf]
    %v4654 = vld [vmem:[#allocation2 + $0x21c] sm:$0xf]
    %v4655 = vld [vmem:[#allocation5 + $0x3d] sm:$0x1]
    %v4656 = vperm.slane %v4655, 0
    %v4661 = vunpack.c.l.b16 %v4651
    %v4662 = vunpack.c.l.b16 %v4652
    %v4663 = vunpack.c.l.b16 %v4653
    %v4664 = vunpack.c.l.b16 %v4654
    %v4665 = vpack.c.b16 %v4662, %v4661
    %v4666 = vpack.c.b16 %v4664, %v4663
    %4669 = vmatpush.bf16.msra.mxu0 0
    %4670 = vmatpush.bf16.msra.mxu0 0
    %4671 = vmatpush.bf16.msra.mxu0 0
    %4672 = vmatpush.bf16.msra.mxu0 0
    %4673 = vmatpush.bf16.msra.mxu0 0
    %4674 = vmatpush.bf16.msra.mxu0 0
    %4675 = vmatpush.bf16.msra.mxu0 %v4666
    %4676 = vmatpush.bf16.msra.mxu0 %v4665
    %4677 = vmatmul.bf16.gmra.mxu0 %v2967
    %v4678 = vpop.f32.mrf.mxu0
    %v4679 = vadd.f32 %v4656, %v4678
    %v4680 = vpop.f32.mrf.mxu0
    %v4681 = vadd.f32 %v4656, %v4680
    %4682 = vdwg.mxu0
    %v4683 = vld [vmem:[#allocation2 + $0x220] sm:$0xf]
    %v4684 = vld [vmem:[#allocation2 + $0x224] sm:$0xf]
    %v4685 = vld [vmem:[#allocation2 + $0x228] sm:$0xf]
    %v4686 = vld [vmem:[#allocation2 + $0x22c] sm:$0xf]
    %v4687 = vld [vmem:[#allocation5 + $0x3e] sm:$0x1]
    %v4688 = vperm.slane %v4687, 0
    %v4693 = vunpack.c.l.b16 %v4683
    %v4694 = vunpack.c.l.b16 %v4684
    %v4695 = vunpack.c.l.b16 %v4685
    %v4696 = vunpack.c.l.b16 %v4686
    %v4697 = vpack.c.b16 %v4694, %v4693
    %v4698 = vpack.c.b16 %v4696, %v4695
    %4701 = vmatpush.bf16.msra.mxu0 0
    %4702 = vmatpush.bf16.msra.mxu0 0
    %4703 = vmatpush.bf16.msra.mxu0 0
    %4704 = vmatpush.bf16.msra.mxu0 0
    %4705 = vmatpush.bf16.msra.mxu0 0
    %4706 = vmatpush.bf16.msra.mxu0 0
    %4707 = vmatpush.bf16.msra.mxu0 %v4698
    %4708 = vmatpush.bf16.msra.mxu0 %v4697
    %4709 = vmatmul.bf16.gmra.mxu0 %v3003
    %v4710 = vpop.f32.mrf.mxu0
    %v4711 = vadd.f32 %v4688, %v4710
    %v4712 = vpop.f32.mrf.mxu0
    %v4713 = vadd.f32 %v4688, %v4712
    %4714 = vdwg.mxu0
    %v4715 = vpack.c.bf16 %v4649, %v4649
    %v4716 = vpack.c.bf16 %v4650, %v4650
    %v4717 = vpack.c.bf16 %v4679, %v4679
    %v4718 = vpack.c.bf16 %v4681, %v4681
    %v4719 = vpack.c.bf16 %v4711, %v4711
    %v4720 = vpack.c.bf16 %v4713, %v4713
    %v4722 = vsel %vm402, %v4715, 0
    %v4725 = vsel %vm402, %v4717, 0
    %4727 = vmatpush.bf16.xpose.msra.mxu0 0
    %4728 = vmatpush.bf16.xpose.msra.mxu0 0
    %4729 = vmatpush.bf16.xpose.msra.mxu0 0
    %4730 = vmatpush.bf16.xpose.msra.mxu0 0
    %4731 = vmatpush.bf16.xpose.msra.mxu0 0
    %4732 = vmatpush.bf16.xpose.msra.mxu0 0
    %4733 = vmatpush.bf16.xpose.msra.mxu0 0
    %4734 = vmatpush.bf16.xpose.msra.mxu0 %v4725
    %4735 = vmatmul.bf16.gmra.mxu0 %v4722
    %v4736 = vpop.f32.mrf.mxu0
    %v4737 = vadd.f32 0.0, %v4736
    %v4738 = vpop.f32.mrf.mxu0
    %4739 = vdwg.mxu0
    %v4741 = vsel %vm402, %v4716, 0
    %v4744 = vsel %vm402, %v4718, 0
    %4746 = vmatpush.bf16.xpose.msra.mxu0 0
    %4747 = vmatpush.bf16.xpose.msra.mxu0 0
    %4748 = vmatpush.bf16.xpose.msra.mxu0 0
    %4749 = vmatpush.bf16.xpose.msra.mxu0 0
    %4750 = vmatpush.bf16.xpose.msra.mxu0 0
    %4751 = vmatpush.bf16.xpose.msra.mxu0 0
    %4752 = vmatpush.bf16.xpose.msra.mxu0 0
    %4753 = vmatpush.bf16.xpose.msra.mxu0 %v4744
    %4754 = vmatmul.bf16.gmra.mxu0 %v4741
    %v4755 = vpop.f32.mrf.mxu0
    %v4756 = vadd.f32 0.0, %v4755
    %v4757 = vpop.f32.mrf.mxu0
    %4758 = vdwg.mxu0
    %v4759 = vsel %vm402, %v4737, -inf
    %4760 = vmax.xlane.f32.xlu0 %v4759
    %v4761 = vpop.xlane.xlu0 %4760
    %v4762 = vsel %vm402, %v4756, -inf
    %4763 = vmax.xlane.f32.xlu0 %v4762
    %v4764 = vpop.xlane.xlu0 %4763
    %v4765 = vsub.f32 %v4737, %v4761
    %v4766 = vsub.f32 %v4756, %v4764
    %v4767 = vmul.f32 %v4765, 1.442695
    %v4768 = vpow.pop %v4767
    %v4769 = vmul.f32 %v4766, 1.442695
    %v4770 = vpow.pop %v4769
    %v4771 = vsel %vm402, %v4768, 0.0
    %4772 = vadd.xlane.f32.xlu0 %v4771
    %v4773 = vpop.xlane.xlu0 %4772
    %v4774 = vsel %vm402, %v4770, 0.0
    %4775 = vadd.xlane.f32.xlu0 %v4774
    %v4776 = vpop.xlane.xlu0 %4775
    %v4777 = vrcp.pop %v4773
    %v4778 = vmul.f32 %v4773, %v4777
    %v4779 = vsub.f32 1.0, %v4778
    %v4780 = vmul.f32 %v4777, %v4779
    %v4781 = vadd.f32 %v4777, %v4780
    %vm4782 = vweird.f32 %v4773
    %vm4783 = vweird.f32 %v4777
    %vm4784 = vmor %vm4782, %vm4783
    %v4785 = vsel %vm4784, %v4777, %v4781
    %v4786 = vand.u32 2147483647, %v4773
    %vm4787 = vcmp.eq.f32.partialorder %v4786, 8.507059e+37
    %v4788 = vand.u32 %v4773, 2147483648
    %v4789 = vor.u32 1.1754944e-38, %v4788
    %v4790 = vsel %vm4787, %v4789, %v4785
    %v4791 = vmul.f32 %v4768, %v4790
    %v4792 = vrcp.pop %v4776
    %v4793 = vmul.f32 %v4776, %v4792
    %v4794 = vsub.f32 1.0, %v4793
    %v4795 = vmul.f32 %v4792, %v4794
    %v4796 = vadd.f32 %v4792, %v4795
    %vm4797 = vweird.f32 %v4776
    %vm4798 = vweird.f32 %v4792
    %vm4799 = vmor %vm4797, %vm4798
    %v4800 = vsel %vm4799, %v4792, %v4796
    %v4801 = vand.u32 2147483647, %v4776
    %vm4802 = vcmp.eq.f32.partialorder %v4801, 8.507059e+37
    %v4803 = vand.u32 %v4776, 2147483648
    %v4804 = vor.u32 1.1754944e-38, %v4803
    %v4805 = vsel %vm4802, %v4804, %v4800
    %v4806 = vmul.f32 %v4770, %v4805
    %v4807 = vpack.c.bf16 %v4791, %v4791
    %v4808 = vpack.c.bf16 %v4806, %v4806
    %v4810 = vsel %vm402, %v4807, 0
    %v4813 = vsel %vm499, %v4719, 0
    %4815 = vmatpush.bf16.msra.mxu0 0
    %4816 = vmatpush.bf16.msra.mxu0 0
    %4817 = vmatpush.bf16.msra.mxu0 0
    %4818 = vmatpush.bf16.msra.mxu0 0
    %4819 = vmatpush.bf16.msra.mxu0 0
    %4820 = vmatpush.bf16.msra.mxu0 0
    %4821 = vmatpush.bf16.msra.mxu0 0
    %4822 = vmatpush.bf16.msra.mxu0 %v4813
    %4823 = vmatmul.bf16.gmra.mxu0 %v4810
    %v4824 = vpop.f32.mrf.mxu0
    %v4825 = vadd.f32 0.0, %v4824
    %v4826 = vpop.f32.mrf.mxu0
    %4827 = vdwg.mxu0
    %v4829 = vsel %vm402, %v4808, 0
    %v4832 = vsel %vm499, %v4720, 0
    %4834 = vmatpush.bf16.msra.mxu0 0
    %4835 = vmatpush.bf16.msra.mxu0 0
    %4836 = vmatpush.bf16.msra.mxu0 0
    %4837 = vmatpush.bf16.msra.mxu0 0
    %4838 = vmatpush.bf16.msra.mxu0 0
    %4839 = vmatpush.bf16.msra.mxu0 0
    %4840 = vmatpush.bf16.msra.mxu0 0
    %4841 = vmatpush.bf16.msra.mxu0 %v4832
    %4842 = vmatmul.bf16.gmra.mxu0 %v4829
    %v4843 = vpop.f32.mrf.mxu0
    %v4844 = vadd.f32 0.0, %v4843
    %v4845 = vpop.f32.mrf.mxu0
    %4846 = vdwg.mxu0
    %v4848 = vunpack.c.l.b16 %v4715
    %v4849 = vpack.c.b16 %v4848, %v4848
    %4850 = vrot.lane.b32.xlu0 %v4849, 120
    %v4851 = vpop.permute.xlu0 %4850
    %v4853 = vunpack.c.l.b16 %v4717
    %v4854 = vpack.c.b16 %v4853, %v4853
    %4855 = vrot.lane.b32.xlu0 %v4854, 120
    %v4856 = vpop.permute.xlu0 %4855
    %v4858 = vsel %vm402, %v4851, 0
    %v4861 = vsel %vm402, %v4856, 0
    %4863 = vmatpush.bf16.xpose.msra.mxu0 0
    %4864 = vmatpush.bf16.xpose.msra.mxu0 0
    %4865 = vmatpush.bf16.xpose.msra.mxu0 0
    %4866 = vmatpush.bf16.xpose.msra.mxu0 0
    %4867 = vmatpush.bf16.xpose.msra.mxu0 0
    %4868 = vmatpush.bf16.xpose.msra.mxu0 0
    %4869 = vmatpush.bf16.xpose.msra.mxu0 0
    %4870 = vmatpush.bf16.xpose.msra.mxu0 %v4861
    %4871 = vmatmul.bf16.gmra.mxu0 %v4858
    %v4872 = vpop.f32.mrf.mxu0
    %v4873 = vadd.f32 0.0, %v4872
    %v4874 = vpop.f32.mrf.mxu0
    %4875 = vdwg.mxu0
    %v4877 = vunpack.c.l.b16 %v4716
    %v4878 = vpack.c.b16 %v4877, %v4877
    %4879 = vrot.lane.b32.xlu0 %v4878, 120
    %v4880 = vpop.permute.xlu0 %4879
    %v4882 = vunpack.c.l.b16 %v4718
    %v4883 = vpack.c.b16 %v4882, %v4882
    %4884 = vrot.lane.b32.xlu0 %v4883, 120
    %v4885 = vpop.permute.xlu0 %4884
    %v4887 = vsel %vm402, %v4880, 0
    %v4890 = vsel %vm402, %v4885, 0
    %4892 = vmatpush.bf16.xpose.msra.mxu0 0
    %4893 = vmatpush.bf16.xpose.msra.mxu0 0
    %4894 = vmatpush.bf16.xpose.msra.mxu0 0
    %4895 = vmatpush.bf16.xpose.msra.mxu0 0
    %4896 = vmatpush.bf16.xpose.msra.mxu0 0
    %4897 = vmatpush.bf16.xpose.msra.mxu0 0
    %4898 = vmatpush.bf16.xpose.msra.mxu0 0
    %4899 = vmatpush.bf16.xpose.msra.mxu0 %v4890
    %4900 = vmatmul.bf16.gmra.mxu0 %v4887
    %v4901 = vpop.f32.mrf.mxu0
    %v4902 = vadd.f32 0.0, %v4901
    %v4903 = vpop.f32.mrf.mxu0
    %4904 = vdwg.mxu0
    %v4905 = vsel %vm402, %v4873, -inf
    %4906 = vmax.xlane.f32.xlu0 %v4905
    %v4907 = vpop.xlane.xlu0 %4906
    %v4908 = vsel %vm402, %v4902, -inf
    %4909 = vmax.xlane.f32.xlu0 %v4908
    %v4910 = vpop.xlane.xlu0 %4909
    %v4911 = vsub.f32 %v4873, %v4907
    %v4912 = vsub.f32 %v4902, %v4910
    %v4913 = vmul.f32 %v4911, 1.442695
    %v4914 = vpow.pop %v4913
    %v4915 = vmul.f32 %v4912, 1.442695
    %v4916 = vpow.pop %v4915
    %v4917 = vsel %vm402, %v4914, 0.0
    %4918 = vadd.xlane.f32.xlu0 %v4917
    %v4919 = vpop.xlane.xlu0 %4918
    %v4920 = vsel %vm402, %v4916, 0.0
    %4921 = vadd.xlane.f32.xlu0 %v4920
    %v4922 = vpop.xlane.xlu0 %4921
    %v4923 = vrcp.pop %v4919
    %v4924 = vmul.f32 %v4919, %v4923
    %v4925 = vsub.f32 1.0, %v4924
    %v4926 = vmul.f32 %v4923, %v4925
    %v4927 = vadd.f32 %v4923, %v4926
    %vm4928 = vweird.f32 %v4919
    %vm4929 = vweird.f32 %v4923
    %vm4930 = vmor %vm4928, %vm4929
    %v4931 = vsel %vm4930, %v4923, %v4927
    %v4932 = vand.u32 2147483647, %v4919
    %vm4933 = vcmp.eq.f32.partialorder %v4932, 8.507059e+37
    %v4934 = vand.u32 %v4919, 2147483648
    %v4935 = vor.u32 1.1754944e-38, %v4934
    %v4936 = vsel %vm4933, %v4935, %v4931
    %v4937 = vmul.f32 %v4914, %v4936
    %v4938 = vrcp.pop %v4922
    %v4939 = vmul.f32 %v4922, %v4938
    %v4940 = vsub.f32 1.0, %v4939
    %v4941 = vmul.f32 %v4938, %v4940
    %v4942 = vadd.f32 %v4938, %v4941
    %vm4943 = vweird.f32 %v4922
    %vm4944 = vweird.f32 %v4938
    %vm4945 = vmor %vm4943, %vm4944
    %v4946 = vsel %vm4945, %v4938, %v4942
    %v4947 = vand.u32 2147483647, %v4922
    %vm4948 = vcmp.eq.f32.partialorder %v4947, 8.507059e+37
    %v4949 = vand.u32 %v4922, 2147483648
    %v4950 = vor.u32 1.1754944e-38, %v4949
    %v4951 = vsel %vm4948, %v4950, %v4946
    %v4952 = vmul.f32 %v4916, %v4951
    %v4953 = vpack.c.bf16 %v4937, %v4937
    %v4954 = vpack.c.bf16 %v4952, %v4952
    %v4956 = vunpack.c.l.b16 %v4719
    %v4957 = vpack.c.b16 %v4956, %v4956
    %4958 = vrot.lane.b32.xlu0 %v4957, 120
    %v4959 = vpop.permute.xlu0 %4958
    %v4961 = vsel %vm402, %v4953, 0
    %v4964 = vsel %vm499, %v4959, 0
    %4966 = vmatpush.bf16.msra.mxu0 0
    %4967 = vmatpush.bf16.msra.mxu0 0
    %4968 = vmatpush.bf16.msra.mxu0 0
    %4969 = vmatpush.bf16.msra.mxu0 0
    %4970 = vmatpush.bf16.msra.mxu0 0
    %4971 = vmatpush.bf16.msra.mxu0 0
    %4972 = vmatpush.bf16.msra.mxu0 0
    %4973 = vmatpush.bf16.msra.mxu0 %v4964
    %4974 = vmatmul.bf16.gmra.mxu0 %v4961
    %v4975 = vpop.f32.mrf.mxu0
    %v4976 = vadd.f32 0.0, %v4975
    %v4977 = vpop.f32.mrf.mxu0
    %4978 = vdwg.mxu0
    %v4980 = vunpack.c.l.b16 %v4720
    %v4981 = vpack.c.b16 %v4980, %v4980
    %4982 = vrot.lane.b32.xlu0 %v4981, 120
    %v4983 = vpop.permute.xlu0 %4982
    %v4985 = vsel %vm402, %v4954, 0
    %v4988 = vsel %vm499, %v4983, 0
    %4990 = vmatpush.bf16.msra.mxu0 0
    %4991 = vmatpush.bf16.msra.mxu0 0
    %4992 = vmatpush.bf16.msra.mxu0 0
    %4993 = vmatpush.bf16.msra.mxu0 0
    %4994 = vmatpush.bf16.msra.mxu0 0
    %4995 = vmatpush.bf16.msra.mxu0 0
    %4996 = vmatpush.bf16.msra.mxu0 0
    %4997 = vmatpush.bf16.msra.mxu0 %v4988
    %4998 = vmatmul.bf16.gmra.mxu0 %v4985
    %v4999 = vpop.f32.mrf.mxu0
    %v5000 = vadd.f32 0.0, %v4999
    %v5001 = vpop.f32.mrf.mxu0
    %5002 = vdwg.mxu0
    %5003 = vrot.lane.b32.xlu0 %v4849, 112
    %v5004 = vpop.permute.xlu0 %5003
    %5005 = vrot.lane.b32.xlu0 %v4854, 112
    %v5006 = vpop.permute.xlu0 %5005
    %v5008 = vsel %vm402, %v5004, 0
    %v5011 = vsel %vm402, %v5006, 0
    %5013 = vmatpush.bf16.xpose.msra.mxu0 0
    %5014 = vmatpush.bf16.xpose.msra.mxu0 0
    %5015 = vmatpush.bf16.xpose.msra.mxu0 0
    %5016 = vmatpush.bf16.xpose.msra.mxu0 0
    %5017 = vmatpush.bf16.xpose.msra.mxu0 0
    %5018 = vmatpush.bf16.xpose.msra.mxu0 0
    %5019 = vmatpush.bf16.xpose.msra.mxu0 0
    %5020 = vmatpush.bf16.xpose.msra.mxu0 %v5011
    %5021 = vmatmul.bf16.gmra.mxu0 %v5008
    %v5022 = vpop.f32.mrf.mxu0
    %v5023 = vadd.f32 0.0, %v5022
    %v5024 = vpop.f32.mrf.mxu0
    %5025 = vdwg.mxu0
    %5026 = vrot.lane.b32.xlu0 %v4878, 112
    %v5027 = vpop.permute.xlu0 %5026
    %5028 = vrot.lane.b32.xlu0 %v4883, 112
    %v5029 = vpop.permute.xlu0 %5028
    %v5031 = vsel %vm402, %v5027, 0
    %v5034 = vsel %vm402, %v5029, 0
    %5036 = vmatpush.bf16.xpose.msra.mxu0 0
    %5037 = vmatpush.bf16.xpose.msra.mxu0 0
    %5038 = vmatpush.bf16.xpose.msra.mxu0 0
    %5039 = vmatpush.bf16.xpose.msra.mxu0 0
    %5040 = vmatpush.bf16.xpose.msra.mxu0 0
    %5041 = vmatpush.bf16.xpose.msra.mxu0 0
    %5042 = vmatpush.bf16.xpose.msra.mxu0 0
    %5043 = vmatpush.bf16.xpose.msra.mxu0 %v5034
    %5044 = vmatmul.bf16.gmra.mxu0 %v5031
    %v5045 = vpop.f32.mrf.mxu0
    %v5046 = vadd.f32 0.0, %v5045
    %v5047 = vpop.f32.mrf.mxu0
    %5048 = vdwg.mxu0
    %v5049 = vsel %vm402, %v5023, -inf
    %5050 = vmax.xlane.f32.xlu0 %v5049
    %v5051 = vpop.xlane.xlu0 %5050
    %v5052 = vsel %vm402, %v5046, -inf
    %5053 = vmax.xlane.f32.xlu0 %v5052
    %v5054 = vpop.xlane.xlu0 %5053
    %v5055 = vsub.f32 %v5023, %v5051
    %v5056 = vsub.f32 %v5046, %v5054
    %v5057 = vmul.f32 %v5055, 1.442695
    %v5058 = vpow.pop %v5057
    %v5059 = vmul.f32 %v5056, 1.442695
    %v5060 = vpow.pop %v5059
    %v5061 = vsel %vm402, %v5058, 0.0
    %5062 = vadd.xlane.f32.xlu0 %v5061
    %v5063 = vpop.xlane.xlu0 %5062
    %v5064 = vsel %vm402, %v5060, 0.0
    %5065 = vadd.xlane.f32.xlu0 %v5064
    %v5066 = vpop.xlane.xlu0 %5065
    %v5067 = vrcp.pop %v5063
    %v5068 = vmul.f32 %v5063, %v5067
    %v5069 = vsub.f32 1.0, %v5068
    %v5070 = vmul.f32 %v5067, %v5069
    %v5071 = vadd.f32 %v5067, %v5070
    %vm5072 = vweird.f32 %v5063
    %vm5073 = vweird.f32 %v5067
    %vm5074 = vmor %vm5072, %vm5073
    %v5075 = vsel %vm5074, %v5067, %v5071
    %v5076 = vand.u32 2147483647, %v5063
    %vm5077 = vcmp.eq.f32.partialorder %v5076, 8.507059e+37
    %v5078 = vand.u32 %v5063, 2147483648
    %v5079 = vor.u32 1.1754944e-38, %v5078
    %v5080 = vsel %vm5077, %v5079, %v5075
    %v5081 = vmul.f32 %v5058, %v5080
    %v5082 = vrcp.pop %v5066
    %v5083 = vmul.f32 %v5066, %v5082
    %v5084 = vsub.f32 1.0, %v5083
    %v5085 = vmul.f32 %v5082, %v5084
    %v5086 = vadd.f32 %v5082, %v5085
    %vm5087 = vweird.f32 %v5066
    %vm5088 = vweird.f32 %v5082
    %vm5089 = vmor %vm5087, %vm5088
    %v5090 = vsel %vm5089, %v5082, %v5086
    %v5091 = vand.u32 2147483647, %v5066
    %vm5092 = vcmp.eq.f32.partialorder %v5091, 8.507059e+37
    %v5093 = vand.u32 %v5066, 2147483648
    %v5094 = vor.u32 1.1754944e-38, %v5093
    %v5095 = vsel %vm5092, %v5094, %v5090
    %v5096 = vmul.f32 %v5060, %v5095
    %v5097 = vpack.c.bf16 %v5081, %v5081
    %v5098 = vpack.c.bf16 %v5096, %v5096
    %5099 = vrot.lane.b32.xlu0 %v4957, 112
    %v5100 = vpop.permute.xlu0 %5099
    %v5102 = vsel %vm402, %v5097, 0
    %v5105 = vsel %vm499, %v5100, 0
    %5107 = vmatpush.bf16.msra.mxu0 0
    %5108 = vmatpush.bf16.msra.mxu0 0
    %5109 = vmatpush.bf16.msra.mxu0 0
    %5110 = vmatpush.bf16.msra.mxu0 0
    %5111 = vmatpush.bf16.msra.mxu0 0
    %5112 = vmatpush.bf16.msra.mxu0 0
    %5113 = vmatpush.bf16.msra.mxu0 0
    %5114 = vmatpush.bf16.msra.mxu0 %v5105
    %5115 = vmatmul.bf16.gmra.mxu0 %v5102
    %v5116 = vpop.f32.mrf.mxu0
    %v5117 = vadd.f32 0.0, %v5116
    %v5118 = vpop.f32.mrf.mxu0
    %5119 = vdwg.mxu0
    %5120 = vrot.lane.b32.xlu0 %v4981, 112
    %v5121 = vpop.permute.xlu0 %5120
    %v5123 = vsel %vm402, %v5098, 0
    %v5126 = vsel %vm499, %v5121, 0
    %5128 = vmatpush.bf16.msra.mxu0 0
    %5129 = vmatpush.bf16.msra.mxu0 0
    %5130 = vmatpush.bf16.msra.mxu0 0
    %5131 = vmatpush.bf16.msra.mxu0 0
    %5132 = vmatpush.bf16.msra.mxu0 0
    %5133 = vmatpush.bf16.msra.mxu0 0
    %5134 = vmatpush.bf16.msra.mxu0 0
    %5135 = vmatpush.bf16.msra.mxu0 %v5126
    %5136 = vmatmul.bf16.gmra.mxu0 %v5123
    %v5137 = vpop.f32.mrf.mxu0
    %v5138 = vadd.f32 0.0, %v5137
    %v5139 = vpop.f32.mrf.mxu0
    %5140 = vdwg.mxu0
    %5141 = vrot.lane.b32.xlu0 %v4849, 104
    %v5142 = vpop.permute.xlu0 %5141
    %5143 = vrot.lane.b32.xlu0 %v4854, 104
    %v5144 = vpop.permute.xlu0 %5143
    %v5146 = vsel %vm402, %v5142, 0
    %v5149 = vsel %vm402, %v5144, 0
    %5151 = vmatpush.bf16.xpose.msra.mxu0 0
    %5152 = vmatpush.bf16.xpose.msra.mxu0 0
    %5153 = vmatpush.bf16.xpose.msra.mxu0 0
    %5154 = vmatpush.bf16.xpose.msra.mxu0 0
    %5155 = vmatpush.bf16.xpose.msra.mxu0 0
    %5156 = vmatpush.bf16.xpose.msra.mxu0 0
    %5157 = vmatpush.bf16.xpose.msra.mxu0 0
    %5158 = vmatpush.bf16.xpose.msra.mxu0 %v5149
    %5159 = vmatmul.bf16.gmra.mxu0 %v5146
    %v5160 = vpop.f32.mrf.mxu0
    %v5161 = vadd.f32 0.0, %v5160
    %v5162 = vpop.f32.mrf.mxu0
    %5163 = vdwg.mxu0
    %5164 = vrot.lane.b32.xlu0 %v4878, 104
    %v5165 = vpop.permute.xlu0 %5164
    %5166 = vrot.lane.b32.xlu0 %v4883, 104
    %v5167 = vpop.permute.xlu0 %5166
    %v5169 = vsel %vm402, %v5165, 0
    %v5172 = vsel %vm402, %v5167, 0
    %5174 = vmatpush.bf16.xpose.msra.mxu0 0
    %5175 = vmatpush.bf16.xpose.msra.mxu0 0
    %5176 = vmatpush.bf16.xpose.msra.mxu0 0
    %5177 = vmatpush.bf16.xpose.msra.mxu0 0
    %5178 = vmatpush.bf16.xpose.msra.mxu0 0
    %5179 = vmatpush.bf16.xpose.msra.mxu0 0
    %5180 = vmatpush.bf16.xpose.msra.mxu0 0
    %5181 = vmatpush.bf16.xpose.msra.mxu0 %v5172
    %5182 = vmatmul.bf16.gmra.mxu0 %v5169
    %v5183 = vpop.f32.mrf.mxu0
    %v5184 = vadd.f32 0.0, %v5183
    %v5185 = vpop.f32.mrf.mxu0
    %5186 = vdwg.mxu0
    %v5187 = vsel %vm402, %v5161, -inf
    %5188 = vmax.xlane.f32.xlu0 %v5187
    %v5189 = vpop.xlane.xlu0 %5188
    %v5190 = vsel %vm402, %v5184, -inf
    %5191 = vmax.xlane.f32.xlu0 %v5190
    %v5192 = vpop.xlane.xlu0 %5191
    %v5193 = vsub.f32 %v5161, %v5189
    %v5194 = vsub.f32 %v5184, %v5192
    %v5195 = vmul.f32 %v5193, 1.442695
    %v5196 = vpow.pop %v5195
    %v5197 = vmul.f32 %v5194, 1.442695
    %v5198 = vpow.pop %v5197
    %v5199 = vsel %vm402, %v5196, 0.0
    %5200 = vadd.xlane.f32.xlu0 %v5199
    %v5201 = vpop.xlane.xlu0 %5200
    %v5202 = vsel %vm402, %v5198, 0.0
    %5203 = vadd.xlane.f32.xlu0 %v5202
    %v5204 = vpop.xlane.xlu0 %5203
    %v5205 = vrcp.pop %v5201
    %v5206 = vmul.f32 %v5201, %v5205
    %v5207 = vsub.f32 1.0, %v5206
    %v5208 = vmul.f32 %v5205, %v5207
    %v5209 = vadd.f32 %v5205, %v5208
    %vm5210 = vweird.f32 %v5201
    %vm5211 = vweird.f32 %v5205
    %vm5212 = vmor %vm5210, %vm5211
    %v5213 = vsel %vm5212, %v5205, %v5209
    %v5214 = vand.u32 2147483647, %v5201
    %vm5215 = vcmp.eq.f32.partialorder %v5214, 8.507059e+37
    %v5216 = vand.u32 %v5201, 2147483648
    %v5217 = vor.u32 1.1754944e-38, %v5216
    %v5218 = vsel %vm5215, %v5217, %v5213
    %v5219 = vmul.f32 %v5196, %v5218
    %v5220 = vrcp.pop %v5204
    %v5221 = vmul.f32 %v5204, %v5220
    %v5222 = vsub.f32 1.0, %v5221
    %v5223 = vmul.f32 %v5220, %v5222
    %v5224 = vadd.f32 %v5220, %v5223
    %vm5225 = vweird.f32 %v5204
    %vm5226 = vweird.f32 %v5220
    %vm5227 = vmor %vm5225, %vm5226
    %v5228 = vsel %vm5227, %v5220, %v5224
    %v5229 = vand.u32 2147483647, %v5204
    %vm5230 = vcmp.eq.f32.partialorder %v5229, 8.507059e+37
    %v5231 = vand.u32 %v5204, 2147483648
    %v5232 = vor.u32 1.1754944e-38, %v5231
    %v5233 = vsel %vm5230, %v5232, %v5228
    %v5234 = vmul.f32 %v5198, %v5233
    %v5235 = vpack.c.bf16 %v5219, %v5219
    %v5236 = vpack.c.bf16 %v5234, %v5234
    %5237 = vrot.lane.b32.xlu0 %v4957, 104
    %v5238 = vpop.permute.xlu0 %5237
    %v5240 = vsel %vm402, %v5235, 0
    %v5243 = vsel %vm499, %v5238, 0
    %5245 = vmatpush.bf16.msra.mxu0 0
    %5246 = vmatpush.bf16.msra.mxu0 0
    %5247 = vmatpush.bf16.msra.mxu0 0
    %5248 = vmatpush.bf16.msra.mxu0 0
    %5249 = vmatpush.bf16.msra.mxu0 0
    %5250 = vmatpush.bf16.msra.mxu0 0
    %5251 = vmatpush.bf16.msra.mxu0 0
    %5252 = vmatpush.bf16.msra.mxu0 %v5243
    %5253 = vmatmul.bf16.gmra.mxu0 %v5240
    %v5254 = vpop.f32.mrf.mxu0
    %v5255 = vadd.f32 0.0, %v5254
    %v5256 = vpop.f32.mrf.mxu0
    %5257 = vdwg.mxu0
    %5258 = vrot.lane.b32.xlu0 %v4981, 104
    %v5259 = vpop.permute.xlu0 %5258
    %v5261 = vsel %vm402, %v5236, 0
    %v5264 = vsel %vm499, %v5259, 0
    %5266 = vmatpush.bf16.msra.mxu0 0
    %5267 = vmatpush.bf16.msra.mxu0 0
    %5268 = vmatpush.bf16.msra.mxu0 0
    %5269 = vmatpush.bf16.msra.mxu0 0
    %5270 = vmatpush.bf16.msra.mxu0 0
    %5271 = vmatpush.bf16.msra.mxu0 0
    %5272 = vmatpush.bf16.msra.mxu0 0
    %5273 = vmatpush.bf16.msra.mxu0 %v5264
    %5274 = vmatmul.bf16.gmra.mxu0 %v5261
    %v5275 = vpop.f32.mrf.mxu0
    %v5276 = vadd.f32 0.0, %v5275
    %v5277 = vpop.f32.mrf.mxu0
    %5278 = vdwg.mxu0
    %5281 = vrot.lane.b32.xlu0 %v4976, 8
    %v5282 = vpop.permute.xlu0 %5281
    %5283 = vrot.lane.b32.xlu0 %v5000, 8
    %v5284 = vpop.permute.xlu0 %5283
    %5289 = vrot.lane.b32.xlu0 %v5117, 16
    %v5290 = vpop.permute.xlu0 %5289
    %5291 = vrot.lane.b32.xlu0 %v5138, 16
    %v5292 = vpop.permute.xlu0 %5291
    %5297 = vrot.lane.b32.xlu0 %v5255, 24
    %v5298 = vpop.permute.xlu0 %5297
    %5299 = vrot.lane.b32.xlu0 %v5276, 24
    %v5300 = vpop.permute.xlu0 %5299
    %v5303 = vsel %vm402, %v4825, %v5282
    %v5304 = vsel %vm402, %v4844, %v5284
    %v5305 = vsel %vm987, %v5303, %v5290
    %v5306 = vsel %vm987, %v5304, %v5292
    %v5307 = vsel %vm990, %v5305, %v5298
    %v5308 = vsel %vm990, %v5306, %v5300
    %v5309 = vld [vmem:[#allocation2 + $0x230] sm:$0xf]
    %v5310 = vld [vmem:[#allocation2 + $0x234] sm:$0xf]
    %v5311 = vld [vmem:[#allocation2 + $0x238] sm:$0xf]
    %v5312 = vld [vmem:[#allocation2 + $0x23c] sm:$0xf]
    %v5313 = vpack.c.bf16 %v5308, %v5307
    %v5314 = vld [vmem:[#allocation5 + $0x3f] sm:$0x1]
    %v5315 = vperm.slane %v5314, 0
    %v5320 = vunpack.c.l.b16 %v5309
    %v5321 = vunpack.c.l.b16 %v5310
    %v5322 = vunpack.c.l.b16 %v5311
    %v5323 = vunpack.c.l.b16 %v5312
    %v5324 = vpack.c.b16 %v5321, %v5320
    %v5325 = vpack.c.b16 %v5323, %v5322
    %v5329 = vsel %vm167, %v5313, 0
    %5331 = vmatpush.bf16.msra.mxu0 0
    %5332 = vmatpush.bf16.msra.mxu0 0
    %5333 = vmatpush.bf16.msra.mxu0 0
    %5334 = vmatpush.bf16.msra.mxu0 0
    %5335 = vmatpush.bf16.msra.mxu0 0
    %5336 = vmatpush.bf16.msra.mxu0 0
    %5337 = vmatpush.bf16.msra.mxu0 %v5325
    %5338 = vmatpush.bf16.msra.mxu0 %v5324
    %5339 = vmatmul.bf16.gmra.mxu0 %v5329
    %v5340 = vpop.f32.mrf.mxu0
    %v5341 = vadd.f32 %v5315, %v5340
    %v5342 = vpop.f32.mrf.mxu0
    %v5343 = vadd.f32 %v5315, %v5342
    %5344 = vdwg.mxu0
    %v5345 = vadd.f32 %v4609, %v5341
    %v5346 = vadd.f32 %v4610, %v5343
    %v5347 = vld [vmem:[#allocation5 + $0x40] sm:$0x1]
    %v5348 = vld [vmem:[#allocation5 + $0x41] sm:$0x1]
    %v5349 = vsel %vm167, %v5345, 0.0
    %5350 = vadd.xlane.f32.xlu0 %v5349
    %v5351 = vpop.xlane.xlu0 %5350
    %v5352 = vsel %vm167, %v5346, 0.0
    %5353 = vadd.xlane.f32.xlu0 %v5352
    %v5354 = vpop.xlane.xlu0 %5353
    %v5355 = vmul.f32 %v5351, %v1045
    %v5356 = vmul.f32 %v5354, %v1045
    %v5357 = vsub.f32 %v5345, %v5355
    %v5358 = vsub.f32 %v5346, %v5356
    %v5359 = vmul.f32 %v5357, %v5357
    %v5360 = vmul.f32 %v5358, %v5358
    %v5361 = vsel %vm167, %v5359, 0.0
    %5362 = vadd.xlane.f32.xlu0 %v5361
    %v5363 = vpop.xlane.xlu0 %5362
    %v5364 = vsel %vm167, %v5360, 0.0
    %5365 = vadd.xlane.f32.xlu0 %v5364
    %v5366 = vpop.xlane.xlu0 %5365
    %v5367 = vmul.f32 %v5363, %v1045
    %v5368 = vmul.f32 %v5366, %v1045
    %v5369 = vadd.f32 %v5367, 1e-05
    %v5370 = vadd.f32 %v5368, 1e-05
    %v5371 = vrsqrt.pop %v5369
    %v5372 = vmul.f32 %v5371, %v5369
    %v5373 = vmul.f32 %v5372, %v5371
    %v5374 = vmul.f32 0.5, %v5373
    %v5375 = vsub.f32 1.5, %v5374
    %v5376 = vmul.f32 %v5371, %v5375
    %vm5377 = vweird.f32 %v5369
    %vm5378 = vweird.f32 %v5371
    %vm5379 = vmor %vm5377, %vm5378
    %v5380 = vsel %vm5379, %v5371, %v5376
    %v5381 = vrsqrt.pop %v5370
    %v5382 = vmul.f32 %v5381, %v5370
    %v5383 = vmul.f32 %v5382, %v5381
    %v5384 = vmul.f32 0.5, %v5383
    %v5385 = vsub.f32 1.5, %v5384
    %v5386 = vmul.f32 %v5381, %v5385
    %vm5387 = vweird.f32 %v5370
    %vm5388 = vweird.f32 %v5381
    %vm5389 = vmor %vm5387, %vm5388
    %v5390 = vsel %vm5389, %v5381, %v5386
    %v5391 = vmul.f32 %v5357, %v5380
    %v5392 = vmul.f32 %v5358, %v5390
    %v5393 = vperm.slane %v5347, 0
    %v5394 = vmul.f32 %v5391, %v5393
    %v5395 = vmul.f32 %v5392, %v5393
    %v5396 = vperm.slane %v5348, 0
    %v5397 = vadd.f32 %v5394, %v5396
    %v5398 = vadd.f32 %v5395, %v5396
    %v5399 = vld [vmem:[#allocation2 + $0x240] sm:$0xf]
    %v5400 = vld [vmem:[#allocation2 + $0x244] sm:$0xf]
    %v5401 = vld [vmem:[#allocation2 + $0x248] sm:$0xf]
    %v5402 = vld [vmem:[#allocation2 + $0x24c] sm:$0xf]
    %v5403 = vpack.c.bf16 %v5398, %v5397
    %v5404 = vld [vmem:[#allocation5 + $0x42] sm:$0x1]
    %v5405 = vperm.slane %v5404, 0
    %v5410 = vunpack.c.l.b16 %v5399
    %v5411 = vunpack.c.l.b16 %v5400
    %v5412 = vunpack.c.l.b16 %v5401
    %v5413 = vunpack.c.l.b16 %v5402
    %v5414 = vpack.c.b16 %v5411, %v5410
    %v5415 = vpack.c.b16 %v5413, %v5412
    %v5419 = vsel %vm167, %v5403, 0
    %5421 = vmatpush.bf16.msra.mxu0 0
    %5422 = vmatpush.bf16.msra.mxu0 0
    %5423 = vmatpush.bf16.msra.mxu0 0
    %5424 = vmatpush.bf16.msra.mxu0 0
    %5425 = vmatpush.bf16.msra.mxu0 0
    %5426 = vmatpush.bf16.msra.mxu0 0
    %5427 = vmatpush.bf16.msra.mxu0 %v5415
    %5428 = vmatpush.bf16.msra.mxu0 %v5414
    %5429 = vmatmul.bf16.gmra.mxu0 %v5419
    %v5430 = vpop.f32.mrf.mxu0
    %v5431 = vadd.f32 %v5405, %v5430
    %v5432 = vpop.f32.mrf.mxu0
    %v5433 = vadd.f32 %v5405, %v5432
    %5434 = vdwg.mxu0
    %v5435 = vmax.f32 %v5431, 0.0
    %v5436 = vmax.f32 %v5433, 0.0
    %v5437 = vld [vmem:[#allocation2 + $0x250] sm:$0xf]
    %v5438 = vld [vmem:[#allocation2 + $0x254] sm:$0xf]
    %v5439 = vld [vmem:[#allocation2 + $0x258] sm:$0xf]
    %v5440 = vld [vmem:[#allocation2 + $0x25c] sm:$0xf]
    %v5441 = vld [vmem:[#allocation2 + $0x260] sm:$0xf]
    %v5442 = vld [vmem:[#allocation2 + $0x264] sm:$0xf]
    %v5443 = vld [vmem:[#allocation2 + $0x268] sm:$0xf]
    %v5444 = vld [vmem:[#allocation2 + $0x26c] sm:$0xf]
    %v5445 = vpack.c.bf16 %v5436, %v5435
    %v5446 = vld [vmem:[#allocation5 + $0x43] sm:$0x1]
    %v5447 = vperm.slane %v5446, 0
    %v5456 = vunpack.c.l.b16 %v5437
    %v5457 = vunpack.c.l.b16 %v5438
    %v5458 = vunpack.c.l.b16 %v5439
    %v5459 = vunpack.c.l.b16 %v5440
    %v5460 = vunpack.c.l.b16 %v5441
    %v5461 = vunpack.c.l.b16 %v5442
    %v5462 = vunpack.c.l.b16 %v5443
    %v5463 = vunpack.c.l.b16 %v5444
    %v5464 = vpack.c.b16 %v5457, %v5456
    %v5465 = vpack.c.b16 %v5459, %v5458
    %v5466 = vpack.c.b16 %v5461, %v5460
    %v5467 = vpack.c.b16 %v5463, %v5462
    %v5473 = vsel %vm120, %v5445, 0
    %5475 = vmatpush.bf16.msra.mxu0 0
    %5476 = vmatpush.bf16.msra.mxu0 0
    %5477 = vmatpush.bf16.msra.mxu0 0
    %5478 = vmatpush.bf16.msra.mxu0 0
    %5479 = vmatpush.bf16.msra.mxu0 %v5467
    %5480 = vmatpush.bf16.msra.mxu0 %v5466
    %5481 = vmatpush.bf16.msra.mxu0 %v5465
    %5482 = vmatpush.bf16.msra.mxu0 %v5464
    %5483 = vmatmul.bf16.gmra.mxu0 %v5473
    %v5484 = vpop.f32.mrf.mxu0
    %v5485 = vadd.f32 %v5447, %v5484
    %v5486 = vpop.f32.mrf.mxu0
    %v5487 = vadd.f32 %v5447, %v5486
    %5488 = vdwg.mxu0
    %v5489 = vadd.f32 %v5397, %v5485
    %v5490 = vadd.f32 %v5398, %v5487
    %v5491 = vld [vmem:[#allocation5 + $0x44] sm:$0x1]
    %v5492 = vld [vmem:[#allocation5 + $0x45] sm:$0x1]
    %v5493 = vsel %vm167, %v5489, 0.0
    %5494 = vadd.xlane.f32.xlu0 %v5493
    %v5495 = vpop.xlane.xlu0 %5494
    %v5496 = vsel %vm167, %v5490, 0.0
    %5497 = vadd.xlane.f32.xlu0 %v5496
    %v5498 = vpop.xlane.xlu0 %5497
    %v5499 = vmul.f32 %v5495, %v1045
    %v5500 = vmul.f32 %v5498, %v1045
    %v5501 = vsub.f32 %v5489, %v5499
    %v5502 = vsub.f32 %v5490, %v5500
    %v5503 = vmul.f32 %v5501, %v5501
    %v5504 = vmul.f32 %v5502, %v5502
    %v5505 = vsel %vm167, %v5503, 0.0
    %5506 = vadd.xlane.f32.xlu0 %v5505
    %v5507 = vpop.xlane.xlu0 %5506
    %v5508 = vsel %vm167, %v5504, 0.0
    %5509 = vadd.xlane.f32.xlu0 %v5508
    %v5510 = vpop.xlane.xlu0 %5509
    %v5511 = vmul.f32 %v5507, %v1045
    %v5512 = vmul.f32 %v5510, %v1045
    %v5513 = vadd.f32 %v5511, 1e-05
    %v5514 = vadd.f32 %v5512, 1e-05
    %v5515 = vrsqrt.pop %v5513
    %v5516 = vmul.f32 %v5515, %v5513
    %v5517 = vmul.f32 %v5516, %v5515
    %v5518 = vmul.f32 0.5, %v5517
    %v5519 = vsub.f32 1.5, %v5518
    %v5520 = vmul.f32 %v5515, %v5519
    %vm5521 = vweird.f32 %v5513
    %vm5522 = vweird.f32 %v5515
    %vm5523 = vmor %vm5521, %vm5522
    %v5524 = vsel %vm5523, %v5515, %v5520
    %v5525 = vrsqrt.pop %v5514
    %v5526 = vmul.f32 %v5525, %v5514
    %v5527 = vmul.f32 %v5526, %v5525
    %v5528 = vmul.f32 0.5, %v5527
    %v5529 = vsub.f32 1.5, %v5528
    %v5530 = vmul.f32 %v5525, %v5529
    %vm5531 = vweird.f32 %v5514
    %vm5532 = vweird.f32 %v5525
    %vm5533 = vmor %vm5531, %vm5532
    %v5534 = vsel %vm5533, %v5525, %v5530
    %v5535 = vmul.f32 %v5501, %v5524
    %v5536 = vmul.f32 %v5502, %v5534
    %v5537 = vperm.slane %v5491, 0
    %v5538 = vmul.f32 %v5535, %v5537
    %v5539 = vmul.f32 %v5536, %v5537
    %v5540 = vperm.slane %v5492, 0
    %v5541 = vadd.f32 %v5538, %v5540
    %v5542 = vadd.f32 %v5539, %v5540
    %v5543 = vld [vmem:[#allocation2 + $0x270] sm:$0xf]
    %v5544 = vld [vmem:[#allocation2 + $0x274] sm:$0xf]
    %v5545 = vld [vmem:[#allocation2 + $0x278] sm:$0xf]
    %v5546 = vld [vmem:[#allocation2 + $0x27c] sm:$0xf]
    %v5547 = vpack.c.bf16 %v5542, %v5541
    %v5548 = vld [vmem:[#allocation5 + $0x46] sm:$0x1]
    %v5549 = vperm.slane %v5548, 0
    %v5554 = vunpack.c.l.b16 %v5543
    %v5555 = vunpack.c.l.b16 %v5544
    %v5556 = vunpack.c.l.b16 %v5545
    %v5557 = vunpack.c.l.b16 %v5546
    %v5558 = vpack.c.b16 %v5555, %v5554
    %v5559 = vpack.c.b16 %v5557, %v5556
    %v5563 = vsel %vm167, %v5547, 0
    %5565 = vmatpush.bf16.msra.mxu0 0
    %5566 = vmatpush.bf16.msra.mxu0 0
    %5567 = vmatpush.bf16.msra.mxu0 0
    %5568 = vmatpush.bf16.msra.mxu0 0
    %5569 = vmatpush.bf16.msra.mxu0 0
    %5570 = vmatpush.bf16.msra.mxu0 0
    %5571 = vmatpush.bf16.msra.mxu0 %v5559
    %5572 = vmatpush.bf16.msra.mxu0 %v5558
    %5573 = vmatmul.bf16.gmra.mxu0 %v5563
    %v5574 = vpop.f32.mrf.mxu0
    %v5575 = vadd.f32 %v5549, %v5574
    %v5576 = vpop.f32.mrf.mxu0
    %v5577 = vadd.f32 %v5549, %v5576
    %5578 = vdwg.mxu0
    %5579 = vst [vmem:[#allocation7] sm:$0xff] %v5575
    %5580 = vst [vmem:[#allocation7 + $0x8] sm:$0xff] %v5577
    // Predicated region
    $region26: #{tpu_custom_call.1} parent=1 // pred_check
      _
    $region27: #{tpu_custom_call.1} parent=1 // pred_check_branch
      %5582 = sbr.rel (0) target = $region29
    $region28: #{tpu_custom_call.1} parent=1 // pred_region
      %5584 = vsyncadd [#allocation4], 0
      %s5585 = sshll.u32 [#allocation7], 4
      %s5586 = int_to_ptr.vmem [resolvable:$true] %s5585
      %s5587 = sshll.u32 %s4, 4
      %s5588 = int_to_ptr.hbm [resolvable:$true] %s5587
      %5593 = dma.vmem_to_hbm [thread:$0]  %s5586, 256, %s5588, [#allocation4], 128, 128, 8
    $region29: #{tpu_custom_call.1} parent=1 // pred_fallthru
      _
    // Predicated region
    $region30: #{tpu_custom_call.1} parent=1 // pred_check
      _
    $region31: #{tpu_custom_call.1} parent=1 // pred_check_branch
      %5595 = sbr.rel (0) target = $region33
    $region32: #{tpu_custom_call.1} parent=1 // pred_region
      %5597 = dma.done [#allocation4], 256
    $region33: #{tpu_custom_call.1} parent=1 // pred_fallthru
      _
    %5598 = vsyncpa [#allocation3], 1
    %5599 = vsyncpa [#allocation6], 1
    %5600 = vsyncpa [#allocation4], 1

</llo_original>
